<compile_context>
chip_gen: v6e
topology: v6e:2x2x1
jax: 0.10.0
libtpu: 0.0.40
codegen_flags: <defaults>
</compile_context>

<pallas_src>
import jax
import jax.numpy as jnp
import numpy as np
from jax import lax
from jax.experimental import pallas as pl
from jax.experimental.pallas import tpu as pltpu

LANE = 128


def _round_up(n, m):
    return ((n + m - 1) // m) * m


# --------------------------------------------------------------------------
# Pallas kernel
# --------------------------------------------------------------------------
def _make_kernel(H, W, Wp, Ho, Wo, stride, mode):
    """mode: 'fused'    -> projection shortcut folded into conv1 (stride==1)
             'separate' -> projection shortcut with its own (strided) matmul
             'identity' -> identity shortcut (Cin == Cout, stride == 1)"""

    def kernel(*refs):
        if mode == "fused":
            (x_ref, w1_ref, b1_ref, bs_ref, w2_ref, b2_ref, w3_ref, b3_ref,
             out_ref, pad_ref) = refs
        elif mode == "separate":
            (x_ref, w1_ref, b1_ref, w2_ref, b2_ref, w3_ref, b3_ref,
             ws_ref, bs_ref, out_ref, pad_ref) = refs
        else:  # identity
            (x_ref, w1_ref, b1_ref, w2_ref, b2_ref, w3_ref, b3_ref,
             out_ref, pad_ref) = refs

        Cin = x_ref.shape[-1]
        Cmid = b1_ref.shape[-1]
        Cout = out_ref.shape[-1]

        x = x_ref[0]                                   # (H, W, Cin) bf16
        xm = x.reshape(H * W, Cin)

        # ---- conv1x1 (+ N-fused projection shortcut) + bias + ReLU --------
        if mode == "fused":
            # Shared-LHS fusion: one (Cin, Cmid+Cout) matmul feeds both the
            # residual branch (h1) and the projection shortcut (sc).
            r = jnp.dot(xm, w1_ref[...], preferred_element_type=jnp.float32)
            h1 = jnp.maximum(r[:, :Cmid] + b1_ref[...], 0.0)
            sc = jnp.maximum(r[:, Cmid:] + bs_ref[...], 0.0)   # q_: ReLU here
        else:
            h1 = jnp.dot(xm, w1_ref[...], preferred_element_type=jnp.float32)
            h1 = jnp.maximum(h1 + b1_ref[...], 0.0)
            if mode == "separate":
                if stride == 1:
                    xs = xm
                else:
                    xs = x_ref[0, pl.ds(0, Ho, stride),
                               pl.ds(0, Wo, stride), :]
                    xs = xs.reshape(Ho * Wo, Cin)
                sc = jnp.dot(xs, ws_ref[...],
                             preferred_element_type=jnp.float32)
                sc = jnp.maximum(sc + bs_ref[...], 0.0)        # q_: ReLU here
            else:
                # identity shortcut (bf16-rounded input; within tolerance)
                sc = xm.astype(jnp.float32)

        # ---- stage h1 into the zero-padded bf16 scratch --------------------
        # Only the border needs zeroing; the interior is fully overwritten
        # every step.  Done every step (megacore-safe: each TensorCore has its
        # own scratch, so gating on a single grid index would be unsafe).
        zrow = jnp.zeros((1, Wp, Cmid), jnp.bfloat16)
        pad_ref[0:1, :, :] = zrow
        pad_ref[H + 1:H + 2, :, :] = zrow
        pad_ref[1:H + 1, 0:1, :] = jnp.zeros((H, 1, Cmid), jnp.bfloat16)
        pad_ref[1:H + 1, W + 1:Wp, :] = jnp.zeros((H, Wp - W - 1, Cmid),
                                                  jnp.bfloat16)
        pad_ref[1:H + 1, 1:W + 1, :] = (
            h1.astype(jnp.bfloat16).reshape(H, W, Cmid))

        # ---- conv3x3 (padding=1, stride) -----------------------------------
        h2acc = None
        if stride == 1:
            # Row-slab form: per ky one contiguous (Ho*Wp, Cmid) LHS read and a
            # single matmul against the kx-fused weight (Cmid, 3*Cmid), so the
            # MXU sees N = 3*Cmid; then the three kx-shifted output windows
            # are summed.  Partials stay as values (no VMEM acc round trips).
            for ky in range(3):
                slab = pad_ref[ky:ky + Ho, :, :].reshape(Ho * Wp, Cmid)
                y = jnp.dot(slab, w2_ref[ky],
                            preferred_element_type=jnp.float32)
                y = y.reshape(Ho, Wp, 3 * Cmid)
                for kx in range(3):
                    win = y[:, kx:kx + Wo, kx * Cmid:(kx + 1) * Cmid]
                    win = win.reshape(Ho * Wo, Cmid)
                    h2acc = win if h2acc is None else h2acc + win
        else:
            # Strided im2col fallback (kx-fused K = 3*Cmid).
            # TODO(synk): de-interleave even/odd columns at staging time so the
            # stride-2 taps become dense sublane reads (per perf review).
            for ky in range(3):
                patch = jnp.concatenate(
                    [pad_ref[pl.ds(ky, Ho, stride), pl.ds(kx, Wo, stride), :]
                         .reshape(Ho * Wo, Cmid) for kx in range(3)],
                    axis=1)
                contrib = jnp.dot(patch, w2_ref[ky],
                                  preferred_element_type=jnp.float32)
                h2acc = contrib if h2acc is None else h2acc + contrib
        h2 = jnp.maximum(h2acc + b2_ref[...], 0.0)

        # ---- conv1x1 + bias (no ReLU before the residual add) --------------
        h3 = jnp.dot(h2.astype(jnp.bfloat16), w3_ref[...],
                     preferred_element_type=jnp.float32) + b3_ref[...]

        # ---- residual add + final ReLU, lane-dense bf16 store ---------------
        out = jnp.maximum(h3 + sc, 0.0)
        out_ref[0] = out.reshape(Ho, Wo, Cout).astype(out_ref.dtype)

    return kernel


# --------------------------------------------------------------------------
# Host-side parameter preparation (once per layer)
# --------------------------------------------------------------------------
def prepare_kernel_params(params, stride, in_channels):
    f32, bf16 = jnp.float32, jnp.bfloat16
    Cin = in_channels
    Cmid = params["w1"].shape[1]
    Cout = params["w3"].shape[1]
    has_shortcut = (stride != 1) or (Cin != Cout)

    Cin_p = _round_up(Cin, LANE)
    Cmid_p = _round_up(Cmid, LANE)
    Cout_p = _round_up(Cout, LANE)

    def pad2(w, r, c):
        return jnp.pad(w, ((0, r - w.shape[0]), (0, c - w.shape[1])))

    def padb(b, c):
        return jnp.pad(b.astype(f32), ((0, 0), (0, c - b.shape[1])))

    # Fold BN scale into conv weights; keep bias separate in f32.
    w1 = params["w1"].astype(f32) * params["s1"][0][None, :]
    w3 = params["w3"].astype(f32) * params["s3"][0][None, :]
    w2 = params["w2"].astype(f32) * params["s2"][0][None, None, None, :]

    w1k = pad2(w1, Cin_p, Cmid_p).astype(bf16)
    w3k = pad2(w3, Cmid_p, Cout_p).astype(bf16)
    w2p = jnp.pad(w2, ((0, 0), (0, 0), (0, Cmid_p - Cmid), (0, Cmid_p - Cmid)))
    if stride == 1:
        # row-slab layout: w2k[ky][i, kx*Cmid_p + o] = w2[ky, kx, i, o]
        w2k = jnp.transpose(w2p, (0, 2, 1, 3)).reshape(3, Cmid_p, 3 * Cmid_p)
    else:
        # im2col layout: rows ordered [kx0 | kx1 | kx2]
        w2k = w2p.reshape(3, 3 * Cmid_p, Cmid_p)
    w2k = w2k.astype(bf16)

    b1k = padb(params["b1"], Cmid_p)
    b2k = padb(params["b2"], Cmid_p)
    b3k = padb(params["b3"], Cout_p)

    kp = {"Cin": Cin, "Cin_p": Cin_p, "Cmid_p": Cmid_p,
          "Cout": Cout, "Cout_p": Cout_p, "stride": stride}
    if has_shortcut:
        ws = params["ws"].astype(f32) * params["ss"][0][None, :]
        wsk = pad2(ws, Cin_p, Cout_p).astype(bf16)
        bsk = padb(params["bs"], Cout_p)
        if stride == 1:
            kp["mode"] = "fused"
            kp["args"] = (jnp.concatenate([w1k, wsk], axis=1),
                          b1k, bsk, w2k, b2k, w3k, b3k)
        else:
            kp["mode"] = "separate"
            kp["args"] = (w1k, b1k, w2k, b2k, w3k, b3k, wsk, bsk)
    else:
        # No projection shortcut -> no dead ws/bs weights DMA'd or buffered.
        kp["mode"] = "identity"
        kp["args"] = (w1k, b1k, w2k, b2k, w3k, b3k)
    return kp


def _vmem_limit_bytes(H, W, Wp, Ho, Wo, Cin_p, Cmid_p, Cout_p, weight_bytes):
    b = 0
    b += 2 * (H * W * Cin_p * 2)           # x block (bf16), double-buffered
    b += 2 * (Ho * Wo * Cout_p * 2)        # out block (bf16), double-buffered
    b += (H + 2) * Wp * Cmid_p * 2         # padded-h1 scratch (bf16)
    b += 2 * weight_bytes                  # weights/biases (worst case x2)
    b += 4 * (Ho * Wp * 3 * Cmid_p * 4)    # in-flight f32 matmul results etc.
    b = int(b * 1.5) + (4 << 20)
    return max(32 << 20, min(b, 64 << 20))


# --------------------------------------------------------------------------
# Steady-state entry point: padded-NHWC bf16 in, padded-NHWC bf16 out
# --------------------------------------------------------------------------
def q_bottleneck_apply_nhwc(x_nhwc_p, kp):
    B, H, W, Cin_p = x_nhwc_p.shape
    assert Cin_p == kp["Cin_p"]
    stride = kp["stride"]
    Ho = (H + 2 - 3) // stride + 1
    Wo = (W + 2 - 3) // stride + 1
    Wp = _round_up(W + 2, 8)
    Cmid_p, Cout_p = kp["Cmid_p"], kp["Cout_p"]

    kernel = _make_kernel(H, W, Wp, Ho, Wo, stride, kp["mode"])
    weight_args = kp["args"]
    wbytes = sum(int(np.prod(a.shape)) * a.dtype.itemsize for a in weight_args)
    vmem_limit = _vmem_limit_bytes(H, W, Wp, Ho, Wo, Cin_p, Cmid_p, Cout_p,
                                   wbytes)

    def build(single_buffer_weights):
        def wspec(a):
            shape = a.shape
            rank = len(shape)
            imap = lambda b, _r=rank: (0,) * _r
            if single_buffer_weights:
                # Constant index_map -> fetched once; one VMEM buffer suffices.
                return pl.BlockSpec(shape, imap, pipeline_mode=pl.Buffered(1))
            return pl.BlockSpec(shape, imap)

        in_specs = [pl.BlockSpec((1, H, W, Cin_p), lambda b: (b, 0, 0, 0))]
        in_specs += [wspec(a) for a in weight_args]

        return pl.pallas_call(
            kernel,
            out_shape=jax.ShapeDtypeStruct((B, Ho, Wo, Cout_p), jnp.bfloat16),
            grid_spec=pltpu.PrefetchScalarGridSpec(
                num_scalar_prefetch=0,
                grid=(B,),
                in_specs=in_specs,
                out_specs=pl.BlockSpec((1, Ho, Wo, Cout_p),
                                       lambda b: (b, 0, 0, 0)),
                scratch_shapes=[
                    pltpu.VMEM((H + 2, Wp, Cmid_p), jnp.bfloat16),
                ]),
            compiler_params=pltpu.CompilerParams(
                dimension_semantics=("parallel",),
                vmem_limit_bytes=vmem_limit),
        )

    try:
        return build(True)(x_nhwc_p, *weight_args)
    except Exception:
        # Compatibility fallback if this JAX build rejects pl.Buffered(1):
        # identical kernel with default (double-buffered) weight pipelining.
        return build(False)(x_nhwc_p, *weight_args)


# --------------------------------------------------------------------------
# NCHW convenience wrapper (matches the PyTorch module interface)
# --------------------------------------------------------------------------
def q_bottleneck_forward(x_nchw, params, stride=1):
    """For chained blocks, use prepare_kernel_params + q_bottleneck_apply_nhwc
    directly and keep activations in padded-NHWC bf16 between blocks (the
    slice/transpose below is only for the standalone NCHW comparison)."""
    Cin = x_nchw.shape[1]
    kp = prepare_kernel_params(params, stride, Cin)
    x = jnp.transpose(x_nchw, (0, 2, 3, 1)).astype(jnp.bfloat16)
    x = jnp.pad(x, ((0, 0), (0, 0), (0, 0), (0, kp["Cin_p"] - Cin)))
    out_p = q_bottleneck_apply_nhwc(x, kp)
    out = out_p[..., :kp["Cout"]].astype(jnp.float32)
    return jnp.transpose(out, (0, 3, 1, 2))


# --------------------------------------------------------------------------
# Pure-JAX reference (f32, unfolded params) for correctness check
# --------------------------------------------------------------------------
def reference_forward(x_nchw, params, stride=1):
    x = jnp.transpose(x_nchw, (0, 2, 3, 1)).astype(jnp.float32)
    Cin = x.shape[-1]
    Cout = params["w3"].shape[1]
    has_shortcut = (stride != 1) or (Cin != Cout)
    dn = ("NHWC", "HWIO", "NHWC")

    h = lax.conv_general_dilated(x, params["w1"][None, None], (1, 1), "VALID",
                                 dimension_numbers=dn)
    h = jnp.maximum(h * params["s1"][0] + params["b1"][0], 0.0)
    h = lax.conv_general_dilated(h, params["w2"], (stride, stride),
                                 ((1, 1), (1, 1)), dimension_numbers=dn)
    h = jnp.maximum(h * params["s2"][0] + params["b2"][0], 0.0)
    h = lax.conv_general_dilated(h, params["w3"][None, None], (1, 1), "VALID",
                                 dimension_numbers=dn)
    h = h * params["s3"][0] + params["b3"][0]

    if has_shortcut:
        sc = lax.conv_general_dilated(x, params["ws"][None, None],
                                      (stride, stride), "VALID",
                                      dimension_numbers=dn)
        sc = jnp.maximum(sc * params["ss"][0] + params["bs"][0], 0.0)
    else:
        sc = x

    out = jnp.maximum(h + sc, 0.0)
    return jnp.transpose(out, (0, 3, 1, 2))


# --------------------------------------------------------------------------
# Deterministic parameter construction (folded BatchNorm: scale/bias per chan)
# --------------------------------------------------------------------------
def make_params(key, Cin, Cmid, Cout):
    ks = jax.random.split(key, 20)

    def bn_fold(k0, k1, k2, k3, C):
        gamma = 1.0 + 0.1 * jax.random.normal(k0, (C,), jnp.float32)
        beta = 0.1 * jax.random.normal(k1, (C,), jnp.float32)
        mean = 0.1 * jax.random.normal(k2, (C,), jnp.float32)
        var = jax.random.uniform(k3, (C,), jnp.float32, 0.5, 1.5)
        scale = gamma / jnp.sqrt(var + 1e-5)
        bias = beta - mean * scale
        return scale.reshape(1, C), bias.reshape(1, C)

    s1, b1 = bn_fold(ks[0], ks[1], ks[2], ks[3], Cmid)
    s2, b2 = bn_fold(ks[4], ks[5], ks[6], ks[7], Cmid)
    s3, b3 = bn_fold(ks[8], ks[9], ks[10], ks[11], Cout)
    ss, bs = bn_fold(ks[12], ks[13], ks[14], ks[15], Cout)

    return {
        # conv weights stored (Cin, Cout) / (kh, kw, Cin, Cout)  [HWIO-style]
        "w1": 0.2 * jax.random.normal(ks[16], (Cin, Cmid), jnp.float32),
        "w2": 0.2 * jax.random.normal(ks[17], (3, 3, Cmid, Cmid), jnp.float32),
        "w3": 0.2 * jax.random.normal(ks[18], (Cmid, Cout), jnp.float32),
        "ws": 0.2 * jax.random.normal(ks[19], (Cin, Cout), jnp.float32),
        "s1": s1, "b1": b1, "s2": s2, "b2": b2,
        "s3": s3, "b3": b3, "ss": ss, "bs": bs,
    }


# --------------------------------------------------------------------------
if __name__ == "__main__":
    key = jax.random.PRNGKey(0)
    k1, k2, k3, k4 = jax.random.split(key, 4)

    # Case 1: projection shortcut with ReLU (the q_BottleNeck-specific path):
    # stride=1, Cin != out_channels * expansion  -> fused conv1+shortcut.
    B, Cin, H, W = 2, 4, 16, 16
    out_channels, expansion = 4, 4
    Cout = out_channels * expansion
    x1 = jax.random.normal(k1, (B, Cin, H, W), jnp.float32)
    p1 = make_params(k2, Cin, out_channels, Cout)
    out1 = jax.block_until_ready(q_bottleneck_forward(x1, p1, stride=1))
    ref1 = jax.block_until_ready(reference_forward(x1, p1, stride=1))
    np.testing.assert_allclose(np.asarray(out1), np.asarray(ref1),
                               rtol=3e-2, atol=3e-2)

    # Case 2: identity shortcut (Cin == out_channels * expansion, stride=1);
    # exercises the no-shortcut-weight argument path.
    Cin2 = Cout
    x2 = jax.random.normal(k3, (B, Cin2, H, W), jnp.float32)
    p2 = make_params(k4, Cin2, out_channels, Cout)
    out2 = jax.block_until_ready(q_bottleneck_forward(x2, p2, stride=1))
    ref2 = jax.block_until_ready(reference_forward(x2, p2, stride=1))
    np.testing.assert_allclose(np.asarray(out2), np.asarray(ref2),
                               rtol=3e-2, atol=3e-2)

    print("KERNEL_OK")
</pallas_src>

<mosaic_0001>
module attributes {stable_mosaic.version = 11 : i64} {
  func.func @kernel(%arg0: i32, %arg1: memref<1x16x16x128xbf16, #tpu.memory_space<vmem>>, %arg2: memref<128x256xbf16, #tpu.memory_space<vmem>>, %arg3: memref<1x128xf32, #tpu.memory_space<vmem>>, %arg4: memref<1x128xf32, #tpu.memory_space<vmem>>, %arg5: memref<3x128x384xbf16, #tpu.memory_space<vmem>>, %arg6: memref<1x128xf32, #tpu.memory_space<vmem>>, %arg7: memref<128x128xbf16, #tpu.memory_space<vmem>>, %arg8: memref<1x128xf32, #tpu.memory_space<vmem>>, %arg9: memref<1x16x16x128xbf16, #tpu.memory_space<vmem>>, %arg10: memref<18x24x128xbf16, #tpu.memory_space<vmem>>) attributes {dimension_semantics = [#tpu.dimension_semantics<parallel>], iteration_bounds = array<i64: 2>, scalar_prefetch = 0 : i64, scratch_operands = 1 : i64, tpu.core_type = #tpu.core_type<tc>, window_params = [{transform_indices = @transform_0, window_bounds = array<i64: 1, 16, 16, 128>}, {pipeline_mode = #tpu.pipeline_mode<synchronous>, transform_indices = @transform_1, window_bounds = array<i64: 128, 256>}, {pipeline_mode = #tpu.pipeline_mode<synchronous>, transform_indices = @transform_2, window_bounds = array<i64: 1, 128>}, {pipeline_mode = #tpu.pipeline_mode<synchronous>, transform_indices = @transform_3, window_bounds = array<i64: 1, 128>}, {pipeline_mode = #tpu.pipeline_mode<synchronous>, transform_indices = @transform_4, window_bounds = array<i64: 3, 128, 384>}, {pipeline_mode = #tpu.pipeline_mode<synchronous>, transform_indices = @transform_5, window_bounds = array<i64: 1, 128>}, {pipeline_mode = #tpu.pipeline_mode<synchronous>, transform_indices = @transform_6, window_bounds = array<i64: 128, 128>}, {pipeline_mode = #tpu.pipeline_mode<synchronous>, transform_indices = @transform_7, window_bounds = array<i64: 1, 128>}, {transform_indices = @transform_8, window_bounds = array<i64: 1, 16, 16, 128>}]} {
    %c0 = arith.constant 0 : index
    %c0_0 = arith.constant 0 : index
    %c0_1 = arith.constant 0 : index
    %c0_2 = arith.constant 0 : index
    %0 = vector.load %arg1[%c0, %c0_0, %c0_1, %c0_2] : memref<1x16x16x128xbf16, #tpu.memory_space<vmem>>, vector<1x16x16x128xbf16>
    %1 = vector.shape_cast %0 : vector<1x16x16x128xbf16> to vector<16x16x128xbf16>
    %2 = vector.shape_cast %1 : vector<16x16x128xbf16> to vector<256x128xbf16>
    %c0_3 = arith.constant 0 : index
    %c0_4 = arith.constant 0 : index
    %3 = vector.load %arg2[%c0_3, %c0_4] : memref<128x256xbf16, #tpu.memory_space<vmem>>, vector<128x256xbf16>
    %cst = arith.constant dense<0.000000e+00> : vector<256x256xf32>
    %4 = tpu.matmul %2, %3, %cst {dimension_numbers = #tpu.dot_dimension_numbers<[1], [0], [0], [1], [0, 0, 1, 1], [], []>} : vector<256x128xbf16>, vector<128x256xbf16>, vector<256x256xf32> -> vector<256x256xf32>
    %5 = vector.extract_strided_slice %4 {offsets = [0, 0], sizes = [256, 128], strides = [1, 1]} : vector<256x256xf32> to vector<256x128xf32>
    %c0_5 = arith.constant 0 : index
    %c0_6 = arith.constant 0 : index
    %6 = vector.load %arg3[%c0_5, %c0_6] : memref<1x128xf32, #tpu.memory_space<vmem>>, vector<1x128xf32>
    %7 = vector.broadcast %6 : vector<1x128xf32> to vector<256x128xf32>
    %8 = arith.addf %5, %7 : vector<256x128xf32>
    %cst_7 = arith.constant 0.000000e+00 : f32
    %9 = vector.broadcast %cst_7 : f32 to vector<256x128xf32>
    %10 = arith.maximumf %8, %9 : vector<256x128xf32>
    %11 = vector.extract_strided_slice %4 {offsets = [0, 128], sizes = [256, 128], strides = [1, 1]} : vector<256x256xf32> to vector<256x128xf32>
    %c0_8 = arith.constant 0 : index
    %c0_9 = arith.constant 0 : index
    %12 = vector.load %arg4[%c0_8, %c0_9] : memref<1x128xf32, #tpu.memory_space<vmem>>, vector<1x128xf32>
    %13 = vector.broadcast %12 : vector<1x128xf32> to vector<256x128xf32>
    %14 = arith.addf %11, %13 : vector<256x128xf32>
    %cst_10 = arith.constant 0.000000e+00 : f32
    %15 = vector.broadcast %cst_10 : f32 to vector<256x128xf32>
    %16 = arith.maximumf %14, %15 : vector<256x128xf32>
    %cst_11 = arith.constant 0.000000e+00 : bf16
    %17 = vector.broadcast %cst_11 : bf16 to vector<1x24x128xbf16>
    %c0_12 = arith.constant 0 : index
    %c0_13 = arith.constant 0 : index
    %c0_14 = arith.constant 0 : index
    %18 = vector.load %arg10[%c0_12, %c0_13, %c0_14] : memref<18x24x128xbf16, #tpu.memory_space<vmem>>, vector<1x24x128xbf16>
    tpu.vector_store %arg10[%c0_12, %c0_13, %c0_14], %17 {strides = array<i32>} : memref<18x24x128xbf16, #tpu.memory_space<vmem>>, vector<1x24x128xbf16>,
    %c17 = arith.constant 17 : index
    %c0_15 = arith.constant 0 : index
    %c0_16 = arith.constant 0 : index
    %19 = vector.load %arg10[%c17, %c0_15, %c0_16] : memref<18x24x128xbf16, #tpu.memory_space<vmem>>, vector<1x24x128xbf16>
    tpu.vector_store %arg10[%c17, %c0_15, %c0_16], %17 {strides = array<i32>} : memref<18x24x128xbf16, #tpu.memory_space<vmem>>, vector<1x24x128xbf16>,
    %cst_17 = arith.constant 0.000000e+00 : bf16
    %20 = vector.broadcast %cst_17 : bf16 to vector<16x1x128xbf16>
    %c1 = arith.constant 1 : index
    %c0_18 = arith.constant 0 : index
    %c0_19 = arith.constant 0 : index
    %21 = vector.load %arg10[%c1, %c0_18, %c0_19] : memref<18x24x128xbf16, #tpu.memory_space<vmem>>, vector<16x1x128xbf16>
    tpu.vector_store %arg10[%c1, %c0_18, %c0_19], %20 {strides = array<i32>} : memref<18x24x128xbf16, #tpu.memory_space<vmem>>, vector<16x1x128xbf16>,
    %cst_20 = arith.constant 0.000000e+00 : bf16
    %22 = vector.broadcast %cst_20 : bf16 to vector<16x7x128xbf16>
    %c1_21 = arith.constant 1 : index
    %c17_22 = arith.constant 17 : index
    %c0_23 = arith.constant 0 : index
    %23 = vector.load %arg10[%c1_21, %c17_22, %c0_23] : memref<18x24x128xbf16, #tpu.memory_space<vmem>>, vector<16x7x128xbf16>
    tpu.vector_store %arg10[%c1_21, %c17_22, %c0_23], %22 {strides = array<i32>} : memref<18x24x128xbf16, #tpu.memory_space<vmem>>, vector<16x7x128xbf16>,
    %24 = arith.truncf %10 : vector<256x128xf32> to vector<256x128xbf16>
    %25 = vector.shape_cast %24 : vector<256x128xbf16> to vector<16x16x128xbf16>
    %c1_24 = arith.constant 1 : index
    %c1_25 = arith.constant 1 : index
    %c0_26 = arith.constant 0 : index
    %26 = vector.load %arg10[%c1_24, %c1_25, %c0_26] : memref<18x24x128xbf16, #tpu.memory_space<vmem>>, vector<16x16x128xbf16>
    tpu.vector_store %arg10[%c1_24, %c1_25, %c0_26], %25 {strides = array<i32>} : memref<18x24x128xbf16, #tpu.memory_space<vmem>>, vector<16x16x128xbf16>,
    %c0_27 = arith.constant 0 : index
    %c0_28 = arith.constant 0 : index
    %c0_29 = arith.constant 0 : index
    %27 = vector.load %arg10[%c0_27, %c0_28, %c0_29] : memref<18x24x128xbf16, #tpu.memory_space<vmem>>, vector<16x24x128xbf16>
    %28 = vector.shape_cast %27 : vector<16x24x128xbf16> to vector<384x128xbf16>
    %c0_30 = arith.constant 0 : index
    %c0_31 = arith.constant 0 : index
    %c0_32 = arith.constant 0 : index
    %29 = vector.load %arg5[%c0_30, %c0_31, %c0_32] : memref<3x128x384xbf16, #tpu.memory_space<vmem>>, vector<1x128x384xbf16>
    %30 = vector.shape_cast %29 : vector<1x128x384xbf16> to vector<128x384xbf16>
    %cst_33 = arith.constant dense<0.000000e+00> : vector<384x384xf32>
    %31 = tpu.matmul %28, %30, %cst_33 {dimension_numbers = #tpu.dot_dimension_numbers<[1], [0], [0], [1], [0, 0, 1, 1], [], []>} : vector<384x128xbf16>, vector<128x384xbf16>, vector<384x384xf32> -> vector<384x384xf32>
    %32 = vector.shape_cast %31 : vector<384x384xf32> to vector<16x24x384xf32>
    %33 = vector.extract_strided_slice %32 {offsets = [0, 0, 0], sizes = [16, 16, 128], strides = [1, 1, 1]} : vector<16x24x384xf32> to vector<16x16x128xf32>
    %34 = vector.shape_cast %33 : vector<16x16x128xf32> to vector<256x128xf32>
    %35 = vector.extract_strided_slice %32 {offsets = [0, 1, 128], sizes = [16, 16, 128], strides = [1, 1, 1]} : vector<16x24x384xf32> to vector<16x16x128xf32>
    %36 = vector.shape_cast %35 : vector<16x16x128xf32> to vector<256x128xf32>
    %37 = arith.addf %34, %36 : vector<256x128xf32>
    %38 = vector.extract_strided_slice %32 {offsets = [0, 2, 256], sizes = [16, 16, 128], strides = [1, 1, 1]} : vector<16x24x384xf32> to vector<16x16x128xf32>
    %39 = vector.shape_cast %38 : vector<16x16x128xf32> to vector<256x128xf32>
    %40 = arith.addf %37, %39 : vector<256x128xf32>
    %c1_34 = arith.constant 1 : index
    %c0_35 = arith.constant 0 : index
    %c0_36 = arith.constant 0 : index
    %41 = vector.load %arg10[%c1_34, %c0_35, %c0_36] : memref<18x24x128xbf16, #tpu.memory_space<vmem>>, vector<16x24x128xbf16>
    %42 = vector.shape_cast %41 : vector<16x24x128xbf16> to vector<384x128xbf16>
    %c1_37 = arith.constant 1 : index
    %c0_38 = arith.constant 0 : index
    %c0_39 = arith.constant 0 : index
    %43 = vector.load %arg5[%c1_37, %c0_38, %c0_39] : memref<3x128x384xbf16, #tpu.memory_space<vmem>>, vector<1x128x384xbf16>
    %44 = vector.shape_cast %43 : vector<1x128x384xbf16> to vector<128x384xbf16>
    %cst_40 = arith.constant dense<0.000000e+00> : vector<384x384xf32>
    %45 = tpu.matmul %42, %44, %cst_40 {dimension_numbers = #tpu.dot_dimension_numbers<[1], [0], [0], [1], [0, 0, 1, 1], [], []>} : vector<384x128xbf16>, vector<128x384xbf16>, vector<384x384xf32> -> vector<384x384xf32>
    %46 = vector.shape_cast %45 : vector<384x384xf32> to vector<16x24x384xf32>
    %47 = vector.extract_strided_slice %46 {offsets = [0, 0, 0], sizes = [16, 16, 128], strides = [1, 1, 1]} : vector<16x24x384xf32> to vector<16x16x128xf32>
    %48 = vector.shape_cast %47 : vector<16x16x128xf32> to vector<256x128xf32>
    %49 = arith.addf %40, %48 : vector<256x128xf32>
    %50 = vector.extract_strided_slice %46 {offsets = [0, 1, 128], sizes = [16, 16, 128], strides = [1, 1, 1]} : vector<16x24x384xf32> to vector<16x16x128xf32>
    %51 = vector.shape_cast %50 : vector<16x16x128xf32> to vector<256x128xf32>
    %52 = arith.addf %49, %51 : vector<256x128xf32>
    %53 = vector.extract_strided_slice %46 {offsets = [0, 2, 256], sizes = [16, 16, 128], strides = [1, 1, 1]} : vector<16x24x384xf32> to vector<16x16x128xf32>
    %54 = vector.shape_cast %53 : vector<16x16x128xf32> to vector<256x128xf32>
    %55 = arith.addf %52, %54 : vector<256x128xf32>
    %c2 = arith.constant 2 : index
    %c0_41 = arith.constant 0 : index
    %c0_42 = arith.constant 0 : index
    %56 = vector.load %arg10[%c2, %c0_41, %c0_42] : memref<18x24x128xbf16, #tpu.memory_space<vmem>>, vector<16x24x128xbf16>
    %57 = vector.shape_cast %56 : vector<16x24x128xbf16> to vector<384x128xbf16>
    %c2_43 = arith.constant 2 : index
    %c0_44 = arith.constant 0 : index
    %c0_45 = arith.constant 0 : index
    %58 = vector.load %arg5[%c2_43, %c0_44, %c0_45] : memref<3x128x384xbf16, #tpu.memory_space<vmem>>, vector<1x128x384xbf16>
    %59 = vector.shape_cast %58 : vector<1x128x384xbf16> to vector<128x384xbf16>
    %cst_46 = arith.constant dense<0.000000e+00> : vector<384x384xf32>
    %60 = tpu.matmul %57, %59, %cst_46 {dimension_numbers = #tpu.dot_dimension_numbers<[1], [0], [0], [1], [0, 0, 1, 1], [], []>} : vector<384x128xbf16>, vector<128x384xbf16>, vector<384x384xf32> -> vector<384x384xf32>
    %61 = vector.shape_cast %60 : vector<384x384xf32> to vector<16x24x384xf32>
    %62 = vector.extract_strided_slice %61 {offsets = [0, 0, 0], sizes = [16, 16, 128], strides = [1, 1, 1]} : vector<16x24x384xf32> to vector<16x16x128xf32>
    %63 = vector.shape_cast %62 : vector<16x16x128xf32> to vector<256x128xf32>
    %64 = arith.addf %55, %63 : vector<256x128xf32>
    %65 = vector.extract_strided_slice %61 {offsets = [0, 1, 128], sizes = [16, 16, 128], strides = [1, 1, 1]} : vector<16x24x384xf32> to vector<16x16x128xf32>
    %66 = vector.shape_cast %65 : vector<16x16x128xf32> to vector<256x128xf32>
    %67 = arith.addf %64, %66 : vector<256x128xf32>
    %68 = vector.extract_strided_slice %61 {offsets = [0, 2, 256], sizes = [16, 16, 128], strides = [1, 1, 1]} : vector<16x24x384xf32> to vector<16x16x128xf32>
    %69 = vector.shape_cast %68 : vector<16x16x128xf32> to vector<256x128xf32>
    %70 = arith.addf %67, %69 : vector<256x128xf32>
    %c0_47 = arith.constant 0 : index
    %c0_48 = arith.constant 0 : index
    %71 = vector.load %arg6[%c0_47, %c0_48] : memref<1x128xf32, #tpu.memory_space<vmem>>, vector<1x128xf32>
    %72 = vector.broadcast %71 : vector<1x128xf32> to vector<256x128xf32>
    %73 = arith.addf %70, %72 : vector<256x128xf32>
    %cst_49 = arith.constant 0.000000e+00 : f32
    %74 = vector.broadcast %cst_49 : f32 to vector<256x128xf32>
    %75 = arith.maximumf %73, %74 : vector<256x128xf32>
    %76 = arith.truncf %75 : vector<256x128xf32> to vector<256x128xbf16>
    %c0_50 = arith.constant 0 : index
    %c0_51 = arith.constant 0 : index
    %77 = vector.load %arg7[%c0_50, %c0_51] : memref<128x128xbf16, #tpu.memory_space<vmem>>, vector<128x128xbf16>
    %cst_52 = arith.constant dense<0.000000e+00> : vector<256x128xf32>
    %78 = tpu.matmul %76, %77, %cst_52 {dimension_numbers = #tpu.dot_dimension_numbers<[1], [0], [0], [1], [0, 0, 1, 1], [], []>} : vector<256x128xbf16>, vector<128x128xbf16>, vector<256x128xf32> -> vector<256x128xf32>
    %c0_53 = arith.constant 0 : index
    %c0_54 = arith.constant 0 : index
    %79 = vector.load %arg8[%c0_53, %c0_54] : memref<1x128xf32, #tpu.memory_space<vmem>>, vector<1x128xf32>
    %80 = vector.broadcast %79 : vector<1x128xf32> to vector<256x128xf32>
    %81 = arith.addf %78, %80 : vector<256x128xf32>
    %82 = arith.addf %81, %16 : vector<256x128xf32>
    %cst_55 = arith.constant 0.000000e+00 : f32
    %83 = vector.broadcast %cst_55 : f32 to vector<256x128xf32>
    %84 = arith.maximumf %82, %83 : vector<256x128xf32>
    %85 = vector.shape_cast %84 : vector<256x128xf32> to vector<16x16x128xf32>
    %86 = arith.truncf %85 : vector<16x16x128xf32> to vector<16x16x128xbf16>
    %c0_56 = arith.constant 0 : index
    %c0_57 = arith.constant 0 : index
    %c0_58 = arith.constant 0 : index
    %c0_59 = arith.constant 0 : index
    %87 = vector.load %arg9[%c0_56, %c0_57, %c0_58, %c0_59] : memref<1x16x16x128xbf16, #tpu.memory_space<vmem>>, vector<1x16x16x128xbf16>
    %88 = vector.shape_cast %87 : vector<1x16x16x128xbf16> to vector<16x16x128xbf16>
    %89 = vector.shape_cast %86 : vector<16x16x128xbf16> to vector<1x16x16x128xbf16>
    tpu.vector_store %arg9[%c0_56, %c0_57, %c0_58, %c0_59], %89 {strides = array<i32>} : memref<1x16x16x128xbf16, #tpu.memory_space<vmem>>, vector<1x16x16x128xbf16>,
    return
  }
  func.func @transform_0(%arg0: i32) -> (i32, i32, i32, i32) {
    %c0_i32 = arith.constant 0 : i32
    %c0_i32_0 = arith.constant 0 : i32
    %c0_i32_1 = arith.constant 0 : i32
    %c0_i32_2 = arith.constant 0 : i32
    return %arg0, %c0_i32, %c0_i32_0, %c0_i32_1 : i32, i32, i32, i32
  }
  func.func @transform_1(%arg0: i32) -> (i32, i32) {
    %c0_i32 = arith.constant 0 : i32
    %c0_i32_0 = arith.constant 0 : i32
    %c0_i32_1 = arith.constant 0 : i32
    return %c0_i32, %c0_i32_0 : i32, i32
  }
  func.func @transform_2(%arg0: i32) -> (i32, i32) {
    %c0_i32 = arith.constant 0 : i32
    %c0_i32_0 = arith.constant 0 : i32
    %c0_i32_1 = arith.constant 0 : i32
    return %c0_i32, %c0_i32_0 : i32, i32
  }
  func.func @transform_3(%arg0: i32) -> (i32, i32) {
    %c0_i32 = arith.constant 0 : i32
    %c0_i32_0 = arith.constant 0 : i32
    %c0_i32_1 = arith.constant 0 : i32
    return %c0_i32, %c0_i32_0 : i32, i32
  }
  func.func @transform_4(%arg0: i32) -> (i32, i32, i32) {
    %c0_i32 = arith.constant 0 : i32
    %c0_i32_0 = arith.constant 0 : i32
    %c0_i32_1 = arith.constant 0 : i32
    %c0_i32_2 = arith.constant 0 : i32
    return %c0_i32, %c0_i32_0, %c0_i32_1 : i32, i32, i32
  }
  func.func @transform_5(%arg0: i32) -> (i32, i32) {
    %c0_i32 = arith.constant 0 : i32
    %c0_i32_0 = arith.constant 0 : i32
    %c0_i32_1 = arith.constant 0 : i32
    return %c0_i32, %c0_i32_0 : i32, i32
  }
  func.func @transform_6(%arg0: i32) -> (i32, i32) {
    %c0_i32 = arith.constant 0 : i32
    %c0_i32_0 = arith.constant 0 : i32
    %c0_i32_1 = arith.constant 0 : i32
    return %c0_i32, %c0_i32_0 : i32, i32
  }
  func.func @transform_7(%arg0: i32) -> (i32, i32) {
    %c0_i32 = arith.constant 0 : i32
    %c0_i32_0 = arith.constant 0 : i32
    %c0_i32_1 = arith.constant 0 : i32
    return %c0_i32, %c0_i32_0 : i32, i32
  }
  func.func @transform_8(%arg0: i32) -> (i32, i32, i32, i32) {
    %c0_i32 = arith.constant 0 : i32
    %c0_i32_0 = arith.constant 0 : i32
    %c0_i32_1 = arith.constant 0 : i32
    %c0_i32_2 = arith.constant 0 : i32
    return %arg0, %c0_i32, %c0_i32_0, %c0_i32_1 : i32, i32, i32, i32
  }
}

module attributes {stable_mosaic.version = 11 : i64} {
  func.func @kernel(%arg0: i32, %arg1: memref<1x16x16x128xbf16, #tpu.memory_space<vmem>>, %arg2: memref<128x256xbf16, #tpu.memory_space<vmem>>, %arg3: memref<1x128xf32, #tpu.memory_space<vmem>>, %arg4: memref<1x128xf32, #tpu.memory_space<vmem>>, %arg5: memref<3x128x384xbf16, #tpu.memory_space<vmem>>, %arg6: memref<1x128xf32, #tpu.memory_space<vmem>>, %arg7: memref<128x128xbf16, #tpu.memory_space<vmem>>, %arg8: memref<1x128xf32, #tpu.memory_space<vmem>>, %arg9: memref<1x16x16x128xbf16, #tpu.memory_space<vmem>>, %arg10: memref<18x24x128xbf16, #tpu.memory_space<vmem>>) attributes {dimension_semantics = [#tpu.dimension_semantics<parallel>], iteration_bounds = array<i64: 2>, scalar_prefetch = 0 : i64, scratch_operands = 1 : i64, tpu.core_type = #tpu.core_type<tc>, window_params = [{transform_indices = @transform_0, window_bounds = array<i64: 1, 16, 16, 128>}, {pipeline_mode = #tpu.pipeline_mode<synchronous>, transform_indices = @transform_1, window_bounds = array<i64: 128, 256>}, {pipeline_mode = #tpu.pipeline_mode<synchronous>, transform_indices = @transform_2, window_bounds = array<i64: 1, 128>}, {pipeline_mode = #tpu.pipeline_mode<synchronous>, transform_indices = @transform_3, window_bounds = array<i64: 1, 128>}, {pipeline_mode = #tpu.pipeline_mode<synchronous>, transform_indices = @transform_4, window_bounds = array<i64: 3, 128, 384>}, {pipeline_mode = #tpu.pipeline_mode<synchronous>, transform_indices = @transform_5, window_bounds = array<i64: 1, 128>}, {pipeline_mode = #tpu.pipeline_mode<synchronous>, transform_indices = @transform_6, window_bounds = array<i64: 128, 128>}, {pipeline_mode = #tpu.pipeline_mode<synchronous>, transform_indices = @transform_7, window_bounds = array<i64: 1, 128>}, {transform_indices = @transform_8, window_bounds = array<i64: 1, 16, 16, 128>}]} {
    %c0 = arith.constant 0 : index
    %c0_0 = arith.constant 0 : index
    %c0_1 = arith.constant 0 : index
    %c0_2 = arith.constant 0 : index
    %0 = vector.load %arg1[%c0, %c0_0, %c0_1, %c0_2] : memref<1x16x16x128xbf16, #tpu.memory_space<vmem>>, vector<1x16x16x128xbf16>
    %1 = vector.shape_cast %0 : vector<1x16x16x128xbf16> to vector<16x16x128xbf16>
    %2 = vector.shape_cast %1 : vector<16x16x128xbf16> to vector<256x128xbf16>
    %c0_3 = arith.constant 0 : index
    %c0_4 = arith.constant 0 : index
    %3 = vector.load %arg2[%c0_3, %c0_4] : memref<128x256xbf16, #tpu.memory_space<vmem>>, vector<128x256xbf16>
    %cst = arith.constant dense<0.000000e+00> : vector<256x256xf32>
    %4 = tpu.matmul %2, %3, %cst {dimension_numbers = #tpu.dot_dimension_numbers<[1], [0], [0], [1], [0, 0, 1, 1], [], []>} : vector<256x128xbf16>, vector<128x256xbf16>, vector<256x256xf32> -> vector<256x256xf32>
    %5 = vector.extract_strided_slice %4 {offsets = [0, 0], sizes = [256, 128], strides = [1, 1]} : vector<256x256xf32> to vector<256x128xf32>
    %c0_5 = arith.constant 0 : index
    %c0_6 = arith.constant 0 : index
    %6 = vector.load %arg3[%c0_5, %c0_6] : memref<1x128xf32, #tpu.memory_space<vmem>>, vector<1x128xf32>
    %7 = vector.broadcast %6 : vector<1x128xf32> to vector<256x128xf32>
    %8 = arith.addf %5, %7 : vector<256x128xf32>
    %cst_7 = arith.constant 0.000000e+00 : f32
    %9 = vector.broadcast %cst_7 : f32 to vector<256x128xf32>
    %10 = arith.maximumf %8, %9 : vector<256x128xf32>
    %11 = vector.extract_strided_slice %4 {offsets = [0, 128], sizes = [256, 128], strides = [1, 1]} : vector<256x256xf32> to vector<256x128xf32>
    %c0_8 = arith.constant 0 : index
    %c0_9 = arith.constant 0 : index
    %12 = vector.load %arg4[%c0_8, %c0_9] : memref<1x128xf32, #tpu.memory_space<vmem>>, vector<1x128xf32>
    %13 = vector.broadcast %12 : vector<1x128xf32> to vector<256x128xf32>
    %14 = arith.addf %11, %13 : vector<256x128xf32>
    %cst_10 = arith.constant 0.000000e+00 : f32
    %15 = vector.broadcast %cst_10 : f32 to vector<256x128xf32>
    %16 = arith.maximumf %14, %15 : vector<256x128xf32>
    %cst_11 = arith.constant 0.000000e+00 : bf16
    %17 = vector.broadcast %cst_11 : bf16 to vector<1x24x128xbf16>
    %c0_12 = arith.constant 0 : index
    %c0_13 = arith.constant 0 : index
    %c0_14 = arith.constant 0 : index
    %18 = vector.load %arg10[%c0_12, %c0_13, %c0_14] : memref<18x24x128xbf16, #tpu.memory_space<vmem>>, vector<1x24x128xbf16>
    tpu.vector_store %arg10[%c0_12, %c0_13, %c0_14], %17 {strides = array<i32>} : memref<18x24x128xbf16, #tpu.memory_space<vmem>>, vector<1x24x128xbf16>,
    %c17 = arith.constant 17 : index
    %c0_15 = arith.constant 0 : index
    %c0_16 = arith.constant 0 : index
    %19 = vector.load %arg10[%c17, %c0_15, %c0_16] : memref<18x24x128xbf16, #tpu.memory_space<vmem>>, vector<1x24x128xbf16>
    tpu.vector_store %arg10[%c17, %c0_15, %c0_16], %17 {strides = array<i32>} : memref<18x24x128xbf16, #tpu.memory_space<vmem>>, vector<1x24x128xbf16>,
    %cst_17 = arith.constant 0.000000e+00 : bf16
    %20 = vector.broadcast %cst_17 : bf16 to vector<16x1x128xbf16>
    %c1 = arith.constant 1 : index
    %c0_18 = arith.constant 0 : index
    %c0_19 = arith.constant 0 : index
    %21 = vector.load %arg10[%c1, %c0_18, %c0_19] : memref<18x24x128xbf16, #tpu.memory_space<vmem>>, vector<16x1x128xbf16>
    tpu.vector_store %arg10[%c1, %c0_18, %c0_19], %20 {strides = array<i32>} : memref<18x24x128xbf16, #tpu.memory_space<vmem>>, vector<16x1x128xbf16>,
    %cst_20 = arith.constant 0.000000e+00 : bf16
    %22 = vector.broadcast %cst_20 : bf16 to vector<16x7x128xbf16>
    %c1_21 = arith.constant 1 : index
    %c17_22 = arith.constant 17 : index
    %c0_23 = arith.constant 0 : index
    %23 = vector.load %arg10[%c1_21, %c17_22, %c0_23] : memref<18x24x128xbf16, #tpu.memory_space<vmem>>, vector<16x7x128xbf16>
    tpu.vector_store %arg10[%c1_21, %c17_22, %c0_23], %22 {strides = array<i32>} : memref<18x24x128xbf16, #tpu.memory_space<vmem>>, vector<16x7x128xbf16>,
    %24 = arith.truncf %10 : vector<256x128xf32> to vector<256x128xbf16>
    %25 = vector.shape_cast %24 : vector<256x128xbf16> to vector<16x16x128xbf16>
    %c1_24 = arith.constant 1 : index
    %c1_25 = arith.constant 1 : index
    %c0_26 = arith.constant 0 : index
    %26 = vector.load %arg10[%c1_24, %c1_25, %c0_26] : memref<18x24x128xbf16, #tpu.memory_space<vmem>>, vector<16x16x128xbf16>
    tpu.vector_store %arg10[%c1_24, %c1_25, %c0_26], %25 {strides = array<i32>} : memref<18x24x128xbf16, #tpu.memory_space<vmem>>, vector<16x16x128xbf16>,
    %c0_27 = arith.constant 0 : index
    %c0_28 = arith.constant 0 : index
    %c0_29 = arith.constant 0 : index
    %27 = vector.load %arg10[%c0_27, %c0_28, %c0_29] : memref<18x24x128xbf16, #tpu.memory_space<vmem>>, vector<16x24x128xbf16>
    %28 = vector.shape_cast %27 : vector<16x24x128xbf16> to vector<384x128xbf16>
    %c0_30 = arith.constant 0 : index
    %c0_31 = arith.constant 0 : index
    %c0_32 = arith.constant 0 : index
    %29 = vector.load %arg5[%c0_30, %c0_31, %c0_32] : memref<3x128x384xbf16, #tpu.memory_space<vmem>>, vector<1x128x384xbf16>
    %30 = vector.shape_cast %29 : vector<1x128x384xbf16> to vector<128x384xbf16>
    %cst_33 = arith.constant dense<0.000000e+00> : vector<384x384xf32>
    %31 = tpu.matmul %28, %30, %cst_33 {dimension_numbers = #tpu.dot_dimension_numbers<[1], [0], [0], [1], [0, 0, 1, 1], [], []>} : vector<384x128xbf16>, vector<128x384xbf16>, vector<384x384xf32> -> vector<384x384xf32>
    %32 = vector.shape_cast %31 : vector<384x384xf32> to vector<16x24x384xf32>
    %33 = vector.extract_strided_slice %32 {offsets = [0, 0, 0], sizes = [16, 16, 128], strides = [1, 1, 1]} : vector<16x24x384xf32> to vector<16x16x128xf32>
    %34 = vector.shape_cast %33 : vector<16x16x128xf32> to vector<256x128xf32>
    %35 = vector.extract_strided_slice %32 {offsets = [0, 1, 128], sizes = [16, 16, 128], strides = [1, 1, 1]} : vector<16x24x384xf32> to vector<16x16x128xf32>
    %36 = vector.shape_cast %35 : vector<16x16x128xf32> to vector<256x128xf32>
    %37 = arith.addf %34, %36 : vector<256x128xf32>
    %38 = vector.extract_strided_slice %32 {offsets = [0, 2, 256], sizes = [16, 16, 128], strides = [1, 1, 1]} : vector<16x24x384xf32> to vector<16x16x128xf32>
    %39 = vector.shape_cast %38 : vector<16x16x128xf32> to vector<256x128xf32>
    %40 = arith.addf %37, %39 : vector<256x128xf32>
    %c1_34 = arith.constant 1 : index
    %c0_35 = arith.constant 0 : index
    %c0_36 = arith.constant 0 : index
    %41 = vector.load %arg10[%c1_34, %c0_35, %c0_36] : memref<18x24x128xbf16, #tpu.memory_space<vmem>>, vector<16x24x128xbf16>
    %42 = vector.shape_cast %41 : vector<16x24x128xbf16> to vector<384x128xbf16>
    %c1_37 = arith.constant 1 : index
    %c0_38 = arith.constant 0 : index
    %c0_39 = arith.constant 0 : index
    %43 = vector.load %arg5[%c1_37, %c0_38, %c0_39] : memref<3x128x384xbf16, #tpu.memory_space<vmem>>, vector<1x128x384xbf16>
    %44 = vector.shape_cast %43 : vector<1x128x384xbf16> to vector<128x384xbf16>
    %cst_40 = arith.constant dense<0.000000e+00> : vector<384x384xf32>
    %45 = tpu.matmul %42, %44, %cst_40 {dimension_numbers = #tpu.dot_dimension_numbers<[1], [0], [0], [1], [0, 0, 1, 1], [], []>} : vector<384x128xbf16>, vector<128x384xbf16>, vector<384x384xf32> -> vector<384x384xf32>
    %46 = vector.shape_cast %45 : vector<384x384xf32> to vector<16x24x384xf32>
    %47 = vector.extract_strided_slice %46 {offsets = [0, 0, 0], sizes = [16, 16, 128], strides = [1, 1, 1]} : vector<16x24x384xf32> to vector<16x16x128xf32>
    %48 = vector.shape_cast %47 : vector<16x16x128xf32> to vector<256x128xf32>
    %49 = arith.addf %40, %48 : vector<256x128xf32>
    %50 = vector.extract_strided_slice %46 {offsets = [0, 1, 128], sizes = [16, 16, 128], strides = [1, 1, 1]} : vector<16x24x384xf32> to vector<16x16x128xf32>
    %51 = vector.shape_cast %50 : vector<16x16x128xf32> to vector<256x128xf32>
    %52 = arith.addf %49, %51 : vector<256x128xf32>
    %53 = vector.extract_strided_slice %46 {offsets = [0, 2, 256], sizes = [16, 16, 128], strides = [1, 1, 1]} : vector<16x24x384xf32> to vector<16x16x128xf32>
    %54 = vector.shape_cast %53 : vector<16x16x128xf32> to vector<256x128xf32>
    %55 = arith.addf %52, %54 : vector<256x128xf32>
    %c2 = arith.constant 2 : index
    %c0_41 = arith.constant 0 : index
    %c0_42 = arith.constant 0 : index
    %56 = vector.load %arg10[%c2, %c0_41, %c0_42] : memref<18x24x128xbf16, #tpu.memory_space<vmem>>, vector<16x24x128xbf16>
    %57 = vector.shape_cast %56 : vector<16x24x128xbf16> to vector<384x128xbf16>
    %c2_43 = arith.constant 2 : index
    %c0_44 = arith.constant 0 : index
    %c0_45 = arith.constant 0 : index
    %58 = vector.load %arg5[%c2_43, %c0_44, %c0_45] : memref<3x128x384xbf16, #tpu.memory_space<vmem>>, vector<1x128x384xbf16>
    %59 = vector.shape_cast %58 : vector<1x128x384xbf16> to vector<128x384xbf16>
    %cst_46 = arith.constant dense<0.000000e+00> : vector<384x384xf32>
    %60 = tpu.matmul %57, %59, %cst_46 {dimension_numbers = #tpu.dot_dimension_numbers<[1], [0], [0], [1], [0, 0, 1, 1], [], []>} : vector<384x128xbf16>, vector<128x384xbf16>, vector<384x384xf32> -> vector<384x384xf32>
    %61 = vector.shape_cast %60 : vector<384x384xf32> to vector<16x24x384xf32>
    %62 = vector.extract_strided_slice %61 {offsets = [0, 0, 0], sizes = [16, 16, 128], strides = [1, 1, 1]} : vector<16x24x384xf32> to vector<16x16x128xf32>
    %63 = vector.shape_cast %62 : vector<16x16x128xf32> to vector<256x128xf32>
    %64 = arith.addf %55, %63 : vector<256x128xf32>
    %65 = vector.extract_strided_slice %61 {offsets = [0, 1, 128], sizes = [16, 16, 128], strides = [1, 1, 1]} : vector<16x24x384xf32> to vector<16x16x128xf32>
    %66 = vector.shape_cast %65 : vector<16x16x128xf32> to vector<256x128xf32>
    %67 = arith.addf %64, %66 : vector<256x128xf32>
    %68 = vector.extract_strided_slice %61 {offsets = [0, 2, 256], sizes = [16, 16, 128], strides = [1, 1, 1]} : vector<16x24x384xf32> to vector<16x16x128xf32>
    %69 = vector.shape_cast %68 : vector<16x16x128xf32> to vector<256x128xf32>
    %70 = arith.addf %67, %69 : vector<256x128xf32>
    %c0_47 = arith.constant 0 : index
    %c0_48 = arith.constant 0 : index
    %71 = vector.load %arg6[%c0_47, %c0_48] : memref<1x128xf32, #tpu.memory_space<vmem>>, vector<1x128xf32>
    %72 = vector.broadcast %71 : vector<1x128xf32> to vector<256x128xf32>
    %73 = arith.addf %70, %72 : vector<256x128xf32>
    %cst_49 = arith.constant 0.000000e+00 : f32
    %74 = vector.broadcast %cst_49 : f32 to vector<256x128xf32>
    %75 = arith.maximumf %73, %74 : vector<256x128xf32>
    %76 = arith.truncf %75 : vector<256x128xf32> to vector<256x128xbf16>
    %c0_50 = arith.constant 0 : index
    %c0_51 = arith.constant 0 : index
    %77 = vector.load %arg7[%c0_50, %c0_51] : memref<128x128xbf16, #tpu.memory_space<vmem>>, vector<128x128xbf16>
    %cst_52 = arith.constant dense<0.000000e+00> : vector<256x128xf32>
    %78 = tpu.matmul %76, %77, %cst_52 {dimension_numbers = #tpu.dot_dimension_numbers<[1], [0], [0], [1], [0, 0, 1, 1], [], []>} : vector<256x128xbf16>, vector<128x128xbf16>, vector<256x128xf32> -> vector<256x128xf32>
    %c0_53 = arith.constant 0 : index
    %c0_54 = arith.constant 0 : index
    %79 = vector.load %arg8[%c0_53, %c0_54] : memref<1x128xf32, #tpu.memory_space<vmem>>, vector<1x128xf32>
    %80 = vector.broadcast %79 : vector<1x128xf32> to vector<256x128xf32>
    %81 = arith.addf %78, %80 : vector<256x128xf32>
    %82 = arith.addf %81, %16 : vector<256x128xf32>
    %cst_55 = arith.constant 0.000000e+00 : f32
    %83 = vector.broadcast %cst_55 : f32 to vector<256x128xf32>
    %84 = arith.maximumf %82, %83 : vector<256x128xf32>
    %85 = vector.shape_cast %84 : vector<256x128xf32> to vector<16x16x128xf32>
    %86 = arith.truncf %85 : vector<16x16x128xf32> to vector<16x16x128xbf16>
    %c0_56 = arith.constant 0 : index
    %c0_57 = arith.constant 0 : index
    %c0_58 = arith.constant 0 : index
    %c0_59 = arith.constant 0 : index
    %87 = vector.load %arg9[%c0_56, %c0_57, %c0_58, %c0_59] : memref<1x16x16x128xbf16, #tpu.memory_space<vmem>>, vector<1x16x16x128xbf16>
    %88 = vector.shape_cast %87 : vector<1x16x16x128xbf16> to vector<16x16x128xbf16>
    %89 = vector.shape_cast %86 : vector<16x16x128xbf16> to vector<1x16x16x128xbf16>
    tpu.vector_store %arg9[%c0_56, %c0_57, %c0_58, %c0_59], %89 {strides = array<i32>} : memref<1x16x16x128xbf16, #tpu.memory_space<vmem>>, vector<1x16x16x128xbf16>,
    return
  }
  func.func @transform_0(%arg0: i32) -> (i32, i32, i32, i32) {
    %c0_i32 = arith.constant 0 : i32
    %c0_i32_0 = arith.constant 0 : i32
    %c0_i32_1 = arith.constant 0 : i32
    %c0_i32_2 = arith.constant 0 : i32
    return %arg0, %c0_i32, %c0_i32_0, %c0_i32_1 : i32, i32, i32, i32
  }
  func.func @transform_1(%arg0: i32) -> (i32, i32) {
    %c0_i32 = arith.constant 0 : i32
    %c0_i32_0 = arith.constant 0 : i32
    %c0_i32_1 = arith.constant 0 : i32
    return %c0_i32, %c0_i32_0 : i32, i32
  }
  func.func @transform_2(%arg0: i32) -> (i32, i32) {
    %c0_i32 = arith.constant 0 : i32
    %c0_i32_0 = arith.constant 0 : i32
    %c0_i32_1 = arith.constant 0 : i32
    return %c0_i32, %c0_i32_0 : i32, i32
  }
  func.func @transform_3(%arg0: i32) -> (i32, i32) {
    %c0_i32 = arith.constant 0 : i32
    %c0_i32_0 = arith.constant 0 : i32
    %c0_i32_1 = arith.constant 0 : i32
    return %c0_i32, %c0_i32_0 : i32, i32
  }
  func.func @transform_4(%arg0: i32) -> (i32, i32, i32) {
    %c0_i32 = arith.constant 0 : i32
    %c0_i32_0 = arith.constant 0 : i32
    %c0_i32_1 = arith.constant 0 : i32
    %c0_i32_2 = arith.constant 0 : i32
    return %c0_i32, %c0_i32_0, %c0_i32_1 : i32, i32, i32
  }
  func.func @transform_5(%arg0: i32) -> (i32, i32) {
    %c0_i32 = arith.constant 0 : i32
    %c0_i32_0 = arith.constant 0 : i32
    %c0_i32_1 = arith.constant 0 : i32
    return %c0_i32, %c0_i32_0 : i32, i32
  }
  func.func @transform_6(%arg0: i32) -> (i32, i32) {
    %c0_i32 = arith.constant 0 : i32
    %c0_i32_0 = arith.constant 0 : i32
    %c0_i32_1 = arith.constant 0 : i32
    return %c0_i32, %c0_i32_0 : i32, i32
  }
  func.func @transform_7(%arg0: i32) -> (i32, i32) {
    %c0_i32 = arith.constant 0 : i32
    %c0_i32_0 = arith.constant 0 : i32
    %c0_i32_1 = arith.constant 0 : i32
    return %c0_i32, %c0_i32_0 : i32, i32
  }
  func.func @transform_8(%arg0: i32) -> (i32, i32, i32, i32) {
    %c0_i32 = arith.constant 0 : i32
    %c0_i32_0 = arith.constant 0 : i32
    %c0_i32_1 = arith.constant 0 : i32
    %c0_i32_2 = arith.constant 0 : i32
    return %arg0, %c0_i32, %c0_i32_0, %c0_i32_1 : i32, i32, i32, i32
  }
}

</mosaic_0001>

<llo_original>
// kernel: tpu_custom_call.1
$region0: #{tpu_custom_call.1}
  #allocation0 [shape = 'u32[]', space=smem, size = 0x4, offset = 0x4, fixed_abs, tag = 'smem constant byte address 0x4 - core index']
  #allocation1 [shape = 'u32[144,128]{1,0:T(1,128)}', space=vmem, size = 0x12000, scoped, tag = 'internal scratch']
  #allocation2 [shape = 'bf16[18,24,128]{2,1,0:T(8,128)(2,1)}', space=vmem, size = 0x1b000, scoped, tag = 'scratch operand']
  %s0 = inlined_call_operand.hbm [shape: bf16[2,16,16,128], index: 0, kind: input, shape index: {}]
  %s1 = inlined_call_operand.hbm [shape: bf16[128,256], index: 1, kind: input, shape index: {}]
  %s2 = inlined_call_operand.vmem [shape: f32[1,128], index: 2, kind: input, shape index: {}]
  %s3 = inlined_call_operand.vmem [shape: f32[1,128], index: 3, kind: input, shape index: {}]
  %s4 = inlined_call_operand.hbm [shape: bf16[3,128,384], index: 4, kind: input, shape index: {}]
  %s5 = inlined_call_operand.vmem [shape: f32[1,128], index: 5, kind: input, shape index: {}]
  %s6 = inlined_call_operand.hbm [shape: bf16[128,128], index: 6, kind: input, shape index: {}]
  %s7 = inlined_call_operand.vmem [shape: f32[1,128], index: 7, kind: input, shape index: {}]
  %s8 = inlined_call_operand.hbm [shape: bf16[2,16,16,128], index: 8, kind: output, shape index: {}]
  %s9 = sld [smem:[#allocation0]]
  $region81: #{tpu_custom_call.1} parent=0
    _
  %s11 = ssub.s32 1, %s9
  %s12 = scalar_select 0, %s11, %s9
  $region1: #{tpu_custom_call.1} parent=0
    #allocation3 [shape = 'u8[131072]{0}', space=vmem, size = 0x20000, scoped, tag = 'input window, operand 0']
    #allocation4 [shape = 's32[2]{0}', space=sflag, size = 0x8, scoped, tag = 'scoped memory for tpu_custom_call.1']
    #allocation5 [shape = 's32[2]{0}', space=sflag, size = 0x8, scoped, tag = 'scoped memory for tpu_custom_call.1']
    #allocation6 [shape = 'u8[65536]{0}', space=vmem, size = 0x10000, scoped, tag = 'input window, operand 1, single buffered']
    #allocation7 [shape = 's32[1]{0}', space=sflag, size = 0x4, scoped, tag = 'scoped memory for tpu_custom_call.1']
    #allocation8 [shape = 'u8[294912]{0}', space=vmem, size = 0x48000, scoped, tag = 'input window, operand 4, single buffered']
    #allocation9 [shape = 'u8[32768]{0}', space=vmem, size = 0x8000, scoped, tag = 'input window, operand 6, single buffered']
    #allocation10 [shape = 's32[1]{0}', space=sflag, size = 0x4, scoped, tag = 'scoped memory for tpu_custom_call.1']
    #allocation11 [shape = 'u8[131072]{0}', space=vmem, size = 0x20000, scoped, tag = 'output window, operand 0']
    %13 = vsyncpa [#allocation4], 0
    %s14 = scalar_lea.sflag [#allocation4], 1
    %15 = vsyncpa %s14, 0
    %16 = vsyncpa [#allocation7], 0
    %17 = vsyncpa [#allocation10], 0
    %18 = vsyncpa [#allocation5], 0
    %s19 = scalar_lea.sflag [#allocation5], 1
    %20 = vsyncpa %s19, 0
    loop: start=0, step=1, limit=4
    $region2: #{tpu_custom_call.1} parent=1 // loop_pre_header
      _
    $region3: #{tpu_custom_call.1} parent=1 // loop_header
      %s22 = sphi 0, %s26
      %p23 = scmp.ge.s32.totalorder %s22, 4
      %s32 = sphi 0, %s34
      %s35 = sphi 0, %s32
      %s36 = sphi 0, %s35
      %s52 = sphi 0, %s36
      %s56 = sphi 0, %s56
      %s58 = sphi 0, %s56
      %s59 = sphi 0, %s58
      %s73 = sphi 0, %s59
      %s77 = sphi 0, %s77
      %s79 = sphi 0, %s77
      %s80 = sphi 0, %s79
      %s94 = sphi 0, %s80
      %s98 = sphi 0, %s98
      %s100 = sphi 0, %s98
      %s101 = sphi 0, %s100
      %s115 = sphi 0, %s101
      %s119 = sphi 0, %s119
      %s121 = sphi 0, %s119
      %s122 = sphi 0, %s121
      %s136 = sphi 0, %s122
      %s140 = sphi 0, %s140
      %s142 = sphi 0, %s140
      %s143 = sphi 0, %s142
      %s157 = sphi 0, %s143
      %s161 = sphi 0, %s161
      %s163 = sphi 0, %s161
      %s164 = sphi 0, %s163
      %s178 = sphi 0, %s164
      %s182 = sphi 0, %s182
      %s184 = sphi 0, %s182
      %s185 = sphi 0, %s184
      %s199 = sphi 0, %s185
      %s205 = sphi 0, %s207
      %s208 = sphi 0, %s205
      %s209 = sphi 0, %s208
      %s225 = sphi 0, %s209
    $region4: #{tpu_custom_call.1} parent=1 // loop_header_branch
      %25 = sbr.rel (%p23) target = $region8
    $region5: #{tpu_custom_call.1} parent=1 // loop_body
      %s27 = ssub.s32 %s22, 1
      %s28 = ssub.s32 %s22, 2
      %s29 = sadd.s32 %s22, 1
      %s30 = ssub.s32 %s22, %s29
      %p31 = scmp.eq.s32.totalorder %s30, 0
      %s33 = sadd.s32 %s32, 1
      %s34 = scalar_select %p31, %s32, %s33
      %p37 = pneg %p31
      %p38 = scmp.eq.s32.totalorder %s22, 1
      %p39 = por %p37, %p38
      %p40 = scmp.ne.s32.totalorder %s32, %s35
      %p41 = scmp.eq.s32.totalorder %s22, 0
      %p42 = por %p40, %p41
      %p43 = scmp.ne.s32.totalorder %s32, %s35
      %p44 = scmp.eq.s32.totalorder %s27, 1
      %p45 = por %p43, %p44
      %p46 = scmp.ne.s32.totalorder %s35, %s36
      %p47 = scmp.eq.s32.totalorder %s27, 0
      %p48 = por %p46, %p47
      %p49 = scmp.ne.s32.totalorder %s35, %s36
      %p50 = scmp.eq.s32.totalorder %s28, 1
      %p51 = por %p49, %p50
      %p53 = scmp.ne.s32.totalorder %s36, %s52
      %p54 = scmp.eq.s32.totalorder %s28, 0
      %p55 = por %p53, %p54
      %s57 = sadd.s32 %s56, 1
      %p60 = scmp.eq.s32.totalorder %s22, 1
      %p61 = scmp.ne.s32.totalorder %s56, %s58
      %p62 = scmp.eq.s32.totalorder %s22, 0
      %p63 = por %p61, %p62
      %p64 = scmp.ne.s32.totalorder %s56, %s58
      %p65 = scmp.eq.s32.totalorder %s27, 1
      %p66 = por %p64, %p65
      %p67 = scmp.ne.s32.totalorder %s58, %s59
      %p68 = scmp.eq.s32.totalorder %s27, 0
      %p69 = por %p67, %p68
      %p70 = scmp.ne.s32.totalorder %s58, %s59
      %p71 = scmp.eq.s32.totalorder %s28, 1
      %p72 = por %p70, %p71
      %p74 = scmp.ne.s32.totalorder %s59, %s73
      %p75 = scmp.eq.s32.totalorder %s28, 0
      %p76 = por %p74, %p75
      %s78 = sadd.s32 %s77, 1
      %p81 = scmp.eq.s32.totalorder %s22, 1
      %p82 = scmp.ne.s32.totalorder %s77, %s79
      %p83 = scmp.eq.s32.totalorder %s22, 0
      %p84 = por %p82, %p83
      %p85 = scmp.ne.s32.totalorder %s77, %s79
      %p86 = scmp.eq.s32.totalorder %s27, 1
      %p87 = por %p85, %p86
      %p88 = scmp.ne.s32.totalorder %s79, %s80
      %p89 = scmp.eq.s32.totalorder %s27, 0
      %p90 = por %p88, %p89
      %p91 = scmp.ne.s32.totalorder %s79, %s80
      %p92 = scmp.eq.s32.totalorder %s28, 1
      %p93 = por %p91, %p92
      %p95 = scmp.ne.s32.totalorder %s80, %s94
      %p96 = scmp.eq.s32.totalorder %s28, 0
      %p97 = por %p95, %p96
      %s99 = sadd.s32 %s98, 1
      %p102 = scmp.eq.s32.totalorder %s22, 1
      %p103 = scmp.ne.s32.totalorder %s98, %s100
      %p104 = scmp.eq.s32.totalorder %s22, 0
      %p105 = por %p103, %p104
      %p106 = scmp.ne.s32.totalorder %s98, %s100
      %p107 = scmp.eq.s32.totalorder %s27, 1
      %p108 = por %p106, %p107
      %p109 = scmp.ne.s32.totalorder %s100, %s101
      %p110 = scmp.eq.s32.totalorder %s27, 0
      %p111 = por %p109, %p110
      %p112 = scmp.ne.s32.totalorder %s100, %s101
      %p113 = scmp.eq.s32.totalorder %s28, 1
      %p114 = por %p112, %p113
      %p116 = scmp.ne.s32.totalorder %s101, %s115
      %p117 = scmp.eq.s32.totalorder %s28, 0
      %p118 = por %p116, %p117
      %s120 = sadd.s32 %s119, 1
      %p123 = scmp.eq.s32.totalorder %s22, 1
      %p124 = scmp.ne.s32.totalorder %s119, %s121
      %p125 = scmp.eq.s32.totalorder %s22, 0
      %p126 = por %p124, %p125
      %p127 = scmp.ne.s32.totalorder %s119, %s121
      %p128 = scmp.eq.s32.totalorder %s27, 1
      %p129 = por %p127, %p128
      %p130 = scmp.ne.s32.totalorder %s121, %s122
      %p131 = scmp.eq.s32.totalorder %s27, 0
      %p132 = por %p130, %p131
      %p133 = scmp.ne.s32.totalorder %s121, %s122
      %p134 = scmp.eq.s32.totalorder %s28, 1
      %p135 = por %p133, %p134
      %p137 = scmp.ne.s32.totalorder %s122, %s136
      %p138 = scmp.eq.s32.totalorder %s28, 0
      %p139 = por %p137, %p138
      %s141 = sadd.s32 %s140, 1
      %p144 = scmp.eq.s32.totalorder %s22, 1
      %p145 = scmp.ne.s32.totalorder %s140, %s142
      %p146 = scmp.eq.s32.totalorder %s22, 0
      %p147 = por %p145, %p146
      %p148 = scmp.ne.s32.totalorder %s140, %s142
      %p149 = scmp.eq.s32.totalorder %s27, 1
      %p150 = por %p148, %p149
      %p151 = scmp.ne.s32.totalorder %s142, %s143
      %p152 = scmp.eq.s32.totalorder %s27, 0
      %p153 = por %p151, %p152
      %p154 = scmp.ne.s32.totalorder %s142, %s143
      %p155 = scmp.eq.s32.totalorder %s28, 1
      %p156 = por %p154, %p155
      %p158 = scmp.ne.s32.totalorder %s143, %s157
      %p159 = scmp.eq.s32.totalorder %s28, 0
      %p160 = por %p158, %p159
      %s162 = sadd.s32 %s161, 1
      %p165 = scmp.eq.s32.totalorder %s22, 1
      %p166 = scmp.ne.s32.totalorder %s161, %s163
      %p167 = scmp.eq.s32.totalorder %s22, 0
      %p168 = por %p166, %p167
      %p169 = scmp.ne.s32.totalorder %s161, %s163
      %p170 = scmp.eq.s32.totalorder %s27, 1
      %p171 = por %p169, %p170
      %p172 = scmp.ne.s32.totalorder %s163, %s164
      %p173 = scmp.eq.s32.totalorder %s27, 0
      %p174 = por %p172, %p173
      %p175 = scmp.ne.s32.totalorder %s163, %s164
      %p176 = scmp.eq.s32.totalorder %s28, 1
      %p177 = por %p175, %p176
      %p179 = scmp.ne.s32.totalorder %s164, %s178
      %p180 = scmp.eq.s32.totalorder %s28, 0
      %p181 = por %p179, %p180
      %s183 = sadd.s32 %s182, 1
      %p186 = scmp.eq.s32.totalorder %s22, 1
      %p187 = scmp.ne.s32.totalorder %s182, %s184
      %p188 = scmp.eq.s32.totalorder %s22, 0
      %p189 = por %p187, %p188
      %p190 = scmp.ne.s32.totalorder %s182, %s184
      %p191 = scmp.eq.s32.totalorder %s27, 1
      %p192 = por %p190, %p191
      %p193 = scmp.ne.s32.totalorder %s184, %s185
      %p194 = scmp.eq.s32.totalorder %s27, 0
      %p195 = por %p193, %p194
      %p196 = scmp.ne.s32.totalorder %s184, %s185
      %p197 = scmp.eq.s32.totalorder %s28, 1
      %p198 = por %p196, %p197
      %p200 = scmp.ne.s32.totalorder %s185, %s199
      %p201 = scmp.eq.s32.totalorder %s28, 0
      %p202 = por %p200, %p201
      %s203 = ssub.s32 %s22, %s29
      %p204 = scmp.eq.s32.totalorder %s203, 0
      %s206 = sadd.s32 %s205, 1
      %s207 = scalar_select %p204, %s205, %s206
      %p210 = pneg %p204
      %p211 = scmp.eq.s32.totalorder %s22, 1
      %p212 = por %p210, %p211
      %p213 = scmp.ne.s32.totalorder %s205, %s208
      %p214 = scmp.eq.s32.totalorder %s22, 0
      %p215 = por %p213, %p214
      %p216 = scmp.ne.s32.totalorder %s205, %s208
      %p217 = scmp.eq.s32.totalorder %s27, 1
      %p218 = por %p216, %p217
      %p219 = scmp.ne.s32.totalorder %s208, %s209
      %p220 = scmp.eq.s32.totalorder %s27, 0
      %p221 = por %p219, %p220
      %p222 = scmp.ne.s32.totalorder %s208, %s209
      %p223 = scmp.eq.s32.totalorder %s28, 1
      %p224 = por %p222, %p223
      %p226 = scmp.ne.s32.totalorder %s209, %s225
      %p227 = scmp.eq.s32.totalorder %s28, 0
      %p228 = por %p226, %p227
      %p229 = scmp.le.s32.totalorder 1, %s22
      %p230 = scmp.lt.s32.totalorder %s22, 3
      %p231 = pnand %p229, %p230
      %p232 = pneg %p231
      // Predicated region
      $region9: #{tpu_custom_call.1} parent=5 // pred_check
        _
      $region10: #{tpu_custom_call.1} parent=5 // pred_check_branch
        %234 = sbr.rel (%p231) target = $region12
      $region11: #{tpu_custom_call.1} parent=5 // pred_region
        %s235 = ssub.s32 %s22, 1
        // Predicated region
        $region13: #{tpu_custom_call.1} parent=11 // pred_check
          %p236 = pneg %p69
        $region14: #{tpu_custom_call.1} parent=11 // pred_check_branch
          %238 = sbr.rel (%p236) target = $region16
        $region15: #{tpu_custom_call.1} parent=11 // pred_region
          %s240 = ssub.s32 2048, 2048
          %241 = vsyncadd [#allocation7], %s240
          %s242 = sshll.u32 [#allocation6], 4
          %s243 = int_to_ptr.vmem [resolvable:$true] %s242
          %248 = dma.hbm_to_vmem [thread:$0]  %s1, 2048, %s243, [#allocation7], 128, 128, 8
        $region16: #{tpu_custom_call.1} parent=11 // pred_fallthru
          _
        // Predicated region
        $region17: #{tpu_custom_call.1} parent=11 // pred_check
          %p249 = pneg %p90
        $region18: #{tpu_custom_call.1} parent=11 // pred_check_branch
          %251 = sbr.rel (%p249) target = $region20
        $region19: #{tpu_custom_call.1} parent=11 // pred_region
          _
        $region20: #{tpu_custom_call.1} parent=11 // pred_fallthru
          _
        // Predicated region
        $region21: #{tpu_custom_call.1} parent=11 // pred_check
          %p252 = pneg %p111
        $region22: #{tpu_custom_call.1} parent=11 // pred_check_branch
          %254 = sbr.rel (%p252) target = $region24
        $region23: #{tpu_custom_call.1} parent=11 // pred_region
          _
        $region24: #{tpu_custom_call.1} parent=11 // pred_fallthru
          _
        // Predicated region
        $region25: #{tpu_custom_call.1} parent=11 // pred_check
          %p255 = pneg %p132
        $region26: #{tpu_custom_call.1} parent=11 // pred_check_branch
          %257 = sbr.rel (%p255) target = $region28
        $region27: #{tpu_custom_call.1} parent=11 // pred_region
          %s259 = ssub.s32 9216, 9216
          %260 = vsyncadd [#allocation7], %s259
          %s261 = sshll.u32 [#allocation8], 4
          %s262 = int_to_ptr.vmem [resolvable:$true] %s261
          %267 = dma.hbm_to_vmem [thread:$0]  %s4, 9216, %s262, [#allocation7], 192, 192, 12
        $region28: #{tpu_custom_call.1} parent=11 // pred_fallthru
          _
        // Predicated region
        $region29: #{tpu_custom_call.1} parent=11 // pred_check
          %p268 = pneg %p153
        $region30: #{tpu_custom_call.1} parent=11 // pred_check_branch
          %270 = sbr.rel (%p268) target = $region32
        $region31: #{tpu_custom_call.1} parent=11 // pred_region
          _
        $region32: #{tpu_custom_call.1} parent=11 // pred_fallthru
          _
        // Predicated region
        $region33: #{tpu_custom_call.1} parent=11 // pred_check
          %p271 = pneg %p174
        $region34: #{tpu_custom_call.1} parent=11 // pred_check_branch
          %273 = sbr.rel (%p271) target = $region36
        $region35: #{tpu_custom_call.1} parent=11 // pred_region
          %s275 = ssub.s32 1024, 1024
          %276 = vsyncadd [#allocation10], %s275
          %s277 = sshll.u32 [#allocation9], 4
          %s278 = int_to_ptr.vmem [resolvable:$true] %s277
          %283 = dma.hbm_to_vmem [thread:$0]  %s6, 1024, %s278, [#allocation10], 64, 64, 4
        $region36: #{tpu_custom_call.1} parent=11 // pred_fallthru
          _
        // Predicated region
        $region37: #{tpu_custom_call.1} parent=11 // pred_check
          %p284 = pneg %p195
        $region38: #{tpu_custom_call.1} parent=11 // pred_check_branch
          %286 = sbr.rel (%p284) target = $region40
        $region39: #{tpu_custom_call.1} parent=11 // pred_region
          _
        $region40: #{tpu_custom_call.1} parent=11 // pred_fallthru
          _
      $region12: #{tpu_custom_call.1} parent=5 // pred_fallthru
        _
      %p287 = scmp.lt.s32.totalorder %s22, 2
      // Predicated region
      $region41: #{tpu_custom_call.1} parent=5 // pred_check
        %p288 = pneg %p287
      $region42: #{tpu_custom_call.1} parent=5 // pred_check_branch
        %290 = sbr.rel (%p288) target = $region44
      $region43: #{tpu_custom_call.1} parent=5 // pred_region
        // Predicated region
        $region45: #{tpu_custom_call.1} parent=43 // pred_check
          %p291 = pneg %p42
        $region46: #{tpu_custom_call.1} parent=43 // pred_check_branch
          %293 = sbr.rel (%p291) target = $region48
        $region47: #{tpu_custom_call.1} parent=43 // pred_region
          %s294 = sand.u32 %s32, 1
          %s295 = scalar_lea.sflag [#allocation4], %s294
          %s296 = sand.u32 %s32, 1
          %s297 = smul.addr %s296, 128
          %s298 = scalar_lea.vmem [#allocation3], %s297
          %s300 = ssub.s32 2048, 2048
          %301 = vsyncadd %s295, %s300
          %s302 = smul.addr %s22, 32
          %s303 = smul.addr %s302, 64
          %s304 = scalar_lea.hbm %s0, %s303
          %s305 = sshll.u32 %s298, 4
          %s306 = int_to_ptr.vmem [resolvable:$true] %s305
          %311 = dma.hbm_to_vmem [thread:$0]  %s304, 2048, %s306, %s295, 64, 64, 4
        $region48: #{tpu_custom_call.1} parent=43 // pred_fallthru
          _
      $region44: #{tpu_custom_call.1} parent=5 // pred_fallthru
        _
      %p312 = scmp.le.s32.totalorder 1, %s22
      %p313 = scmp.lt.s32.totalorder %s22, 3
      %p314 = pnand %p312, %p313
      %p315 = pneg %p314
      // Predicated region
      $region49: #{tpu_custom_call.1} parent=5 // pred_check
        _
      $region50: #{tpu_custom_call.1} parent=5 // pred_check_branch
        %317 = sbr.rel (%p314) target = $region52
      $region51: #{tpu_custom_call.1} parent=5 // pred_region
        %s318 = ssub.s32 %s22, 1
        %s319 = sand.u32 %s35, 1
        %s320 = scalar_lea.sflag [#allocation4], %s319
        %s321 = sand.u32 %s35, 1
        %s322 = smul.addr %s321, 128
        %s323 = scalar_lea.vmem [#allocation3], %s322
        // Predicated region
        $region53: #{tpu_custom_call.1} parent=51 // pred_check
          %p324 = pneg %p48
        $region54: #{tpu_custom_call.1} parent=51 // pred_check_branch
          %326 = sbr.rel (%p324) target = $region56
        $region55: #{tpu_custom_call.1} parent=51 // pred_region
          %327 = dma.done %s320, 2048
        $region56: #{tpu_custom_call.1} parent=51 // pred_fallthru
          _
        // Predicated region
        $region57: #{tpu_custom_call.1} parent=51 // pred_check
          %p328 = pneg %p69
        $region58: #{tpu_custom_call.1} parent=51 // pred_check_branch
          %330 = sbr.rel (%p328) target = $region60
        $region59: #{tpu_custom_call.1} parent=51 // pred_region
          %331 = dma.done [#allocation7], 2048
        $region60: #{tpu_custom_call.1} parent=51 // pred_fallthru
          _
        // Predicated region
        $region61: #{tpu_custom_call.1} parent=51 // pred_check
          %p332 = pneg %p132
        $region62: #{tpu_custom_call.1} parent=51 // pred_check_branch
          %334 = sbr.rel (%p332) target = $region64
        $region63: #{tpu_custom_call.1} parent=51 // pred_region
          %335 = dma.done [#allocation7], 9216
        $region64: #{tpu_custom_call.1} parent=51 // pred_fallthru
          _
        // Predicated region
        $region65: #{tpu_custom_call.1} parent=51 // pred_check
          %p336 = pneg %p174
        $region66: #{tpu_custom_call.1} parent=51 // pred_check_branch
          %338 = sbr.rel (%p336) target = $region68
        $region67: #{tpu_custom_call.1} parent=51 // pred_region
          %339 = dma.done [#allocation10], 1024
        $region68: #{tpu_custom_call.1} parent=51 // pred_fallthru
          _
        %s340 = sand.u32 %s35, 1
        %s341 = scalar_lea.sflag [#allocation4], %s340
        %s342 = sand.u32 %s35, 1
        %s343 = smul.addr %s342, 128
        %s344 = scalar_lea.vmem [#allocation3], %s343
        %p345 = pneg %p48
        %p346 = pneg %p45
        %p347 = pneg %p69
        %p348 = pneg %p66
        %p349 = pneg %p90
        %p350 = pneg %p87
        %p351 = pneg %p111
        %p352 = pneg %p108
        %p353 = pneg %p132
        %p354 = pneg %p129
        %p355 = pneg %p153
        %p356 = pneg %p150
        %p357 = pneg %p174
        %p358 = pneg %p171
        %p359 = pneg %p195
        %p360 = pneg %p192
        %p361 = pneg %p221
        %p362 = pneg %p218
        %s363 = sand.u32 %s208, 1
        %s364 = scalar_lea.sflag [#allocation5], %s363
        %s365 = sand.u32 %s208, 1
        %s366 = smul.addr %s365, 128
        %s367 = scalar_lea.vmem [#allocation11], %s366
        %v369 = vld [vmem:[%s323] sm:$0xf]
        %v370 = vld [vmem:[%s323 + $0x4] sm:$0xf]
        %v371 = vld [vmem:[%s323 + $0x8] sm:$0xf]
        %v372 = vld [vmem:[%s323 + $0xc] sm:$0xf]
        %v373 = vld [vmem:[%s323 + $0x10] sm:$0xf]
        %v374 = vld [vmem:[%s323 + $0x14] sm:$0xf]
        %v375 = vld [vmem:[%s323 + $0x18] sm:$0xf]
        %v376 = vld [vmem:[%s323 + $0x1c] sm:$0xf]
        %v377 = vld [vmem:[%s323 + $0x20] sm:$0xf]
        %v378 = vld [vmem:[%s323 + $0x24] sm:$0xf]
        %v379 = vld [vmem:[%s323 + $0x28] sm:$0xf]
        %v380 = vld [vmem:[%s323 + $0x2c] sm:$0xf]
        %v381 = vld [vmem:[%s323 + $0x30] sm:$0xf]
        %v382 = vld [vmem:[%s323 + $0x34] sm:$0xf]
        %v383 = vld [vmem:[%s323 + $0x38] sm:$0xf]
        %v384 = vld [vmem:[%s323 + $0x3c] sm:$0xf]
        %v385 = vld [vmem:[%s323 + $0x40] sm:$0xf]
        %v386 = vld [vmem:[%s323 + $0x44] sm:$0xf]
        %v387 = vld [vmem:[%s323 + $0x48] sm:$0xf]
        %v388 = vld [vmem:[%s323 + $0x4c] sm:$0xf]
        %v389 = vld [vmem:[%s323 + $0x50] sm:$0xf]
        %v390 = vld [vmem:[%s323 + $0x54] sm:$0xf]
        %v391 = vld [vmem:[%s323 + $0x58] sm:$0xf]
        %v392 = vld [vmem:[%s323 + $0x5c] sm:$0xf]
        %v393 = vld [vmem:[%s323 + $0x60] sm:$0xf]
        %v394 = vld [vmem:[%s323 + $0x64] sm:$0xf]
        %v395 = vld [vmem:[%s323 + $0x68] sm:$0xf]
        %v396 = vld [vmem:[%s323 + $0x6c] sm:$0xf]
        %v397 = vld [vmem:[%s323 + $0x70] sm:$0xf]
        %v398 = vld [vmem:[%s323 + $0x74] sm:$0xf]
        %v399 = vld [vmem:[%s323 + $0x78] sm:$0xf]
        %v400 = vld [vmem:[%s323 + $0x7c] sm:$0xf]
        %v401 = vld [vmem:[#allocation6] sm:$0xff]
        %v402 = vld [vmem:[#allocation6 + $0x8] sm:$0xff]
        %v403 = vld [vmem:[#allocation6 + $0x10] sm:$0xff]
        %v404 = vld [vmem:[#allocation6 + $0x18] sm:$0xff]
        %v405 = vld [vmem:[#allocation6 + $0x20] sm:$0xff]
        %v406 = vld [vmem:[#allocation6 + $0x28] sm:$0xff]
        %v407 = vld [vmem:[#allocation6 + $0x30] sm:$0xff]
        %v408 = vld [vmem:[#allocation6 + $0x38] sm:$0xff]
        %v409 = vld [vmem:[#allocation6 + $0x40] sm:$0xff]
        %v410 = vld [vmem:[#allocation6 + $0x48] sm:$0xff]
        %v411 = vld [vmem:[#allocation6 + $0x50] sm:$0xff]
        %v412 = vld [vmem:[#allocation6 + $0x58] sm:$0xff]
        %v413 = vld [vmem:[#allocation6 + $0x60] sm:$0xff]
        %v414 = vld [vmem:[#allocation6 + $0x68] sm:$0xff]
        %v415 = vld [vmem:[#allocation6 + $0x70] sm:$0xff]
        %v416 = vld [vmem:[#allocation6 + $0x78] sm:$0xff]
        %v449 = vunpack.c.l.b16 %v369
        %v450 = vunpack.c.l.b16 %v370
        %v451 = vunpack.c.l.b16 %v371
        %v452 = vunpack.c.l.b16 %v372
        %v453 = vunpack.c.l.b16 %v373
        %v454 = vunpack.c.l.b16 %v374
        %v455 = vunpack.c.l.b16 %v375
        %v456 = vunpack.c.l.b16 %v376
        %v457 = vunpack.c.l.b16 %v377
        %v458 = vunpack.c.l.b16 %v378
        %v459 = vunpack.c.l.b16 %v379
        %v460 = vunpack.c.l.b16 %v380
        %v461 = vunpack.c.l.b16 %v381
        %v462 = vunpack.c.l.b16 %v382
        %v463 = vunpack.c.l.b16 %v383
        %v464 = vunpack.c.l.b16 %v384
        %v465 = vunpack.c.l.b16 %v385
        %v466 = vunpack.c.l.b16 %v386
        %v467 = vunpack.c.l.b16 %v387
        %v468 = vunpack.c.l.b16 %v388
        %v469 = vunpack.c.l.b16 %v389
        %v470 = vunpack.c.l.b16 %v390
        %v471 = vunpack.c.l.b16 %v391
        %v472 = vunpack.c.l.b16 %v392
        %v473 = vunpack.c.l.b16 %v393
        %v474 = vunpack.c.l.b16 %v394
        %v475 = vunpack.c.l.b16 %v395
        %v476 = vunpack.c.l.b16 %v396
        %v477 = vunpack.c.l.b16 %v397
        %v478 = vunpack.c.l.b16 %v398
        %v479 = vunpack.c.l.b16 %v399
        %v480 = vunpack.c.l.b16 %v400
        %v481 = vpack.c.b16 %v450, %v449
        %v482 = vpack.c.b16 %v452, %v451
        %v483 = vpack.c.b16 %v454, %v453
        %v484 = vpack.c.b16 %v456, %v455
        %v485 = vpack.c.b16 %v458, %v457
        %v486 = vpack.c.b16 %v460, %v459
        %v487 = vpack.c.b16 %v462, %v461
        %v488 = vpack.c.b16 %v464, %v463
        %v489 = vpack.c.b16 %v466, %v465
        %v490 = vpack.c.b16 %v468, %v467
        %v491 = vpack.c.b16 %v470, %v469
        %v492 = vpack.c.b16 %v472, %v471
        %v493 = vpack.c.b16 %v474, %v473
        %v494 = vpack.c.b16 %v476, %v475
        %v495 = vpack.c.b16 %v478, %v477
        %v496 = vpack.c.b16 %v480, %v479
        %v529 = vunpack.c.l.b16 %v401
        %v530 = vunpack.c.h.b16 %v401
        %v531 = vunpack.c.l.b16 %v402
        %v532 = vunpack.c.h.b16 %v402
        %v533 = vunpack.c.l.b16 %v403
        %v534 = vunpack.c.h.b16 %v403
        %v535 = vunpack.c.l.b16 %v404
        %v536 = vunpack.c.h.b16 %v404
        %v537 = vunpack.c.l.b16 %v405
        %v538 = vunpack.c.h.b16 %v405
        %v539 = vunpack.c.l.b16 %v406
        %v540 = vunpack.c.h.b16 %v406
        %v541 = vunpack.c.l.b16 %v407
        %v542 = vunpack.c.h.b16 %v407
        %v543 = vunpack.c.l.b16 %v408
        %v544 = vunpack.c.h.b16 %v408
        %v545 = vunpack.c.l.b16 %v409
        %v546 = vunpack.c.h.b16 %v409
        %v547 = vunpack.c.l.b16 %v410
        %v548 = vunpack.c.h.b16 %v410
        %v549 = vunpack.c.l.b16 %v411
        %v550 = vunpack.c.h.b16 %v411
        %v551 = vunpack.c.l.b16 %v412
        %v552 = vunpack.c.h.b16 %v412
        %v553 = vunpack.c.l.b16 %v413
        %v554 = vunpack.c.h.b16 %v413
        %v555 = vunpack.c.l.b16 %v414
        %v556 = vunpack.c.h.b16 %v414
        %v557 = vunpack.c.l.b16 %v415
        %v558 = vunpack.c.h.b16 %v415
        %v559 = vunpack.c.l.b16 %v416
        %v560 = vunpack.c.h.b16 %v416
        %v561 = vpack.c.b16 %v531, %v529
        %v562 = vpack.c.b16 %v532, %v530
        %v563 = vpack.c.b16 %v535, %v533
        %v564 = vpack.c.b16 %v536, %v534
        %v565 = vpack.c.b16 %v539, %v537
        %v566 = vpack.c.b16 %v540, %v538
        %v567 = vpack.c.b16 %v543, %v541
        %v568 = vpack.c.b16 %v544, %v542
        %v569 = vpack.c.b16 %v547, %v545
        %v570 = vpack.c.b16 %v548, %v546
        %v571 = vpack.c.b16 %v551, %v549
        %v572 = vpack.c.b16 %v552, %v550
        %v573 = vpack.c.b16 %v555, %v553
        %v574 = vpack.c.b16 %v556, %v554
        %v575 = vpack.c.b16 %v559, %v557
        %v576 = vpack.c.b16 %v560, %v558
        %593 = vmatprep.subr.bf16.mxu0 %v576
        %594 = vmatpush1.bf16.msra.mxu0 %v575
        %595 = vmatprep.subr.bf16.mxu0 %v574
        %596 = vmatpush1.bf16.msra.mxu0 %v573
        %597 = vmatprep.subr.bf16.mxu0 %v572
        %598 = vmatpush1.bf16.msra.mxu0 %v571
        %599 = vmatprep.subr.bf16.mxu0 %v570
        %600 = vmatpush1.bf16.msra.mxu0 %v569
        %601 = vmatprep.subr.bf16.mxu0 %v568
        %602 = vmatpush1.bf16.msra.mxu0 %v567
        %603 = vmatprep.subr.bf16.mxu0 %v566
        %604 = vmatpush1.bf16.msra.mxu0 %v565
        %605 = vmatprep.subr.bf16.mxu0 %v564
        %606 = vmatpush1.bf16.msra.mxu0 %v563
        %607 = vmatprep.subr.bf16.mxu0 %v562
        %608 = vmatpush1.bf16.msra.mxu0 %v561
        %609 = vmatprep.subr.bf16.mxu0 0
        %610 = vmatpush2.bf16.msra.mxu0 0
        %611 = vmatprep.subr.bf16.mxu0 0
        %612 = vmatpush2.bf16.msra.mxu0 0
        %613 = vmatprep.subr.bf16.mxu0 0
        %614 = vmatpush2.bf16.msra.mxu0 0
        %615 = vmatprep.subr.bf16.mxu0 0
        %616 = vmatpush2.bf16.msra.mxu0 0
        %617 = vmatprep.subr.bf16.mxu0 0
        %618 = vmatpush2.bf16.msra.mxu0 0
        %619 = vmatprep.subr.bf16.mxu0 0
        %620 = vmatpush2.bf16.msra.mxu0 0
        %621 = vmatprep.subr.bf16.mxu0 0
        %622 = vmatpush2.bf16.msra.mxu0 0
        %623 = vmatprep.subr.bf16.mxu0 0
        %624 = vmatpush2.bf16.msra.mxu0 0
        %625 = vmatprep.mubr.bf16.mxu0 0
        %626 = vmatmul.mubr.bf16.gmra.mxu0 %v481
        %v627 = vpop.f32.mrf.mxu0
        %v628 = vadd.f32 0.0, %v627
        %v629 = vpop.f32.mrf.mxu0
        %v630 = vadd.f32 0.0, %v629
        %v631 = vpop.f32.mrf.mxu0
        %v632 = vadd.f32 0.0, %v631
        %v633 = vpop.f32.mrf.mxu0
        %v634 = vadd.f32 0.0, %v633
        %635 = vmatprep.mubr.bf16.mxu0 0
        %636 = vmatmul.mubr.bf16.gmra.mxu0 %v482
        %v637 = vpop.f32.mrf.mxu0
        %v638 = vadd.f32 0.0, %v637
        %v639 = vpop.f32.mrf.mxu0
        %v640 = vadd.f32 0.0, %v639
        %v641 = vpop.f32.mrf.mxu0
        %v642 = vadd.f32 0.0, %v641
        %v643 = vpop.f32.mrf.mxu0
        %v644 = vadd.f32 0.0, %v643
        %645 = vmatprep.mubr.bf16.mxu0 0
        %646 = vmatmul.mubr.bf16.gmra.mxu0 %v483
        %v647 = vpop.f32.mrf.mxu0
        %v648 = vadd.f32 0.0, %v647
        %v649 = vpop.f32.mrf.mxu0
        %v650 = vadd.f32 0.0, %v649
        %v651 = vpop.f32.mrf.mxu0
        %v652 = vadd.f32 0.0, %v651
        %v653 = vpop.f32.mrf.mxu0
        %v654 = vadd.f32 0.0, %v653
        %655 = vmatprep.mubr.bf16.mxu0 0
        %656 = vmatmul.mubr.bf16.gmra.mxu0 %v484
        %v657 = vpop.f32.mrf.mxu0
        %v658 = vadd.f32 0.0, %v657
        %v659 = vpop.f32.mrf.mxu0
        %v660 = vadd.f32 0.0, %v659
        %v661 = vpop.f32.mrf.mxu0
        %v662 = vadd.f32 0.0, %v661
        %v663 = vpop.f32.mrf.mxu0
        %v664 = vadd.f32 0.0, %v663
        %665 = vmatprep.mubr.bf16.mxu0 0
        %666 = vmatmul.mubr.bf16.gmra.mxu0 %v485
        %v667 = vpop.f32.mrf.mxu0
        %v668 = vadd.f32 0.0, %v667
        %v669 = vpop.f32.mrf.mxu0
        %v670 = vadd.f32 0.0, %v669
        %v671 = vpop.f32.mrf.mxu0
        %v672 = vadd.f32 0.0, %v671
        %v673 = vpop.f32.mrf.mxu0
        %v674 = vadd.f32 0.0, %v673
        %675 = vmatprep.mubr.bf16.mxu0 0
        %676 = vmatmul.mubr.bf16.gmra.mxu0 %v486
        %v677 = vpop.f32.mrf.mxu0
        %v678 = vadd.f32 0.0, %v677
        %v679 = vpop.f32.mrf.mxu0
        %v680 = vadd.f32 0.0, %v679
        %v681 = vpop.f32.mrf.mxu0
        %v682 = vadd.f32 0.0, %v681
        %v683 = vpop.f32.mrf.mxu0
        %v684 = vadd.f32 0.0, %v683
        %685 = vmatprep.mubr.bf16.mxu0 0
        %686 = vmatmul.mubr.bf16.gmra.mxu0 %v487
        %v687 = vpop.f32.mrf.mxu0
        %v688 = vadd.f32 0.0, %v687
        %v689 = vpop.f32.mrf.mxu0
        %v690 = vadd.f32 0.0, %v689
        %v691 = vpop.f32.mrf.mxu0
        %v692 = vadd.f32 0.0, %v691
        %v693 = vpop.f32.mrf.mxu0
        %v694 = vadd.f32 0.0, %v693
        %695 = vmatprep.mubr.bf16.mxu0 0
        %696 = vmatmul.mubr.bf16.gmra.mxu0 %v488
        %v697 = vpop.f32.mrf.mxu0
        %v698 = vadd.f32 0.0, %v697
        %v699 = vpop.f32.mrf.mxu0
        %v700 = vadd.f32 0.0, %v699
        %v701 = vpop.f32.mrf.mxu0
        %v702 = vadd.f32 0.0, %v701
        %v703 = vpop.f32.mrf.mxu0
        %v704 = vadd.f32 0.0, %v703
        %705 = vmatprep.mubr.bf16.mxu0 0
        %706 = vmatmul.mubr.bf16.gmra.mxu0 %v489
        %v707 = vpop.f32.mrf.mxu0
        %v708 = vadd.f32 0.0, %v707
        %v709 = vpop.f32.mrf.mxu0
        %v710 = vadd.f32 0.0, %v709
        %v711 = vpop.f32.mrf.mxu0
        %v712 = vadd.f32 0.0, %v711
        %v713 = vpop.f32.mrf.mxu0
        %v714 = vadd.f32 0.0, %v713
        %715 = vmatprep.mubr.bf16.mxu0 0
        %716 = vmatmul.mubr.bf16.gmra.mxu0 %v490
        %v717 = vpop.f32.mrf.mxu0
        %v718 = vadd.f32 0.0, %v717
        %v719 = vpop.f32.mrf.mxu0
        %v720 = vadd.f32 0.0, %v719
        %v721 = vpop.f32.mrf.mxu0
        %v722 = vadd.f32 0.0, %v721
        %v723 = vpop.f32.mrf.mxu0
        %v724 = vadd.f32 0.0, %v723
        %725 = vmatprep.mubr.bf16.mxu0 0
        %726 = vmatmul.mubr.bf16.gmra.mxu0 %v491
        %v727 = vpop.f32.mrf.mxu0
        %v728 = vadd.f32 0.0, %v727
        %v729 = vpop.f32.mrf.mxu0
        %v730 = vadd.f32 0.0, %v729
        %v731 = vpop.f32.mrf.mxu0
        %v732 = vadd.f32 0.0, %v731
        %v733 = vpop.f32.mrf.mxu0
        %v734 = vadd.f32 0.0, %v733
        %735 = vmatprep.mubr.bf16.mxu0 0
        %736 = vmatmul.mubr.bf16.gmra.mxu0 %v492
        %v737 = vpop.f32.mrf.mxu0
        %v738 = vadd.f32 0.0, %v737
        %v739 = vpop.f32.mrf.mxu0
        %v740 = vadd.f32 0.0, %v739
        %v741 = vpop.f32.mrf.mxu0
        %v742 = vadd.f32 0.0, %v741
        %v743 = vpop.f32.mrf.mxu0
        %v744 = vadd.f32 0.0, %v743
        %745 = vmatprep.mubr.bf16.mxu0 0
        %746 = vmatmul.mubr.bf16.gmra.mxu0 %v493
        %v747 = vpop.f32.mrf.mxu0
        %v748 = vadd.f32 0.0, %v747
        %v749 = vpop.f32.mrf.mxu0
        %v750 = vadd.f32 0.0, %v749
        %v751 = vpop.f32.mrf.mxu0
        %v752 = vadd.f32 0.0, %v751
        %v753 = vpop.f32.mrf.mxu0
        %v754 = vadd.f32 0.0, %v753
        %755 = vmatprep.mubr.bf16.mxu0 0
        %756 = vmatmul.mubr.bf16.gmra.mxu0 %v494
        %v757 = vpop.f32.mrf.mxu0
        %v758 = vadd.f32 0.0, %v757
        %v759 = vpop.f32.mrf.mxu0
        %v760 = vadd.f32 0.0, %v759
        %v761 = vpop.f32.mrf.mxu0
        %v762 = vadd.f32 0.0, %v761
        %v763 = vpop.f32.mrf.mxu0
        %v764 = vadd.f32 0.0, %v763
        %765 = vmatprep.mubr.bf16.mxu0 0
        %766 = vmatmul.mubr.bf16.gmra.mxu0 %v495
        %v767 = vpop.f32.mrf.mxu0
        %v768 = vadd.f32 0.0, %v767
        %v769 = vpop.f32.mrf.mxu0
        %v770 = vadd.f32 0.0, %v769
        %v771 = vpop.f32.mrf.mxu0
        %v772 = vadd.f32 0.0, %v771
        %v773 = vpop.f32.mrf.mxu0
        %v774 = vadd.f32 0.0, %v773
        %775 = vmatprep.mubr.bf16.mxu0 0
        %776 = vmatmul.mubr.bf16.gmra.mxu0 %v496
        %v777 = vpop.f32.mrf.mxu0
        %v778 = vadd.f32 0.0, %v777
        %v779 = vpop.f32.mrf.mxu0
        %v780 = vadd.f32 0.0, %v779
        %v781 = vpop.f32.mrf.mxu0
        %v782 = vadd.f32 0.0, %v781
        %v783 = vpop.f32.mrf.mxu0
        %v784 = vadd.f32 0.0, %v783
        %785 = vdwg.mxu0
        %v786 = vld [vmem:[%s2] sm:$0x1]
        %v788 = vlaneseq
        %v789 = vshrl.u32 %v788, 7
        %v790 = vsub.s32 0, %v789
        %v791 = vrot.slane %v786, %v790
        %v793 = vadd.f32 %v628, %v791
        %v794 = vadd.f32 %v632, %v791
        %v795 = vadd.f32 %v638, %v791
        %v796 = vadd.f32 %v642, %v791
        %v797 = vadd.f32 %v648, %v791
        %v798 = vadd.f32 %v652, %v791
        %v799 = vadd.f32 %v658, %v791
        %v800 = vadd.f32 %v662, %v791
        %v801 = vadd.f32 %v668, %v791
        %v802 = vadd.f32 %v672, %v791
        %v803 = vadd.f32 %v678, %v791
        %v804 = vadd.f32 %v682, %v791
        %v805 = vadd.f32 %v688, %v791
        %v806 = vadd.f32 %v692, %v791
        %v807 = vadd.f32 %v698, %v791
        %v808 = vadd.f32 %v702, %v791
        %v809 = vadd.f32 %v708, %v791
        %v810 = vadd.f32 %v712, %v791
        %v811 = vadd.f32 %v718, %v791
        %v812 = vadd.f32 %v722, %v791
        %v813 = vadd.f32 %v728, %v791
        %v814 = vadd.f32 %v732, %v791
        %v815 = vadd.f32 %v738, %v791
        %v816 = vadd.f32 %v742, %v791
        %v817 = vadd.f32 %v748, %v791
        %v818 = vadd.f32 %v752, %v791
        %v819 = vadd.f32 %v758, %v791
        %v820 = vadd.f32 %v762, %v791
        %v821 = vadd.f32 %v768, %v791
        %v822 = vadd.f32 %v772, %v791
        %v823 = vadd.f32 %v778, %v791
        %v824 = vadd.f32 %v782, %v791
        %v825 = vmax.f32 %v793, 0.0
        %v826 = vmax.f32 %v794, 0.0
        %v827 = vmax.f32 %v795, 0.0
        %v828 = vmax.f32 %v796, 0.0
        %v829 = vmax.f32 %v797, 0.0
        %v830 = vmax.f32 %v798, 0.0
        %v831 = vmax.f32 %v799, 0.0
        %v832 = vmax.f32 %v800, 0.0
        %v833 = vmax.f32 %v801, 0.0
        %v834 = vmax.f32 %v802, 0.0
        %v835 = vmax.f32 %v803, 0.0
        %v836 = vmax.f32 %v804, 0.0
        %v837 = vmax.f32 %v805, 0.0
        %v838 = vmax.f32 %v806, 0.0
        %v839 = vmax.f32 %v807, 0.0
        %v840 = vmax.f32 %v808, 0.0
        %v841 = vmax.f32 %v809, 0.0
        %v842 = vmax.f32 %v810, 0.0
        %v843 = vmax.f32 %v811, 0.0
        %v844 = vmax.f32 %v812, 0.0
        %v845 = vmax.f32 %v813, 0.0
        %v846 = vmax.f32 %v814, 0.0
        %v847 = vmax.f32 %v815, 0.0
        %v848 = vmax.f32 %v816, 0.0
        %v849 = vmax.f32 %v817, 0.0
        %v850 = vmax.f32 %v818, 0.0
        %v851 = vmax.f32 %v819, 0.0
        %v852 = vmax.f32 %v820, 0.0
        %v853 = vmax.f32 %v821, 0.0
        %v854 = vmax.f32 %v822, 0.0
        %v855 = vmax.f32 %v823, 0.0
        %v856 = vmax.f32 %v824, 0.0
        %v857 = vld [vmem:[%s3] sm:$0x1]
        %v859 = vlaneseq
        %v860 = vshrl.u32 %v859, 7
        %v861 = vsub.s32 0, %v860
        %v862 = vrot.slane %v857, %v861
        %v864 = vadd.f32 %v630, %v862
        %v865 = vadd.f32 %v634, %v862
        %v866 = vadd.f32 %v640, %v862
        %v867 = vadd.f32 %v644, %v862
        %v868 = vadd.f32 %v650, %v862
        %v869 = vadd.f32 %v654, %v862
        %v870 = vadd.f32 %v660, %v862
        %v871 = vadd.f32 %v664, %v862
        %v872 = vadd.f32 %v670, %v862
        %v873 = vadd.f32 %v674, %v862
        %v874 = vadd.f32 %v680, %v862
        %v875 = vadd.f32 %v684, %v862
        %v876 = vadd.f32 %v690, %v862
        %v877 = vadd.f32 %v694, %v862
        %v878 = vadd.f32 %v700, %v862
        %v879 = vadd.f32 %v704, %v862
        %v880 = vadd.f32 %v710, %v862
        %v881 = vadd.f32 %v714, %v862
        %v882 = vadd.f32 %v720, %v862
        %v883 = vadd.f32 %v724, %v862
        %v884 = vadd.f32 %v730, %v862
        %v885 = vadd.f32 %v734, %v862
        %v886 = vadd.f32 %v740, %v862
        %v887 = vadd.f32 %v744, %v862
        %v888 = vadd.f32 %v750, %v862
        %v889 = vadd.f32 %v754, %v862
        %v890 = vadd.f32 %v760, %v862
        %v891 = vadd.f32 %v764, %v862
        %v892 = vadd.f32 %v770, %v862
        %v893 = vadd.f32 %v774, %v862
        %v894 = vadd.f32 %v780, %v862
        %v895 = vadd.f32 %v784, %v862
        %v896 = vmax.f32 %v864, 0.0
        %v897 = vmax.f32 %v865, 0.0
        %v898 = vmax.f32 %v866, 0.0
        %v899 = vmax.f32 %v867, 0.0
        %v900 = vmax.f32 %v868, 0.0
        %v901 = vmax.f32 %v869, 0.0
        %v902 = vmax.f32 %v870, 0.0
        %v903 = vmax.f32 %v871, 0.0
        %v904 = vmax.f32 %v872, 0.0
        %v905 = vmax.f32 %v873, 0.0
        %v906 = vmax.f32 %v874, 0.0
        %v907 = vmax.f32 %v875, 0.0
        %v908 = vmax.f32 %v876, 0.0
        %v909 = vmax.f32 %v877, 0.0
        %v910 = vmax.f32 %v878, 0.0
        %v911 = vmax.f32 %v879, 0.0
        %v912 = vmax.f32 %v880, 0.0
        %v913 = vmax.f32 %v881, 0.0
        %v914 = vmax.f32 %v882, 0.0
        %v915 = vmax.f32 %v883, 0.0
        %v916 = vmax.f32 %v884, 0.0
        %v917 = vmax.f32 %v885, 0.0
        %v918 = vmax.f32 %v886, 0.0
        %v919 = vmax.f32 %v887, 0.0
        %v920 = vmax.f32 %v888, 0.0
        %v921 = vmax.f32 %v889, 0.0
        %v922 = vmax.f32 %v890, 0.0
        %v923 = vmax.f32 %v891, 0.0
        %v924 = vmax.f32 %v892, 0.0
        %v925 = vmax.f32 %v893, 0.0
        %v926 = vmax.f32 %v894, 0.0
        %v927 = vmax.f32 %v895, 0.0
        %928 = vst [vmem:[#allocation2] sm:$0xf] 0
        %929 = vst [vmem:[#allocation2 + $0x4] sm:$0xf] 0
        %930 = vst [vmem:[#allocation2 + $0x8] sm:$0xf] 0
        %s931 = scalar_lea.vmem [#allocation2], 204
        %932 = vst [vmem:[%s931] sm:$0xf] 0
        %933 = vst [vmem:[%s931 + $0x4] sm:$0xf] 0
        %934 = vst [vmem:[%s931 + $0x8] sm:$0xf] 0
        %s935 = scalar_lea.vmem [#allocation2], 12
        %vm936 = vcmask 1040384
        %vm937 = vsmask.f32 256
        %vm938 = vmand %vm936, %vm937
        %v939 = vld [vmem:[%s935] sm:$0x1]
        %v940 = vsel %vm938, 0, %v939
        %941 = vst [vmem:[%s935] sm:$0x1] %v940
        %v942 = vld [vmem:[%s935 + $0xc] sm:$0x1]
        %v943 = vsel %vm938, 0, %v942
        %944 = vst [vmem:[%s935 + $0xc] sm:$0x1] %v943
        %v945 = vld [vmem:[%s935 + $0x18] sm:$0x1]
        %v946 = vsel %vm938, 0, %v945
        %947 = vst [vmem:[%s935 + $0x18] sm:$0x1] %v946
        %v948 = vld [vmem:[%s935 + $0x24] sm:$0x1]
        %v949 = vsel %vm938, 0, %v948
        %950 = vst [vmem:[%s935 + $0x24] sm:$0x1] %v949
        %v951 = vld [vmem:[%s935 + $0x30] sm:$0x1]
        %v952 = vsel %vm938, 0, %v951
        %953 = vst [vmem:[%s935 + $0x30] sm:$0x1] %v952
        %v954 = vld [vmem:[%s935 + $0x3c] sm:$0x1]
        %v955 = vsel %vm938, 0, %v954
        %956 = vst [vmem:[%s935 + $0x3c] sm:$0x1] %v955
        %v957 = vld [vmem:[%s935 + $0x48] sm:$0x1]
        %v958 = vsel %vm938, 0, %v957
        %959 = vst [vmem:[%s935 + $0x48] sm:$0x1] %v958
        %v960 = vld [vmem:[%s935 + $0x54] sm:$0x1]
        %v961 = vsel %vm938, 0, %v960
        %962 = vst [vmem:[%s935 + $0x54] sm:$0x1] %v961
        %v963 = vld [vmem:[%s935 + $0x60] sm:$0x1]
        %v964 = vsel %vm938, 0, %v963
        %965 = vst [vmem:[%s935 + $0x60] sm:$0x1] %v964
        %v966 = vld [vmem:[%s935 + $0x6c] sm:$0x1]
        %v967 = vsel %vm938, 0, %v966
        %968 = vst [vmem:[%s935 + $0x6c] sm:$0x1] %v967
        %v969 = vld [vmem:[%s935 + $0x78] sm:$0x1]
        %v970 = vsel %vm938, 0, %v969
        %971 = vst [vmem:[%s935 + $0x78] sm:$0x1] %v970
        %v972 = vld [vmem:[%s935 + $0x84] sm:$0x1]
        %v973 = vsel %vm938, 0, %v972
        %974 = vst [vmem:[%s935 + $0x84] sm:$0x1] %v973
        %v975 = vld [vmem:[%s935 + $0x90] sm:$0x1]
        %v976 = vsel %vm938, 0, %v975
        %977 = vst [vmem:[%s935 + $0x90] sm:$0x1] %v976
        %v978 = vld [vmem:[%s935 + $0x9c] sm:$0x1]
        %v979 = vsel %vm938, 0, %v978
        %980 = vst [vmem:[%s935 + $0x9c] sm:$0x1] %v979
        %v981 = vld [vmem:[%s935 + $0xa8] sm:$0x1]
        %v982 = vsel %vm938, 0, %v981
        %983 = vst [vmem:[%s935 + $0xa8] sm:$0x1] %v982
        %v984 = vld [vmem:[%s935 + $0xb4] sm:$0x1]
        %v985 = vsel %vm938, 0, %v984
        %986 = vst [vmem:[%s935 + $0xb4] sm:$0x1] %v985
        %vm987 = vcmask 1043456
        %vm988 = vsmask.f32 7938
        %vm989 = vmand %vm987, %vm988
        %v990 = vld [vmem:[%s935 + $0x8] sm:$0xf]
        %v991 = vsel %vm989, 0, %v990
        %992 = vst [vmem:[%s935 + $0x8] sm:$0xf] %v991
        %v993 = vld [vmem:[%s935 + $0x14] sm:$0xf]
        %v994 = vsel %vm989, 0, %v993
        %995 = vst [vmem:[%s935 + $0x14] sm:$0xf] %v994
        %v996 = vld [vmem:[%s935 + $0x20] sm:$0xf]
        %v997 = vsel %vm989, 0, %v996
        %998 = vst [vmem:[%s935 + $0x20] sm:$0xf] %v997
        %v999 = vld [vmem:[%s935 + $0x2c] sm:$0xf]
        %v1000 = vsel %vm989, 0, %v999
        %1001 = vst [vmem:[%s935 + $0x2c] sm:$0xf] %v1000
        %v1002 = vld [vmem:[%s935 + $0x38] sm:$0xf]
        %v1003 = vsel %vm989, 0, %v1002
        %1004 = vst [vmem:[%s935 + $0x38] sm:$0xf] %v1003
        %v1005 = vld [vmem:[%s935 + $0x44] sm:$0xf]
        %v1006 = vsel %vm989, 0, %v1005
        %1007 = vst [vmem:[%s935 + $0x44] sm:$0xf] %v1006
        %v1008 = vld [vmem:[%s935 + $0x50] sm:$0xf]
        %v1009 = vsel %vm989, 0, %v1008
        %1010 = vst [vmem:[%s935 + $0x50] sm:$0xf] %v1009
        %v1011 = vld [vmem:[%s935 + $0x5c] sm:$0xf]
        %v1012 = vsel %vm989, 0, %v1011
        %1013 = vst [vmem:[%s935 + $0x5c] sm:$0xf] %v1012
        %v1014 = vld [vmem:[%s935 + $0x68] sm:$0xf]
        %v1015 = vsel %vm989, 0, %v1014
        %1016 = vst [vmem:[%s935 + $0x68] sm:$0xf] %v1015
        %v1017 = vld [vmem:[%s935 + $0x74] sm:$0xf]
        %v1018 = vsel %vm989, 0, %v1017
        %1019 = vst [vmem:[%s935 + $0x74] sm:$0xf] %v1018
        %v1020 = vld [vmem:[%s935 + $0x80] sm:$0xf]
        %v1021 = vsel %vm989, 0, %v1020
        %1022 = vst [vmem:[%s935 + $0x80] sm:$0xf] %v1021
        %v1023 = vld [vmem:[%s935 + $0x8c] sm:$0xf]
        %v1024 = vsel %vm989, 0, %v1023
        %1025 = vst [vmem:[%s935 + $0x8c] sm:$0xf] %v1024
        %v1026 = vld [vmem:[%s935 + $0x98] sm:$0xf]
        %v1027 = vsel %vm989, 0, %v1026
        %1028 = vst [vmem:[%s935 + $0x98] sm:$0xf] %v1027
        %v1029 = vld [vmem:[%s935 + $0xa4] sm:$0xf]
        %v1030 = vsel %vm989, 0, %v1029
        %1031 = vst [vmem:[%s935 + $0xa4] sm:$0xf] %v1030
        %v1032 = vld [vmem:[%s935 + $0xb0] sm:$0xf]
        %v1033 = vsel %vm989, 0, %v1032
        %1034 = vst [vmem:[%s935 + $0xb0] sm:$0xf] %v1033
        %v1035 = vld [vmem:[%s935 + $0xbc] sm:$0xf]
        %v1036 = vsel %vm989, 0, %v1035
        %1037 = vst [vmem:[%s935 + $0xbc] sm:$0xf] %v1036
        %v1038 = vpack.c.bf16 %v826, %v825
        %v1039 = vpack.c.bf16 %v828, %v827
        %v1040 = vpack.c.bf16 %v830, %v829
        %v1041 = vpack.c.bf16 %v832, %v831
        %v1042 = vpack.c.bf16 %v834, %v833
        %v1043 = vpack.c.bf16 %v836, %v835
        %v1044 = vpack.c.bf16 %v838, %v837
        %v1045 = vpack.c.bf16 %v840, %v839
        %v1046 = vpack.c.bf16 %v842, %v841
        %v1047 = vpack.c.bf16 %v844, %v843
        %v1048 = vpack.c.bf16 %v846, %v845
        %v1049 = vpack.c.bf16 %v848, %v847
        %v1050 = vpack.c.bf16 %v850, %v849
        %v1051 = vpack.c.bf16 %v852, %v851
        %v1052 = vpack.c.bf16 %v854, %v853
        %v1053 = vpack.c.bf16 %v856, %v855
        %v1070 = vunpack.c.l.b16 %v1038
        %v1071 = vunpack.c.h.b16 %v1038
        %v1072 = vunpack.c.l.b16 %v1039
        %v1073 = vunpack.c.h.b16 %v1039
        %v1074 = vunpack.c.l.b16 %v1040
        %v1075 = vunpack.c.h.b16 %v1040
        %v1076 = vunpack.c.l.b16 %v1041
        %v1077 = vunpack.c.h.b16 %v1041
        %v1078 = vunpack.c.l.b16 %v1042
        %v1079 = vunpack.c.h.b16 %v1042
        %v1080 = vunpack.c.l.b16 %v1043
        %v1081 = vunpack.c.h.b16 %v1043
        %v1082 = vunpack.c.l.b16 %v1044
        %v1083 = vunpack.c.h.b16 %v1044
        %v1084 = vunpack.c.l.b16 %v1045
        %v1085 = vunpack.c.h.b16 %v1045
        %v1086 = vunpack.c.l.b16 %v1046
        %v1087 = vunpack.c.h.b16 %v1046
        %v1088 = vunpack.c.l.b16 %v1047
        %v1089 = vunpack.c.h.b16 %v1047
        %v1090 = vunpack.c.l.b16 %v1048
        %v1091 = vunpack.c.h.b16 %v1048
        %v1092 = vunpack.c.l.b16 %v1049
        %v1093 = vunpack.c.h.b16 %v1049
        %v1094 = vunpack.c.l.b16 %v1050
        %v1095 = vunpack.c.h.b16 %v1050
        %v1096 = vunpack.c.l.b16 %v1051
        %v1097 = vunpack.c.h.b16 %v1051
        %v1098 = vunpack.c.l.b16 %v1052
        %v1099 = vunpack.c.h.b16 %v1052
        %v1100 = vunpack.c.l.b16 %v1053
        %v1101 = vunpack.c.h.b16 %v1053
        %v1102 = vpack.c.b16 %v1070, %v1070
        %v1103 = vpack.c.b16 %v1071, %v1071
        %v1104 = vpack.c.b16 %v1072, %v1072
        %v1105 = vpack.c.b16 %v1073, %v1073
        %v1106 = vpack.c.b16 %v1074, %v1074
        %v1107 = vpack.c.b16 %v1075, %v1075
        %v1108 = vpack.c.b16 %v1076, %v1076
        %v1109 = vpack.c.b16 %v1077, %v1077
        %v1110 = vpack.c.b16 %v1078, %v1078
        %v1111 = vpack.c.b16 %v1079, %v1079
        %v1112 = vpack.c.b16 %v1080, %v1080
        %v1113 = vpack.c.b16 %v1081, %v1081
        %v1114 = vpack.c.b16 %v1082, %v1082
        %v1115 = vpack.c.b16 %v1083, %v1083
        %v1116 = vpack.c.b16 %v1084, %v1084
        %v1117 = vpack.c.b16 %v1085, %v1085
        %v1118 = vpack.c.b16 %v1086, %v1086
        %v1119 = vpack.c.b16 %v1087, %v1087
        %v1120 = vpack.c.b16 %v1088, %v1088
        %v1121 = vpack.c.b16 %v1089, %v1089
        %v1122 = vpack.c.b16 %v1090, %v1090
        %v1123 = vpack.c.b16 %v1091, %v1091
        %v1124 = vpack.c.b16 %v1092, %v1092
        %v1125 = vpack.c.b16 %v1093, %v1093
        %v1126 = vpack.c.b16 %v1094, %v1094
        %v1127 = vpack.c.b16 %v1095, %v1095
        %v1128 = vpack.c.b16 %v1096, %v1096
        %v1129 = vpack.c.b16 %v1097, %v1097
        %v1130 = vpack.c.b16 %v1098, %v1098
        %v1131 = vpack.c.b16 %v1099, %v1099
        %v1132 = vpack.c.b16 %v1100, %v1100
        %v1133 = vpack.c.b16 %v1101, %v1101
        %vm1134 = vsmask.f32 4368
        %vm1135 = vmor %vm937, %vm1134
        %v1137 = vshrl.u32 %v1102, 16
        %v1139 = vrot.slane %v1137, 7
        %v1140 = vshll.u32 %v1102, 16
        %v1142 = vor.u32 %v1139, %v1140
        %v1143 = vrot.slane %v1139, 4
        %v1145 = vshrl.u32 %v1103, 16
        %v1147 = vrot.slane %v1145, 7
        %v1148 = vshll.u32 %v1103, 16
        %v1150 = vor.u32 %v1147, %v1148
        %v1151 = vsel %vm1135, %v1143, %v1150
        %v1152 = vrot.slane %v1147, 4
        %v1154 = vshrl.u32 %v1104, 16
        %v1156 = vrot.slane %v1154, 7
        %v1157 = vshll.u32 %v1104, 16
        %v1159 = vor.u32 %v1156, %v1157
        %v1160 = vrot.slane %v1156, 4
        %v1162 = vshrl.u32 %v1105, 16
        %v1164 = vrot.slane %v1162, 7
        %v1165 = vshll.u32 %v1105, 16
        %v1167 = vor.u32 %v1164, %v1165
        %v1168 = vsel %vm1135, %v1160, %v1167
        %v1169 = vrot.slane %v1164, 4
        %v1171 = vshrl.u32 %v1106, 16
        %v1173 = vrot.slane %v1171, 7
        %v1174 = vshll.u32 %v1106, 16
        %v1176 = vor.u32 %v1173, %v1174
        %v1177 = vrot.slane %v1173, 4
        %v1179 = vshrl.u32 %v1107, 16
        %v1181 = vrot.slane %v1179, 7
        %v1182 = vshll.u32 %v1107, 16
        %v1184 = vor.u32 %v1181, %v1182
        %v1185 = vsel %vm1135, %v1177, %v1184
        %v1186 = vrot.slane %v1181, 4
        %v1188 = vshrl.u32 %v1108, 16
        %v1190 = vrot.slane %v1188, 7
        %v1191 = vshll.u32 %v1108, 16
        %v1193 = vor.u32 %v1190, %v1191
        %v1194 = vrot.slane %v1190, 4
        %v1196 = vshrl.u32 %v1109, 16
        %v1198 = vrot.slane %v1196, 7
        %v1199 = vshll.u32 %v1109, 16
        %v1201 = vor.u32 %v1198, %v1199
        %v1202 = vsel %vm1135, %v1194, %v1201
        %v1203 = vrot.slane %v1198, 4
        %v1205 = vshrl.u32 %v1110, 16
        %v1207 = vrot.slane %v1205, 7
        %v1208 = vshll.u32 %v1110, 16
        %v1210 = vor.u32 %v1207, %v1208
        %v1211 = vrot.slane %v1207, 4
        %v1213 = vshrl.u32 %v1111, 16
        %v1215 = vrot.slane %v1213, 7
        %v1216 = vshll.u32 %v1111, 16
        %v1218 = vor.u32 %v1215, %v1216
        %v1219 = vsel %vm1135, %v1211, %v1218
        %v1220 = vrot.slane %v1215, 4
        %v1222 = vshrl.u32 %v1112, 16
        %v1224 = vrot.slane %v1222, 7
        %v1225 = vshll.u32 %v1112, 16
        %v1227 = vor.u32 %v1224, %v1225
        %v1228 = vrot.slane %v1224, 4
        %v1230 = vshrl.u32 %v1113, 16
        %v1232 = vrot.slane %v1230, 7
        %v1233 = vshll.u32 %v1113, 16
        %v1235 = vor.u32 %v1232, %v1233
        %v1236 = vsel %vm1135, %v1228, %v1235
        %v1237 = vrot.slane %v1232, 4
        %v1239 = vshrl.u32 %v1114, 16
        %v1241 = vrot.slane %v1239, 7
        %v1242 = vshll.u32 %v1114, 16
        %v1244 = vor.u32 %v1241, %v1242
        %v1245 = vrot.slane %v1241, 4
        %v1247 = vshrl.u32 %v1115, 16
        %v1249 = vrot.slane %v1247, 7
        %v1250 = vshll.u32 %v1115, 16
        %v1252 = vor.u32 %v1249, %v1250
        %v1253 = vsel %vm1135, %v1245, %v1252
        %v1254 = vrot.slane %v1249, 4
        %v1256 = vshrl.u32 %v1116, 16
        %v1258 = vrot.slane %v1256, 7
        %v1259 = vshll.u32 %v1116, 16
        %v1261 = vor.u32 %v1258, %v1259
        %v1262 = vrot.slane %v1258, 4
        %v1264 = vshrl.u32 %v1117, 16
        %v1266 = vrot.slane %v1264, 7
        %v1267 = vshll.u32 %v1117, 16
        %v1269 = vor.u32 %v1266, %v1267
        %v1270 = vsel %vm1135, %v1262, %v1269
        %v1271 = vrot.slane %v1266, 4
        %v1273 = vshrl.u32 %v1118, 16
        %v1275 = vrot.slane %v1273, 7
        %v1276 = vshll.u32 %v1118, 16
        %v1278 = vor.u32 %v1275, %v1276
        %v1279 = vrot.slane %v1275, 4
        %v1281 = vshrl.u32 %v1119, 16
        %v1283 = vrot.slane %v1281, 7
        %v1284 = vshll.u32 %v1119, 16
        %v1286 = vor.u32 %v1283, %v1284
        %v1287 = vsel %vm1135, %v1279, %v1286
        %v1288 = vrot.slane %v1283, 4
        %v1290 = vshrl.u32 %v1120, 16
        %v1292 = vrot.slane %v1290, 7
        %v1293 = vshll.u32 %v1120, 16
        %v1295 = vor.u32 %v1292, %v1293
        %v1296 = vrot.slane %v1292, 4
        %v1298 = vshrl.u32 %v1121, 16
        %v1300 = vrot.slane %v1298, 7
        %v1301 = vshll.u32 %v1121, 16
        %v1303 = vor.u32 %v1300, %v1301
        %v1304 = vsel %vm1135, %v1296, %v1303
        %v1305 = vrot.slane %v1300, 4
        %v1307 = vshrl.u32 %v1122, 16
        %v1309 = vrot.slane %v1307, 7
        %v1310 = vshll.u32 %v1122, 16
        %v1312 = vor.u32 %v1309, %v1310
        %v1313 = vrot.slane %v1309, 4
        %v1315 = vshrl.u32 %v1123, 16
        %v1317 = vrot.slane %v1315, 7
        %v1318 = vshll.u32 %v1123, 16
        %v1320 = vor.u32 %v1317, %v1318
        %v1321 = vsel %vm1135, %v1313, %v1320
        %v1322 = vrot.slane %v1317, 4
        %v1324 = vshrl.u32 %v1124, 16
        %v1326 = vrot.slane %v1324, 7
        %v1327 = vshll.u32 %v1124, 16
        %v1329 = vor.u32 %v1326, %v1327
        %v1330 = vrot.slane %v1326, 4
        %v1332 = vshrl.u32 %v1125, 16
        %v1334 = vrot.slane %v1332, 7
        %v1335 = vshll.u32 %v1125, 16
        %v1337 = vor.u32 %v1334, %v1335
        %v1338 = vsel %vm1135, %v1330, %v1337
        %v1339 = vrot.slane %v1334, 4
        %v1341 = vshrl.u32 %v1126, 16
        %v1343 = vrot.slane %v1341, 7
        %v1344 = vshll.u32 %v1126, 16
        %v1346 = vor.u32 %v1343, %v1344
        %v1347 = vrot.slane %v1343, 4
        %v1349 = vshrl.u32 %v1127, 16
        %v1351 = vrot.slane %v1349, 7
        %v1352 = vshll.u32 %v1127, 16
        %v1354 = vor.u32 %v1351, %v1352
        %v1355 = vsel %vm1135, %v1347, %v1354
        %v1356 = vrot.slane %v1351, 4
        %v1358 = vshrl.u32 %v1128, 16
        %v1360 = vrot.slane %v1358, 7
        %v1361 = vshll.u32 %v1128, 16
        %v1363 = vor.u32 %v1360, %v1361
        %v1364 = vrot.slane %v1360, 4
        %v1366 = vshrl.u32 %v1129, 16
        %v1368 = vrot.slane %v1366, 7
        %v1369 = vshll.u32 %v1129, 16
        %v1371 = vor.u32 %v1368, %v1369
        %v1372 = vsel %vm1135, %v1364, %v1371
        %v1373 = vrot.slane %v1368, 4
        %v1375 = vshrl.u32 %v1130, 16
        %v1377 = vrot.slane %v1375, 7
        %v1378 = vshll.u32 %v1130, 16
        %v1380 = vor.u32 %v1377, %v1378
        %v1381 = vrot.slane %v1377, 4
        %v1383 = vshrl.u32 %v1131, 16
        %v1385 = vrot.slane %v1383, 7
        %v1386 = vshll.u32 %v1131, 16
        %v1388 = vor.u32 %v1385, %v1386
        %v1389 = vsel %vm1135, %v1381, %v1388
        %v1390 = vrot.slane %v1385, 4
        %v1392 = vshrl.u32 %v1132, 16
        %v1394 = vrot.slane %v1392, 7
        %v1395 = vshll.u32 %v1132, 16
        %v1397 = vor.u32 %v1394, %v1395
        %v1398 = vrot.slane %v1394, 4
        %v1400 = vshrl.u32 %v1133, 16
        %v1402 = vrot.slane %v1400, 7
        %v1403 = vshll.u32 %v1133, 16
        %v1405 = vor.u32 %v1402, %v1403
        %v1406 = vsel %vm1135, %v1398, %v1405
        %v1407 = vrot.slane %v1402, 4
        %v1456 = vld [vmem:[%s935] sm:$0xf]
        %v1457 = vsel %vm989, %v1142, %v1456
        %1458 = vst [vmem:[%s935] sm:$0xf] %v1457
        %1459 = vst [vmem:[%s935 + $0x4] sm:$0xf] %v1151
        %v1460 = vld [vmem:[%s935 + $0x8] sm:$0x1]
        %v1461 = vsel %vm938, %v1152, %v1460
        %1462 = vst [vmem:[%s935 + $0x8] sm:$0x1] %v1461
        %v1463 = vld [vmem:[%s935 + $0xc] sm:$0xf]
        %v1464 = vsel %vm989, %v1159, %v1463
        %1465 = vst [vmem:[%s935 + $0xc] sm:$0xf] %v1464
        %1466 = vst [vmem:[%s935 + $0x10] sm:$0xf] %v1168
        %v1467 = vld [vmem:[%s935 + $0x14] sm:$0x1]
        %v1468 = vsel %vm938, %v1169, %v1467
        %1469 = vst [vmem:[%s935 + $0x14] sm:$0x1] %v1468
        %v1470 = vld [vmem:[%s935 + $0x18] sm:$0xf]
        %v1471 = vsel %vm989, %v1176, %v1470
        %1472 = vst [vmem:[%s935 + $0x18] sm:$0xf] %v1471
        %1473 = vst [vmem:[%s935 + $0x1c] sm:$0xf] %v1185
        %v1474 = vld [vmem:[%s935 + $0x20] sm:$0x1]
        %v1475 = vsel %vm938, %v1186, %v1474
        %1476 = vst [vmem:[%s935 + $0x20] sm:$0x1] %v1475
        %v1477 = vld [vmem:[%s935 + $0x24] sm:$0xf]
        %v1478 = vsel %vm989, %v1193, %v1477
        %1479 = vst [vmem:[%s935 + $0x24] sm:$0xf] %v1478
        %1480 = vst [vmem:[%s935 + $0x28] sm:$0xf] %v1202
        %v1481 = vld [vmem:[%s935 + $0x2c] sm:$0x1]
        %v1482 = vsel %vm938, %v1203, %v1481
        %1483 = vst [vmem:[%s935 + $0x2c] sm:$0x1] %v1482
        %v1484 = vld [vmem:[%s935 + $0x30] sm:$0xf]
        %v1485 = vsel %vm989, %v1210, %v1484
        %1486 = vst [vmem:[%s935 + $0x30] sm:$0xf] %v1485
        %1487 = vst [vmem:[%s935 + $0x34] sm:$0xf] %v1219
        %v1488 = vld [vmem:[%s935 + $0x38] sm:$0x1]
        %v1489 = vsel %vm938, %v1220, %v1488
        %1490 = vst [vmem:[%s935 + $0x38] sm:$0x1] %v1489
        %v1491 = vld [vmem:[%s935 + $0x3c] sm:$0xf]
        %v1492 = vsel %vm989, %v1227, %v1491
        %1493 = vst [vmem:[%s935 + $0x3c] sm:$0xf] %v1492
        %1494 = vst [vmem:[%s935 + $0x40] sm:$0xf] %v1236
        %v1495 = vld [vmem:[%s935 + $0x44] sm:$0x1]
        %v1496 = vsel %vm938, %v1237, %v1495
        %1497 = vst [vmem:[%s935 + $0x44] sm:$0x1] %v1496
        %v1498 = vld [vmem:[%s935 + $0x48] sm:$0xf]
        %v1499 = vsel %vm989, %v1244, %v1498
        %1500 = vst [vmem:[%s935 + $0x48] sm:$0xf] %v1499
        %1501 = vst [vmem:[%s935 + $0x4c] sm:$0xf] %v1253
        %v1502 = vld [vmem:[%s935 + $0x50] sm:$0x1]
        %v1503 = vsel %vm938, %v1254, %v1502
        %1504 = vst [vmem:[%s935 + $0x50] sm:$0x1] %v1503
        %v1505 = vld [vmem:[%s935 + $0x54] sm:$0xf]
        %v1506 = vsel %vm989, %v1261, %v1505
        %1507 = vst [vmem:[%s935 + $0x54] sm:$0xf] %v1506
        %1508 = vst [vmem:[%s935 + $0x58] sm:$0xf] %v1270
        %v1509 = vld [vmem:[%s935 + $0x5c] sm:$0x1]
        %v1510 = vsel %vm938, %v1271, %v1509
        %1511 = vst [vmem:[%s935 + $0x5c] sm:$0x1] %v1510
        %v1512 = vld [vmem:[%s935 + $0x60] sm:$0xf]
        %v1513 = vsel %vm989, %v1278, %v1512
        %1514 = vst [vmem:[%s935 + $0x60] sm:$0xf] %v1513
        %1515 = vst [vmem:[%s935 + $0x64] sm:$0xf] %v1287
        %v1516 = vld [vmem:[%s935 + $0x68] sm:$0x1]
        %v1517 = vsel %vm938, %v1288, %v1516
        %1518 = vst [vmem:[%s935 + $0x68] sm:$0x1] %v1517
        %v1519 = vld [vmem:[%s935 + $0x6c] sm:$0xf]
        %v1520 = vsel %vm989, %v1295, %v1519
        %1521 = vst [vmem:[%s935 + $0x6c] sm:$0xf] %v1520
        %1522 = vst [vmem:[%s935 + $0x70] sm:$0xf] %v1304
        %v1523 = vld [vmem:[%s935 + $0x74] sm:$0x1]
        %v1524 = vsel %vm938, %v1305, %v1523
        %1525 = vst [vmem:[%s935 + $0x74] sm:$0x1] %v1524
        %v1526 = vld [vmem:[%s935 + $0x78] sm:$0xf]
        %v1527 = vsel %vm989, %v1312, %v1526
        %1528 = vst [vmem:[%s935 + $0x78] sm:$0xf] %v1527
        %1529 = vst [vmem:[%s935 + $0x7c] sm:$0xf] %v1321
        %v1530 = vld [vmem:[%s935 + $0x80] sm:$0x1]
        %v1531 = vsel %vm938, %v1322, %v1530
        %1532 = vst [vmem:[%s935 + $0x80] sm:$0x1] %v1531
        %v1533 = vld [vmem:[%s935 + $0x84] sm:$0xf]
        %v1534 = vsel %vm989, %v1329, %v1533
        %1535 = vst [vmem:[%s935 + $0x84] sm:$0xf] %v1534
        %1536 = vst [vmem:[%s935 + $0x88] sm:$0xf] %v1338
        %v1537 = vld [vmem:[%s935 + $0x8c] sm:$0x1]
        %v1538 = vsel %vm938, %v1339, %v1537
        %1539 = vst [vmem:[%s935 + $0x8c] sm:$0x1] %v1538
        %v1540 = vld [vmem:[%s935 + $0x90] sm:$0xf]
        %v1541 = vsel %vm989, %v1346, %v1540
        %1542 = vst [vmem:[%s935 + $0x90] sm:$0xf] %v1541
        %1543 = vst [vmem:[%s935 + $0x94] sm:$0xf] %v1355
        %v1544 = vld [vmem:[%s935 + $0x98] sm:$0x1]
        %v1545 = vsel %vm938, %v1356, %v1544
        %1546 = vst [vmem:[%s935 + $0x98] sm:$0x1] %v1545
        %v1547 = vld [vmem:[%s935 + $0x9c] sm:$0xf]
        %v1548 = vsel %vm989, %v1363, %v1547
        %1549 = vst [vmem:[%s935 + $0x9c] sm:$0xf] %v1548
        %1550 = vst [vmem:[%s935 + $0xa0] sm:$0xf] %v1372
        %v1551 = vld [vmem:[%s935 + $0xa4] sm:$0x1]
        %v1552 = vsel %vm938, %v1373, %v1551
        %1553 = vst [vmem:[%s935 + $0xa4] sm:$0x1] %v1552
        %v1554 = vld [vmem:[%s935 + $0xa8] sm:$0xf]
        %v1555 = vsel %vm989, %v1380, %v1554
        %1556 = vst [vmem:[%s935 + $0xa8] sm:$0xf] %v1555
        %1557 = vst [vmem:[%s935 + $0xac] sm:$0xf] %v1389
        %v1558 = vld [vmem:[%s935 + $0xb0] sm:$0x1]
        %v1559 = vsel %vm938, %v1390, %v1558
        %1560 = vst [vmem:[%s935 + $0xb0] sm:$0x1] %v1559
        %v1561 = vld [vmem:[%s935 + $0xb4] sm:$0xf]
        %v1562 = vsel %vm989, %v1397, %v1561
        %1563 = vst [vmem:[%s935 + $0xb4] sm:$0xf] %v1562
        %1564 = vst [vmem:[%s935 + $0xb8] sm:$0xf] %v1406
        %v1565 = vld [vmem:[%s935 + $0xbc] sm:$0x1]
        %v1566 = vsel %vm938, %v1407, %v1565
        %1567 = vst [vmem:[%s935 + $0xbc] sm:$0x1] %v1566
        %v1568 = vld [vmem:[#allocation2] sm:$0xf]
        %v1569 = vld [vmem:[#allocation2 + $0x4] sm:$0xf]
        %v1570 = vld [vmem:[#allocation2 + $0x8] sm:$0xf]
        %v1571 = vld [vmem:[#allocation2 + $0xc] sm:$0xf]
        %v1572 = vld [vmem:[#allocation2 + $0x10] sm:$0xf]
        %v1573 = vld [vmem:[#allocation2 + $0x14] sm:$0xf]
        %v1574 = vld [vmem:[#allocation2 + $0x18] sm:$0xf]
        %v1575 = vld [vmem:[#allocation2 + $0x1c] sm:$0xf]
        %v1576 = vld [vmem:[#allocation2 + $0x20] sm:$0xf]
        %v1577 = vld [vmem:[#allocation2 + $0x24] sm:$0xf]
        %v1578 = vld [vmem:[#allocation2 + $0x28] sm:$0xf]
        %v1579 = vld [vmem:[#allocation2 + $0x2c] sm:$0xf]
        %v1580 = vld [vmem:[#allocation2 + $0x30] sm:$0xf]
        %v1581 = vld [vmem:[#allocation2 + $0x34] sm:$0xf]
        %v1582 = vld [vmem:[#allocation2 + $0x38] sm:$0xf]
        %v1583 = vld [vmem:[#allocation2 + $0x3c] sm:$0xf]
        %v1584 = vld [vmem:[#allocation2 + $0x40] sm:$0xf]
        %v1585 = vld [vmem:[#allocation2 + $0x44] sm:$0xf]
        %v1586 = vld [vmem:[#allocation2 + $0x48] sm:$0xf]
        %v1587 = vld [vmem:[#allocation2 + $0x4c] sm:$0xf]
        %v1588 = vld [vmem:[#allocation2 + $0x50] sm:$0xf]
        %v1589 = vld [vmem:[#allocation2 + $0x54] sm:$0xf]
        %v1590 = vld [vmem:[#allocation2 + $0x58] sm:$0xf]
        %v1591 = vld [vmem:[#allocation2 + $0x5c] sm:$0xf]
        %v1592 = vld [vmem:[#allocation2 + $0x60] sm:$0xf]
        %v1593 = vld [vmem:[#allocation2 + $0x64] sm:$0xf]
        %v1594 = vld [vmem:[#allocation2 + $0x68] sm:$0xf]
        %v1595 = vld [vmem:[#allocation2 + $0x6c] sm:$0xf]
        %v1596 = vld [vmem:[#allocation2 + $0x70] sm:$0xf]
        %v1597 = vld [vmem:[#allocation2 + $0x74] sm:$0xf]
        %v1598 = vld [vmem:[#allocation2 + $0x78] sm:$0xf]
        %v1599 = vld [vmem:[#allocation2 + $0x7c] sm:$0xf]
        %v1600 = vld [vmem:[#allocation2 + $0x80] sm:$0xf]
        %v1601 = vld [vmem:[#allocation2 + $0x84] sm:$0xf]
        %v1602 = vld [vmem:[#allocation2 + $0x88] sm:$0xf]
        %v1603 = vld [vmem:[#allocation2 + $0x8c] sm:$0xf]
        %v1604 = vld [vmem:[#allocation2 + $0x90] sm:$0xf]
        %v1605 = vld [vmem:[#allocation2 + $0x94] sm:$0xf]
        %v1606 = vld [vmem:[#allocation2 + $0x98] sm:$0xf]
        %v1607 = vld [vmem:[#allocation2 + $0x9c] sm:$0xf]
        %v1608 = vld [vmem:[#allocation2 + $0xa0] sm:$0xf]
        %v1609 = vld [vmem:[#allocation2 + $0xa4] sm:$0xf]
        %v1610 = vld [vmem:[#allocation2 + $0xa8] sm:$0xf]
        %v1611 = vld [vmem:[#allocation2 + $0xac] sm:$0xf]
        %v1612 = vld [vmem:[#allocation2 + $0xb0] sm:$0xf]
        %v1613 = vld [vmem:[#allocation2 + $0xb4] sm:$0xf]
        %v1614 = vld [vmem:[#allocation2 + $0xb8] sm:$0xf]
        %v1615 = vld [vmem:[#allocation2 + $0xbc] sm:$0xf]
        %v1616 = vld [vmem:[#allocation8] sm:$0xff]
        %v1617 = vld [vmem:[#allocation8 + $0x8] sm:$0xf]
        %v1618 = vld [vmem:[#allocation8 + $0xc] sm:$0xff]
        %v1619 = vld [vmem:[#allocation8 + $0x14] sm:$0xf]
        %v1620 = vld [vmem:[#allocation8 + $0x18] sm:$0xff]
        %v1621 = vld [vmem:[#allocation8 + $0x20] sm:$0xf]
        %v1622 = vld [vmem:[#allocation8 + $0x24] sm:$0xff]
        %v1623 = vld [vmem:[#allocation8 + $0x2c] sm:$0xf]
        %v1624 = vld [vmem:[#allocation8 + $0x30] sm:$0xff]
        %v1625 = vld [vmem:[#allocation8 + $0x38] sm:$0xf]
        %v1626 = vld [vmem:[#allocation8 + $0x3c] sm:$0xff]
        %v1627 = vld [vmem:[#allocation8 + $0x44] sm:$0xf]
        %v1628 = vld [vmem:[#allocation8 + $0x48] sm:$0xff]
        %v1629 = vld [vmem:[#allocation8 + $0x50] sm:$0xf]
        %v1630 = vld [vmem:[#allocation8 + $0x54] sm:$0xff]
        %v1631 = vld [vmem:[#allocation8 + $0x5c] sm:$0xf]
        %v1632 = vld [vmem:[#allocation8 + $0x60] sm:$0xff]
        %v1633 = vld [vmem:[#allocation8 + $0x68] sm:$0xf]
        %v1634 = vld [vmem:[#allocation8 + $0x6c] sm:$0xff]
        %v1635 = vld [vmem:[#allocation8 + $0x74] sm:$0xf]
        %v1636 = vld [vmem:[#allocation8 + $0x78] sm:$0xff]
        %v1637 = vld [vmem:[#allocation8 + $0x80] sm:$0xf]
        %v1638 = vld [vmem:[#allocation8 + $0x84] sm:$0xff]
        %v1639 = vld [vmem:[#allocation8 + $0x8c] sm:$0xf]
        %v1640 = vld [vmem:[#allocation8 + $0x90] sm:$0xff]
        %v1641 = vld [vmem:[#allocation8 + $0x98] sm:$0xf]
        %v1642 = vld [vmem:[#allocation8 + $0x9c] sm:$0xff]
        %v1643 = vld [vmem:[#allocation8 + $0xa4] sm:$0xf]
        %v1644 = vld [vmem:[#allocation8 + $0xa8] sm:$0xff]
        %v1645 = vld [vmem:[#allocation8 + $0xb0] sm:$0xf]
        %v1646 = vld [vmem:[#allocation8 + $0xb4] sm:$0xff]
        %v1647 = vld [vmem:[#allocation8 + $0xbc] sm:$0xf]
        %v1696 = vunpack.c.l.b16 %v1568
        %v1697 = vunpack.c.l.b16 %v1569
        %v1698 = vunpack.c.l.b16 %v1570
        %v1699 = vunpack.c.l.b16 %v1571
        %v1700 = vunpack.c.l.b16 %v1572
        %v1701 = vunpack.c.l.b16 %v1573
        %v1702 = vunpack.c.l.b16 %v1574
        %v1703 = vunpack.c.l.b16 %v1575
        %v1704 = vunpack.c.l.b16 %v1576
        %v1705 = vunpack.c.l.b16 %v1577
        %v1706 = vunpack.c.l.b16 %v1578
        %v1707 = vunpack.c.l.b16 %v1579
        %v1708 = vunpack.c.l.b16 %v1580
        %v1709 = vunpack.c.l.b16 %v1581
        %v1710 = vunpack.c.l.b16 %v1582
        %v1711 = vunpack.c.l.b16 %v1583
        %v1712 = vunpack.c.l.b16 %v1584
        %v1713 = vunpack.c.l.b16 %v1585
        %v1714 = vunpack.c.l.b16 %v1586
        %v1715 = vunpack.c.l.b16 %v1587
        %v1716 = vunpack.c.l.b16 %v1588
        %v1717 = vunpack.c.l.b16 %v1589
        %v1718 = vunpack.c.l.b16 %v1590
        %v1719 = vunpack.c.l.b16 %v1591
        %v1720 = vunpack.c.l.b16 %v1592
        %v1721 = vunpack.c.l.b16 %v1593
        %v1722 = vunpack.c.l.b16 %v1594
        %v1723 = vunpack.c.l.b16 %v1595
        %v1724 = vunpack.c.l.b16 %v1596
        %v1725 = vunpack.c.l.b16 %v1597
        %v1726 = vunpack.c.l.b16 %v1598
        %v1727 = vunpack.c.l.b16 %v1599
        %v1728 = vunpack.c.l.b16 %v1600
        %v1729 = vunpack.c.l.b16 %v1601
        %v1730 = vunpack.c.l.b16 %v1602
        %v1731 = vunpack.c.l.b16 %v1603
        %v1732 = vunpack.c.l.b16 %v1604
        %v1733 = vunpack.c.l.b16 %v1605
        %v1734 = vunpack.c.l.b16 %v1606
        %v1735 = vunpack.c.l.b16 %v1607
        %v1736 = vunpack.c.l.b16 %v1608
        %v1737 = vunpack.c.l.b16 %v1609
        %v1738 = vunpack.c.l.b16 %v1610
        %v1739 = vunpack.c.l.b16 %v1611
        %v1740 = vunpack.c.l.b16 %v1612
        %v1741 = vunpack.c.l.b16 %v1613
        %v1742 = vunpack.c.l.b16 %v1614
        %v1743 = vunpack.c.l.b16 %v1615
        %v1744 = vpack.c.b16 %v1697, %v1696
        %v1745 = vpack.c.b16 %v1699, %v1698
        %v1746 = vpack.c.b16 %v1701, %v1700
        %v1747 = vpack.c.b16 %v1703, %v1702
        %v1748 = vpack.c.b16 %v1705, %v1704
        %v1749 = vpack.c.b16 %v1707, %v1706
        %v1750 = vpack.c.b16 %v1709, %v1708
        %v1751 = vpack.c.b16 %v1711, %v1710
        %v1752 = vpack.c.b16 %v1713, %v1712
        %v1753 = vpack.c.b16 %v1715, %v1714
        %v1754 = vpack.c.b16 %v1717, %v1716
        %v1755 = vpack.c.b16 %v1719, %v1718
        %v1756 = vpack.c.b16 %v1721, %v1720
        %v1757 = vpack.c.b16 %v1723, %v1722
        %v1758 = vpack.c.b16 %v1725, %v1724
        %v1759 = vpack.c.b16 %v1727, %v1726
        %v1760 = vpack.c.b16 %v1729, %v1728
        %v1761 = vpack.c.b16 %v1731, %v1730
        %v1762 = vpack.c.b16 %v1733, %v1732
        %v1763 = vpack.c.b16 %v1735, %v1734
        %v1764 = vpack.c.b16 %v1737, %v1736
        %v1765 = vpack.c.b16 %v1739, %v1738
        %v1766 = vpack.c.b16 %v1741, %v1740
        %v1767 = vpack.c.b16 %v1743, %v1742
        %v1824 = vunpack.c.l.b16 %v1616
        %v1825 = vunpack.c.h.b16 %v1616
        %v1826 = vunpack.c.l.b16 %v1617
        %v1827 = vunpack.c.l.b16 %v1618
        %v1828 = vunpack.c.h.b16 %v1618
        %v1829 = vunpack.c.l.b16 %v1619
        %v1830 = vunpack.c.l.b16 %v1620
        %v1831 = vunpack.c.h.b16 %v1620
        %v1832 = vunpack.c.l.b16 %v1621
        %v1833 = vunpack.c.l.b16 %v1622
        %v1834 = vunpack.c.h.b16 %v1622
        %v1835 = vunpack.c.l.b16 %v1623
        %v1836 = vunpack.c.l.b16 %v1624
        %v1837 = vunpack.c.h.b16 %v1624
        %v1838 = vunpack.c.l.b16 %v1625
        %v1839 = vunpack.c.l.b16 %v1626
        %v1840 = vunpack.c.h.b16 %v1626
        %v1841 = vunpack.c.l.b16 %v1627
        %v1842 = vunpack.c.l.b16 %v1628
        %v1843 = vunpack.c.h.b16 %v1628
        %v1844 = vunpack.c.l.b16 %v1629
        %v1845 = vunpack.c.l.b16 %v1630
        %v1846 = vunpack.c.h.b16 %v1630
        %v1847 = vunpack.c.l.b16 %v1631
        %v1848 = vunpack.c.l.b16 %v1632
        %v1849 = vunpack.c.h.b16 %v1632
        %v1850 = vunpack.c.l.b16 %v1633
        %v1851 = vunpack.c.l.b16 %v1634
        %v1852 = vunpack.c.h.b16 %v1634
        %v1853 = vunpack.c.l.b16 %v1635
        %v1854 = vunpack.c.l.b16 %v1636
        %v1855 = vunpack.c.h.b16 %v1636
        %v1856 = vunpack.c.l.b16 %v1637
        %v1857 = vunpack.c.l.b16 %v1638
        %v1858 = vunpack.c.h.b16 %v1638
        %v1859 = vunpack.c.l.b16 %v1639
        %v1860 = vunpack.c.l.b16 %v1640
        %v1861 = vunpack.c.h.b16 %v1640
        %v1862 = vunpack.c.l.b16 %v1641
        %v1863 = vunpack.c.l.b16 %v1642
        %v1864 = vunpack.c.h.b16 %v1642
        %v1865 = vunpack.c.l.b16 %v1643
        %v1866 = vunpack.c.l.b16 %v1644
        %v1867 = vunpack.c.h.b16 %v1644
        %v1868 = vunpack.c.l.b16 %v1645
        %v1869 = vunpack.c.l.b16 %v1646
        %v1870 = vunpack.c.h.b16 %v1646
        %v1871 = vunpack.c.l.b16 %v1647
        %v1872 = vpack.c.b16 %v1827, %v1824
        %v1873 = vpack.c.b16 %v1828, %v1825
        %v1874 = vpack.c.b16 %v1829, %v1826
        %v1875 = vpack.c.b16 %v1833, %v1830
        %v1876 = vpack.c.b16 %v1834, %v1831
        %v1877 = vpack.c.b16 %v1835, %v1832
        %v1878 = vpack.c.b16 %v1839, %v1836
        %v1879 = vpack.c.b16 %v1840, %v1837
        %v1880 = vpack.c.b16 %v1841, %v1838
        %v1881 = vpack.c.b16 %v1845, %v1842
        %v1882 = vpack.c.b16 %v1846, %v1843
        %v1883 = vpack.c.b16 %v1847, %v1844
        %v1884 = vpack.c.b16 %v1851, %v1848
        %v1885 = vpack.c.b16 %v1852, %v1849
        %v1886 = vpack.c.b16 %v1853, %v1850
        %v1887 = vpack.c.b16 %v1857, %v1854
        %v1888 = vpack.c.b16 %v1858, %v1855
        %v1889 = vpack.c.b16 %v1859, %v1856
        %v1890 = vpack.c.b16 %v1863, %v1860
        %v1891 = vpack.c.b16 %v1864, %v1861
        %v1892 = vpack.c.b16 %v1865, %v1862
        %v1893 = vpack.c.b16 %v1869, %v1866
        %v1894 = vpack.c.b16 %v1870, %v1867
        %v1895 = vpack.c.b16 %v1871, %v1868
        %1920 = vmatprep.subr.bf16.mxu0 %v1894
        %1921 = vmatpush1.bf16.msra.mxu0 %v1893
        %1922 = vmatprep.subr.bf16.mxu0 %v1891
        %1923 = vmatpush1.bf16.msra.mxu0 %v1890
        %1924 = vmatprep.subr.bf16.mxu0 %v1888
        %1925 = vmatpush1.bf16.msra.mxu0 %v1887
        %1926 = vmatprep.subr.bf16.mxu0 %v1885
        %1927 = vmatpush1.bf16.msra.mxu0 %v1884
        %1928 = vmatprep.subr.bf16.mxu0 %v1882
        %1929 = vmatpush1.bf16.msra.mxu0 %v1881
        %1930 = vmatprep.subr.bf16.mxu0 %v1879
        %1931 = vmatpush1.bf16.msra.mxu0 %v1878
        %1932 = vmatprep.subr.bf16.mxu0 %v1876
        %1933 = vmatpush1.bf16.msra.mxu0 %v1875
        %1934 = vmatprep.subr.bf16.mxu0 %v1873
        %1935 = vmatpush1.bf16.msra.mxu0 %v1872
        %1936 = vmatprep.subr.bf16.mxu0 0
        %1937 = vmatpush2.bf16.msra.mxu0 0
        %1938 = vmatprep.subr.bf16.mxu0 0
        %1939 = vmatpush2.bf16.msra.mxu0 0
        %1940 = vmatprep.subr.bf16.mxu0 0
        %1941 = vmatpush2.bf16.msra.mxu0 0
        %1942 = vmatprep.subr.bf16.mxu0 0
        %1943 = vmatpush2.bf16.msra.mxu0 0
        %1944 = vmatprep.subr.bf16.mxu0 0
        %1945 = vmatpush2.bf16.msra.mxu0 0
        %1946 = vmatprep.subr.bf16.mxu0 0
        %1947 = vmatpush2.bf16.msra.mxu0 0
        %1948 = vmatprep.subr.bf16.mxu0 0
        %1949 = vmatpush2.bf16.msra.mxu0 0
        %1950 = vmatprep.subr.bf16.mxu0 0
        %1951 = vmatpush2.bf16.msra.mxu0 0
        %1952 = vmatprep.mubr.bf16.mxu0 0
        %1953 = vmatmul.mubr.bf16.gmra.mxu0 %v1744
        %v1954 = vpop.f32.mrf.mxu0
        %v1955 = vadd.f32 0.0, %v1954
        %v1956 = vpop.f32.mrf.mxu0
        %v1957 = vadd.f32 0.0, %v1956
        %v1958 = vpop.f32.mrf.mxu0
        %v1959 = vadd.f32 0.0, %v1958
        %v1960 = vpop.f32.mrf.mxu0
        %v1961 = vadd.f32 0.0, %v1960
        %1962 = vmatprep.mubr.bf16.mxu0 0
        %1963 = vmatmul.mubr.bf16.gmra.mxu0 %v1745
        %v1964 = vpop.f32.mrf.mxu0
        %v1965 = vpop.f32.mrf.mxu0
        %v1966 = vadd.f32 0.0, %v1965
        %v1967 = vpop.f32.mrf.mxu0
        %v1968 = vadd.f32 0.0, %v1967
        %v1969 = vpop.f32.mrf.mxu0
        %v1970 = vadd.f32 0.0, %v1969
        %1971 = vmatprep.mubr.bf16.mxu0 0
        %1972 = vmatmul.mubr.bf16.gmra.mxu0 %v1746
        %v1973 = vpop.f32.mrf.mxu0
        %v1974 = vadd.f32 0.0, %v1973
        %v1975 = vpop.f32.mrf.mxu0
        %v1976 = vadd.f32 0.0, %v1975
        %v1977 = vpop.f32.mrf.mxu0
        %v1978 = vpop.f32.mrf.mxu0
        %v1979 = vadd.f32 0.0, %v1978
        %1980 = vmatprep.mubr.bf16.mxu0 0
        %1981 = vmatmul.mubr.bf16.gmra.mxu0 %v1747
        %v1982 = vpop.f32.mrf.mxu0
        %v1983 = vadd.f32 0.0, %v1982
        %v1984 = vpop.f32.mrf.mxu0
        %v1985 = vadd.f32 0.0, %v1984
        %v1986 = vpop.f32.mrf.mxu0
        %v1987 = vadd.f32 0.0, %v1986
        %v1988 = vpop.f32.mrf.mxu0
        %v1989 = vadd.f32 0.0, %v1988
        %1990 = vmatprep.mubr.bf16.mxu0 0
        %1991 = vmatmul.mubr.bf16.gmra.mxu0 %v1748
        %v1992 = vpop.f32.mrf.mxu0
        %v1993 = vpop.f32.mrf.mxu0
        %v1994 = vadd.f32 0.0, %v1993
        %v1995 = vpop.f32.mrf.mxu0
        %v1996 = vadd.f32 0.0, %v1995
        %v1997 = vpop.f32.mrf.mxu0
        %v1998 = vadd.f32 0.0, %v1997
        %1999 = vmatprep.mubr.bf16.mxu0 0
        %2000 = vmatmul.mubr.bf16.gmra.mxu0 %v1749
        %v2001 = vpop.f32.mrf.mxu0
        %v2002 = vadd.f32 0.0, %v2001
        %v2003 = vpop.f32.mrf.mxu0
        %v2004 = vadd.f32 0.0, %v2003
        %v2005 = vpop.f32.mrf.mxu0
        %v2006 = vpop.f32.mrf.mxu0
        %v2007 = vadd.f32 0.0, %v2006
        %2008 = vmatprep.mubr.bf16.mxu0 0
        %2009 = vmatmul.mubr.bf16.gmra.mxu0 %v1750
        %v2010 = vpop.f32.mrf.mxu0
        %v2011 = vadd.f32 0.0, %v2010
        %v2012 = vpop.f32.mrf.mxu0
        %v2013 = vadd.f32 0.0, %v2012
        %v2014 = vpop.f32.mrf.mxu0
        %v2015 = vadd.f32 0.0, %v2014
        %v2016 = vpop.f32.mrf.mxu0
        %v2017 = vadd.f32 0.0, %v2016
        %2018 = vmatprep.mubr.bf16.mxu0 0
        %2019 = vmatmul.mubr.bf16.gmra.mxu0 %v1751
        %v2020 = vpop.f32.mrf.mxu0
        %v2021 = vpop.f32.mrf.mxu0
        %v2022 = vadd.f32 0.0, %v2021
        %v2023 = vpop.f32.mrf.mxu0
        %v2024 = vadd.f32 0.0, %v2023
        %v2025 = vpop.f32.mrf.mxu0
        %v2026 = vadd.f32 0.0, %v2025
        %2027 = vmatprep.mubr.bf16.mxu0 0
        %2028 = vmatmul.mubr.bf16.gmra.mxu0 %v1752
        %v2029 = vpop.f32.mrf.mxu0
        %v2030 = vadd.f32 0.0, %v2029
        %v2031 = vpop.f32.mrf.mxu0
        %v2032 = vadd.f32 0.0, %v2031
        %v2033 = vpop.f32.mrf.mxu0
        %v2034 = vpop.f32.mrf.mxu0
        %v2035 = vadd.f32 0.0, %v2034
        %2036 = vmatprep.mubr.bf16.mxu0 0
        %2037 = vmatmul.mubr.bf16.gmra.mxu0 %v1753
        %v2038 = vpop.f32.mrf.mxu0
        %v2039 = vadd.f32 0.0, %v2038
        %v2040 = vpop.f32.mrf.mxu0
        %v2041 = vadd.f32 0.0, %v2040
        %v2042 = vpop.f32.mrf.mxu0
        %v2043 = vadd.f32 0.0, %v2042
        %v2044 = vpop.f32.mrf.mxu0
        %v2045 = vadd.f32 0.0, %v2044
        %2046 = vmatprep.mubr.bf16.mxu0 0
        %2047 = vmatmul.mubr.bf16.gmra.mxu0 %v1754
        %v2048 = vpop.f32.mrf.mxu0
        %v2049 = vpop.f32.mrf.mxu0
        %v2050 = vadd.f32 0.0, %v2049
        %v2051 = vpop.f32.mrf.mxu0
        %v2052 = vadd.f32 0.0, %v2051
        %v2053 = vpop.f32.mrf.mxu0
        %v2054 = vadd.f32 0.0, %v2053
        %2055 = vmatprep.mubr.bf16.mxu0 0
        %2056 = vmatmul.mubr.bf16.gmra.mxu0 %v1755
        %v2057 = vpop.f32.mrf.mxu0
        %v2058 = vadd.f32 0.0, %v2057
        %v2059 = vpop.f32.mrf.mxu0
        %v2060 = vadd.f32 0.0, %v2059
        %v2061 = vpop.f32.mrf.mxu0
        %v2062 = vpop.f32.mrf.mxu0
        %v2063 = vadd.f32 0.0, %v2062
        %2064 = vmatprep.mubr.bf16.mxu0 0
        %2065 = vmatmul.mubr.bf16.gmra.mxu0 %v1756
        %v2066 = vpop.f32.mrf.mxu0
        %v2067 = vadd.f32 0.0, %v2066
        %v2068 = vpop.f32.mrf.mxu0
        %v2069 = vadd.f32 0.0, %v2068
        %v2070 = vpop.f32.mrf.mxu0
        %v2071 = vadd.f32 0.0, %v2070
        %v2072 = vpop.f32.mrf.mxu0
        %v2073 = vadd.f32 0.0, %v2072
        %2074 = vmatprep.mubr.bf16.mxu0 0
        %2075 = vmatmul.mubr.bf16.gmra.mxu0 %v1757
        %v2076 = vpop.f32.mrf.mxu0
        %v2077 = vpop.f32.mrf.mxu0
        %v2078 = vadd.f32 0.0, %v2077
        %v2079 = vpop.f32.mrf.mxu0
        %v2080 = vadd.f32 0.0, %v2079
        %v2081 = vpop.f32.mrf.mxu0
        %v2082 = vadd.f32 0.0, %v2081
        %2083 = vmatprep.mubr.bf16.mxu0 0
        %2084 = vmatmul.mubr.bf16.gmra.mxu0 %v1758
        %v2085 = vpop.f32.mrf.mxu0
        %v2086 = vadd.f32 0.0, %v2085
        %v2087 = vpop.f32.mrf.mxu0
        %v2088 = vadd.f32 0.0, %v2087
        %v2089 = vpop.f32.mrf.mxu0
        %v2090 = vpop.f32.mrf.mxu0
        %v2091 = vadd.f32 0.0, %v2090
        %2092 = vmatprep.mubr.bf16.mxu0 0
        %2093 = vmatmul.mubr.bf16.gmra.mxu0 %v1759
        %v2094 = vpop.f32.mrf.mxu0
        %v2095 = vadd.f32 0.0, %v2094
        %v2096 = vpop.f32.mrf.mxu0
        %v2097 = vadd.f32 0.0, %v2096
        %v2098 = vpop.f32.mrf.mxu0
        %v2099 = vadd.f32 0.0, %v2098
        %v2100 = vpop.f32.mrf.mxu0
        %v2101 = vadd.f32 0.0, %v2100
        %2102 = vmatprep.mubr.bf16.mxu0 0
        %2103 = vmatmul.mubr.bf16.gmra.mxu0 %v1760
        %v2104 = vpop.f32.mrf.mxu0
        %v2105 = vpop.f32.mrf.mxu0
        %v2106 = vadd.f32 0.0, %v2105
        %v2107 = vpop.f32.mrf.mxu0
        %v2108 = vadd.f32 0.0, %v2107
        %v2109 = vpop.f32.mrf.mxu0
        %v2110 = vadd.f32 0.0, %v2109
        %2111 = vmatprep.mubr.bf16.mxu0 0
        %2112 = vmatmul.mubr.bf16.gmra.mxu0 %v1761
        %v2113 = vpop.f32.mrf.mxu0
        %v2114 = vadd.f32 0.0, %v2113
        %v2115 = vpop.f32.mrf.mxu0
        %v2116 = vadd.f32 0.0, %v2115
        %v2117 = vpop.f32.mrf.mxu0
        %v2118 = vpop.f32.mrf.mxu0
        %v2119 = vadd.f32 0.0, %v2118
        %2120 = vmatprep.mubr.bf16.mxu0 0
        %2121 = vmatmul.mubr.bf16.gmra.mxu0 %v1762
        %v2122 = vpop.f32.mrf.mxu0
        %v2123 = vadd.f32 0.0, %v2122
        %v2124 = vpop.f32.mrf.mxu0
        %v2125 = vadd.f32 0.0, %v2124
        %v2126 = vpop.f32.mrf.mxu0
        %v2127 = vadd.f32 0.0, %v2126
        %v2128 = vpop.f32.mrf.mxu0
        %v2129 = vadd.f32 0.0, %v2128
        %2130 = vmatprep.mubr.bf16.mxu0 0
        %2131 = vmatmul.mubr.bf16.gmra.mxu0 %v1763
        %v2132 = vpop.f32.mrf.mxu0
        %v2133 = vpop.f32.mrf.mxu0
        %v2134 = vadd.f32 0.0, %v2133
        %v2135 = vpop.f32.mrf.mxu0
        %v2136 = vadd.f32 0.0, %v2135
        %v2137 = vpop.f32.mrf.mxu0
        %v2138 = vadd.f32 0.0, %v2137
        %2139 = vmatprep.mubr.bf16.mxu0 0
        %2140 = vmatmul.mubr.bf16.gmra.mxu0 %v1764
        %v2141 = vpop.f32.mrf.mxu0
        %v2142 = vadd.f32 0.0, %v2141
        %v2143 = vpop.f32.mrf.mxu0
        %v2144 = vadd.f32 0.0, %v2143
        %v2145 = vpop.f32.mrf.mxu0
        %v2146 = vpop.f32.mrf.mxu0
        %v2147 = vadd.f32 0.0, %v2146
        %2148 = vmatprep.mubr.bf16.mxu0 0
        %2149 = vmatmul.mubr.bf16.gmra.mxu0 %v1765
        %v2150 = vpop.f32.mrf.mxu0
        %v2151 = vadd.f32 0.0, %v2150
        %v2152 = vpop.f32.mrf.mxu0
        %v2153 = vadd.f32 0.0, %v2152
        %v2154 = vpop.f32.mrf.mxu0
        %v2155 = vadd.f32 0.0, %v2154
        %v2156 = vpop.f32.mrf.mxu0
        %v2157 = vadd.f32 0.0, %v2156
        %2158 = vmatprep.mubr.bf16.mxu0 0
        %2159 = vmatmul.mubr.bf16.gmra.mxu0 %v1766
        %v2160 = vpop.f32.mrf.mxu0
        %v2161 = vpop.f32.mrf.mxu0
        %v2162 = vadd.f32 0.0, %v2161
        %v2163 = vpop.f32.mrf.mxu0
        %v2164 = vadd.f32 0.0, %v2163
        %v2165 = vpop.f32.mrf.mxu0
        %v2166 = vadd.f32 0.0, %v2165
        %2167 = vmatprep.mubr.bf16.mxu0 0
        %2168 = vmatmul.mubr.bf16.gmra.mxu0 %v1767
        %v2169 = vpop.f32.mrf.mxu0
        %v2170 = vadd.f32 0.0, %v2169
        %v2171 = vpop.f32.mrf.mxu0
        %v2172 = vadd.f32 0.0, %v2171
        %v2173 = vpop.f32.mrf.mxu0
        %v2174 = vpop.f32.mrf.mxu0
        %v2175 = vadd.f32 0.0, %v2174
        %2176 = vdwg.mxu0
        %2177 = vmatprep.subr.bf16.mxu0 0
        %2178 = vmatpush1.bf16.msra.mxu0 %v1895
        %2179 = vmatprep.subr.bf16.mxu0 0
        %2180 = vmatpush1.bf16.msra.mxu0 %v1892
        %2181 = vmatprep.subr.bf16.mxu0 0
        %2182 = vmatpush1.bf16.msra.mxu0 %v1889
        %2183 = vmatprep.subr.bf16.mxu0 0
        %2184 = vmatpush1.bf16.msra.mxu0 %v1886
        %2185 = vmatprep.subr.bf16.mxu0 0
        %2186 = vmatpush1.bf16.msra.mxu0 %v1883
        %2187 = vmatprep.subr.bf16.mxu0 0
        %2188 = vmatpush1.bf16.msra.mxu0 %v1880
        %2189 = vmatprep.subr.bf16.mxu0 0
        %2190 = vmatpush1.bf16.msra.mxu0 %v1877
        %2191 = vmatprep.subr.bf16.mxu0 0
        %2192 = vmatpush1.bf16.msra.mxu0 %v1874
        %2193 = vmatprep.subr.bf16.mxu0 0
        %2194 = vmatpush2.bf16.msra.mxu0 0
        %2195 = vmatprep.subr.bf16.mxu0 0
        %2196 = vmatpush2.bf16.msra.mxu0 0
        %2197 = vmatprep.subr.bf16.mxu0 0
        %2198 = vmatpush2.bf16.msra.mxu0 0
        %2199 = vmatprep.subr.bf16.mxu0 0
        %2200 = vmatpush2.bf16.msra.mxu0 0
        %2201 = vmatprep.subr.bf16.mxu0 0
        %2202 = vmatpush2.bf16.msra.mxu0 0
        %2203 = vmatprep.subr.bf16.mxu0 0
        %2204 = vmatpush2.bf16.msra.mxu0 0
        %2205 = vmatprep.subr.bf16.mxu0 0
        %2206 = vmatpush2.bf16.msra.mxu0 0
        %2207 = vmatprep.subr.bf16.mxu0 0
        %2208 = vmatpush2.bf16.msra.mxu0 0
        %2209 = vmatprep.mubr.bf16.mxu0 0
        %2210 = vmatmul.mubr.bf16.gmra.mxu0 %v1744
        %v2211 = vpop.f32.mrf.mxu0
        %v2212 = vadd.f32 0.0, %v2211
        %v2213 = vpop.f32.mrf.mxu0
        %v2214 = vpop.f32.mrf.mxu0
        %v2215 = vadd.f32 0.0, %v2214
        %v2216 = vpop.f32.mrf.mxu0
        %2217 = vmatprep.mubr.bf16.mxu0 0
        %2218 = vmatmul.mubr.bf16.gmra.mxu0 %v1745
        %v2219 = vpop.f32.mrf.mxu0
        %v2220 = vadd.f32 0.0, %v2219
        %v2221 = vpop.f32.mrf.mxu0
        %v2222 = vpop.f32.mrf.mxu0
        %v2223 = vadd.f32 0.0, %v2222
        %v2224 = vpop.f32.mrf.mxu0
        %2225 = vmatprep.mubr.bf16.mxu0 0
        %2226 = vmatmul.mubr.bf16.gmra.mxu0 %v1746
        %v2227 = vpop.f32.mrf.mxu0
        %v2228 = vadd.f32 0.0, %v2227
        %v2229 = vpop.f32.mrf.mxu0
        %v2230 = vpop.f32.mrf.mxu0
        %v2231 = vadd.f32 0.0, %v2230
        %v2232 = vpop.f32.mrf.mxu0
        %2233 = vmatprep.mubr.bf16.mxu0 0
        %2234 = vmatmul.mubr.bf16.gmra.mxu0 %v1747
        %v2235 = vpop.f32.mrf.mxu0
        %v2236 = vadd.f32 0.0, %v2235
        %v2237 = vpop.f32.mrf.mxu0
        %v2238 = vpop.f32.mrf.mxu0
        %v2239 = vadd.f32 0.0, %v2238
        %v2240 = vpop.f32.mrf.mxu0
        %2241 = vmatprep.mubr.bf16.mxu0 0
        %2242 = vmatmul.mubr.bf16.gmra.mxu0 %v1748
        %v2243 = vpop.f32.mrf.mxu0
        %v2244 = vadd.f32 0.0, %v2243
        %v2245 = vpop.f32.mrf.mxu0
        %v2246 = vpop.f32.mrf.mxu0
        %v2247 = vadd.f32 0.0, %v2246
        %v2248 = vpop.f32.mrf.mxu0
        %2249 = vmatprep.mubr.bf16.mxu0 0
        %2250 = vmatmul.mubr.bf16.gmra.mxu0 %v1749
        %v2251 = vpop.f32.mrf.mxu0
        %v2252 = vadd.f32 0.0, %v2251
        %v2253 = vpop.f32.mrf.mxu0
        %v2254 = vpop.f32.mrf.mxu0
        %v2255 = vadd.f32 0.0, %v2254
        %v2256 = vpop.f32.mrf.mxu0
        %2257 = vmatprep.mubr.bf16.mxu0 0
        %2258 = vmatmul.mubr.bf16.gmra.mxu0 %v1750
        %v2259 = vpop.f32.mrf.mxu0
        %v2260 = vadd.f32 0.0, %v2259
        %v2261 = vpop.f32.mrf.mxu0
        %v2262 = vpop.f32.mrf.mxu0
        %v2263 = vadd.f32 0.0, %v2262
        %v2264 = vpop.f32.mrf.mxu0
        %2265 = vmatprep.mubr.bf16.mxu0 0
        %2266 = vmatmul.mubr.bf16.gmra.mxu0 %v1751
        %v2267 = vpop.f32.mrf.mxu0
        %v2268 = vadd.f32 0.0, %v2267
        %v2269 = vpop.f32.mrf.mxu0
        %v2270 = vpop.f32.mrf.mxu0
        %v2271 = vadd.f32 0.0, %v2270
        %v2272 = vpop.f32.mrf.mxu0
        %2273 = vmatprep.mubr.bf16.mxu0 0
        %2274 = vmatmul.mubr.bf16.gmra.mxu0 %v1752
        %v2275 = vpop.f32.mrf.mxu0
        %v2276 = vadd.f32 0.0, %v2275
        %v2277 = vpop.f32.mrf.mxu0
        %v2278 = vpop.f32.mrf.mxu0
        %v2279 = vadd.f32 0.0, %v2278
        %v2280 = vpop.f32.mrf.mxu0
        %2281 = vmatprep.mubr.bf16.mxu0 0
        %2282 = vmatmul.mubr.bf16.gmra.mxu0 %v1753
        %v2283 = vpop.f32.mrf.mxu0
        %v2284 = vadd.f32 0.0, %v2283
        %v2285 = vpop.f32.mrf.mxu0
        %v2286 = vpop.f32.mrf.mxu0
        %v2287 = vadd.f32 0.0, %v2286
        %v2288 = vpop.f32.mrf.mxu0
        %2289 = vmatprep.mubr.bf16.mxu0 0
        %2290 = vmatmul.mubr.bf16.gmra.mxu0 %v1754
        %v2291 = vpop.f32.mrf.mxu0
        %v2292 = vadd.f32 0.0, %v2291
        %v2293 = vpop.f32.mrf.mxu0
        %v2294 = vpop.f32.mrf.mxu0
        %v2295 = vadd.f32 0.0, %v2294
        %v2296 = vpop.f32.mrf.mxu0
        %2297 = vmatprep.mubr.bf16.mxu0 0
        %2298 = vmatmul.mubr.bf16.gmra.mxu0 %v1755
        %v2299 = vpop.f32.mrf.mxu0
        %v2300 = vadd.f32 0.0, %v2299
        %v2301 = vpop.f32.mrf.mxu0
        %v2302 = vpop.f32.mrf.mxu0
        %v2303 = vadd.f32 0.0, %v2302
        %v2304 = vpop.f32.mrf.mxu0
        %2305 = vmatprep.mubr.bf16.mxu0 0
        %2306 = vmatmul.mubr.bf16.gmra.mxu0 %v1756
        %v2307 = vpop.f32.mrf.mxu0
        %v2308 = vadd.f32 0.0, %v2307
        %v2309 = vpop.f32.mrf.mxu0
        %v2310 = vpop.f32.mrf.mxu0
        %v2311 = vadd.f32 0.0, %v2310
        %v2312 = vpop.f32.mrf.mxu0
        %2313 = vmatprep.mubr.bf16.mxu0 0
        %2314 = vmatmul.mubr.bf16.gmra.mxu0 %v1757
        %v2315 = vpop.f32.mrf.mxu0
        %v2316 = vadd.f32 0.0, %v2315
        %v2317 = vpop.f32.mrf.mxu0
        %v2318 = vpop.f32.mrf.mxu0
        %v2319 = vadd.f32 0.0, %v2318
        %v2320 = vpop.f32.mrf.mxu0
        %2321 = vmatprep.mubr.bf16.mxu0 0
        %2322 = vmatmul.mubr.bf16.gmra.mxu0 %v1758
        %v2323 = vpop.f32.mrf.mxu0
        %v2324 = vadd.f32 0.0, %v2323
        %v2325 = vpop.f32.mrf.mxu0
        %v2326 = vpop.f32.mrf.mxu0
        %v2327 = vadd.f32 0.0, %v2326
        %v2328 = vpop.f32.mrf.mxu0
        %2329 = vmatprep.mubr.bf16.mxu0 0
        %2330 = vmatmul.mubr.bf16.gmra.mxu0 %v1759
        %v2331 = vpop.f32.mrf.mxu0
        %v2332 = vadd.f32 0.0, %v2331
        %v2333 = vpop.f32.mrf.mxu0
        %v2334 = vpop.f32.mrf.mxu0
        %v2335 = vadd.f32 0.0, %v2334
        %v2336 = vpop.f32.mrf.mxu0
        %2337 = vmatprep.mubr.bf16.mxu0 0
        %2338 = vmatmul.mubr.bf16.gmra.mxu0 %v1760
        %v2339 = vpop.f32.mrf.mxu0
        %v2340 = vadd.f32 0.0, %v2339
        %v2341 = vpop.f32.mrf.mxu0
        %v2342 = vpop.f32.mrf.mxu0
        %v2343 = vadd.f32 0.0, %v2342
        %v2344 = vpop.f32.mrf.mxu0
        %2345 = vmatprep.mubr.bf16.mxu0 0
        %2346 = vmatmul.mubr.bf16.gmra.mxu0 %v1761
        %v2347 = vpop.f32.mrf.mxu0
        %v2348 = vadd.f32 0.0, %v2347
        %v2349 = vpop.f32.mrf.mxu0
        %v2350 = vpop.f32.mrf.mxu0
        %v2351 = vadd.f32 0.0, %v2350
        %v2352 = vpop.f32.mrf.mxu0
        %2353 = vmatprep.mubr.bf16.mxu0 0
        %2354 = vmatmul.mubr.bf16.gmra.mxu0 %v1762
        %v2355 = vpop.f32.mrf.mxu0
        %v2356 = vadd.f32 0.0, %v2355
        %v2357 = vpop.f32.mrf.mxu0
        %v2358 = vpop.f32.mrf.mxu0
        %v2359 = vadd.f32 0.0, %v2358
        %v2360 = vpop.f32.mrf.mxu0
        %2361 = vmatprep.mubr.bf16.mxu0 0
        %2362 = vmatmul.mubr.bf16.gmra.mxu0 %v1763
        %v2363 = vpop.f32.mrf.mxu0
        %v2364 = vadd.f32 0.0, %v2363
        %v2365 = vpop.f32.mrf.mxu0
        %v2366 = vpop.f32.mrf.mxu0
        %v2367 = vadd.f32 0.0, %v2366
        %v2368 = vpop.f32.mrf.mxu0
        %2369 = vmatprep.mubr.bf16.mxu0 0
        %2370 = vmatmul.mubr.bf16.gmra.mxu0 %v1764
        %v2371 = vpop.f32.mrf.mxu0
        %v2372 = vadd.f32 0.0, %v2371
        %v2373 = vpop.f32.mrf.mxu0
        %v2374 = vpop.f32.mrf.mxu0
        %v2375 = vadd.f32 0.0, %v2374
        %v2376 = vpop.f32.mrf.mxu0
        %2377 = vmatprep.mubr.bf16.mxu0 0
        %2378 = vmatmul.mubr.bf16.gmra.mxu0 %v1765
        %v2379 = vpop.f32.mrf.mxu0
        %v2380 = vadd.f32 0.0, %v2379
        %v2381 = vpop.f32.mrf.mxu0
        %v2382 = vpop.f32.mrf.mxu0
        %v2383 = vadd.f32 0.0, %v2382
        %v2384 = vpop.f32.mrf.mxu0
        %2385 = vmatprep.mubr.bf16.mxu0 0
        %2386 = vmatmul.mubr.bf16.gmra.mxu0 %v1766
        %v2387 = vpop.f32.mrf.mxu0
        %v2388 = vadd.f32 0.0, %v2387
        %v2389 = vpop.f32.mrf.mxu0
        %v2390 = vpop.f32.mrf.mxu0
        %v2391 = vadd.f32 0.0, %v2390
        %v2392 = vpop.f32.mrf.mxu0
        %2393 = vmatprep.mubr.bf16.mxu0 0
        %2394 = vmatmul.mubr.bf16.gmra.mxu0 %v1767
        %v2395 = vpop.f32.mrf.mxu0
        %v2396 = vadd.f32 0.0, %v2395
        %v2397 = vpop.f32.mrf.mxu0
        %v2398 = vpop.f32.mrf.mxu0
        %v2399 = vadd.f32 0.0, %v2398
        %v2400 = vpop.f32.mrf.mxu0
        %2401 = vdwg.mxu0
        %vm2450 = vcmask 1046528
        %v2451 = vrot.slane %v1957, 1
        %v2452 = vrot.slane %v1961, 1
        %v2453 = vsel %vm2450, %v2451, %v2452
        %v2454 = vrot.slane %v1966, 1
        %v2455 = vsel %vm2450, %v2452, %v2454
        %v2456 = vrot.slane %v1970, 1
        %v2457 = vrot.slane %v1976, 1
        %v2458 = vsel %vm2450, %v2456, %v2457
        %v2459 = vrot.slane %v1979, 1
        %v2460 = vsel %vm2450, %v2457, %v2459
        %v2461 = vrot.slane %v1985, 1
        %v2462 = vrot.slane %v1989, 1
        %v2463 = vsel %vm2450, %v2461, %v2462
        %v2464 = vrot.slane %v1994, 1
        %v2465 = vsel %vm2450, %v2462, %v2464
        %v2466 = vrot.slane %v1998, 1
        %v2467 = vrot.slane %v2004, 1
        %v2468 = vsel %vm2450, %v2466, %v2467
        %v2469 = vrot.slane %v2007, 1
        %v2470 = vsel %vm2450, %v2467, %v2469
        %v2471 = vrot.slane %v2013, 1
        %v2472 = vrot.slane %v2017, 1
        %v2473 = vsel %vm2450, %v2471, %v2472
        %v2474 = vrot.slane %v2022, 1
        %v2475 = vsel %vm2450, %v2472, %v2474
        %v2476 = vrot.slane %v2026, 1
        %v2477 = vrot.slane %v2032, 1
        %v2478 = vsel %vm2450, %v2476, %v2477
        %v2479 = vrot.slane %v2035, 1
        %v2480 = vsel %vm2450, %v2477, %v2479
        %v2481 = vrot.slane %v2041, 1
        %v2482 = vrot.slane %v2045, 1
        %v2483 = vsel %vm2450, %v2481, %v2482
        %v2484 = vrot.slane %v2050, 1
        %v2485 = vsel %vm2450, %v2482, %v2484
        %v2486 = vrot.slane %v2054, 1
        %v2487 = vrot.slane %v2060, 1
        %v2488 = vsel %vm2450, %v2486, %v2487
        %v2489 = vrot.slane %v2063, 1
        %v2490 = vsel %vm2450, %v2487, %v2489
        %v2491 = vrot.slane %v2069, 1
        %v2492 = vrot.slane %v2073, 1
        %v2493 = vsel %vm2450, %v2491, %v2492
        %v2494 = vrot.slane %v2078, 1
        %v2495 = vsel %vm2450, %v2492, %v2494
        %v2496 = vrot.slane %v2082, 1
        %v2497 = vrot.slane %v2088, 1
        %v2498 = vsel %vm2450, %v2496, %v2497
        %v2499 = vrot.slane %v2091, 1
        %v2500 = vsel %vm2450, %v2497, %v2499
        %v2501 = vrot.slane %v2097, 1
        %v2502 = vrot.slane %v2101, 1
        %v2503 = vsel %vm2450, %v2501, %v2502
        %v2504 = vrot.slane %v2106, 1
        %v2505 = vsel %vm2450, %v2502, %v2504
        %v2506 = vrot.slane %v2110, 1
        %v2507 = vrot.slane %v2116, 1
        %v2508 = vsel %vm2450, %v2506, %v2507
        %v2509 = vrot.slane %v2119, 1
        %v2510 = vsel %vm2450, %v2507, %v2509
        %v2511 = vrot.slane %v2125, 1
        %v2512 = vrot.slane %v2129, 1
        %v2513 = vsel %vm2450, %v2511, %v2512
        %v2514 = vrot.slane %v2134, 1
        %v2515 = vsel %vm2450, %v2512, %v2514
        %v2516 = vrot.slane %v2138, 1
        %v2517 = vrot.slane %v2144, 1
        %v2518 = vsel %vm2450, %v2516, %v2517
        %v2519 = vrot.slane %v2147, 1
        %v2520 = vsel %vm2450, %v2517, %v2519
        %v2521 = vrot.slane %v2153, 1
        %v2522 = vrot.slane %v2157, 1
        %v2523 = vsel %vm2450, %v2521, %v2522
        %v2524 = vrot.slane %v2162, 1
        %v2525 = vsel %vm2450, %v2522, %v2524
        %v2526 = vrot.slane %v2166, 1
        %v2527 = vrot.slane %v2172, 1
        %v2528 = vsel %vm2450, %v2526, %v2527
        %v2529 = vrot.slane %v2175, 1
        %v2530 = vsel %vm2450, %v2527, %v2529
        %v2563 = vadd.f32 %v1955, %v2453
        %v2564 = vadd.f32 %v1959, %v2455
        %v2565 = vadd.f32 %v1968, %v2458
        %v2566 = vadd.f32 %v1974, %v2460
        %v2567 = vadd.f32 %v1983, %v2463
        %v2568 = vadd.f32 %v1987, %v2465
        %v2569 = vadd.f32 %v1996, %v2468
        %v2570 = vadd.f32 %v2002, %v2470
        %v2571 = vadd.f32 %v2011, %v2473
        %v2572 = vadd.f32 %v2015, %v2475
        %v2573 = vadd.f32 %v2024, %v2478
        %v2574 = vadd.f32 %v2030, %v2480
        %v2575 = vadd.f32 %v2039, %v2483
        %v2576 = vadd.f32 %v2043, %v2485
        %v2577 = vadd.f32 %v2052, %v2488
        %v2578 = vadd.f32 %v2058, %v2490
        %v2579 = vadd.f32 %v2067, %v2493
        %v2580 = vadd.f32 %v2071, %v2495
        %v2581 = vadd.f32 %v2080, %v2498
        %v2582 = vadd.f32 %v2086, %v2500
        %v2583 = vadd.f32 %v2095, %v2503
        %v2584 = vadd.f32 %v2099, %v2505
        %v2585 = vadd.f32 %v2108, %v2508
        %v2586 = vadd.f32 %v2114, %v2510
        %v2587 = vadd.f32 %v2123, %v2513
        %v2588 = vadd.f32 %v2127, %v2515
        %v2589 = vadd.f32 %v2136, %v2518
        %v2590 = vadd.f32 %v2142, %v2520
        %v2591 = vadd.f32 %v2151, %v2523
        %v2592 = vadd.f32 %v2155, %v2525
        %v2593 = vadd.f32 %v2164, %v2528
        %v2594 = vadd.f32 %v2170, %v2530
        %vm2643 = vcmask 1045504
        %v2644 = vrot.slane %v2212, 2
        %v2645 = vrot.slane %v2215, 2
        %v2646 = vsel %vm2643, %v2644, %v2645
        %v2647 = vrot.slane %v2220, 2
        %v2648 = vsel %vm2643, %v2645, %v2647
        %v2649 = vrot.slane %v2223, 2
        %v2650 = vrot.slane %v2228, 2
        %v2651 = vsel %vm2643, %v2649, %v2650
        %v2652 = vrot.slane %v2231, 2
        %v2653 = vsel %vm2643, %v2650, %v2652
        %v2654 = vrot.slane %v2236, 2
        %v2655 = vrot.slane %v2239, 2
        %v2656 = vsel %vm2643, %v2654, %v2655
        %v2657 = vrot.slane %v2244, 2
        %v2658 = vsel %vm2643, %v2655, %v2657
        %v2659 = vrot.slane %v2247, 2
        %v2660 = vrot.slane %v2252, 2
        %v2661 = vsel %vm2643, %v2659, %v2660
        %v2662 = vrot.slane %v2255, 2
        %v2663 = vsel %vm2643, %v2660, %v2662
        %v2664 = vrot.slane %v2260, 2
        %v2665 = vrot.slane %v2263, 2
        %v2666 = vsel %vm2643, %v2664, %v2665
        %v2667 = vrot.slane %v2268, 2
        %v2668 = vsel %vm2643, %v2665, %v2667
        %v2669 = vrot.slane %v2271, 2
        %v2670 = vrot.slane %v2276, 2
        %v2671 = vsel %vm2643, %v2669, %v2670
        %v2672 = vrot.slane %v2279, 2
        %v2673 = vsel %vm2643, %v2670, %v2672
        %v2674 = vrot.slane %v2284, 2
        %v2675 = vrot.slane %v2287, 2
        %v2676 = vsel %vm2643, %v2674, %v2675
        %v2677 = vrot.slane %v2292, 2
        %v2678 = vsel %vm2643, %v2675, %v2677
        %v2679 = vrot.slane %v2295, 2
        %v2680 = vrot.slane %v2300, 2
        %v2681 = vsel %vm2643, %v2679, %v2680
        %v2682 = vrot.slane %v2303, 2
        %v2683 = vsel %vm2643, %v2680, %v2682
        %v2684 = vrot.slane %v2308, 2
        %v2685 = vrot.slane %v2311, 2
        %v2686 = vsel %vm2643, %v2684, %v2685
        %v2687 = vrot.slane %v2316, 2
        %v2688 = vsel %vm2643, %v2685, %v2687
        %v2689 = vrot.slane %v2319, 2
        %v2690 = vrot.slane %v2324, 2
        %v2691 = vsel %vm2643, %v2689, %v2690
        %v2692 = vrot.slane %v2327, 2
        %v2693 = vsel %vm2643, %v2690, %v2692
        %v2694 = vrot.slane %v2332, 2
        %v2695 = vrot.slane %v2335, 2
        %v2696 = vsel %vm2643, %v2694, %v2695
        %v2697 = vrot.slane %v2340, 2
        %v2698 = vsel %vm2643, %v2695, %v2697
        %v2699 = vrot.slane %v2343, 2
        %v2700 = vrot.slane %v2348, 2
        %v2701 = vsel %vm2643, %v2699, %v2700
        %v2702 = vrot.slane %v2351, 2
        %v2703 = vsel %vm2643, %v2700, %v2702
        %v2704 = vrot.slane %v2356, 2
        %v2705 = vrot.slane %v2359, 2
        %v2706 = vsel %vm2643, %v2704, %v2705
        %v2707 = vrot.slane %v2364, 2
        %v2708 = vsel %vm2643, %v2705, %v2707
        %v2709 = vrot.slane %v2367, 2
        %v2710 = vrot.slane %v2372, 2
        %v2711 = vsel %vm2643, %v2709, %v2710
        %v2712 = vrot.slane %v2375, 2
        %v2713 = vsel %vm2643, %v2710, %v2712
        %v2714 = vrot.slane %v2380, 2
        %v2715 = vrot.slane %v2383, 2
        %v2716 = vsel %vm2643, %v2714, %v2715
        %v2717 = vrot.slane %v2388, 2
        %v2718 = vsel %vm2643, %v2715, %v2717
        %v2719 = vrot.slane %v2391, 2
        %v2720 = vrot.slane %v2396, 2
        %v2721 = vsel %vm2643, %v2719, %v2720
        %v2722 = vrot.slane %v2399, 2
        %v2723 = vsel %vm2643, %v2720, %v2722
        %v2756 = vadd.f32 %v2563, %v2646
        %v2757 = vadd.f32 %v2564, %v2648
        %v2758 = vadd.f32 %v2565, %v2651
        %v2759 = vadd.f32 %v2566, %v2653
        %v2760 = vadd.f32 %v2567, %v2656
        %v2761 = vadd.f32 %v2568, %v2658
        %v2762 = vadd.f32 %v2569, %v2661
        %v2763 = vadd.f32 %v2570, %v2663
        %v2764 = vadd.f32 %v2571, %v2666
        %v2765 = vadd.f32 %v2572, %v2668
        %v2766 = vadd.f32 %v2573, %v2671
        %v2767 = vadd.f32 %v2574, %v2673
        %v2768 = vadd.f32 %v2575, %v2676
        %v2769 = vadd.f32 %v2576, %v2678
        %v2770 = vadd.f32 %v2577, %v2681
        %v2771 = vadd.f32 %v2578, %v2683
        %v2772 = vadd.f32 %v2579, %v2686
        %v2773 = vadd.f32 %v2580, %v2688
        %v2774 = vadd.f32 %v2581, %v2691
        %v2775 = vadd.f32 %v2582, %v2693
        %v2776 = vadd.f32 %v2583, %v2696
        %v2777 = vadd.f32 %v2584, %v2698
        %v2778 = vadd.f32 %v2585, %v2701
        %v2779 = vadd.f32 %v2586, %v2703
        %v2780 = vadd.f32 %v2587, %v2706
        %v2781 = vadd.f32 %v2588, %v2708
        %v2782 = vadd.f32 %v2589, %v2711
        %v2783 = vadd.f32 %v2590, %v2713
        %v2784 = vadd.f32 %v2591, %v2716
        %v2785 = vadd.f32 %v2592, %v2718
        %v2786 = vadd.f32 %v2593, %v2721
        %v2787 = vadd.f32 %v2594, %v2723
        %v2788 = vld [vmem:[%s935] sm:$0xf]
        %v2789 = vld [vmem:[%s935 + $0x4] sm:$0xf]
        %v2790 = vld [vmem:[%s935 + $0x8] sm:$0xf]
        %v2791 = vld [vmem:[%s935 + $0xc] sm:$0xf]
        %v2792 = vld [vmem:[%s935 + $0x10] sm:$0xf]
        %v2793 = vld [vmem:[%s935 + $0x14] sm:$0xf]
        %v2794 = vld [vmem:[%s935 + $0x18] sm:$0xf]
        %v2795 = vld [vmem:[%s935 + $0x1c] sm:$0xf]
        %v2796 = vld [vmem:[%s935 + $0x20] sm:$0xf]
        %v2797 = vld [vmem:[%s935 + $0x24] sm:$0xf]
        %v2798 = vld [vmem:[%s935 + $0x28] sm:$0xf]
        %v2799 = vld [vmem:[%s935 + $0x2c] sm:$0xf]
        %v2800 = vld [vmem:[%s935 + $0x30] sm:$0xf]
        %v2801 = vld [vmem:[%s935 + $0x34] sm:$0xf]
        %v2802 = vld [vmem:[%s935 + $0x38] sm:$0xf]
        %v2803 = vld [vmem:[%s935 + $0x3c] sm:$0xf]
        %v2804 = vld [vmem:[%s935 + $0x40] sm:$0xf]
        %v2805 = vld [vmem:[%s935 + $0x44] sm:$0xf]
        %v2806 = vld [vmem:[%s935 + $0x48] sm:$0xf]
        %v2807 = vld [vmem:[%s935 + $0x4c] sm:$0xf]
        %v2808 = vld [vmem:[%s935 + $0x50] sm:$0xf]
        %v2809 = vld [vmem:[%s935 + $0x54] sm:$0xf]
        %v2810 = vld [vmem:[%s935 + $0x58] sm:$0xf]
        %v2811 = vld [vmem:[%s935 + $0x5c] sm:$0xf]
        %v2812 = vld [vmem:[%s935 + $0x60] sm:$0xf]
        %v2813 = vld [vmem:[%s935 + $0x64] sm:$0xf]
        %v2814 = vld [vmem:[%s935 + $0x68] sm:$0xf]
        %v2815 = vld [vmem:[%s935 + $0x6c] sm:$0xf]
        %v2816 = vld [vmem:[%s935 + $0x70] sm:$0xf]
        %v2817 = vld [vmem:[%s935 + $0x74] sm:$0xf]
        %v2818 = vld [vmem:[%s935 + $0x78] sm:$0xf]
        %v2819 = vld [vmem:[%s935 + $0x7c] sm:$0xf]
        %v2820 = vld [vmem:[%s935 + $0x80] sm:$0xf]
        %v2821 = vld [vmem:[%s935 + $0x84] sm:$0xf]
        %v2822 = vld [vmem:[%s935 + $0x88] sm:$0xf]
        %v2823 = vld [vmem:[%s935 + $0x8c] sm:$0xf]
        %v2824 = vld [vmem:[%s935 + $0x90] sm:$0xf]
        %v2825 = vld [vmem:[%s935 + $0x94] sm:$0xf]
        %v2826 = vld [vmem:[%s935 + $0x98] sm:$0xf]
        %v2827 = vld [vmem:[%s935 + $0x9c] sm:$0xf]
        %v2828 = vld [vmem:[%s935 + $0xa0] sm:$0xf]
        %v2829 = vld [vmem:[%s935 + $0xa4] sm:$0xf]
        %v2830 = vld [vmem:[%s935 + $0xa8] sm:$0xf]
        %v2831 = vld [vmem:[%s935 + $0xac] sm:$0xf]
        %v2832 = vld [vmem:[%s935 + $0xb0] sm:$0xf]
        %v2833 = vld [vmem:[%s935 + $0xb4] sm:$0xf]
        %v2834 = vld [vmem:[%s935 + $0xb8] sm:$0xf]
        %v2835 = vld [vmem:[%s935 + $0xbc] sm:$0xf]
        %s2836 = scalar_lea.vmem [#allocation8], 192
        %v2837 = vld [vmem:[%s2836] sm:$0xff]
        %v2838 = vld [vmem:[%s2836 + $0x8] sm:$0xf]
        %v2839 = vld [vmem:[%s2836 + $0xc] sm:$0xff]
        %v2840 = vld [vmem:[%s2836 + $0x14] sm:$0xf]
        %v2841 = vld [vmem:[%s2836 + $0x18] sm:$0xff]
        %v2842 = vld [vmem:[%s2836 + $0x20] sm:$0xf]
        %v2843 = vld [vmem:[%s2836 + $0x24] sm:$0xff]
        %v2844 = vld [vmem:[%s2836 + $0x2c] sm:$0xf]
        %v2845 = vld [vmem:[%s2836 + $0x30] sm:$0xff]
        %v2846 = vld [vmem:[%s2836 + $0x38] sm:$0xf]
        %v2847 = vld [vmem:[%s2836 + $0x3c] sm:$0xff]
        %v2848 = vld [vmem:[%s2836 + $0x44] sm:$0xf]
        %v2849 = vld [vmem:[%s2836 + $0x48] sm:$0xff]
        %v2850 = vld [vmem:[%s2836 + $0x50] sm:$0xf]
        %v2851 = vld [vmem:[%s2836 + $0x54] sm:$0xff]
        %v2852 = vld [vmem:[%s2836 + $0x5c] sm:$0xf]
        %v2853 = vld [vmem:[%s2836 + $0x60] sm:$0xff]
        %v2854 = vld [vmem:[%s2836 + $0x68] sm:$0xf]
        %v2855 = vld [vmem:[%s2836 + $0x6c] sm:$0xff]
        %v2856 = vld [vmem:[%s2836 + $0x74] sm:$0xf]
        %v2857 = vld [vmem:[%s2836 + $0x78] sm:$0xff]
        %v2858 = vld [vmem:[%s2836 + $0x80] sm:$0xf]
        %v2859 = vld [vmem:[%s2836 + $0x84] sm:$0xff]
        %v2860 = vld [vmem:[%s2836 + $0x8c] sm:$0xf]
        %v2861 = vld [vmem:[%s2836 + $0x90] sm:$0xff]
        %v2862 = vld [vmem:[%s2836 + $0x98] sm:$0xf]
        %v2863 = vld [vmem:[%s2836 + $0x9c] sm:$0xff]
        %v2864 = vld [vmem:[%s2836 + $0xa4] sm:$0xf]
        %v2865 = vld [vmem:[%s2836 + $0xa8] sm:$0xff]
        %v2866 = vld [vmem:[%s2836 + $0xb0] sm:$0xf]
        %v2867 = vld [vmem:[%s2836 + $0xb4] sm:$0xff]
        %v2868 = vld [vmem:[%s2836 + $0xbc] sm:$0xf]
        %v2917 = vunpack.c.l.b16 %v2788
        %v2918 = vunpack.c.l.b16 %v2789
        %v2919 = vunpack.c.l.b16 %v2790
        %v2920 = vunpack.c.l.b16 %v2791
        %v2921 = vunpack.c.l.b16 %v2792
        %v2922 = vunpack.c.l.b16 %v2793
        %v2923 = vunpack.c.l.b16 %v2794
        %v2924 = vunpack.c.l.b16 %v2795
        %v2925 = vunpack.c.l.b16 %v2796
        %v2926 = vunpack.c.l.b16 %v2797
        %v2927 = vunpack.c.l.b16 %v2798
        %v2928 = vunpack.c.l.b16 %v2799
        %v2929 = vunpack.c.l.b16 %v2800
        %v2930 = vunpack.c.l.b16 %v2801
        %v2931 = vunpack.c.l.b16 %v2802
        %v2932 = vunpack.c.l.b16 %v2803
        %v2933 = vunpack.c.l.b16 %v2804
        %v2934 = vunpack.c.l.b16 %v2805
        %v2935 = vunpack.c.l.b16 %v2806
        %v2936 = vunpack.c.l.b16 %v2807
        %v2937 = vunpack.c.l.b16 %v2808
        %v2938 = vunpack.c.l.b16 %v2809
        %v2939 = vunpack.c.l.b16 %v2810
        %v2940 = vunpack.c.l.b16 %v2811
        %v2941 = vunpack.c.l.b16 %v2812
        %v2942 = vunpack.c.l.b16 %v2813
        %v2943 = vunpack.c.l.b16 %v2814
        %v2944 = vunpack.c.l.b16 %v2815
        %v2945 = vunpack.c.l.b16 %v2816
        %v2946 = vunpack.c.l.b16 %v2817
        %v2947 = vunpack.c.l.b16 %v2818
        %v2948 = vunpack.c.l.b16 %v2819
        %v2949 = vunpack.c.l.b16 %v2820
        %v2950 = vunpack.c.l.b16 %v2821
        %v2951 = vunpack.c.l.b16 %v2822
        %v2952 = vunpack.c.l.b16 %v2823
        %v2953 = vunpack.c.l.b16 %v2824
        %v2954 = vunpack.c.l.b16 %v2825
        %v2955 = vunpack.c.l.b16 %v2826
        %v2956 = vunpack.c.l.b16 %v2827
        %v2957 = vunpack.c.l.b16 %v2828
        %v2958 = vunpack.c.l.b16 %v2829
        %v2959 = vunpack.c.l.b16 %v2830
        %v2960 = vunpack.c.l.b16 %v2831
        %v2961 = vunpack.c.l.b16 %v2832
        %v2962 = vunpack.c.l.b16 %v2833
        %v2963 = vunpack.c.l.b16 %v2834
        %v2964 = vunpack.c.l.b16 %v2835
        %v2965 = vpack.c.b16 %v2918, %v2917
        %v2966 = vpack.c.b16 %v2920, %v2919
        %v2967 = vpack.c.b16 %v2922, %v2921
        %v2968 = vpack.c.b16 %v2924, %v2923
        %v2969 = vpack.c.b16 %v2926, %v2925
        %v2970 = vpack.c.b16 %v2928, %v2927
        %v2971 = vpack.c.b16 %v2930, %v2929
        %v2972 = vpack.c.b16 %v2932, %v2931
        %v2973 = vpack.c.b16 %v2934, %v2933
        %v2974 = vpack.c.b16 %v2936, %v2935
        %v2975 = vpack.c.b16 %v2938, %v2937
        %v2976 = vpack.c.b16 %v2940, %v2939
        %v2977 = vpack.c.b16 %v2942, %v2941
        %v2978 = vpack.c.b16 %v2944, %v2943
        %v2979 = vpack.c.b16 %v2946, %v2945
        %v2980 = vpack.c.b16 %v2948, %v2947
        %v2981 = vpack.c.b16 %v2950, %v2949
        %v2982 = vpack.c.b16 %v2952, %v2951
        %v2983 = vpack.c.b16 %v2954, %v2953
        %v2984 = vpack.c.b16 %v2956, %v2955
        %v2985 = vpack.c.b16 %v2958, %v2957
        %v2986 = vpack.c.b16 %v2960, %v2959
        %v2987 = vpack.c.b16 %v2962, %v2961
        %v2988 = vpack.c.b16 %v2964, %v2963
        %v3045 = vunpack.c.l.b16 %v2837
        %v3046 = vunpack.c.h.b16 %v2837
        %v3047 = vunpack.c.l.b16 %v2838
        %v3048 = vunpack.c.l.b16 %v2839
        %v3049 = vunpack.c.h.b16 %v2839
        %v3050 = vunpack.c.l.b16 %v2840
        %v3051 = vunpack.c.l.b16 %v2841
        %v3052 = vunpack.c.h.b16 %v2841
        %v3053 = vunpack.c.l.b16 %v2842
        %v3054 = vunpack.c.l.b16 %v2843
        %v3055 = vunpack.c.h.b16 %v2843
        %v3056 = vunpack.c.l.b16 %v2844
        %v3057 = vunpack.c.l.b16 %v2845
        %v3058 = vunpack.c.h.b16 %v2845
        %v3059 = vunpack.c.l.b16 %v2846
        %v3060 = vunpack.c.l.b16 %v2847
        %v3061 = vunpack.c.h.b16 %v2847
        %v3062 = vunpack.c.l.b16 %v2848
        %v3063 = vunpack.c.l.b16 %v2849
        %v3064 = vunpack.c.h.b16 %v2849
        %v3065 = vunpack.c.l.b16 %v2850
        %v3066 = vunpack.c.l.b16 %v2851
        %v3067 = vunpack.c.h.b16 %v2851
        %v3068 = vunpack.c.l.b16 %v2852
        %v3069 = vunpack.c.l.b16 %v2853
        %v3070 = vunpack.c.h.b16 %v2853
        %v3071 = vunpack.c.l.b16 %v2854
        %v3072 = vunpack.c.l.b16 %v2855
        %v3073 = vunpack.c.h.b16 %v2855
        %v3074 = vunpack.c.l.b16 %v2856
        %v3075 = vunpack.c.l.b16 %v2857
        %v3076 = vunpack.c.h.b16 %v2857
        %v3077 = vunpack.c.l.b16 %v2858
        %v3078 = vunpack.c.l.b16 %v2859
        %v3079 = vunpack.c.h.b16 %v2859
        %v3080 = vunpack.c.l.b16 %v2860
        %v3081 = vunpack.c.l.b16 %v2861
        %v3082 = vunpack.c.h.b16 %v2861
        %v3083 = vunpack.c.l.b16 %v2862
        %v3084 = vunpack.c.l.b16 %v2863
        %v3085 = vunpack.c.h.b16 %v2863
        %v3086 = vunpack.c.l.b16 %v2864
        %v3087 = vunpack.c.l.b16 %v2865
        %v3088 = vunpack.c.h.b16 %v2865
        %v3089 = vunpack.c.l.b16 %v2866
        %v3090 = vunpack.c.l.b16 %v2867
        %v3091 = vunpack.c.h.b16 %v2867
        %v3092 = vunpack.c.l.b16 %v2868
        %v3093 = vpack.c.b16 %v3048, %v3045
        %v3094 = vpack.c.b16 %v3049, %v3046
        %v3095 = vpack.c.b16 %v3050, %v3047
        %v3096 = vpack.c.b16 %v3054, %v3051
        %v3097 = vpack.c.b16 %v3055, %v3052
        %v3098 = vpack.c.b16 %v3056, %v3053
        %v3099 = vpack.c.b16 %v3060, %v3057
        %v3100 = vpack.c.b16 %v3061, %v3058
        %v3101 = vpack.c.b16 %v3062, %v3059
        %v3102 = vpack.c.b16 %v3066, %v3063
        %v3103 = vpack.c.b16 %v3067, %v3064
        %v3104 = vpack.c.b16 %v3068, %v3065
        %v3105 = vpack.c.b16 %v3072, %v3069
        %v3106 = vpack.c.b16 %v3073, %v3070
        %v3107 = vpack.c.b16 %v3074, %v3071
        %v3108 = vpack.c.b16 %v3078, %v3075
        %v3109 = vpack.c.b16 %v3079, %v3076
        %v3110 = vpack.c.b16 %v3080, %v3077
        %v3111 = vpack.c.b16 %v3084, %v3081
        %v3112 = vpack.c.b16 %v3085, %v3082
        %v3113 = vpack.c.b16 %v3086, %v3083
        %v3114 = vpack.c.b16 %v3090, %v3087
        %v3115 = vpack.c.b16 %v3091, %v3088
        %v3116 = vpack.c.b16 %v3092, %v3089
        %3141 = vmatprep.subr.bf16.mxu0 %v3115
        %3142 = vmatpush1.bf16.msra.mxu0 %v3114
        %3143 = vmatprep.subr.bf16.mxu0 %v3112
        %3144 = vmatpush1.bf16.msra.mxu0 %v3111
        %3145 = vmatprep.subr.bf16.mxu0 %v3109
        %3146 = vmatpush1.bf16.msra.mxu0 %v3108
        %3147 = vmatprep.subr.bf16.mxu0 %v3106
        %3148 = vmatpush1.bf16.msra.mxu0 %v3105
        %3149 = vmatprep.subr.bf16.mxu0 %v3103
        %3150 = vmatpush1.bf16.msra.mxu0 %v3102
        %3151 = vmatprep.subr.bf16.mxu0 %v3100
        %3152 = vmatpush1.bf16.msra.mxu0 %v3099
        %3153 = vmatprep.subr.bf16.mxu0 %v3097
        %3154 = vmatpush1.bf16.msra.mxu0 %v3096
        %3155 = vmatprep.subr.bf16.mxu0 %v3094
        %3156 = vmatpush1.bf16.msra.mxu0 %v3093
        %3157 = vmatprep.subr.bf16.mxu0 0
        %3158 = vmatpush2.bf16.msra.mxu0 0
        %3159 = vmatprep.subr.bf16.mxu0 0
        %3160 = vmatpush2.bf16.msra.mxu0 0
        %3161 = vmatprep.subr.bf16.mxu0 0
        %3162 = vmatpush2.bf16.msra.mxu0 0
        %3163 = vmatprep.subr.bf16.mxu0 0
        %3164 = vmatpush2.bf16.msra.mxu0 0
        %3165 = vmatprep.subr.bf16.mxu0 0
        %3166 = vmatpush2.bf16.msra.mxu0 0
        %3167 = vmatprep.subr.bf16.mxu0 0
        %3168 = vmatpush2.bf16.msra.mxu0 0
        %3169 = vmatprep.subr.bf16.mxu0 0
        %3170 = vmatpush2.bf16.msra.mxu0 0
        %3171 = vmatprep.subr.bf16.mxu0 0
        %3172 = vmatpush2.bf16.msra.mxu0 0
        %3173 = vmatprep.mubr.bf16.mxu0 0
        %3174 = vmatmul.mubr.bf16.gmra.mxu0 %v2965
        %v3175 = vpop.f32.mrf.mxu0
        %v3176 = vadd.f32 0.0, %v3175
        %v3177 = vpop.f32.mrf.mxu0
        %v3178 = vadd.f32 0.0, %v3177
        %v3179 = vpop.f32.mrf.mxu0
        %v3180 = vadd.f32 0.0, %v3179
        %v3181 = vpop.f32.mrf.mxu0
        %v3182 = vadd.f32 0.0, %v3181
        %3183 = vmatprep.mubr.bf16.mxu0 0
        %3184 = vmatmul.mubr.bf16.gmra.mxu0 %v2966
        %v3185 = vpop.f32.mrf.mxu0
        %v3186 = vpop.f32.mrf.mxu0
        %v3187 = vadd.f32 0.0, %v3186
        %v3188 = vpop.f32.mrf.mxu0
        %v3189 = vadd.f32 0.0, %v3188
        %v3190 = vpop.f32.mrf.mxu0
        %v3191 = vadd.f32 0.0, %v3190
        %3192 = vmatprep.mubr.bf16.mxu0 0
        %3193 = vmatmul.mubr.bf16.gmra.mxu0 %v2967
        %v3194 = vpop.f32.mrf.mxu0
        %v3195 = vadd.f32 0.0, %v3194
        %v3196 = vpop.f32.mrf.mxu0
        %v3197 = vadd.f32 0.0, %v3196
        %v3198 = vpop.f32.mrf.mxu0
        %v3199 = vpop.f32.mrf.mxu0
        %v3200 = vadd.f32 0.0, %v3199
        %3201 = vmatprep.mubr.bf16.mxu0 0
        %3202 = vmatmul.mubr.bf16.gmra.mxu0 %v2968
        %v3203 = vpop.f32.mrf.mxu0
        %v3204 = vadd.f32 0.0, %v3203
        %v3205 = vpop.f32.mrf.mxu0
        %v3206 = vadd.f32 0.0, %v3205
        %v3207 = vpop.f32.mrf.mxu0
        %v3208 = vadd.f32 0.0, %v3207
        %v3209 = vpop.f32.mrf.mxu0
        %v3210 = vadd.f32 0.0, %v3209
        %3211 = vmatprep.mubr.bf16.mxu0 0
        %3212 = vmatmul.mubr.bf16.gmra.mxu0 %v2969
        %v3213 = vpop.f32.mrf.mxu0
        %v3214 = vpop.f32.mrf.mxu0
        %v3215 = vadd.f32 0.0, %v3214
        %v3216 = vpop.f32.mrf.mxu0
        %v3217 = vadd.f32 0.0, %v3216
        %v3218 = vpop.f32.mrf.mxu0
        %v3219 = vadd.f32 0.0, %v3218
        %3220 = vmatprep.mubr.bf16.mxu0 0
        %3221 = vmatmul.mubr.bf16.gmra.mxu0 %v2970
        %v3222 = vpop.f32.mrf.mxu0
        %v3223 = vadd.f32 0.0, %v3222
        %v3224 = vpop.f32.mrf.mxu0
        %v3225 = vadd.f32 0.0, %v3224
        %v3226 = vpop.f32.mrf.mxu0
        %v3227 = vpop.f32.mrf.mxu0
        %v3228 = vadd.f32 0.0, %v3227
        %3229 = vmatprep.mubr.bf16.mxu0 0
        %3230 = vmatmul.mubr.bf16.gmra.mxu0 %v2971
        %v3231 = vpop.f32.mrf.mxu0
        %v3232 = vadd.f32 0.0, %v3231
        %v3233 = vpop.f32.mrf.mxu0
        %v3234 = vadd.f32 0.0, %v3233
        %v3235 = vpop.f32.mrf.mxu0
        %v3236 = vadd.f32 0.0, %v3235
        %v3237 = vpop.f32.mrf.mxu0
        %v3238 = vadd.f32 0.0, %v3237
        %3239 = vmatprep.mubr.bf16.mxu0 0
        %3240 = vmatmul.mubr.bf16.gmra.mxu0 %v2972
        %v3241 = vpop.f32.mrf.mxu0
        %v3242 = vpop.f32.mrf.mxu0
        %v3243 = vadd.f32 0.0, %v3242
        %v3244 = vpop.f32.mrf.mxu0
        %v3245 = vadd.f32 0.0, %v3244
        %v3246 = vpop.f32.mrf.mxu0
        %v3247 = vadd.f32 0.0, %v3246
        %3248 = vmatprep.mubr.bf16.mxu0 0
        %3249 = vmatmul.mubr.bf16.gmra.mxu0 %v2973
        %v3250 = vpop.f32.mrf.mxu0
        %v3251 = vadd.f32 0.0, %v3250
        %v3252 = vpop.f32.mrf.mxu0
        %v3253 = vadd.f32 0.0, %v3252
        %v3254 = vpop.f32.mrf.mxu0
        %v3255 = vpop.f32.mrf.mxu0
        %v3256 = vadd.f32 0.0, %v3255
        %3257 = vmatprep.mubr.bf16.mxu0 0
        %3258 = vmatmul.mubr.bf16.gmra.mxu0 %v2974
        %v3259 = vpop.f32.mrf.mxu0
        %v3260 = vadd.f32 0.0, %v3259
        %v3261 = vpop.f32.mrf.mxu0
        %v3262 = vadd.f32 0.0, %v3261
        %v3263 = vpop.f32.mrf.mxu0
        %v3264 = vadd.f32 0.0, %v3263
        %v3265 = vpop.f32.mrf.mxu0
        %v3266 = vadd.f32 0.0, %v3265
        %3267 = vmatprep.mubr.bf16.mxu0 0
        %3268 = vmatmul.mubr.bf16.gmra.mxu0 %v2975
        %v3269 = vpop.f32.mrf.mxu0
        %v3270 = vpop.f32.mrf.mxu0
        %v3271 = vadd.f32 0.0, %v3270
        %v3272 = vpop.f32.mrf.mxu0
        %v3273 = vadd.f32 0.0, %v3272
        %v3274 = vpop.f32.mrf.mxu0
        %v3275 = vadd.f32 0.0, %v3274
        %3276 = vmatprep.mubr.bf16.mxu0 0
        %3277 = vmatmul.mubr.bf16.gmra.mxu0 %v2976
        %v3278 = vpop.f32.mrf.mxu0
        %v3279 = vadd.f32 0.0, %v3278
        %v3280 = vpop.f32.mrf.mxu0
        %v3281 = vadd.f32 0.0, %v3280
        %v3282 = vpop.f32.mrf.mxu0
        %v3283 = vpop.f32.mrf.mxu0
        %v3284 = vadd.f32 0.0, %v3283
        %3285 = vmatprep.mubr.bf16.mxu0 0
        %3286 = vmatmul.mubr.bf16.gmra.mxu0 %v2977
        %v3287 = vpop.f32.mrf.mxu0
        %v3288 = vadd.f32 0.0, %v3287
        %v3289 = vpop.f32.mrf.mxu0
        %v3290 = vadd.f32 0.0, %v3289
        %v3291 = vpop.f32.mrf.mxu0
        %v3292 = vadd.f32 0.0, %v3291
        %v3293 = vpop.f32.mrf.mxu0
        %v3294 = vadd.f32 0.0, %v3293
        %3295 = vmatprep.mubr.bf16.mxu0 0
        %3296 = vmatmul.mubr.bf16.gmra.mxu0 %v2978
        %v3297 = vpop.f32.mrf.mxu0
        %v3298 = vpop.f32.mrf.mxu0
        %v3299 = vadd.f32 0.0, %v3298
        %v3300 = vpop.f32.mrf.mxu0
        %v3301 = vadd.f32 0.0, %v3300
        %v3302 = vpop.f32.mrf.mxu0
        %v3303 = vadd.f32 0.0, %v3302
        %3304 = vmatprep.mubr.bf16.mxu0 0
        %3305 = vmatmul.mubr.bf16.gmra.mxu0 %v2979
        %v3306 = vpop.f32.mrf.mxu0
        %v3307 = vadd.f32 0.0, %v3306
        %v3308 = vpop.f32.mrf.mxu0
        %v3309 = vadd.f32 0.0, %v3308
        %v3310 = vpop.f32.mrf.mxu0
        %v3311 = vpop.f32.mrf.mxu0
        %v3312 = vadd.f32 0.0, %v3311
        %3313 = vmatprep.mubr.bf16.mxu0 0
        %3314 = vmatmul.mubr.bf16.gmra.mxu0 %v2980
        %v3315 = vpop.f32.mrf.mxu0
        %v3316 = vadd.f32 0.0, %v3315
        %v3317 = vpop.f32.mrf.mxu0
        %v3318 = vadd.f32 0.0, %v3317
        %v3319 = vpop.f32.mrf.mxu0
        %v3320 = vadd.f32 0.0, %v3319
        %v3321 = vpop.f32.mrf.mxu0
        %v3322 = vadd.f32 0.0, %v3321
        %3323 = vmatprep.mubr.bf16.mxu0 0
        %3324 = vmatmul.mubr.bf16.gmra.mxu0 %v2981
        %v3325 = vpop.f32.mrf.mxu0
        %v3326 = vpop.f32.mrf.mxu0
        %v3327 = vadd.f32 0.0, %v3326
        %v3328 = vpop.f32.mrf.mxu0
        %v3329 = vadd.f32 0.0, %v3328
        %v3330 = vpop.f32.mrf.mxu0
        %v3331 = vadd.f32 0.0, %v3330
        %3332 = vmatprep.mubr.bf16.mxu0 0
        %3333 = vmatmul.mubr.bf16.gmra.mxu0 %v2982
        %v3334 = vpop.f32.mrf.mxu0
        %v3335 = vadd.f32 0.0, %v3334
        %v3336 = vpop.f32.mrf.mxu0
        %v3337 = vadd.f32 0.0, %v3336
        %v3338 = vpop.f32.mrf.mxu0
        %v3339 = vpop.f32.mrf.mxu0
        %v3340 = vadd.f32 0.0, %v3339
        %3341 = vmatprep.mubr.bf16.mxu0 0
        %3342 = vmatmul.mubr.bf16.gmra.mxu0 %v2983
        %v3343 = vpop.f32.mrf.mxu0
        %v3344 = vadd.f32 0.0, %v3343
        %v3345 = vpop.f32.mrf.mxu0
        %v3346 = vadd.f32 0.0, %v3345
        %v3347 = vpop.f32.mrf.mxu0
        %v3348 = vadd.f32 0.0, %v3347
        %v3349 = vpop.f32.mrf.mxu0
        %v3350 = vadd.f32 0.0, %v3349
        %3351 = vmatprep.mubr.bf16.mxu0 0
        %3352 = vmatmul.mubr.bf16.gmra.mxu0 %v2984
        %v3353 = vpop.f32.mrf.mxu0
        %v3354 = vpop.f32.mrf.mxu0
        %v3355 = vadd.f32 0.0, %v3354
        %v3356 = vpop.f32.mrf.mxu0
        %v3357 = vadd.f32 0.0, %v3356
        %v3358 = vpop.f32.mrf.mxu0
        %v3359 = vadd.f32 0.0, %v3358
        %3360 = vmatprep.mubr.bf16.mxu0 0
        %3361 = vmatmul.mubr.bf16.gmra.mxu0 %v2985
        %v3362 = vpop.f32.mrf.mxu0
        %v3363 = vadd.f32 0.0, %v3362
        %v3364 = vpop.f32.mrf.mxu0
        %v3365 = vadd.f32 0.0, %v3364
        %v3366 = vpop.f32.mrf.mxu0
        %v3367 = vpop.f32.mrf.mxu0
        %v3368 = vadd.f32 0.0, %v3367
        %3369 = vmatprep.mubr.bf16.mxu0 0
        %3370 = vmatmul.mubr.bf16.gmra.mxu0 %v2986
        %v3371 = vpop.f32.mrf.mxu0
        %v3372 = vadd.f32 0.0, %v3371
        %v3373 = vpop.f32.mrf.mxu0
        %v3374 = vadd.f32 0.0, %v3373
        %v3375 = vpop.f32.mrf.mxu0
        %v3376 = vadd.f32 0.0, %v3375
        %v3377 = vpop.f32.mrf.mxu0
        %v3378 = vadd.f32 0.0, %v3377
        %3379 = vmatprep.mubr.bf16.mxu0 0
        %3380 = vmatmul.mubr.bf16.gmra.mxu0 %v2987
        %v3381 = vpop.f32.mrf.mxu0
        %v3382 = vpop.f32.mrf.mxu0
        %v3383 = vadd.f32 0.0, %v3382
        %v3384 = vpop.f32.mrf.mxu0
        %v3385 = vadd.f32 0.0, %v3384
        %v3386 = vpop.f32.mrf.mxu0
        %v3387 = vadd.f32 0.0, %v3386
        %3388 = vmatprep.mubr.bf16.mxu0 0
        %3389 = vmatmul.mubr.bf16.gmra.mxu0 %v2988
        %v3390 = vpop.f32.mrf.mxu0
        %v3391 = vadd.f32 0.0, %v3390
        %v3392 = vpop.f32.mrf.mxu0
        %v3393 = vadd.f32 0.0, %v3392
        %v3394 = vpop.f32.mrf.mxu0
        %v3395 = vpop.f32.mrf.mxu0
        %v3396 = vadd.f32 0.0, %v3395
        %3397 = vdwg.mxu0
        %3398 = vmatprep.subr.bf16.mxu0 0
        %3399 = vmatpush1.bf16.msra.mxu0 %v3116
        %3400 = vmatprep.subr.bf16.mxu0 0
        %3401 = vmatpush1.bf16.msra.mxu0 %v3113
        %3402 = vmatprep.subr.bf16.mxu0 0
        %3403 = vmatpush1.bf16.msra.mxu0 %v3110
        %3404 = vmatprep.subr.bf16.mxu0 0
        %3405 = vmatpush1.bf16.msra.mxu0 %v3107
        %3406 = vmatprep.subr.bf16.mxu0 0
        %3407 = vmatpush1.bf16.msra.mxu0 %v3104
        %3408 = vmatprep.subr.bf16.mxu0 0
        %3409 = vmatpush1.bf16.msra.mxu0 %v3101
        %3410 = vmatprep.subr.bf16.mxu0 0
        %3411 = vmatpush1.bf16.msra.mxu0 %v3098
        %3412 = vmatprep.subr.bf16.mxu0 0
        %3413 = vmatpush1.bf16.msra.mxu0 %v3095
        %3414 = vmatprep.subr.bf16.mxu0 0
        %3415 = vmatpush2.bf16.msra.mxu0 0
        %3416 = vmatprep.subr.bf16.mxu0 0
        %3417 = vmatpush2.bf16.msra.mxu0 0
        %3418 = vmatprep.subr.bf16.mxu0 0
        %3419 = vmatpush2.bf16.msra.mxu0 0
        %3420 = vmatprep.subr.bf16.mxu0 0
        %3421 = vmatpush2.bf16.msra.mxu0 0
        %3422 = vmatprep.subr.bf16.mxu0 0
        %3423 = vmatpush2.bf16.msra.mxu0 0
        %3424 = vmatprep.subr.bf16.mxu0 0
        %3425 = vmatpush2.bf16.msra.mxu0 0
        %3426 = vmatprep.subr.bf16.mxu0 0
        %3427 = vmatpush2.bf16.msra.mxu0 0
        %3428 = vmatprep.subr.bf16.mxu0 0
        %3429 = vmatpush2.bf16.msra.mxu0 0
        %3430 = vmatprep.mubr.bf16.mxu0 0
        %3431 = vmatmul.mubr.bf16.gmra.mxu0 %v2965
        %v3432 = vpop.f32.mrf.mxu0
        %v3433 = vadd.f32 0.0, %v3432
        %v3434 = vpop.f32.mrf.mxu0
        %v3435 = vpop.f32.mrf.mxu0
        %v3436 = vadd.f32 0.0, %v3435
        %v3437 = vpop.f32.mrf.mxu0
        %3438 = vmatprep.mubr.bf16.mxu0 0
        %3439 = vmatmul.mubr.bf16.gmra.mxu0 %v2966
        %v3440 = vpop.f32.mrf.mxu0
        %v3441 = vadd.f32 0.0, %v3440
        %v3442 = vpop.f32.mrf.mxu0
        %v3443 = vpop.f32.mrf.mxu0
        %v3444 = vadd.f32 0.0, %v3443
        %v3445 = vpop.f32.mrf.mxu0
        %3446 = vmatprep.mubr.bf16.mxu0 0
        %3447 = vmatmul.mubr.bf16.gmra.mxu0 %v2967
        %v3448 = vpop.f32.mrf.mxu0
        %v3449 = vadd.f32 0.0, %v3448
        %v3450 = vpop.f32.mrf.mxu0
        %v3451 = vpop.f32.mrf.mxu0
        %v3452 = vadd.f32 0.0, %v3451
        %v3453 = vpop.f32.mrf.mxu0
        %3454 = vmatprep.mubr.bf16.mxu0 0
        %3455 = vmatmul.mubr.bf16.gmra.mxu0 %v2968
        %v3456 = vpop.f32.mrf.mxu0
        %v3457 = vadd.f32 0.0, %v3456
        %v3458 = vpop.f32.mrf.mxu0
        %v3459 = vpop.f32.mrf.mxu0
        %v3460 = vadd.f32 0.0, %v3459
        %v3461 = vpop.f32.mrf.mxu0
        %3462 = vmatprep.mubr.bf16.mxu0 0
        %3463 = vmatmul.mubr.bf16.gmra.mxu0 %v2969
        %v3464 = vpop.f32.mrf.mxu0
        %v3465 = vadd.f32 0.0, %v3464
        %v3466 = vpop.f32.mrf.mxu0
        %v3467 = vpop.f32.mrf.mxu0
        %v3468 = vadd.f32 0.0, %v3467
        %v3469 = vpop.f32.mrf.mxu0
        %3470 = vmatprep.mubr.bf16.mxu0 0
        %3471 = vmatmul.mubr.bf16.gmra.mxu0 %v2970
        %v3472 = vpop.f32.mrf.mxu0
        %v3473 = vadd.f32 0.0, %v3472
        %v3474 = vpop.f32.mrf.mxu0
        %v3475 = vpop.f32.mrf.mxu0
        %v3476 = vadd.f32 0.0, %v3475
        %v3477 = vpop.f32.mrf.mxu0
        %3478 = vmatprep.mubr.bf16.mxu0 0
        %3479 = vmatmul.mubr.bf16.gmra.mxu0 %v2971
        %v3480 = vpop.f32.mrf.mxu0
        %v3481 = vadd.f32 0.0, %v3480
        %v3482 = vpop.f32.mrf.mxu0
        %v3483 = vpop.f32.mrf.mxu0
        %v3484 = vadd.f32 0.0, %v3483
        %v3485 = vpop.f32.mrf.mxu0
        %3486 = vmatprep.mubr.bf16.mxu0 0
        %3487 = vmatmul.mubr.bf16.gmra.mxu0 %v2972
        %v3488 = vpop.f32.mrf.mxu0
        %v3489 = vadd.f32 0.0, %v3488
        %v3490 = vpop.f32.mrf.mxu0
        %v3491 = vpop.f32.mrf.mxu0
        %v3492 = vadd.f32 0.0, %v3491
        %v3493 = vpop.f32.mrf.mxu0
        %3494 = vmatprep.mubr.bf16.mxu0 0
        %3495 = vmatmul.mubr.bf16.gmra.mxu0 %v2973
        %v3496 = vpop.f32.mrf.mxu0
        %v3497 = vadd.f32 0.0, %v3496
        %v3498 = vpop.f32.mrf.mxu0
        %v3499 = vpop.f32.mrf.mxu0
        %v3500 = vadd.f32 0.0, %v3499
        %v3501 = vpop.f32.mrf.mxu0
        %3502 = vmatprep.mubr.bf16.mxu0 0
        %3503 = vmatmul.mubr.bf16.gmra.mxu0 %v2974
        %v3504 = vpop.f32.mrf.mxu0
        %v3505 = vadd.f32 0.0, %v3504
        %v3506 = vpop.f32.mrf.mxu0
        %v3507 = vpop.f32.mrf.mxu0
        %v3508 = vadd.f32 0.0, %v3507
        %v3509 = vpop.f32.mrf.mxu0
        %3510 = vmatprep.mubr.bf16.mxu0 0
        %3511 = vmatmul.mubr.bf16.gmra.mxu0 %v2975
        %v3512 = vpop.f32.mrf.mxu0
        %v3513 = vadd.f32 0.0, %v3512
        %v3514 = vpop.f32.mrf.mxu0
        %v3515 = vpop.f32.mrf.mxu0
        %v3516 = vadd.f32 0.0, %v3515
        %v3517 = vpop.f32.mrf.mxu0
        %3518 = vmatprep.mubr.bf16.mxu0 0
        %3519 = vmatmul.mubr.bf16.gmra.mxu0 %v2976
        %v3520 = vpop.f32.mrf.mxu0
        %v3521 = vadd.f32 0.0, %v3520
        %v3522 = vpop.f32.mrf.mxu0
        %v3523 = vpop.f32.mrf.mxu0
        %v3524 = vadd.f32 0.0, %v3523
        %v3525 = vpop.f32.mrf.mxu0
        %3526 = vmatprep.mubr.bf16.mxu0 0
        %3527 = vmatmul.mubr.bf16.gmra.mxu0 %v2977
        %v3528 = vpop.f32.mrf.mxu0
        %v3529 = vadd.f32 0.0, %v3528
        %v3530 = vpop.f32.mrf.mxu0
        %v3531 = vpop.f32.mrf.mxu0
        %v3532 = vadd.f32 0.0, %v3531
        %v3533 = vpop.f32.mrf.mxu0
        %3534 = vmatprep.mubr.bf16.mxu0 0
        %3535 = vmatmul.mubr.bf16.gmra.mxu0 %v2978
        %v3536 = vpop.f32.mrf.mxu0
        %v3537 = vadd.f32 0.0, %v3536
        %v3538 = vpop.f32.mrf.mxu0
        %v3539 = vpop.f32.mrf.mxu0
        %v3540 = vadd.f32 0.0, %v3539
        %v3541 = vpop.f32.mrf.mxu0
        %3542 = vmatprep.mubr.bf16.mxu0 0
        %3543 = vmatmul.mubr.bf16.gmra.mxu0 %v2979
        %v3544 = vpop.f32.mrf.mxu0
        %v3545 = vadd.f32 0.0, %v3544
        %v3546 = vpop.f32.mrf.mxu0
        %v3547 = vpop.f32.mrf.mxu0
        %v3548 = vadd.f32 0.0, %v3547
        %v3549 = vpop.f32.mrf.mxu0
        %3550 = vmatprep.mubr.bf16.mxu0 0
        %3551 = vmatmul.mubr.bf16.gmra.mxu0 %v2980
        %v3552 = vpop.f32.mrf.mxu0
        %v3553 = vadd.f32 0.0, %v3552
        %v3554 = vpop.f32.mrf.mxu0
        %v3555 = vpop.f32.mrf.mxu0
        %v3556 = vadd.f32 0.0, %v3555
        %v3557 = vpop.f32.mrf.mxu0
        %3558 = vmatprep.mubr.bf16.mxu0 0
        %3559 = vmatmul.mubr.bf16.gmra.mxu0 %v2981
        %v3560 = vpop.f32.mrf.mxu0
        %v3561 = vadd.f32 0.0, %v3560
        %v3562 = vpop.f32.mrf.mxu0
        %v3563 = vpop.f32.mrf.mxu0
        %v3564 = vadd.f32 0.0, %v3563
        %v3565 = vpop.f32.mrf.mxu0
        %3566 = vmatprep.mubr.bf16.mxu0 0
        %3567 = vmatmul.mubr.bf16.gmra.mxu0 %v2982
        %v3568 = vpop.f32.mrf.mxu0
        %v3569 = vadd.f32 0.0, %v3568
        %v3570 = vpop.f32.mrf.mxu0
        %v3571 = vpop.f32.mrf.mxu0
        %v3572 = vadd.f32 0.0, %v3571
        %v3573 = vpop.f32.mrf.mxu0
        %3574 = vmatprep.mubr.bf16.mxu0 0
        %3575 = vmatmul.mubr.bf16.gmra.mxu0 %v2983
        %v3576 = vpop.f32.mrf.mxu0
        %v3577 = vadd.f32 0.0, %v3576
        %v3578 = vpop.f32.mrf.mxu0
        %v3579 = vpop.f32.mrf.mxu0
        %v3580 = vadd.f32 0.0, %v3579
        %v3581 = vpop.f32.mrf.mxu0
        %3582 = vmatprep.mubr.bf16.mxu0 0
        %3583 = vmatmul.mubr.bf16.gmra.mxu0 %v2984
        %v3584 = vpop.f32.mrf.mxu0
        %v3585 = vadd.f32 0.0, %v3584
        %v3586 = vpop.f32.mrf.mxu0
        %v3587 = vpop.f32.mrf.mxu0
        %v3588 = vadd.f32 0.0, %v3587
        %v3589 = vpop.f32.mrf.mxu0
        %3590 = vmatprep.mubr.bf16.mxu0 0
        %3591 = vmatmul.mubr.bf16.gmra.mxu0 %v2985
        %v3592 = vpop.f32.mrf.mxu0
        %v3593 = vadd.f32 0.0, %v3592
        %v3594 = vpop.f32.mrf.mxu0
        %v3595 = vpop.f32.mrf.mxu0
        %v3596 = vadd.f32 0.0, %v3595
        %v3597 = vpop.f32.mrf.mxu0
        %3598 = vmatprep.mubr.bf16.mxu0 0
        %3599 = vmatmul.mubr.bf16.gmra.mxu0 %v2986
        %v3600 = vpop.f32.mrf.mxu0
        %v3601 = vadd.f32 0.0, %v3600
        %v3602 = vpop.f32.mrf.mxu0
        %v3603 = vpop.f32.mrf.mxu0
        %v3604 = vadd.f32 0.0, %v3603
        %v3605 = vpop.f32.mrf.mxu0
        %3606 = vmatprep.mubr.bf16.mxu0 0
        %3607 = vmatmul.mubr.bf16.gmra.mxu0 %v2987
        %v3608 = vpop.f32.mrf.mxu0
        %v3609 = vadd.f32 0.0, %v3608
        %v3610 = vpop.f32.mrf.mxu0
        %v3611 = vpop.f32.mrf.mxu0
        %v3612 = vadd.f32 0.0, %v3611
        %v3613 = vpop.f32.mrf.mxu0
        %3614 = vmatprep.mubr.bf16.mxu0 0
        %3615 = vmatmul.mubr.bf16.gmra.mxu0 %v2988
        %v3616 = vpop.f32.mrf.mxu0
        %v3617 = vadd.f32 0.0, %v3616
        %v3618 = vpop.f32.mrf.mxu0
        %v3619 = vpop.f32.mrf.mxu0
        %v3620 = vadd.f32 0.0, %v3619
        %v3621 = vpop.f32.mrf.mxu0
        %3622 = vdwg.mxu0
        %v3623 = vadd.f32 %v2756, %v3176
        %v3624 = vadd.f32 %v2757, %v3180
        %v3625 = vadd.f32 %v2758, %v3189
        %v3626 = vadd.f32 %v2759, %v3195
        %v3627 = vadd.f32 %v2760, %v3204
        %v3628 = vadd.f32 %v2761, %v3208
        %v3629 = vadd.f32 %v2762, %v3217
        %v3630 = vadd.f32 %v2763, %v3223
        %v3631 = vadd.f32 %v2764, %v3232
        %v3632 = vadd.f32 %v2765, %v3236
        %v3633 = vadd.f32 %v2766, %v3245
        %v3634 = vadd.f32 %v2767, %v3251
        %v3635 = vadd.f32 %v2768, %v3260
        %v3636 = vadd.f32 %v2769, %v3264
        %v3637 = vadd.f32 %v2770, %v3273
        %v3638 = vadd.f32 %v2771, %v3279
        %v3639 = vadd.f32 %v2772, %v3288
        %v3640 = vadd.f32 %v2773, %v3292
        %v3641 = vadd.f32 %v2774, %v3301
        %v3642 = vadd.f32 %v2775, %v3307
        %v3643 = vadd.f32 %v2776, %v3316
        %v3644 = vadd.f32 %v2777, %v3320
        %v3645 = vadd.f32 %v2778, %v3329
        %v3646 = vadd.f32 %v2779, %v3335
        %v3647 = vadd.f32 %v2780, %v3344
        %v3648 = vadd.f32 %v2781, %v3348
        %v3649 = vadd.f32 %v2782, %v3357
        %v3650 = vadd.f32 %v2783, %v3363
        %v3651 = vadd.f32 %v2784, %v3372
        %v3652 = vadd.f32 %v2785, %v3376
        %v3653 = vadd.f32 %v2786, %v3385
        %v3654 = vadd.f32 %v2787, %v3391
        %v3703 = vrot.slane %v3178, 1
        %v3704 = vrot.slane %v3182, 1
        %v3705 = vsel %vm2450, %v3703, %v3704
        %v3706 = vrot.slane %v3187, 1
        %v3707 = vsel %vm2450, %v3704, %v3706
        %v3708 = vrot.slane %v3191, 1
        %v3709 = vrot.slane %v3197, 1
        %v3710 = vsel %vm2450, %v3708, %v3709
        %v3711 = vrot.slane %v3200, 1
        %v3712 = vsel %vm2450, %v3709, %v3711
        %v3713 = vrot.slane %v3206, 1
        %v3714 = vrot.slane %v3210, 1
        %v3715 = vsel %vm2450, %v3713, %v3714
        %v3716 = vrot.slane %v3215, 1
        %v3717 = vsel %vm2450, %v3714, %v3716
        %v3718 = vrot.slane %v3219, 1
        %v3719 = vrot.slane %v3225, 1
        %v3720 = vsel %vm2450, %v3718, %v3719
        %v3721 = vrot.slane %v3228, 1
        %v3722 = vsel %vm2450, %v3719, %v3721
        %v3723 = vrot.slane %v3234, 1
        %v3724 = vrot.slane %v3238, 1
        %v3725 = vsel %vm2450, %v3723, %v3724
        %v3726 = vrot.slane %v3243, 1
        %v3727 = vsel %vm2450, %v3724, %v3726
        %v3728 = vrot.slane %v3247, 1
        %v3729 = vrot.slane %v3253, 1
        %v3730 = vsel %vm2450, %v3728, %v3729
        %v3731 = vrot.slane %v3256, 1
        %v3732 = vsel %vm2450, %v3729, %v3731
        %v3733 = vrot.slane %v3262, 1
        %v3734 = vrot.slane %v3266, 1
        %v3735 = vsel %vm2450, %v3733, %v3734
        %v3736 = vrot.slane %v3271, 1
        %v3737 = vsel %vm2450, %v3734, %v3736
        %v3738 = vrot.slane %v3275, 1
        %v3739 = vrot.slane %v3281, 1
        %v3740 = vsel %vm2450, %v3738, %v3739
        %v3741 = vrot.slane %v3284, 1
        %v3742 = vsel %vm2450, %v3739, %v3741
        %v3743 = vrot.slane %v3290, 1
        %v3744 = vrot.slane %v3294, 1
        %v3745 = vsel %vm2450, %v3743, %v3744
        %v3746 = vrot.slane %v3299, 1
        %v3747 = vsel %vm2450, %v3744, %v3746
        %v3748 = vrot.slane %v3303, 1
        %v3749 = vrot.slane %v3309, 1
        %v3750 = vsel %vm2450, %v3748, %v3749
        %v3751 = vrot.slane %v3312, 1
        %v3752 = vsel %vm2450, %v3749, %v3751
        %v3753 = vrot.slane %v3318, 1
        %v3754 = vrot.slane %v3322, 1
        %v3755 = vsel %vm2450, %v3753, %v3754
        %v3756 = vrot.slane %v3327, 1
        %v3757 = vsel %vm2450, %v3754, %v3756
        %v3758 = vrot.slane %v3331, 1
        %v3759 = vrot.slane %v3337, 1
        %v3760 = vsel %vm2450, %v3758, %v3759
        %v3761 = vrot.slane %v3340, 1
        %v3762 = vsel %vm2450, %v3759, %v3761
        %v3763 = vrot.slane %v3346, 1
        %v3764 = vrot.slane %v3350, 1
        %v3765 = vsel %vm2450, %v3763, %v3764
        %v3766 = vrot.slane %v3355, 1
        %v3767 = vsel %vm2450, %v3764, %v3766
        %v3768 = vrot.slane %v3359, 1
        %v3769 = vrot.slane %v3365, 1
        %v3770 = vsel %vm2450, %v3768, %v3769
        %v3771 = vrot.slane %v3368, 1
        %v3772 = vsel %vm2450, %v3769, %v3771
        %v3773 = vrot.slane %v3374, 1
        %v3774 = vrot.slane %v3378, 1
        %v3775 = vsel %vm2450, %v3773, %v3774
        %v3776 = vrot.slane %v3383, 1
        %v3777 = vsel %vm2450, %v3774, %v3776
        %v3778 = vrot.slane %v3387, 1
        %v3779 = vrot.slane %v3393, 1
        %v3780 = vsel %vm2450, %v3778, %v3779
        %v3781 = vrot.slane %v3396, 1
        %v3782 = vsel %vm2450, %v3779, %v3781
        %v3815 = vadd.f32 %v3623, %v3705
        %v3816 = vadd.f32 %v3624, %v3707
        %v3817 = vadd.f32 %v3625, %v3710
        %v3818 = vadd.f32 %v3626, %v3712
        %v3819 = vadd.f32 %v3627, %v3715
        %v3820 = vadd.f32 %v3628, %v3717
        %v3821 = vadd.f32 %v3629, %v3720
        %v3822 = vadd.f32 %v3630, %v3722
        %v3823 = vadd.f32 %v3631, %v3725
        %v3824 = vadd.f32 %v3632, %v3727
        %v3825 = vadd.f32 %v3633, %v3730
        %v3826 = vadd.f32 %v3634, %v3732
        %v3827 = vadd.f32 %v3635, %v3735
        %v3828 = vadd.f32 %v3636, %v3737
        %v3829 = vadd.f32 %v3637, %v3740
        %v3830 = vadd.f32 %v3638, %v3742
        %v3831 = vadd.f32 %v3639, %v3745
        %v3832 = vadd.f32 %v3640, %v3747
        %v3833 = vadd.f32 %v3641, %v3750
        %v3834 = vadd.f32 %v3642, %v3752
        %v3835 = vadd.f32 %v3643, %v3755
        %v3836 = vadd.f32 %v3644, %v3757
        %v3837 = vadd.f32 %v3645, %v3760
        %v3838 = vadd.f32 %v3646, %v3762
        %v3839 = vadd.f32 %v3647, %v3765
        %v3840 = vadd.f32 %v3648, %v3767
        %v3841 = vadd.f32 %v3649, %v3770
        %v3842 = vadd.f32 %v3650, %v3772
        %v3843 = vadd.f32 %v3651, %v3775
        %v3844 = vadd.f32 %v3652, %v3777
        %v3845 = vadd.f32 %v3653, %v3780
        %v3846 = vadd.f32 %v3654, %v3782
        %v3895 = vrot.slane %v3433, 2
        %v3896 = vrot.slane %v3436, 2
        %v3897 = vsel %vm2643, %v3895, %v3896
        %v3898 = vrot.slane %v3441, 2
        %v3899 = vsel %vm2643, %v3896, %v3898
        %v3900 = vrot.slane %v3444, 2
        %v3901 = vrot.slane %v3449, 2
        %v3902 = vsel %vm2643, %v3900, %v3901
        %v3903 = vrot.slane %v3452, 2
        %v3904 = vsel %vm2643, %v3901, %v3903
        %v3905 = vrot.slane %v3457, 2
        %v3906 = vrot.slane %v3460, 2
        %v3907 = vsel %vm2643, %v3905, %v3906
        %v3908 = vrot.slane %v3465, 2
        %v3909 = vsel %vm2643, %v3906, %v3908
        %v3910 = vrot.slane %v3468, 2
        %v3911 = vrot.slane %v3473, 2
        %v3912 = vsel %vm2643, %v3910, %v3911
        %v3913 = vrot.slane %v3476, 2
        %v3914 = vsel %vm2643, %v3911, %v3913
        %v3915 = vrot.slane %v3481, 2
        %v3916 = vrot.slane %v3484, 2
        %v3917 = vsel %vm2643, %v3915, %v3916
        %v3918 = vrot.slane %v3489, 2
        %v3919 = vsel %vm2643, %v3916, %v3918
        %v3920 = vrot.slane %v3492, 2
        %v3921 = vrot.slane %v3497, 2
        %v3922 = vsel %vm2643, %v3920, %v3921
        %v3923 = vrot.slane %v3500, 2
        %v3924 = vsel %vm2643, %v3921, %v3923
        %v3925 = vrot.slane %v3505, 2
        %v3926 = vrot.slane %v3508, 2
        %v3927 = vsel %vm2643, %v3925, %v3926
        %v3928 = vrot.slane %v3513, 2
        %v3929 = vsel %vm2643, %v3926, %v3928
        %v3930 = vrot.slane %v3516, 2
        %v3931 = vrot.slane %v3521, 2
        %v3932 = vsel %vm2643, %v3930, %v3931
        %v3933 = vrot.slane %v3524, 2
        %v3934 = vsel %vm2643, %v3931, %v3933
        %v3935 = vrot.slane %v3529, 2
        %v3936 = vrot.slane %v3532, 2
        %v3937 = vsel %vm2643, %v3935, %v3936
        %v3938 = vrot.slane %v3537, 2
        %v3939 = vsel %vm2643, %v3936, %v3938
        %v3940 = vrot.slane %v3540, 2
        %v3941 = vrot.slane %v3545, 2
        %v3942 = vsel %vm2643, %v3940, %v3941
        %v3943 = vrot.slane %v3548, 2
        %v3944 = vsel %vm2643, %v3941, %v3943
        %v3945 = vrot.slane %v3553, 2
        %v3946 = vrot.slane %v3556, 2
        %v3947 = vsel %vm2643, %v3945, %v3946
        %v3948 = vrot.slane %v3561, 2
        %v3949 = vsel %vm2643, %v3946, %v3948
        %v3950 = vrot.slane %v3564, 2
        %v3951 = vrot.slane %v3569, 2
        %v3952 = vsel %vm2643, %v3950, %v3951
        %v3953 = vrot.slane %v3572, 2
        %v3954 = vsel %vm2643, %v3951, %v3953
        %v3955 = vrot.slane %v3577, 2
        %v3956 = vrot.slane %v3580, 2
        %v3957 = vsel %vm2643, %v3955, %v3956
        %v3958 = vrot.slane %v3585, 2
        %v3959 = vsel %vm2643, %v3956, %v3958
        %v3960 = vrot.slane %v3588, 2
        %v3961 = vrot.slane %v3593, 2
        %v3962 = vsel %vm2643, %v3960, %v3961
        %v3963 = vrot.slane %v3596, 2
        %v3964 = vsel %vm2643, %v3961, %v3963
        %v3965 = vrot.slane %v3601, 2
        %v3966 = vrot.slane %v3604, 2
        %v3967 = vsel %vm2643, %v3965, %v3966
        %v3968 = vrot.slane %v3609, 2
        %v3969 = vsel %vm2643, %v3966, %v3968
        %v3970 = vrot.slane %v3612, 2
        %v3971 = vrot.slane %v3617, 2
        %v3972 = vsel %vm2643, %v3970, %v3971
        %v3973 = vrot.slane %v3620, 2
        %v3974 = vsel %vm2643, %v3971, %v3973
        %v4007 = vadd.f32 %v3815, %v3897
        %v4008 = vadd.f32 %v3816, %v3899
        %v4009 = vadd.f32 %v3817, %v3902
        %v4010 = vadd.f32 %v3818, %v3904
        %v4011 = vadd.f32 %v3819, %v3907
        %v4012 = vadd.f32 %v3820, %v3909
        %v4013 = vadd.f32 %v3821, %v3912
        %v4014 = vadd.f32 %v3822, %v3914
        %v4015 = vadd.f32 %v3823, %v3917
        %v4016 = vadd.f32 %v3824, %v3919
        %v4017 = vadd.f32 %v3825, %v3922
        %v4018 = vadd.f32 %v3826, %v3924
        %v4019 = vadd.f32 %v3827, %v3927
        %v4020 = vadd.f32 %v3828, %v3929
        %v4021 = vadd.f32 %v3829, %v3932
        %v4022 = vadd.f32 %v3830, %v3934
        %v4023 = vadd.f32 %v3831, %v3937
        %v4024 = vadd.f32 %v3832, %v3939
        %v4025 = vadd.f32 %v3833, %v3942
        %v4026 = vadd.f32 %v3834, %v3944
        %v4027 = vadd.f32 %v3835, %v3947
        %v4028 = vadd.f32 %v3836, %v3949
        %v4029 = vadd.f32 %v3837, %v3952
        %v4030 = vadd.f32 %v3838, %v3954
        %v4031 = vadd.f32 %v3839, %v3957
        %v4032 = vadd.f32 %v3840, %v3959
        %v4033 = vadd.f32 %v3841, %v3962
        %v4034 = vadd.f32 %v3842, %v3964
        %v4035 = vadd.f32 %v3843, %v3967
        %v4036 = vadd.f32 %v3844, %v3969
        %v4037 = vadd.f32 %v3845, %v3972
        %v4038 = vadd.f32 %v3846, %v3974
        %s4039 = scalar_lea.vmem [#allocation2], 24
        %v4040 = vld [vmem:[%s4039] sm:$0xf]
        %v4041 = vld [vmem:[%s4039 + $0x4] sm:$0xf]
        %v4042 = vld [vmem:[%s4039 + $0x8] sm:$0xf]
        %v4043 = vld [vmem:[%s4039 + $0xc] sm:$0xf]
        %v4044 = vld [vmem:[%s4039 + $0x10] sm:$0xf]
        %v4045 = vld [vmem:[%s4039 + $0x14] sm:$0xf]
        %v4046 = vld [vmem:[%s4039 + $0x18] sm:$0xf]
        %v4047 = vld [vmem:[%s4039 + $0x1c] sm:$0xf]
        %v4048 = vld [vmem:[%s4039 + $0x20] sm:$0xf]
        %v4049 = vld [vmem:[%s4039 + $0x24] sm:$0xf]
        %v4050 = vld [vmem:[%s4039 + $0x28] sm:$0xf]
        %v4051 = vld [vmem:[%s4039 + $0x2c] sm:$0xf]
        %v4052 = vld [vmem:[%s4039 + $0x30] sm:$0xf]
        %v4053 = vld [vmem:[%s4039 + $0x34] sm:$0xf]
        %v4054 = vld [vmem:[%s4039 + $0x38] sm:$0xf]
        %v4055 = vld [vmem:[%s4039 + $0x3c] sm:$0xf]
        %v4056 = vld [vmem:[%s4039 + $0x40] sm:$0xf]
        %v4057 = vld [vmem:[%s4039 + $0x44] sm:$0xf]
        %v4058 = vld [vmem:[%s4039 + $0x48] sm:$0xf]
        %v4059 = vld [vmem:[%s4039 + $0x4c] sm:$0xf]
        %v4060 = vld [vmem:[%s4039 + $0x50] sm:$0xf]
        %v4061 = vld [vmem:[%s4039 + $0x54] sm:$0xf]
        %v4062 = vld [vmem:[%s4039 + $0x58] sm:$0xf]
        %v4063 = vld [vmem:[%s4039 + $0x5c] sm:$0xf]
        %v4064 = vld [vmem:[%s4039 + $0x60] sm:$0xf]
        %v4065 = vld [vmem:[%s4039 + $0x64] sm:$0xf]
        %v4066 = vld [vmem:[%s4039 + $0x68] sm:$0xf]
        %v4067 = vld [vmem:[%s4039 + $0x6c] sm:$0xf]
        %v4068 = vld [vmem:[%s4039 + $0x70] sm:$0xf]
        %v4069 = vld [vmem:[%s4039 + $0x74] sm:$0xf]
        %v4070 = vld [vmem:[%s4039 + $0x78] sm:$0xf]
        %v4071 = vld [vmem:[%s4039 + $0x7c] sm:$0xf]
        %v4072 = vld [vmem:[%s4039 + $0x80] sm:$0xf]
        %v4073 = vld [vmem:[%s4039 + $0x84] sm:$0xf]
        %v4074 = vld [vmem:[%s4039 + $0x88] sm:$0xf]
        %v4075 = vld [vmem:[%s4039 + $0x8c] sm:$0xf]
        %v4076 = vld [vmem:[%s4039 + $0x90] sm:$0xf]
        %v4077 = vld [vmem:[%s4039 + $0x94] sm:$0xf]
        %v4078 = vld [vmem:[%s4039 + $0x98] sm:$0xf]
        %v4079 = vld [vmem:[%s4039 + $0x9c] sm:$0xf]
        %v4080 = vld [vmem:[%s4039 + $0xa0] sm:$0xf]
        %v4081 = vld [vmem:[%s4039 + $0xa4] sm:$0xf]
        %v4082 = vld [vmem:[%s4039 + $0xa8] sm:$0xf]
        %v4083 = vld [vmem:[%s4039 + $0xac] sm:$0xf]
        %v4084 = vld [vmem:[%s4039 + $0xb0] sm:$0xf]
        %v4085 = vld [vmem:[%s4039 + $0xb4] sm:$0xf]
        %v4086 = vld [vmem:[%s4039 + $0xb8] sm:$0xf]
        %v4087 = vld [vmem:[%s4039 + $0xbc] sm:$0xf]
        %s4088 = scalar_lea.vmem [#allocation8], 384
        %v4089 = vld [vmem:[%s4088] sm:$0xff]
        %v4090 = vld [vmem:[%s4088 + $0x8] sm:$0xf]
        %v4091 = vld [vmem:[%s4088 + $0xc] sm:$0xff]
        %v4092 = vld [vmem:[%s4088 + $0x14] sm:$0xf]
        %v4093 = vld [vmem:[%s4088 + $0x18] sm:$0xff]
        %v4094 = vld [vmem:[%s4088 + $0x20] sm:$0xf]
        %v4095 = vld [vmem:[%s4088 + $0x24] sm:$0xff]
        %v4096 = vld [vmem:[%s4088 + $0x2c] sm:$0xf]
        %v4097 = vld [vmem:[%s4088 + $0x30] sm:$0xff]
        %v4098 = vld [vmem:[%s4088 + $0x38] sm:$0xf]
        %v4099 = vld [vmem:[%s4088 + $0x3c] sm:$0xff]
        %v4100 = vld [vmem:[%s4088 + $0x44] sm:$0xf]
        %v4101 = vld [vmem:[%s4088 + $0x48] sm:$0xff]
        %v4102 = vld [vmem:[%s4088 + $0x50] sm:$0xf]
        %v4103 = vld [vmem:[%s4088 + $0x54] sm:$0xff]
        %v4104 = vld [vmem:[%s4088 + $0x5c] sm:$0xf]
        %v4105 = vld [vmem:[%s4088 + $0x60] sm:$0xff]
        %v4106 = vld [vmem:[%s4088 + $0x68] sm:$0xf]
        %v4107 = vld [vmem:[%s4088 + $0x6c] sm:$0xff]
        %v4108 = vld [vmem:[%s4088 + $0x74] sm:$0xf]
        %v4109 = vld [vmem:[%s4088 + $0x78] sm:$0xff]
        %v4110 = vld [vmem:[%s4088 + $0x80] sm:$0xf]
        %v4111 = vld [vmem:[%s4088 + $0x84] sm:$0xff]
        %v4112 = vld [vmem:[%s4088 + $0x8c] sm:$0xf]
        %v4113 = vld [vmem:[%s4088 + $0x90] sm:$0xff]
        %v4114 = vld [vmem:[%s4088 + $0x98] sm:$0xf]
        %v4115 = vld [vmem:[%s4088 + $0x9c] sm:$0xff]
        %v4116 = vld [vmem:[%s4088 + $0xa4] sm:$0xf]
        %v4117 = vld [vmem:[%s4088 + $0xa8] sm:$0xff]
        %v4118 = vld [vmem:[%s4088 + $0xb0] sm:$0xf]
        %v4119 = vld [vmem:[%s4088 + $0xb4] sm:$0xff]
        %v4120 = vld [vmem:[%s4088 + $0xbc] sm:$0xf]
        %v4169 = vunpack.c.l.b16 %v4040
        %v4170 = vunpack.c.l.b16 %v4041
        %v4171 = vunpack.c.l.b16 %v4042
        %v4172 = vunpack.c.l.b16 %v4043
        %v4173 = vunpack.c.l.b16 %v4044
        %v4174 = vunpack.c.l.b16 %v4045
        %v4175 = vunpack.c.l.b16 %v4046
        %v4176 = vunpack.c.l.b16 %v4047
        %v4177 = vunpack.c.l.b16 %v4048
        %v4178 = vunpack.c.l.b16 %v4049
        %v4179 = vunpack.c.l.b16 %v4050
        %v4180 = vunpack.c.l.b16 %v4051
        %v4181 = vunpack.c.l.b16 %v4052
        %v4182 = vunpack.c.l.b16 %v4053
        %v4183 = vunpack.c.l.b16 %v4054
        %v4184 = vunpack.c.l.b16 %v4055
        %v4185 = vunpack.c.l.b16 %v4056
        %v4186 = vunpack.c.l.b16 %v4057
        %v4187 = vunpack.c.l.b16 %v4058
        %v4188 = vunpack.c.l.b16 %v4059
        %v4189 = vunpack.c.l.b16 %v4060
        %v4190 = vunpack.c.l.b16 %v4061
        %v4191 = vunpack.c.l.b16 %v4062
        %v4192 = vunpack.c.l.b16 %v4063
        %v4193 = vunpack.c.l.b16 %v4064
        %v4194 = vunpack.c.l.b16 %v4065
        %v4195 = vunpack.c.l.b16 %v4066
        %v4196 = vunpack.c.l.b16 %v4067
        %v4197 = vunpack.c.l.b16 %v4068
        %v4198 = vunpack.c.l.b16 %v4069
        %v4199 = vunpack.c.l.b16 %v4070
        %v4200 = vunpack.c.l.b16 %v4071
        %v4201 = vunpack.c.l.b16 %v4072
        %v4202 = vunpack.c.l.b16 %v4073
        %v4203 = vunpack.c.l.b16 %v4074
        %v4204 = vunpack.c.l.b16 %v4075
        %v4205 = vunpack.c.l.b16 %v4076
        %v4206 = vunpack.c.l.b16 %v4077
        %v4207 = vunpack.c.l.b16 %v4078
        %v4208 = vunpack.c.l.b16 %v4079
        %v4209 = vunpack.c.l.b16 %v4080
        %v4210 = vunpack.c.l.b16 %v4081
        %v4211 = vunpack.c.l.b16 %v4082
        %v4212 = vunpack.c.l.b16 %v4083
        %v4213 = vunpack.c.l.b16 %v4084
        %v4214 = vunpack.c.l.b16 %v4085
        %v4215 = vunpack.c.l.b16 %v4086
        %v4216 = vunpack.c.l.b16 %v4087
        %v4217 = vpack.c.b16 %v4170, %v4169
        %v4218 = vpack.c.b16 %v4172, %v4171
        %v4219 = vpack.c.b16 %v4174, %v4173
        %v4220 = vpack.c.b16 %v4176, %v4175
        %v4221 = vpack.c.b16 %v4178, %v4177
        %v4222 = vpack.c.b16 %v4180, %v4179
        %v4223 = vpack.c.b16 %v4182, %v4181
        %v4224 = vpack.c.b16 %v4184, %v4183
        %v4225 = vpack.c.b16 %v4186, %v4185
        %v4226 = vpack.c.b16 %v4188, %v4187
        %v4227 = vpack.c.b16 %v4190, %v4189
        %v4228 = vpack.c.b16 %v4192, %v4191
        %v4229 = vpack.c.b16 %v4194, %v4193
        %v4230 = vpack.c.b16 %v4196, %v4195
        %v4231 = vpack.c.b16 %v4198, %v4197
        %v4232 = vpack.c.b16 %v4200, %v4199
        %v4233 = vpack.c.b16 %v4202, %v4201
        %v4234 = vpack.c.b16 %v4204, %v4203
        %v4235 = vpack.c.b16 %v4206, %v4205
        %v4236 = vpack.c.b16 %v4208, %v4207
        %v4237 = vpack.c.b16 %v4210, %v4209
        %v4238 = vpack.c.b16 %v4212, %v4211
        %v4239 = vpack.c.b16 %v4214, %v4213
        %v4240 = vpack.c.b16 %v4216, %v4215
        %v4297 = vunpack.c.l.b16 %v4089
        %v4298 = vunpack.c.h.b16 %v4089
        %v4299 = vunpack.c.l.b16 %v4090
        %v4300 = vunpack.c.l.b16 %v4091
        %v4301 = vunpack.c.h.b16 %v4091
        %v4302 = vunpack.c.l.b16 %v4092
        %v4303 = vunpack.c.l.b16 %v4093
        %v4304 = vunpack.c.h.b16 %v4093
        %v4305 = vunpack.c.l.b16 %v4094
        %v4306 = vunpack.c.l.b16 %v4095
        %v4307 = vunpack.c.h.b16 %v4095
        %v4308 = vunpack.c.l.b16 %v4096
        %v4309 = vunpack.c.l.b16 %v4097
        %v4310 = vunpack.c.h.b16 %v4097
        %v4311 = vunpack.c.l.b16 %v4098
        %v4312 = vunpack.c.l.b16 %v4099
        %v4313 = vunpack.c.h.b16 %v4099
        %v4314 = vunpack.c.l.b16 %v4100
        %v4315 = vunpack.c.l.b16 %v4101
        %v4316 = vunpack.c.h.b16 %v4101
        %v4317 = vunpack.c.l.b16 %v4102
        %v4318 = vunpack.c.l.b16 %v4103
        %v4319 = vunpack.c.h.b16 %v4103
        %v4320 = vunpack.c.l.b16 %v4104
        %v4321 = vunpack.c.l.b16 %v4105
        %v4322 = vunpack.c.h.b16 %v4105
        %v4323 = vunpack.c.l.b16 %v4106
        %v4324 = vunpack.c.l.b16 %v4107
        %v4325 = vunpack.c.h.b16 %v4107
        %v4326 = vunpack.c.l.b16 %v4108
        %v4327 = vunpack.c.l.b16 %v4109
        %v4328 = vunpack.c.h.b16 %v4109
        %v4329 = vunpack.c.l.b16 %v4110
        %v4330 = vunpack.c.l.b16 %v4111
        %v4331 = vunpack.c.h.b16 %v4111
        %v4332 = vunpack.c.l.b16 %v4112
        %v4333 = vunpack.c.l.b16 %v4113
        %v4334 = vunpack.c.h.b16 %v4113
        %v4335 = vunpack.c.l.b16 %v4114
        %v4336 = vunpack.c.l.b16 %v4115
        %v4337 = vunpack.c.h.b16 %v4115
        %v4338 = vunpack.c.l.b16 %v4116
        %v4339 = vunpack.c.l.b16 %v4117
        %v4340 = vunpack.c.h.b16 %v4117
        %v4341 = vunpack.c.l.b16 %v4118
        %v4342 = vunpack.c.l.b16 %v4119
        %v4343 = vunpack.c.h.b16 %v4119
        %v4344 = vunpack.c.l.b16 %v4120
        %v4345 = vpack.c.b16 %v4300, %v4297
        %v4346 = vpack.c.b16 %v4301, %v4298
        %v4347 = vpack.c.b16 %v4302, %v4299
        %v4348 = vpack.c.b16 %v4306, %v4303
        %v4349 = vpack.c.b16 %v4307, %v4304
        %v4350 = vpack.c.b16 %v4308, %v4305
        %v4351 = vpack.c.b16 %v4312, %v4309
        %v4352 = vpack.c.b16 %v4313, %v4310
        %v4353 = vpack.c.b16 %v4314, %v4311
        %v4354 = vpack.c.b16 %v4318, %v4315
        %v4355 = vpack.c.b16 %v4319, %v4316
        %v4356 = vpack.c.b16 %v4320, %v4317
        %v4357 = vpack.c.b16 %v4324, %v4321
        %v4358 = vpack.c.b16 %v4325, %v4322
        %v4359 = vpack.c.b16 %v4326, %v4323
        %v4360 = vpack.c.b16 %v4330, %v4327
        %v4361 = vpack.c.b16 %v4331, %v4328
        %v4362 = vpack.c.b16 %v4332, %v4329
        %v4363 = vpack.c.b16 %v4336, %v4333
        %v4364 = vpack.c.b16 %v4337, %v4334
        %v4365 = vpack.c.b16 %v4338, %v4335
        %v4366 = vpack.c.b16 %v4342, %v4339
        %v4367 = vpack.c.b16 %v4343, %v4340
        %v4368 = vpack.c.b16 %v4344, %v4341
        %4393 = vmatprep.subr.bf16.mxu0 %v4367
        %4394 = vmatpush1.bf16.msra.mxu0 %v4366
        %4395 = vmatprep.subr.bf16.mxu0 %v4364
        %4396 = vmatpush1.bf16.msra.mxu0 %v4363
        %4397 = vmatprep.subr.bf16.mxu0 %v4361
        %4398 = vmatpush1.bf16.msra.mxu0 %v4360
        %4399 = vmatprep.subr.bf16.mxu0 %v4358
        %4400 = vmatpush1.bf16.msra.mxu0 %v4357
        %4401 = vmatprep.subr.bf16.mxu0 %v4355
        %4402 = vmatpush1.bf16.msra.mxu0 %v4354
        %4403 = vmatprep.subr.bf16.mxu0 %v4352
        %4404 = vmatpush1.bf16.msra.mxu0 %v4351
        %4405 = vmatprep.subr.bf16.mxu0 %v4349
        %4406 = vmatpush1.bf16.msra.mxu0 %v4348
        %4407 = vmatprep.subr.bf16.mxu0 %v4346
        %4408 = vmatpush1.bf16.msra.mxu0 %v4345
        %4409 = vmatprep.subr.bf16.mxu0 0
        %4410 = vmatpush2.bf16.msra.mxu0 0
        %4411 = vmatprep.subr.bf16.mxu0 0
        %4412 = vmatpush2.bf16.msra.mxu0 0
        %4413 = vmatprep.subr.bf16.mxu0 0
        %4414 = vmatpush2.bf16.msra.mxu0 0
        %4415 = vmatprep.subr.bf16.mxu0 0
        %4416 = vmatpush2.bf16.msra.mxu0 0
        %4417 = vmatprep.subr.bf16.mxu0 0
        %4418 = vmatpush2.bf16.msra.mxu0 0
        %4419 = vmatprep.subr.bf16.mxu0 0
        %4420 = vmatpush2.bf16.msra.mxu0 0
        %4421 = vmatprep.subr.bf16.mxu0 0
        %4422 = vmatpush2.bf16.msra.mxu0 0
        %4423 = vmatprep.subr.bf16.mxu0 0
        %4424 = vmatpush2.bf16.msra.mxu0 0
        %4425 = vmatprep.mubr.bf16.mxu0 0
        %4426 = vmatmul.mubr.bf16.gmra.mxu0 %v4217
        %v4427 = vpop.f32.mrf.mxu0
        %v4428 = vadd.f32 0.0, %v4427
        %v4429 = vpop.f32.mrf.mxu0
        %v4430 = vadd.f32 0.0, %v4429
        %v4431 = vpop.f32.mrf.mxu0
        %v4432 = vadd.f32 0.0, %v4431
        %v4433 = vpop.f32.mrf.mxu0
        %v4434 = vadd.f32 0.0, %v4433
        %4435 = vmatprep.mubr.bf16.mxu0 0
        %4436 = vmatmul.mubr.bf16.gmra.mxu0 %v4218
        %v4437 = vpop.f32.mrf.mxu0
        %v4438 = vpop.f32.mrf.mxu0
        %v4439 = vadd.f32 0.0, %v4438
        %v4440 = vpop.f32.mrf.mxu0
        %v4441 = vadd.f32 0.0, %v4440
        %v4442 = vpop.f32.mrf.mxu0
        %v4443 = vadd.f32 0.0, %v4442
        %4444 = vmatprep.mubr.bf16.mxu0 0
        %4445 = vmatmul.mubr.bf16.gmra.mxu0 %v4219
        %v4446 = vpop.f32.mrf.mxu0
        %v4447 = vadd.f32 0.0, %v4446
        %v4448 = vpop.f32.mrf.mxu0
        %v4449 = vadd.f32 0.0, %v4448
        %v4450 = vpop.f32.mrf.mxu0
        %v4451 = vpop.f32.mrf.mxu0
        %v4452 = vadd.f32 0.0, %v4451
        %4453 = vmatprep.mubr.bf16.mxu0 0
        %4454 = vmatmul.mubr.bf16.gmra.mxu0 %v4220
        %v4455 = vpop.f32.mrf.mxu0
        %v4456 = vadd.f32 0.0, %v4455
        %v4457 = vpop.f32.mrf.mxu0
        %v4458 = vadd.f32 0.0, %v4457
        %v4459 = vpop.f32.mrf.mxu0
        %v4460 = vadd.f32 0.0, %v4459
        %v4461 = vpop.f32.mrf.mxu0
        %v4462 = vadd.f32 0.0, %v4461
        %4463 = vmatprep.mubr.bf16.mxu0 0
        %4464 = vmatmul.mubr.bf16.gmra.mxu0 %v4221
        %v4465 = vpop.f32.mrf.mxu0
        %v4466 = vpop.f32.mrf.mxu0
        %v4467 = vadd.f32 0.0, %v4466
        %v4468 = vpop.f32.mrf.mxu0
        %v4469 = vadd.f32 0.0, %v4468
        %v4470 = vpop.f32.mrf.mxu0
        %v4471 = vadd.f32 0.0, %v4470
        %4472 = vmatprep.mubr.bf16.mxu0 0
        %4473 = vmatmul.mubr.bf16.gmra.mxu0 %v4222
        %v4474 = vpop.f32.mrf.mxu0
        %v4475 = vadd.f32 0.0, %v4474
        %v4476 = vpop.f32.mrf.mxu0
        %v4477 = vadd.f32 0.0, %v4476
        %v4478 = vpop.f32.mrf.mxu0
        %v4479 = vpop.f32.mrf.mxu0
        %v4480 = vadd.f32 0.0, %v4479
        %4481 = vmatprep.mubr.bf16.mxu0 0
        %4482 = vmatmul.mubr.bf16.gmra.mxu0 %v4223
        %v4483 = vpop.f32.mrf.mxu0
        %v4484 = vadd.f32 0.0, %v4483
        %v4485 = vpop.f32.mrf.mxu0
        %v4486 = vadd.f32 0.0, %v4485
        %v4487 = vpop.f32.mrf.mxu0
        %v4488 = vadd.f32 0.0, %v4487
        %v4489 = vpop.f32.mrf.mxu0
        %v4490 = vadd.f32 0.0, %v4489
        %4491 = vmatprep.mubr.bf16.mxu0 0
        %4492 = vmatmul.mubr.bf16.gmra.mxu0 %v4224
        %v4493 = vpop.f32.mrf.mxu0
        %v4494 = vpop.f32.mrf.mxu0
        %v4495 = vadd.f32 0.0, %v4494
        %v4496 = vpop.f32.mrf.mxu0
        %v4497 = vadd.f32 0.0, %v4496
        %v4498 = vpop.f32.mrf.mxu0
        %v4499 = vadd.f32 0.0, %v4498
        %4500 = vmatprep.mubr.bf16.mxu0 0
        %4501 = vmatmul.mubr.bf16.gmra.mxu0 %v4225
        %v4502 = vpop.f32.mrf.mxu0
        %v4503 = vadd.f32 0.0, %v4502
        %v4504 = vpop.f32.mrf.mxu0
        %v4505 = vadd.f32 0.0, %v4504
        %v4506 = vpop.f32.mrf.mxu0
        %v4507 = vpop.f32.mrf.mxu0
        %v4508 = vadd.f32 0.0, %v4507
        %4509 = vmatprep.mubr.bf16.mxu0 0
        %4510 = vmatmul.mubr.bf16.gmra.mxu0 %v4226
        %v4511 = vpop.f32.mrf.mxu0
        %v4512 = vadd.f32 0.0, %v4511
        %v4513 = vpop.f32.mrf.mxu0
        %v4514 = vadd.f32 0.0, %v4513
        %v4515 = vpop.f32.mrf.mxu0
        %v4516 = vadd.f32 0.0, %v4515
        %v4517 = vpop.f32.mrf.mxu0
        %v4518 = vadd.f32 0.0, %v4517
        %4519 = vmatprep.mubr.bf16.mxu0 0
        %4520 = vmatmul.mubr.bf16.gmra.mxu0 %v4227
        %v4521 = vpop.f32.mrf.mxu0
        %v4522 = vpop.f32.mrf.mxu0
        %v4523 = vadd.f32 0.0, %v4522
        %v4524 = vpop.f32.mrf.mxu0
        %v4525 = vadd.f32 0.0, %v4524
        %v4526 = vpop.f32.mrf.mxu0
        %v4527 = vadd.f32 0.0, %v4526
        %4528 = vmatprep.mubr.bf16.mxu0 0
        %4529 = vmatmul.mubr.bf16.gmra.mxu0 %v4228
        %v4530 = vpop.f32.mrf.mxu0
        %v4531 = vadd.f32 0.0, %v4530
        %v4532 = vpop.f32.mrf.mxu0
        %v4533 = vadd.f32 0.0, %v4532
        %v4534 = vpop.f32.mrf.mxu0
        %v4535 = vpop.f32.mrf.mxu0
        %v4536 = vadd.f32 0.0, %v4535
        %4537 = vmatprep.mubr.bf16.mxu0 0
        %4538 = vmatmul.mubr.bf16.gmra.mxu0 %v4229
        %v4539 = vpop.f32.mrf.mxu0
        %v4540 = vadd.f32 0.0, %v4539
        %v4541 = vpop.f32.mrf.mxu0
        %v4542 = vadd.f32 0.0, %v4541
        %v4543 = vpop.f32.mrf.mxu0
        %v4544 = vadd.f32 0.0, %v4543
        %v4545 = vpop.f32.mrf.mxu0
        %v4546 = vadd.f32 0.0, %v4545
        %4547 = vmatprep.mubr.bf16.mxu0 0
        %4548 = vmatmul.mubr.bf16.gmra.mxu0 %v4230
        %v4549 = vpop.f32.mrf.mxu0
        %v4550 = vpop.f32.mrf.mxu0
        %v4551 = vadd.f32 0.0, %v4550
        %v4552 = vpop.f32.mrf.mxu0
        %v4553 = vadd.f32 0.0, %v4552
        %v4554 = vpop.f32.mrf.mxu0
        %v4555 = vadd.f32 0.0, %v4554
        %4556 = vmatprep.mubr.bf16.mxu0 0
        %4557 = vmatmul.mubr.bf16.gmra.mxu0 %v4231
        %v4558 = vpop.f32.mrf.mxu0
        %v4559 = vadd.f32 0.0, %v4558
        %v4560 = vpop.f32.mrf.mxu0
        %v4561 = vadd.f32 0.0, %v4560
        %v4562 = vpop.f32.mrf.mxu0
        %v4563 = vpop.f32.mrf.mxu0
        %v4564 = vadd.f32 0.0, %v4563
        %4565 = vmatprep.mubr.bf16.mxu0 0
        %4566 = vmatmul.mubr.bf16.gmra.mxu0 %v4232
        %v4567 = vpop.f32.mrf.mxu0
        %v4568 = vadd.f32 0.0, %v4567
        %v4569 = vpop.f32.mrf.mxu0
        %v4570 = vadd.f32 0.0, %v4569
        %v4571 = vpop.f32.mrf.mxu0
        %v4572 = vadd.f32 0.0, %v4571
        %v4573 = vpop.f32.mrf.mxu0
        %v4574 = vadd.f32 0.0, %v4573
        %4575 = vmatprep.mubr.bf16.mxu0 0
        %4576 = vmatmul.mubr.bf16.gmra.mxu0 %v4233
        %v4577 = vpop.f32.mrf.mxu0
        %v4578 = vpop.f32.mrf.mxu0
        %v4579 = vadd.f32 0.0, %v4578
        %v4580 = vpop.f32.mrf.mxu0
        %v4581 = vadd.f32 0.0, %v4580
        %v4582 = vpop.f32.mrf.mxu0
        %v4583 = vadd.f32 0.0, %v4582
        %4584 = vmatprep.mubr.bf16.mxu0 0
        %4585 = vmatmul.mubr.bf16.gmra.mxu0 %v4234
        %v4586 = vpop.f32.mrf.mxu0
        %v4587 = vadd.f32 0.0, %v4586
        %v4588 = vpop.f32.mrf.mxu0
        %v4589 = vadd.f32 0.0, %v4588
        %v4590 = vpop.f32.mrf.mxu0
        %v4591 = vpop.f32.mrf.mxu0
        %v4592 = vadd.f32 0.0, %v4591
        %4593 = vmatprep.mubr.bf16.mxu0 0
        %4594 = vmatmul.mubr.bf16.gmra.mxu0 %v4235
        %v4595 = vpop.f32.mrf.mxu0
        %v4596 = vadd.f32 0.0, %v4595
        %v4597 = vpop.f32.mrf.mxu0
        %v4598 = vadd.f32 0.0, %v4597
        %v4599 = vpop.f32.mrf.mxu0
        %v4600 = vadd.f32 0.0, %v4599
        %v4601 = vpop.f32.mrf.mxu0
        %v4602 = vadd.f32 0.0, %v4601
        %4603 = vmatprep.mubr.bf16.mxu0 0
        %4604 = vmatmul.mubr.bf16.gmra.mxu0 %v4236
        %v4605 = vpop.f32.mrf.mxu0
        %v4606 = vpop.f32.mrf.mxu0
        %v4607 = vadd.f32 0.0, %v4606
        %v4608 = vpop.f32.mrf.mxu0
        %v4609 = vadd.f32 0.0, %v4608
        %v4610 = vpop.f32.mrf.mxu0
        %v4611 = vadd.f32 0.0, %v4610
        %4612 = vmatprep.mubr.bf16.mxu0 0
        %4613 = vmatmul.mubr.bf16.gmra.mxu0 %v4237
        %v4614 = vpop.f32.mrf.mxu0
        %v4615 = vadd.f32 0.0, %v4614
        %v4616 = vpop.f32.mrf.mxu0
        %v4617 = vadd.f32 0.0, %v4616
        %v4618 = vpop.f32.mrf.mxu0
        %v4619 = vpop.f32.mrf.mxu0
        %v4620 = vadd.f32 0.0, %v4619
        %4621 = vmatprep.mubr.bf16.mxu0 0
        %4622 = vmatmul.mubr.bf16.gmra.mxu0 %v4238
        %v4623 = vpop.f32.mrf.mxu0
        %v4624 = vadd.f32 0.0, %v4623
        %v4625 = vpop.f32.mrf.mxu0
        %v4626 = vadd.f32 0.0, %v4625
        %v4627 = vpop.f32.mrf.mxu0
        %v4628 = vadd.f32 0.0, %v4627
        %v4629 = vpop.f32.mrf.mxu0
        %v4630 = vadd.f32 0.0, %v4629
        %4631 = vmatprep.mubr.bf16.mxu0 0
        %4632 = vmatmul.mubr.bf16.gmra.mxu0 %v4239
        %v4633 = vpop.f32.mrf.mxu0
        %v4634 = vpop.f32.mrf.mxu0
        %v4635 = vadd.f32 0.0, %v4634
        %v4636 = vpop.f32.mrf.mxu0
        %v4637 = vadd.f32 0.0, %v4636
        %v4638 = vpop.f32.mrf.mxu0
        %v4639 = vadd.f32 0.0, %v4638
        %4640 = vmatprep.mubr.bf16.mxu0 0
        %4641 = vmatmul.mubr.bf16.gmra.mxu0 %v4240
        %v4642 = vpop.f32.mrf.mxu0
        %v4643 = vadd.f32 0.0, %v4642
        %v4644 = vpop.f32.mrf.mxu0
        %v4645 = vadd.f32 0.0, %v4644
        %v4646 = vpop.f32.mrf.mxu0
        %v4647 = vpop.f32.mrf.mxu0
        %v4648 = vadd.f32 0.0, %v4647
        %4649 = vdwg.mxu0
        %4650 = vmatprep.subr.bf16.mxu0 0
        %4651 = vmatpush1.bf16.msra.mxu0 %v4368
        %4652 = vmatprep.subr.bf16.mxu0 0
        %4653 = vmatpush1.bf16.msra.mxu0 %v4365
        %4654 = vmatprep.subr.bf16.mxu0 0
        %4655 = vmatpush1.bf16.msra.mxu0 %v4362
        %4656 = vmatprep.subr.bf16.mxu0 0
        %4657 = vmatpush1.bf16.msra.mxu0 %v4359
        %4658 = vmatprep.subr.bf16.mxu0 0
        %4659 = vmatpush1.bf16.msra.mxu0 %v4356
        %4660 = vmatprep.subr.bf16.mxu0 0
        %4661 = vmatpush1.bf16.msra.mxu0 %v4353
        %4662 = vmatprep.subr.bf16.mxu0 0
        %4663 = vmatpush1.bf16.msra.mxu0 %v4350
        %4664 = vmatprep.subr.bf16.mxu0 0
        %4665 = vmatpush1.bf16.msra.mxu0 %v4347
        %4666 = vmatprep.subr.bf16.mxu0 0
        %4667 = vmatpush2.bf16.msra.mxu0 0
        %4668 = vmatprep.subr.bf16.mxu0 0
        %4669 = vmatpush2.bf16.msra.mxu0 0
        %4670 = vmatprep.subr.bf16.mxu0 0
        %4671 = vmatpush2.bf16.msra.mxu0 0
        %4672 = vmatprep.subr.bf16.mxu0 0
        %4673 = vmatpush2.bf16.msra.mxu0 0
        %4674 = vmatprep.subr.bf16.mxu0 0
        %4675 = vmatpush2.bf16.msra.mxu0 0
        %4676 = vmatprep.subr.bf16.mxu0 0
        %4677 = vmatpush2.bf16.msra.mxu0 0
        %4678 = vmatprep.subr.bf16.mxu0 0
        %4679 = vmatpush2.bf16.msra.mxu0 0
        %4680 = vmatprep.subr.bf16.mxu0 0
        %4681 = vmatpush2.bf16.msra.mxu0 0
        %4682 = vmatprep.mubr.bf16.mxu0 0
        %4683 = vmatmul.mubr.bf16.gmra.mxu0 %v4217
        %v4684 = vpop.f32.mrf.mxu0
        %v4685 = vadd.f32 0.0, %v4684
        %v4686 = vpop.f32.mrf.mxu0
        %v4687 = vpop.f32.mrf.mxu0
        %v4688 = vadd.f32 0.0, %v4687
        %v4689 = vpop.f32.mrf.mxu0
        %4690 = vmatprep.mubr.bf16.mxu0 0
        %4691 = vmatmul.mubr.bf16.gmra.mxu0 %v4218
        %v4692 = vpop.f32.mrf.mxu0
        %v4693 = vadd.f32 0.0, %v4692
        %v4694 = vpop.f32.mrf.mxu0
        %v4695 = vpop.f32.mrf.mxu0
        %v4696 = vadd.f32 0.0, %v4695
        %v4697 = vpop.f32.mrf.mxu0
        %4698 = vmatprep.mubr.bf16.mxu0 0
        %4699 = vmatmul.mubr.bf16.gmra.mxu0 %v4219
        %v4700 = vpop.f32.mrf.mxu0
        %v4701 = vadd.f32 0.0, %v4700
        %v4702 = vpop.f32.mrf.mxu0
        %v4703 = vpop.f32.mrf.mxu0
        %v4704 = vadd.f32 0.0, %v4703
        %v4705 = vpop.f32.mrf.mxu0
        %4706 = vmatprep.mubr.bf16.mxu0 0
        %4707 = vmatmul.mubr.bf16.gmra.mxu0 %v4220
        %v4708 = vpop.f32.mrf.mxu0
        %v4709 = vadd.f32 0.0, %v4708
        %v4710 = vpop.f32.mrf.mxu0
        %v4711 = vpop.f32.mrf.mxu0
        %v4712 = vadd.f32 0.0, %v4711
        %v4713 = vpop.f32.mrf.mxu0
        %4714 = vmatprep.mubr.bf16.mxu0 0
        %4715 = vmatmul.mubr.bf16.gmra.mxu0 %v4221
        %v4716 = vpop.f32.mrf.mxu0
        %v4717 = vadd.f32 0.0, %v4716
        %v4718 = vpop.f32.mrf.mxu0
        %v4719 = vpop.f32.mrf.mxu0
        %v4720 = vadd.f32 0.0, %v4719
        %v4721 = vpop.f32.mrf.mxu0
        %4722 = vmatprep.mubr.bf16.mxu0 0
        %4723 = vmatmul.mubr.bf16.gmra.mxu0 %v4222
        %v4724 = vpop.f32.mrf.mxu0
        %v4725 = vadd.f32 0.0, %v4724
        %v4726 = vpop.f32.mrf.mxu0
        %v4727 = vpop.f32.mrf.mxu0
        %v4728 = vadd.f32 0.0, %v4727
        %v4729 = vpop.f32.mrf.mxu0
        %4730 = vmatprep.mubr.bf16.mxu0 0
        %4731 = vmatmul.mubr.bf16.gmra.mxu0 %v4223
        %v4732 = vpop.f32.mrf.mxu0
        %v4733 = vadd.f32 0.0, %v4732
        %v4734 = vpop.f32.mrf.mxu0
        %v4735 = vpop.f32.mrf.mxu0
        %v4736 = vadd.f32 0.0, %v4735
        %v4737 = vpop.f32.mrf.mxu0
        %4738 = vmatprep.mubr.bf16.mxu0 0
        %4739 = vmatmul.mubr.bf16.gmra.mxu0 %v4224
        %v4740 = vpop.f32.mrf.mxu0
        %v4741 = vadd.f32 0.0, %v4740
        %v4742 = vpop.f32.mrf.mxu0
        %v4743 = vpop.f32.mrf.mxu0
        %v4744 = vadd.f32 0.0, %v4743
        %v4745 = vpop.f32.mrf.mxu0
        %4746 = vmatprep.mubr.bf16.mxu0 0
        %4747 = vmatmul.mubr.bf16.gmra.mxu0 %v4225
        %v4748 = vpop.f32.mrf.mxu0
        %v4749 = vadd.f32 0.0, %v4748
        %v4750 = vpop.f32.mrf.mxu0
        %v4751 = vpop.f32.mrf.mxu0
        %v4752 = vadd.f32 0.0, %v4751
        %v4753 = vpop.f32.mrf.mxu0
        %4754 = vmatprep.mubr.bf16.mxu0 0
        %4755 = vmatmul.mubr.bf16.gmra.mxu0 %v4226
        %v4756 = vpop.f32.mrf.mxu0
        %v4757 = vadd.f32 0.0, %v4756
        %v4758 = vpop.f32.mrf.mxu0
        %v4759 = vpop.f32.mrf.mxu0
        %v4760 = vadd.f32 0.0, %v4759
        %v4761 = vpop.f32.mrf.mxu0
        %4762 = vmatprep.mubr.bf16.mxu0 0
        %4763 = vmatmul.mubr.bf16.gmra.mxu0 %v4227
        %v4764 = vpop.f32.mrf.mxu0
        %v4765 = vadd.f32 0.0, %v4764
        %v4766 = vpop.f32.mrf.mxu0
        %v4767 = vpop.f32.mrf.mxu0
        %v4768 = vadd.f32 0.0, %v4767
        %v4769 = vpop.f32.mrf.mxu0
        %4770 = vmatprep.mubr.bf16.mxu0 0
        %4771 = vmatmul.mubr.bf16.gmra.mxu0 %v4228
        %v4772 = vpop.f32.mrf.mxu0
        %v4773 = vadd.f32 0.0, %v4772
        %v4774 = vpop.f32.mrf.mxu0
        %v4775 = vpop.f32.mrf.mxu0
        %v4776 = vadd.f32 0.0, %v4775
        %v4777 = vpop.f32.mrf.mxu0
        %4778 = vmatprep.mubr.bf16.mxu0 0
        %4779 = vmatmul.mubr.bf16.gmra.mxu0 %v4229
        %v4780 = vpop.f32.mrf.mxu0
        %v4781 = vadd.f32 0.0, %v4780
        %v4782 = vpop.f32.mrf.mxu0
        %v4783 = vpop.f32.mrf.mxu0
        %v4784 = vadd.f32 0.0, %v4783
        %v4785 = vpop.f32.mrf.mxu0
        %4786 = vmatprep.mubr.bf16.mxu0 0
        %4787 = vmatmul.mubr.bf16.gmra.mxu0 %v4230
        %v4788 = vpop.f32.mrf.mxu0
        %v4789 = vadd.f32 0.0, %v4788
        %v4790 = vpop.f32.mrf.mxu0
        %v4791 = vpop.f32.mrf.mxu0
        %v4792 = vadd.f32 0.0, %v4791
        %v4793 = vpop.f32.mrf.mxu0
        %4794 = vmatprep.mubr.bf16.mxu0 0
        %4795 = vmatmul.mubr.bf16.gmra.mxu0 %v4231
        %v4796 = vpop.f32.mrf.mxu0
        %v4797 = vadd.f32 0.0, %v4796
        %v4798 = vpop.f32.mrf.mxu0
        %v4799 = vpop.f32.mrf.mxu0
        %v4800 = vadd.f32 0.0, %v4799
        %v4801 = vpop.f32.mrf.mxu0
        %4802 = vmatprep.mubr.bf16.mxu0 0
        %4803 = vmatmul.mubr.bf16.gmra.mxu0 %v4232
        %v4804 = vpop.f32.mrf.mxu0
        %v4805 = vadd.f32 0.0, %v4804
        %v4806 = vpop.f32.mrf.mxu0
        %v4807 = vpop.f32.mrf.mxu0
        %v4808 = vadd.f32 0.0, %v4807
        %v4809 = vpop.f32.mrf.mxu0
        %4810 = vmatprep.mubr.bf16.mxu0 0
        %4811 = vmatmul.mubr.bf16.gmra.mxu0 %v4233
        %v4812 = vpop.f32.mrf.mxu0
        %v4813 = vadd.f32 0.0, %v4812
        %v4814 = vpop.f32.mrf.mxu0
        %v4815 = vpop.f32.mrf.mxu0
        %v4816 = vadd.f32 0.0, %v4815
        %v4817 = vpop.f32.mrf.mxu0
        %4818 = vmatprep.mubr.bf16.mxu0 0
        %4819 = vmatmul.mubr.bf16.gmra.mxu0 %v4234
        %v4820 = vpop.f32.mrf.mxu0
        %v4821 = vadd.f32 0.0, %v4820
        %v4822 = vpop.f32.mrf.mxu0
        %v4823 = vpop.f32.mrf.mxu0
        %v4824 = vadd.f32 0.0, %v4823
        %v4825 = vpop.f32.mrf.mxu0
        %4826 = vmatprep.mubr.bf16.mxu0 0
        %4827 = vmatmul.mubr.bf16.gmra.mxu0 %v4235
        %v4828 = vpop.f32.mrf.mxu0
        %v4829 = vadd.f32 0.0, %v4828
        %v4830 = vpop.f32.mrf.mxu0
        %v4831 = vpop.f32.mrf.mxu0
        %v4832 = vadd.f32 0.0, %v4831
        %v4833 = vpop.f32.mrf.mxu0
        %4834 = vmatprep.mubr.bf16.mxu0 0
        %4835 = vmatmul.mubr.bf16.gmra.mxu0 %v4236
        %v4836 = vpop.f32.mrf.mxu0
        %v4837 = vadd.f32 0.0, %v4836
        %v4838 = vpop.f32.mrf.mxu0
        %v4839 = vpop.f32.mrf.mxu0
        %v4840 = vadd.f32 0.0, %v4839
        %v4841 = vpop.f32.mrf.mxu0
        %4842 = vmatprep.mubr.bf16.mxu0 0
        %4843 = vmatmul.mubr.bf16.gmra.mxu0 %v4237
        %v4844 = vpop.f32.mrf.mxu0
        %v4845 = vadd.f32 0.0, %v4844
        %v4846 = vpop.f32.mrf.mxu0
        %v4847 = vpop.f32.mrf.mxu0
        %v4848 = vadd.f32 0.0, %v4847
        %v4849 = vpop.f32.mrf.mxu0
        %4850 = vmatprep.mubr.bf16.mxu0 0
        %4851 = vmatmul.mubr.bf16.gmra.mxu0 %v4238
        %v4852 = vpop.f32.mrf.mxu0
        %v4853 = vadd.f32 0.0, %v4852
        %v4854 = vpop.f32.mrf.mxu0
        %v4855 = vpop.f32.mrf.mxu0
        %v4856 = vadd.f32 0.0, %v4855
        %v4857 = vpop.f32.mrf.mxu0
        %4858 = vmatprep.mubr.bf16.mxu0 0
        %4859 = vmatmul.mubr.bf16.gmra.mxu0 %v4239
        %v4860 = vpop.f32.mrf.mxu0
        %v4861 = vadd.f32 0.0, %v4860
        %v4862 = vpop.f32.mrf.mxu0
        %v4863 = vpop.f32.mrf.mxu0
        %v4864 = vadd.f32 0.0, %v4863
        %v4865 = vpop.f32.mrf.mxu0
        %4866 = vmatprep.mubr.bf16.mxu0 0
        %4867 = vmatmul.mubr.bf16.gmra.mxu0 %v4240
        %v4868 = vpop.f32.mrf.mxu0
        %v4869 = vadd.f32 0.0, %v4868
        %v4870 = vpop.f32.mrf.mxu0
        %v4871 = vpop.f32.mrf.mxu0
        %v4872 = vadd.f32 0.0, %v4871
        %v4873 = vpop.f32.mrf.mxu0
        %4874 = vdwg.mxu0
        %v4875 = vadd.f32 %v4007, %v4428
        %v4876 = vadd.f32 %v4008, %v4432
        %v4877 = vadd.f32 %v4009, %v4441
        %v4878 = vadd.f32 %v4010, %v4447
        %v4879 = vadd.f32 %v4011, %v4456
        %v4880 = vadd.f32 %v4012, %v4460
        %v4881 = vadd.f32 %v4013, %v4469
        %v4882 = vadd.f32 %v4014, %v4475
        %v4883 = vadd.f32 %v4015, %v4484
        %v4884 = vadd.f32 %v4016, %v4488
        %v4885 = vadd.f32 %v4017, %v4497
        %v4886 = vadd.f32 %v4018, %v4503
        %v4887 = vadd.f32 %v4019, %v4512
        %v4888 = vadd.f32 %v4020, %v4516
        %v4889 = vadd.f32 %v4021, %v4525
        %v4890 = vadd.f32 %v4022, %v4531
        %v4891 = vadd.f32 %v4023, %v4540
        %v4892 = vadd.f32 %v4024, %v4544
        %v4893 = vadd.f32 %v4025, %v4553
        %v4894 = vadd.f32 %v4026, %v4559
        %v4895 = vadd.f32 %v4027, %v4568
        %v4896 = vadd.f32 %v4028, %v4572
        %v4897 = vadd.f32 %v4029, %v4581
        %v4898 = vadd.f32 %v4030, %v4587
        %v4899 = vadd.f32 %v4031, %v4596
        %v4900 = vadd.f32 %v4032, %v4600
        %v4901 = vadd.f32 %v4033, %v4609
        %v4902 = vadd.f32 %v4034, %v4615
        %v4903 = vadd.f32 %v4035, %v4624
        %v4904 = vadd.f32 %v4036, %v4628
        %v4905 = vadd.f32 %v4037, %v4637
        %v4906 = vadd.f32 %v4038, %v4643
        %v4955 = vrot.slane %v4430, 1
        %v4956 = vrot.slane %v4434, 1
        %v4957 = vsel %vm2450, %v4955, %v4956
        %v4958 = vrot.slane %v4439, 1
        %v4959 = vsel %vm2450, %v4956, %v4958
        %v4960 = vrot.slane %v4443, 1
        %v4961 = vrot.slane %v4449, 1
        %v4962 = vsel %vm2450, %v4960, %v4961
        %v4963 = vrot.slane %v4452, 1
        %v4964 = vsel %vm2450, %v4961, %v4963
        %v4965 = vrot.slane %v4458, 1
        %v4966 = vrot.slane %v4462, 1
        %v4967 = vsel %vm2450, %v4965, %v4966
        %v4968 = vrot.slane %v4467, 1
        %v4969 = vsel %vm2450, %v4966, %v4968
        %v4970 = vrot.slane %v4471, 1
        %v4971 = vrot.slane %v4477, 1
        %v4972 = vsel %vm2450, %v4970, %v4971
        %v4973 = vrot.slane %v4480, 1
        %v4974 = vsel %vm2450, %v4971, %v4973
        %v4975 = vrot.slane %v4486, 1
        %v4976 = vrot.slane %v4490, 1
        %v4977 = vsel %vm2450, %v4975, %v4976
        %v4978 = vrot.slane %v4495, 1
        %v4979 = vsel %vm2450, %v4976, %v4978
        %v4980 = vrot.slane %v4499, 1
        %v4981 = vrot.slane %v4505, 1
        %v4982 = vsel %vm2450, %v4980, %v4981
        %v4983 = vrot.slane %v4508, 1
        %v4984 = vsel %vm2450, %v4981, %v4983
        %v4985 = vrot.slane %v4514, 1
        %v4986 = vrot.slane %v4518, 1
        %v4987 = vsel %vm2450, %v4985, %v4986
        %v4988 = vrot.slane %v4523, 1
        %v4989 = vsel %vm2450, %v4986, %v4988
        %v4990 = vrot.slane %v4527, 1
        %v4991 = vrot.slane %v4533, 1
        %v4992 = vsel %vm2450, %v4990, %v4991
        %v4993 = vrot.slane %v4536, 1
        %v4994 = vsel %vm2450, %v4991, %v4993
        %v4995 = vrot.slane %v4542, 1
        %v4996 = vrot.slane %v4546, 1
        %v4997 = vsel %vm2450, %v4995, %v4996
        %v4998 = vrot.slane %v4551, 1
        %v4999 = vsel %vm2450, %v4996, %v4998
        %v5000 = vrot.slane %v4555, 1
        %v5001 = vrot.slane %v4561, 1
        %v5002 = vsel %vm2450, %v5000, %v5001
        %v5003 = vrot.slane %v4564, 1
        %v5004 = vsel %vm2450, %v5001, %v5003
        %v5005 = vrot.slane %v4570, 1
        %v5006 = vrot.slane %v4574, 1
        %v5007 = vsel %vm2450, %v5005, %v5006
        %v5008 = vrot.slane %v4579, 1
        %v5009 = vsel %vm2450, %v5006, %v5008
        %v5010 = vrot.slane %v4583, 1
        %v5011 = vrot.slane %v4589, 1
        %v5012 = vsel %vm2450, %v5010, %v5011
        %v5013 = vrot.slane %v4592, 1
        %v5014 = vsel %vm2450, %v5011, %v5013
        %v5015 = vrot.slane %v4598, 1
        %v5016 = vrot.slane %v4602, 1
        %v5017 = vsel %vm2450, %v5015, %v5016
        %v5018 = vrot.slane %v4607, 1
        %v5019 = vsel %vm2450, %v5016, %v5018
        %v5020 = vrot.slane %v4611, 1
        %v5021 = vrot.slane %v4617, 1
        %v5022 = vsel %vm2450, %v5020, %v5021
        %v5023 = vrot.slane %v4620, 1
        %v5024 = vsel %vm2450, %v5021, %v5023
        %v5025 = vrot.slane %v4626, 1
        %v5026 = vrot.slane %v4630, 1
        %v5027 = vsel %vm2450, %v5025, %v5026
        %v5028 = vrot.slane %v4635, 1
        %v5029 = vsel %vm2450, %v5026, %v5028
        %v5030 = vrot.slane %v4639, 1
        %v5031 = vrot.slane %v4645, 1
        %v5032 = vsel %vm2450, %v5030, %v5031
        %v5033 = vrot.slane %v4648, 1
        %v5034 = vsel %vm2450, %v5031, %v5033
        %v5067 = vadd.f32 %v4875, %v4957
        %v5068 = vadd.f32 %v4876, %v4959
        %v5069 = vadd.f32 %v4877, %v4962
        %v5070 = vadd.f32 %v4878, %v4964
        %v5071 = vadd.f32 %v4879, %v4967
        %v5072 = vadd.f32 %v4880, %v4969
        %v5073 = vadd.f32 %v4881, %v4972
        %v5074 = vadd.f32 %v4882, %v4974
        %v5075 = vadd.f32 %v4883, %v4977
        %v5076 = vadd.f32 %v4884, %v4979
        %v5077 = vadd.f32 %v4885, %v4982
        %v5078 = vadd.f32 %v4886, %v4984
        %v5079 = vadd.f32 %v4887, %v4987
        %v5080 = vadd.f32 %v4888, %v4989
        %v5081 = vadd.f32 %v4889, %v4992
        %v5082 = vadd.f32 %v4890, %v4994
        %v5083 = vadd.f32 %v4891, %v4997
        %v5084 = vadd.f32 %v4892, %v4999
        %v5085 = vadd.f32 %v4893, %v5002
        %v5086 = vadd.f32 %v4894, %v5004
        %v5087 = vadd.f32 %v4895, %v5007
        %v5088 = vadd.f32 %v4896, %v5009
        %v5089 = vadd.f32 %v4897, %v5012
        %v5090 = vadd.f32 %v4898, %v5014
        %v5091 = vadd.f32 %v4899, %v5017
        %v5092 = vadd.f32 %v4900, %v5019
        %v5093 = vadd.f32 %v4901, %v5022
        %v5094 = vadd.f32 %v4902, %v5024
        %v5095 = vadd.f32 %v4903, %v5027
        %v5096 = vadd.f32 %v4904, %v5029
        %v5097 = vadd.f32 %v4905, %v5032
        %v5098 = vadd.f32 %v4906, %v5034
        %v5147 = vrot.slane %v4685, 2
        %v5148 = vrot.slane %v4688, 2
        %v5149 = vsel %vm2643, %v5147, %v5148
        %v5150 = vrot.slane %v4693, 2
        %v5151 = vsel %vm2643, %v5148, %v5150
        %v5152 = vrot.slane %v4696, 2
        %v5153 = vrot.slane %v4701, 2
        %v5154 = vsel %vm2643, %v5152, %v5153
        %v5155 = vrot.slane %v4704, 2
        %v5156 = vsel %vm2643, %v5153, %v5155
        %v5157 = vrot.slane %v4709, 2
        %v5158 = vrot.slane %v4712, 2
        %v5159 = vsel %vm2643, %v5157, %v5158
        %v5160 = vrot.slane %v4717, 2
        %v5161 = vsel %vm2643, %v5158, %v5160
        %v5162 = vrot.slane %v4720, 2
        %v5163 = vrot.slane %v4725, 2
        %v5164 = vsel %vm2643, %v5162, %v5163
        %v5165 = vrot.slane %v4728, 2
        %v5166 = vsel %vm2643, %v5163, %v5165
        %v5167 = vrot.slane %v4733, 2
        %v5168 = vrot.slane %v4736, 2
        %v5169 = vsel %vm2643, %v5167, %v5168
        %v5170 = vrot.slane %v4741, 2
        %v5171 = vsel %vm2643, %v5168, %v5170
        %v5172 = vrot.slane %v4744, 2
        %v5173 = vrot.slane %v4749, 2
        %v5174 = vsel %vm2643, %v5172, %v5173
        %v5175 = vrot.slane %v4752, 2
        %v5176 = vsel %vm2643, %v5173, %v5175
        %v5177 = vrot.slane %v4757, 2
        %v5178 = vrot.slane %v4760, 2
        %v5179 = vsel %vm2643, %v5177, %v5178
        %v5180 = vrot.slane %v4765, 2
        %v5181 = vsel %vm2643, %v5178, %v5180
        %v5182 = vrot.slane %v4768, 2
        %v5183 = vrot.slane %v4773, 2
        %v5184 = vsel %vm2643, %v5182, %v5183
        %v5185 = vrot.slane %v4776, 2
        %v5186 = vsel %vm2643, %v5183, %v5185
        %v5187 = vrot.slane %v4781, 2
        %v5188 = vrot.slane %v4784, 2
        %v5189 = vsel %vm2643, %v5187, %v5188
        %v5190 = vrot.slane %v4789, 2
        %v5191 = vsel %vm2643, %v5188, %v5190
        %v5192 = vrot.slane %v4792, 2
        %v5193 = vrot.slane %v4797, 2
        %v5194 = vsel %vm2643, %v5192, %v5193
        %v5195 = vrot.slane %v4800, 2
        %v5196 = vsel %vm2643, %v5193, %v5195
        %v5197 = vrot.slane %v4805, 2
        %v5198 = vrot.slane %v4808, 2
        %v5199 = vsel %vm2643, %v5197, %v5198
        %v5200 = vrot.slane %v4813, 2
        %v5201 = vsel %vm2643, %v5198, %v5200
        %v5202 = vrot.slane %v4816, 2
        %v5203 = vrot.slane %v4821, 2
        %v5204 = vsel %vm2643, %v5202, %v5203
        %v5205 = vrot.slane %v4824, 2
        %v5206 = vsel %vm2643, %v5203, %v5205
        %v5207 = vrot.slane %v4829, 2
        %v5208 = vrot.slane %v4832, 2
        %v5209 = vsel %vm2643, %v5207, %v5208
        %v5210 = vrot.slane %v4837, 2
        %v5211 = vsel %vm2643, %v5208, %v5210
        %v5212 = vrot.slane %v4840, 2
        %v5213 = vrot.slane %v4845, 2
        %v5214 = vsel %vm2643, %v5212, %v5213
        %v5215 = vrot.slane %v4848, 2
        %v5216 = vsel %vm2643, %v5213, %v5215
        %v5217 = vrot.slane %v4853, 2
        %v5218 = vrot.slane %v4856, 2
        %v5219 = vsel %vm2643, %v5217, %v5218
        %v5220 = vrot.slane %v4861, 2
        %v5221 = vsel %vm2643, %v5218, %v5220
        %v5222 = vrot.slane %v4864, 2
        %v5223 = vrot.slane %v4869, 2
        %v5224 = vsel %vm2643, %v5222, %v5223
        %v5225 = vrot.slane %v4872, 2
        %v5226 = vsel %vm2643, %v5223, %v5225
        %v5259 = vadd.f32 %v5067, %v5149
        %v5260 = vadd.f32 %v5068, %v5151
        %v5261 = vadd.f32 %v5069, %v5154
        %v5262 = vadd.f32 %v5070, %v5156
        %v5263 = vadd.f32 %v5071, %v5159
        %v5264 = vadd.f32 %v5072, %v5161
        %v5265 = vadd.f32 %v5073, %v5164
        %v5266 = vadd.f32 %v5074, %v5166
        %v5267 = vadd.f32 %v5075, %v5169
        %v5268 = vadd.f32 %v5076, %v5171
        %v5269 = vadd.f32 %v5077, %v5174
        %v5270 = vadd.f32 %v5078, %v5176
        %v5271 = vadd.f32 %v5079, %v5179
        %v5272 = vadd.f32 %v5080, %v5181
        %v5273 = vadd.f32 %v5081, %v5184
        %v5274 = vadd.f32 %v5082, %v5186
        %v5275 = vadd.f32 %v5083, %v5189
        %v5276 = vadd.f32 %v5084, %v5191
        %v5277 = vadd.f32 %v5085, %v5194
        %v5278 = vadd.f32 %v5086, %v5196
        %v5279 = vadd.f32 %v5087, %v5199
        %v5280 = vadd.f32 %v5088, %v5201
        %v5281 = vadd.f32 %v5089, %v5204
        %v5282 = vadd.f32 %v5090, %v5206
        %v5283 = vadd.f32 %v5091, %v5209
        %v5284 = vadd.f32 %v5092, %v5211
        %v5285 = vadd.f32 %v5093, %v5214
        %v5286 = vadd.f32 %v5094, %v5216
        %v5287 = vadd.f32 %v5095, %v5219
        %v5288 = vadd.f32 %v5096, %v5221
        %v5289 = vadd.f32 %v5097, %v5224
        %v5290 = vadd.f32 %v5098, %v5226
        %v5291 = vld [vmem:[%s5] sm:$0x1]
        %v5293 = vlaneseq
        %v5294 = vshrl.u32 %v5293, 7
        %v5295 = vsub.s32 0, %v5294
        %v5296 = vrot.slane %v5291, %v5295
        %v5298 = vadd.f32 %v5259, %v5296
        %v5299 = vadd.f32 %v5260, %v5296
        %v5300 = vadd.f32 %v5261, %v5296
        %v5301 = vadd.f32 %v5262, %v5296
        %v5302 = vadd.f32 %v5263, %v5296
        %v5303 = vadd.f32 %v5264, %v5296
        %v5304 = vadd.f32 %v5265, %v5296
        %v5305 = vadd.f32 %v5266, %v5296
        %v5306 = vadd.f32 %v5267, %v5296
        %v5307 = vadd.f32 %v5268, %v5296
        %v5308 = vadd.f32 %v5269, %v5296
        %v5309 = vadd.f32 %v5270, %v5296
        %v5310 = vadd.f32 %v5271, %v5296
        %v5311 = vadd.f32 %v5272, %v5296
        %v5312 = vadd.f32 %v5273, %v5296
        %v5313 = vadd.f32 %v5274, %v5296
        %v5314 = vadd.f32 %v5275, %v5296
        %v5315 = vadd.f32 %v5276, %v5296
        %v5316 = vadd.f32 %v5277, %v5296
        %v5317 = vadd.f32 %v5278, %v5296
        %v5318 = vadd.f32 %v5279, %v5296
        %v5319 = vadd.f32 %v5280, %v5296
        %v5320 = vadd.f32 %v5281, %v5296
        %v5321 = vadd.f32 %v5282, %v5296
        %v5322 = vadd.f32 %v5283, %v5296
        %v5323 = vadd.f32 %v5284, %v5296
        %v5324 = vadd.f32 %v5285, %v5296
        %v5325 = vadd.f32 %v5286, %v5296
        %v5326 = vadd.f32 %v5287, %v5296
        %v5327 = vadd.f32 %v5288, %v5296
        %v5328 = vadd.f32 %v5289, %v5296
        %v5329 = vadd.f32 %v5290, %v5296
        %v5330 = vmax.f32 %v5298, 0.0
        %v5331 = vmax.f32 %v5299, 0.0
        %v5332 = vmax.f32 %v5300, 0.0
        %v5333 = vmax.f32 %v5301, 0.0
        %v5334 = vmax.f32 %v5302, 0.0
        %v5335 = vmax.f32 %v5303, 0.0
        %v5336 = vmax.f32 %v5304, 0.0
        %v5337 = vmax.f32 %v5305, 0.0
        %v5338 = vmax.f32 %v5306, 0.0
        %v5339 = vmax.f32 %v5307, 0.0
        %v5340 = vmax.f32 %v5308, 0.0
        %v5341 = vmax.f32 %v5309, 0.0
        %v5342 = vmax.f32 %v5310, 0.0
        %v5343 = vmax.f32 %v5311, 0.0
        %v5344 = vmax.f32 %v5312, 0.0
        %v5345 = vmax.f32 %v5313, 0.0
        %v5346 = vmax.f32 %v5314, 0.0
        %v5347 = vmax.f32 %v5315, 0.0
        %v5348 = vmax.f32 %v5316, 0.0
        %v5349 = vmax.f32 %v5317, 0.0
        %v5350 = vmax.f32 %v5318, 0.0
        %v5351 = vmax.f32 %v5319, 0.0
        %v5352 = vmax.f32 %v5320, 0.0
        %v5353 = vmax.f32 %v5321, 0.0
        %v5354 = vmax.f32 %v5322, 0.0
        %v5355 = vmax.f32 %v5323, 0.0
        %v5356 = vmax.f32 %v5324, 0.0
        %v5357 = vmax.f32 %v5325, 0.0
        %v5358 = vmax.f32 %v5326, 0.0
        %v5359 = vmax.f32 %v5327, 0.0
        %v5360 = vmax.f32 %v5328, 0.0
        %v5361 = vmax.f32 %v5329, 0.0
        %v5362 = vpack.c.bf16 %v5331, %v5330
        %v5363 = vpack.c.bf16 %v5333, %v5332
        %v5364 = vpack.c.bf16 %v5335, %v5334
        %v5365 = vpack.c.bf16 %v5337, %v5336
        %v5366 = vpack.c.bf16 %v5339, %v5338
        %v5367 = vpack.c.bf16 %v5341, %v5340
        %v5368 = vpack.c.bf16 %v5343, %v5342
        %v5369 = vpack.c.bf16 %v5345, %v5344
        %v5370 = vpack.c.bf16 %v5347, %v5346
        %v5371 = vpack.c.bf16 %v5349, %v5348
        %v5372 = vpack.c.bf16 %v5351, %v5350
        %v5373 = vpack.c.bf16 %v5353, %v5352
        %v5374 = vpack.c.bf16 %v5355, %v5354
        %v5375 = vpack.c.bf16 %v5357, %v5356
        %v5376 = vpack.c.bf16 %v5359, %v5358
        %v5377 = vpack.c.bf16 %v5361, %v5360
        %v5378 = vld [vmem:[#allocation9] sm:$0xf]
        %v5379 = vld [vmem:[#allocation9 + $0x4] sm:$0xf]
        %v5380 = vld [vmem:[#allocation9 + $0x8] sm:$0xf]
        %v5381 = vld [vmem:[#allocation9 + $0xc] sm:$0xf]
        %v5382 = vld [vmem:[#allocation9 + $0x10] sm:$0xf]
        %v5383 = vld [vmem:[#allocation9 + $0x14] sm:$0xf]
        %v5384 = vld [vmem:[#allocation9 + $0x18] sm:$0xf]
        %v5385 = vld [vmem:[#allocation9 + $0x1c] sm:$0xf]
        %v5386 = vld [vmem:[#allocation9 + $0x20] sm:$0xf]
        %v5387 = vld [vmem:[#allocation9 + $0x24] sm:$0xf]
        %v5388 = vld [vmem:[#allocation9 + $0x28] sm:$0xf]
        %v5389 = vld [vmem:[#allocation9 + $0x2c] sm:$0xf]
        %v5390 = vld [vmem:[#allocation9 + $0x30] sm:$0xf]
        %v5391 = vld [vmem:[#allocation9 + $0x34] sm:$0xf]
        %v5392 = vld [vmem:[#allocation9 + $0x38] sm:$0xf]
        %v5393 = vld [vmem:[#allocation9 + $0x3c] sm:$0xf]
        %v5394 = vld [vmem:[%s7] sm:$0x1]
        %v5396 = vlaneseq
        %v5397 = vshrl.u32 %v5396, 7
        %v5398 = vsub.s32 0, %v5397
        %v5399 = vrot.slane %v5394, %v5398
        %v5417 = vunpack.c.l.b16 %v5378
        %v5418 = vunpack.c.l.b16 %v5379
        %v5419 = vunpack.c.l.b16 %v5380
        %v5420 = vunpack.c.l.b16 %v5381
        %v5421 = vunpack.c.l.b16 %v5382
        %v5422 = vunpack.c.l.b16 %v5383
        %v5423 = vunpack.c.l.b16 %v5384
        %v5424 = vunpack.c.l.b16 %v5385
        %v5425 = vunpack.c.l.b16 %v5386
        %v5426 = vunpack.c.l.b16 %v5387
        %v5427 = vunpack.c.l.b16 %v5388
        %v5428 = vunpack.c.l.b16 %v5389
        %v5429 = vunpack.c.l.b16 %v5390
        %v5430 = vunpack.c.l.b16 %v5391
        %v5431 = vunpack.c.l.b16 %v5392
        %v5432 = vunpack.c.l.b16 %v5393
        %v5433 = vpack.c.b16 %v5418, %v5417
        %v5434 = vpack.c.b16 %v5420, %v5419
        %v5435 = vpack.c.b16 %v5422, %v5421
        %v5436 = vpack.c.b16 %v5424, %v5423
        %v5437 = vpack.c.b16 %v5426, %v5425
        %v5438 = vpack.c.b16 %v5428, %v5427
        %v5439 = vpack.c.b16 %v5430, %v5429
        %v5440 = vpack.c.b16 %v5432, %v5431
        %5449 = vmatprep.subr.bf16.mxu0 0
        %5450 = vmatpush1.bf16.msra.mxu0 %v5440
        %5451 = vmatprep.subr.bf16.mxu0 0
        %5452 = vmatpush1.bf16.msra.mxu0 %v5439
        %5453 = vmatprep.subr.bf16.mxu0 0
        %5454 = vmatpush1.bf16.msra.mxu0 %v5438
        %5455 = vmatprep.subr.bf16.mxu0 0
        %5456 = vmatpush1.bf16.msra.mxu0 %v5437
        %5457 = vmatprep.subr.bf16.mxu0 0
        %5458 = vmatpush1.bf16.msra.mxu0 %v5436
        %5459 = vmatprep.subr.bf16.mxu0 0
        %5460 = vmatpush1.bf16.msra.mxu0 %v5435
        %5461 = vmatprep.subr.bf16.mxu0 0
        %5462 = vmatpush1.bf16.msra.mxu0 %v5434
        %5463 = vmatprep.subr.bf16.mxu0 0
        %5464 = vmatpush1.bf16.msra.mxu0 %v5433
        %5465 = vmatprep.subr.bf16.mxu0 0
        %5466 = vmatpush2.bf16.msra.mxu0 0
        %5467 = vmatprep.subr.bf16.mxu0 0
        %5468 = vmatpush2.bf16.msra.mxu0 0
        %5469 = vmatprep.subr.bf16.mxu0 0
        %5470 = vmatpush2.bf16.msra.mxu0 0
        %5471 = vmatprep.subr.bf16.mxu0 0
        %5472 = vmatpush2.bf16.msra.mxu0 0
        %5473 = vmatprep.subr.bf16.mxu0 0
        %5474 = vmatpush2.bf16.msra.mxu0 0
        %5475 = vmatprep.subr.bf16.mxu0 0
        %5476 = vmatpush2.bf16.msra.mxu0 0
        %5477 = vmatprep.subr.bf16.mxu0 0
        %5478 = vmatpush2.bf16.msra.mxu0 0
        %5479 = vmatprep.subr.bf16.mxu0 0
        %5480 = vmatpush2.bf16.msra.mxu0 0
        %5481 = vmatprep.mubr.bf16.mxu0 0
        %5482 = vmatmul.mubr.bf16.gmra.mxu0 %v5362
        %v5483 = vpop.f32.mrf.mxu0
        %v5484 = vadd.f32 %v5399, %v5483
        %v5485 = vpop.f32.mrf.mxu0
        %v5486 = vpop.f32.mrf.mxu0
        %v5487 = vadd.f32 %v5399, %v5486
        %v5488 = vpop.f32.mrf.mxu0
        %5489 = vmatprep.mubr.bf16.mxu0 0
        %5490 = vmatmul.mubr.bf16.gmra.mxu0 %v5363
        %v5491 = vpop.f32.mrf.mxu0
        %v5492 = vadd.f32 %v5399, %v5491
        %v5493 = vpop.f32.mrf.mxu0
        %v5494 = vpop.f32.mrf.mxu0
        %v5495 = vadd.f32 %v5399, %v5494
        %v5496 = vpop.f32.mrf.mxu0
        %5497 = vmatprep.mubr.bf16.mxu0 0
        %5498 = vmatmul.mubr.bf16.gmra.mxu0 %v5364
        %v5499 = vpop.f32.mrf.mxu0
        %v5500 = vadd.f32 %v5399, %v5499
        %v5501 = vpop.f32.mrf.mxu0
        %v5502 = vpop.f32.mrf.mxu0
        %v5503 = vadd.f32 %v5399, %v5502
        %v5504 = vpop.f32.mrf.mxu0
        %5505 = vmatprep.mubr.bf16.mxu0 0
        %5506 = vmatmul.mubr.bf16.gmra.mxu0 %v5365
        %v5507 = vpop.f32.mrf.mxu0
        %v5508 = vadd.f32 %v5399, %v5507
        %v5509 = vpop.f32.mrf.mxu0
        %v5510 = vpop.f32.mrf.mxu0
        %v5511 = vadd.f32 %v5399, %v5510
        %v5512 = vpop.f32.mrf.mxu0
        %5513 = vmatprep.mubr.bf16.mxu0 0
        %5514 = vmatmul.mubr.bf16.gmra.mxu0 %v5366
        %v5515 = vpop.f32.mrf.mxu0
        %v5516 = vadd.f32 %v5399, %v5515
        %v5517 = vpop.f32.mrf.mxu0
        %v5518 = vpop.f32.mrf.mxu0
        %v5519 = vadd.f32 %v5399, %v5518
        %v5520 = vpop.f32.mrf.mxu0
        %5521 = vmatprep.mubr.bf16.mxu0 0
        %5522 = vmatmul.mubr.bf16.gmra.mxu0 %v5367
        %v5523 = vpop.f32.mrf.mxu0
        %v5524 = vadd.f32 %v5399, %v5523
        %v5525 = vpop.f32.mrf.mxu0
        %v5526 = vpop.f32.mrf.mxu0
        %v5527 = vadd.f32 %v5399, %v5526
        %v5528 = vpop.f32.mrf.mxu0
        %5529 = vmatprep.mubr.bf16.mxu0 0
        %5530 = vmatmul.mubr.bf16.gmra.mxu0 %v5368
        %v5531 = vpop.f32.mrf.mxu0
        %v5532 = vadd.f32 %v5399, %v5531
        %v5533 = vpop.f32.mrf.mxu0
        %v5534 = vpop.f32.mrf.mxu0
        %v5535 = vadd.f32 %v5399, %v5534
        %v5536 = vpop.f32.mrf.mxu0
        %5537 = vmatprep.mubr.bf16.mxu0 0
        %5538 = vmatmul.mubr.bf16.gmra.mxu0 %v5369
        %v5539 = vpop.f32.mrf.mxu0
        %v5540 = vadd.f32 %v5399, %v5539
        %v5541 = vpop.f32.mrf.mxu0
        %v5542 = vpop.f32.mrf.mxu0
        %v5543 = vadd.f32 %v5399, %v5542
        %v5544 = vpop.f32.mrf.mxu0
        %5545 = vmatprep.mubr.bf16.mxu0 0
        %5546 = vmatmul.mubr.bf16.gmra.mxu0 %v5370
        %v5547 = vpop.f32.mrf.mxu0
        %v5548 = vadd.f32 %v5399, %v5547
        %v5549 = vpop.f32.mrf.mxu0
        %v5550 = vpop.f32.mrf.mxu0
        %v5551 = vadd.f32 %v5399, %v5550
        %v5552 = vpop.f32.mrf.mxu0
        %5553 = vmatprep.mubr.bf16.mxu0 0
        %5554 = vmatmul.mubr.bf16.gmra.mxu0 %v5371
        %v5555 = vpop.f32.mrf.mxu0
        %v5556 = vadd.f32 %v5399, %v5555
        %v5557 = vpop.f32.mrf.mxu0
        %v5558 = vpop.f32.mrf.mxu0
        %v5559 = vadd.f32 %v5399, %v5558
        %v5560 = vpop.f32.mrf.mxu0
        %5561 = vmatprep.mubr.bf16.mxu0 0
        %5562 = vmatmul.mubr.bf16.gmra.mxu0 %v5372
        %v5563 = vpop.f32.mrf.mxu0
        %v5564 = vadd.f32 %v5399, %v5563
        %v5565 = vpop.f32.mrf.mxu0
        %v5566 = vpop.f32.mrf.mxu0
        %v5567 = vadd.f32 %v5399, %v5566
        %v5568 = vpop.f32.mrf.mxu0
        %5569 = vmatprep.mubr.bf16.mxu0 0
        %5570 = vmatmul.mubr.bf16.gmra.mxu0 %v5373
        %v5571 = vpop.f32.mrf.mxu0
        %v5572 = vadd.f32 %v5399, %v5571
        %v5573 = vpop.f32.mrf.mxu0
        %v5574 = vpop.f32.mrf.mxu0
        %v5575 = vadd.f32 %v5399, %v5574
        %v5576 = vpop.f32.mrf.mxu0
        %5577 = vmatprep.mubr.bf16.mxu0 0
        %5578 = vmatmul.mubr.bf16.gmra.mxu0 %v5374
        %v5579 = vpop.f32.mrf.mxu0
        %v5580 = vadd.f32 %v5399, %v5579
        %v5581 = vpop.f32.mrf.mxu0
        %v5582 = vpop.f32.mrf.mxu0
        %v5583 = vadd.f32 %v5399, %v5582
        %v5584 = vpop.f32.mrf.mxu0
        %5585 = vmatprep.mubr.bf16.mxu0 0
        %5586 = vmatmul.mubr.bf16.gmra.mxu0 %v5375
        %v5587 = vpop.f32.mrf.mxu0
        %v5588 = vadd.f32 %v5399, %v5587
        %v5589 = vpop.f32.mrf.mxu0
        %v5590 = vpop.f32.mrf.mxu0
        %v5591 = vadd.f32 %v5399, %v5590
        %v5592 = vpop.f32.mrf.mxu0
        %5593 = vmatprep.mubr.bf16.mxu0 0
        %5594 = vmatmul.mubr.bf16.gmra.mxu0 %v5376
        %v5595 = vpop.f32.mrf.mxu0
        %v5596 = vadd.f32 %v5399, %v5595
        %v5597 = vpop.f32.mrf.mxu0
        %v5598 = vpop.f32.mrf.mxu0
        %v5599 = vadd.f32 %v5399, %v5598
        %v5600 = vpop.f32.mrf.mxu0
        %5601 = vmatprep.mubr.bf16.mxu0 0
        %5602 = vmatmul.mubr.bf16.gmra.mxu0 %v5377
        %v5603 = vpop.f32.mrf.mxu0
        %v5604 = vadd.f32 %v5399, %v5603
        %v5605 = vpop.f32.mrf.mxu0
        %v5606 = vpop.f32.mrf.mxu0
        %v5607 = vadd.f32 %v5399, %v5606
        %v5608 = vpop.f32.mrf.mxu0
        %5609 = vdwg.mxu0
        %v5610 = vadd.f32 %v5484, %v896
        %v5611 = vadd.f32 %v5487, %v897
        %v5612 = vadd.f32 %v5492, %v898
        %v5613 = vadd.f32 %v5495, %v899
        %v5614 = vadd.f32 %v5500, %v900
        %v5615 = vadd.f32 %v5503, %v901
        %v5616 = vadd.f32 %v5508, %v902
        %v5617 = vadd.f32 %v5511, %v903
        %v5618 = vadd.f32 %v5516, %v904
        %v5619 = vadd.f32 %v5519, %v905
        %v5620 = vadd.f32 %v5524, %v906
        %v5621 = vadd.f32 %v5527, %v907
        %v5622 = vadd.f32 %v5532, %v908
        %v5623 = vadd.f32 %v5535, %v909
        %v5624 = vadd.f32 %v5540, %v910
        %v5625 = vadd.f32 %v5543, %v911
        %v5626 = vadd.f32 %v5548, %v912
        %v5627 = vadd.f32 %v5551, %v913
        %v5628 = vadd.f32 %v5556, %v914
        %v5629 = vadd.f32 %v5559, %v915
        %v5630 = vadd.f32 %v5564, %v916
        %v5631 = vadd.f32 %v5567, %v917
        %v5632 = vadd.f32 %v5572, %v918
        %v5633 = vadd.f32 %v5575, %v919
        %v5634 = vadd.f32 %v5580, %v920
        %v5635 = vadd.f32 %v5583, %v921
        %v5636 = vadd.f32 %v5588, %v922
        %v5637 = vadd.f32 %v5591, %v923
        %v5638 = vadd.f32 %v5596, %v924
        %v5639 = vadd.f32 %v5599, %v925
        %v5640 = vadd.f32 %v5604, %v926
        %v5641 = vadd.f32 %v5607, %v927
        %v5642 = vmax.f32 %v5610, 0.0
        %v5643 = vmax.f32 %v5611, 0.0
        %v5644 = vmax.f32 %v5612, 0.0
        %v5645 = vmax.f32 %v5613, 0.0
        %v5646 = vmax.f32 %v5614, 0.0
        %v5647 = vmax.f32 %v5615, 0.0
        %v5648 = vmax.f32 %v5616, 0.0
        %v5649 = vmax.f32 %v5617, 0.0
        %v5650 = vmax.f32 %v5618, 0.0
        %v5651 = vmax.f32 %v5619, 0.0
        %v5652 = vmax.f32 %v5620, 0.0
        %v5653 = vmax.f32 %v5621, 0.0
        %v5654 = vmax.f32 %v5622, 0.0
        %v5655 = vmax.f32 %v5623, 0.0
        %v5656 = vmax.f32 %v5624, 0.0
        %v5657 = vmax.f32 %v5625, 0.0
        %v5658 = vmax.f32 %v5626, 0.0
        %v5659 = vmax.f32 %v5627, 0.0
        %v5660 = vmax.f32 %v5628, 0.0
        %v5661 = vmax.f32 %v5629, 0.0
        %v5662 = vmax.f32 %v5630, 0.0
        %v5663 = vmax.f32 %v5631, 0.0
        %v5664 = vmax.f32 %v5632, 0.0
        %v5665 = vmax.f32 %v5633, 0.0
        %v5666 = vmax.f32 %v5634, 0.0
        %v5667 = vmax.f32 %v5635, 0.0
        %v5668 = vmax.f32 %v5636, 0.0
        %v5669 = vmax.f32 %v5637, 0.0
        %v5670 = vmax.f32 %v5638, 0.0
        %v5671 = vmax.f32 %v5639, 0.0
        %v5672 = vmax.f32 %v5640, 0.0
        %v5673 = vmax.f32 %v5641, 0.0
        %v5674 = vpack.c.bf16 %v5643, %v5642
        %v5675 = vpack.c.bf16 %v5645, %v5644
        %v5676 = vpack.c.bf16 %v5647, %v5646
        %v5677 = vpack.c.bf16 %v5649, %v5648
        %v5678 = vpack.c.bf16 %v5651, %v5650
        %v5679 = vpack.c.bf16 %v5653, %v5652
        %v5680 = vpack.c.bf16 %v5655, %v5654
        %v5681 = vpack.c.bf16 %v5657, %v5656
        %v5682 = vpack.c.bf16 %v5659, %v5658
        %v5683 = vpack.c.bf16 %v5661, %v5660
        %v5684 = vpack.c.bf16 %v5663, %v5662
        %v5685 = vpack.c.bf16 %v5665, %v5664
        %v5686 = vpack.c.bf16 %v5667, %v5666
        %v5687 = vpack.c.bf16 %v5669, %v5668
        %v5688 = vpack.c.bf16 %v5671, %v5670
        %v5689 = vpack.c.bf16 %v5673, %v5672
        %v5706 = vunpack.c.l.b16 %v5674
        %v5707 = vunpack.c.h.b16 %v5674
        %v5708 = vunpack.c.l.b16 %v5675
        %v5709 = vunpack.c.h.b16 %v5675
        %v5710 = vunpack.c.l.b16 %v5676
        %v5711 = vunpack.c.h.b16 %v5676
        %v5712 = vunpack.c.l.b16 %v5677
        %v5713 = vunpack.c.h.b16 %v5677
        %v5714 = vunpack.c.l.b16 %v5678
        %v5715 = vunpack.c.h.b16 %v5678
        %v5716 = vunpack.c.l.b16 %v5679
        %v5717 = vunpack.c.h.b16 %v5679
        %v5718 = vunpack.c.l.b16 %v5680
        %v5719 = vunpack.c.h.b16 %v5680
        %v5720 = vunpack.c.l.b16 %v5681
        %v5721 = vunpack.c.h.b16 %v5681
        %v5722 = vunpack.c.l.b16 %v5682
        %v5723 = vunpack.c.h.b16 %v5682
        %v5724 = vunpack.c.l.b16 %v5683
        %v5725 = vunpack.c.h.b16 %v5683
        %v5726 = vunpack.c.l.b16 %v5684
        %v5727 = vunpack.c.h.b16 %v5684
        %v5728 = vunpack.c.l.b16 %v5685
        %v5729 = vunpack.c.h.b16 %v5685
        %v5730 = vunpack.c.l.b16 %v5686
        %v5731 = vunpack.c.h.b16 %v5686
        %v5732 = vunpack.c.l.b16 %v5687
        %v5733 = vunpack.c.h.b16 %v5687
        %v5734 = vunpack.c.l.b16 %v5688
        %v5735 = vunpack.c.h.b16 %v5688
        %v5736 = vunpack.c.l.b16 %v5689
        %v5737 = vunpack.c.h.b16 %v5689
        %v5738 = vpack.c.b16 %v5706, %v5706
        %v5739 = vpack.c.b16 %v5707, %v5707
        %v5740 = vpack.c.b16 %v5708, %v5708
        %v5741 = vpack.c.b16 %v5709, %v5709
        %v5742 = vpack.c.b16 %v5710, %v5710
        %v5743 = vpack.c.b16 %v5711, %v5711
        %v5744 = vpack.c.b16 %v5712, %v5712
        %v5745 = vpack.c.b16 %v5713, %v5713
        %v5746 = vpack.c.b16 %v5714, %v5714
        %v5747 = vpack.c.b16 %v5715, %v5715
        %v5748 = vpack.c.b16 %v5716, %v5716
        %v5749 = vpack.c.b16 %v5717, %v5717
        %v5750 = vpack.c.b16 %v5718, %v5718
        %v5751 = vpack.c.b16 %v5719, %v5719
        %v5752 = vpack.c.b16 %v5720, %v5720
        %v5753 = vpack.c.b16 %v5721, %v5721
        %v5754 = vpack.c.b16 %v5722, %v5722
        %v5755 = vpack.c.b16 %v5723, %v5723
        %v5756 = vpack.c.b16 %v5724, %v5724
        %v5757 = vpack.c.b16 %v5725, %v5725
        %v5758 = vpack.c.b16 %v5726, %v5726
        %v5759 = vpack.c.b16 %v5727, %v5727
        %v5760 = vpack.c.b16 %v5728, %v5728
        %v5761 = vpack.c.b16 %v5729, %v5729
        %v5762 = vpack.c.b16 %v5730, %v5730
        %v5763 = vpack.c.b16 %v5731, %v5731
        %v5764 = vpack.c.b16 %v5732, %v5732
        %v5765 = vpack.c.b16 %v5733, %v5733
        %v5766 = vpack.c.b16 %v5734, %v5734
        %v5767 = vpack.c.b16 %v5735, %v5735
        %v5768 = vpack.c.b16 %v5736, %v5736
        %v5769 = vpack.c.b16 %v5737, %v5737
        %5802 = vst [vmem:[%s367] sm:$0xf] %v5738
        %5803 = vst [vmem:[%s367 + $0x4] sm:$0xf] %v5739
        %5804 = vst [vmem:[%s367 + $0x8] sm:$0xf] %v5740
        %5805 = vst [vmem:[%s367 + $0xc] sm:$0xf] %v5741
        %5806 = vst [vmem:[%s367 + $0x10] sm:$0xf] %v5742
        %5807 = vst [vmem:[%s367 + $0x14] sm:$0xf] %v5743
        %5808 = vst [vmem:[%s367 + $0x18] sm:$0xf] %v5744
        %5809 = vst [vmem:[%s367 + $0x1c] sm:$0xf] %v5745
        %5810 = vst [vmem:[%s367 + $0x20] sm:$0xf] %v5746
        %5811 = vst [vmem:[%s367 + $0x24] sm:$0xf] %v5747
        %5812 = vst [vmem:[%s367 + $0x28] sm:$0xf] %v5748
        %5813 = vst [vmem:[%s367 + $0x2c] sm:$0xf] %v5749
        %5814 = vst [vmem:[%s367 + $0x30] sm:$0xf] %v5750
        %5815 = vst [vmem:[%s367 + $0x34] sm:$0xf] %v5751
        %5816 = vst [vmem:[%s367 + $0x38] sm:$0xf] %v5752
        %5817 = vst [vmem:[%s367 + $0x3c] sm:$0xf] %v5753
        %5818 = vst [vmem:[%s367 + $0x40] sm:$0xf] %v5754
        %5819 = vst [vmem:[%s367 + $0x44] sm:$0xf] %v5755
        %5820 = vst [vmem:[%s367 + $0x48] sm:$0xf] %v5756
        %5821 = vst [vmem:[%s367 + $0x4c] sm:$0xf] %v5757
        %5822 = vst [vmem:[%s367 + $0x50] sm:$0xf] %v5758
        %5823 = vst [vmem:[%s367 + $0x54] sm:$0xf] %v5759
        %5824 = vst [vmem:[%s367 + $0x58] sm:$0xf] %v5760
        %5825 = vst [vmem:[%s367 + $0x5c] sm:$0xf] %v5761
        %5826 = vst [vmem:[%s367 + $0x60] sm:$0xf] %v5762
        %5827 = vst [vmem:[%s367 + $0x64] sm:$0xf] %v5763
        %5828 = vst [vmem:[%s367 + $0x68] sm:$0xf] %v5764
        %5829 = vst [vmem:[%s367 + $0x6c] sm:$0xf] %v5765
        %5830 = vst [vmem:[%s367 + $0x70] sm:$0xf] %v5766
        %5831 = vst [vmem:[%s367 + $0x74] sm:$0xf] %v5767
        %5832 = vst [vmem:[%s367 + $0x78] sm:$0xf] %v5768
        %5833 = vst [vmem:[%s367 + $0x7c] sm:$0xf] %v5769
        %s5834 = sand.u32 %s208, 1
        %s5835 = scalar_lea.sflag [#allocation5], %s5834
        %s5836 = sand.u32 %s208, 1
        %s5837 = smul.addr %s5836, 128
        %s5838 = scalar_lea.vmem [#allocation11], %s5837
        // Predicated region
        $region69: #{tpu_custom_call.1} parent=51 // pred_check
          %p5839 = pneg %p218
        $region70: #{tpu_custom_call.1} parent=51 // pred_check_branch
          %5841 = sbr.rel (%p5839) target = $region72
        $region71: #{tpu_custom_call.1} parent=51 // pred_region
          %s5843 = ssub.s32 2048, 2048
          %5844 = vsyncadd %s5835, %s5843
          %s5845 = smul.addr %s27, 32
          %s5846 = smul.addr %s5845, 64
          %s5847 = scalar_lea.hbm %s8, %s5846
          %s5848 = sshll.u32 %s5838, 4
          %s5849 = int_to_ptr.vmem [resolvable:$true] %s5848
          %5854 = dma.vmem_to_hbm [thread:$0]  %s5849, 2048, %s5847, %s5835, 64, 64, 4
        $region72: #{tpu_custom_call.1} parent=51 // pred_fallthru
          _
      $region52: #{tpu_custom_call.1} parent=5 // pred_fallthru
        _
      %p5855 = scmp.le.s32.totalorder 2, %s22
      // Predicated region
      $region73: #{tpu_custom_call.1} parent=5 // pred_check
        %p5856 = pneg %p5855
      $region74: #{tpu_custom_call.1} parent=5 // pred_check_branch
        %5858 = sbr.rel (%p5856) target = $region76
      $region75: #{tpu_custom_call.1} parent=5 // pred_region
        %s5859 = ssub.s32 %s22, 2
        // Predicated region
        $region77: #{tpu_custom_call.1} parent=75 // pred_check
          %p5860 = pneg %p224
        $region78: #{tpu_custom_call.1} parent=75 // pred_check_branch
          %5862 = sbr.rel (%p5860) target = $region80
        $region79: #{tpu_custom_call.1} parent=75 // pred_region
          %s5863 = sand.u32 %s209, 1
          %s5864 = scalar_lea.sflag [#allocation5], %s5863
          %s5865 = sand.u32 %s209, 1
          %s5866 = smul.addr %s5865, 128
          %s5867 = scalar_lea.vmem [#allocation11], %s5866
          %5868 = dma.done %s5864, 2048
        $region80: #{tpu_custom_call.1} parent=75 // pred_fallthru
          _
      $region76: #{tpu_custom_call.1} parent=5 // pred_fallthru
        _
    $region6: #{tpu_custom_call.1} parent=1 // loop_footer
      %s26 = sadd.s32 1, %s22
    $region7: #{tpu_custom_call.1} parent=1 // loop_footer_branch
      %21 = sbr.rel target = $region3
    $region8: #{tpu_custom_call.1} parent=1 // loop_exit
      _
    %5869 = vsyncpa [#allocation4], 1
    %s5870 = scalar_lea.sflag [#allocation4], 1
    %5871 = vsyncpa %s5870, 1
    %5872 = vsyncpa [#allocation7], 1
    %5873 = vsyncpa [#allocation10], 1
    %5874 = vsyncpa [#allocation5], 1
    %s5875 = scalar_lea.sflag [#allocation5], 1
    %5876 = vsyncpa %s5875, 1

// kernel: tpu_custom_call.1
$region0: #{tpu_custom_call.1}
  #allocation0 [shape = 'u32[]', space=smem, size = 0x4, offset = 0x4, fixed_abs, tag = 'smem constant byte address 0x4 - core index']
  #allocation1 [shape = 'u32[144,128]{1,0:T(1,128)}', space=vmem, size = 0x12000, scoped, tag = 'internal scratch']
  #allocation2 [shape = 'bf16[18,24,128]{2,1,0:T(8,128)(2,1)}', space=vmem, size = 0x1b000, scoped, tag = 'scratch operand']
  %s0 = inlined_call_operand.hbm [shape: bf16[2,16,16,128], index: 0, kind: input, shape index: {}]
  %s1 = inlined_call_operand.hbm [shape: bf16[128,256], index: 1, kind: input, shape index: {}]
  %s2 = inlined_call_operand.vmem [shape: f32[1,128], index: 2, kind: input, shape index: {}]
  %s3 = inlined_call_operand.vmem [shape: f32[1,128], index: 3, kind: input, shape index: {}]
  %s4 = inlined_call_operand.hbm [shape: bf16[3,128,384], index: 4, kind: input, shape index: {}]
  %s5 = inlined_call_operand.vmem [shape: f32[1,128], index: 5, kind: input, shape index: {}]
  %s6 = inlined_call_operand.hbm [shape: bf16[128,128], index: 6, kind: input, shape index: {}]
  %s7 = inlined_call_operand.vmem [shape: f32[1,128], index: 7, kind: input, shape index: {}]
  %s8 = inlined_call_operand.hbm [shape: bf16[2,16,16,128], index: 8, kind: output, shape index: {}]
  %s9 = sld [smem:[#allocation0]]
  $region81: #{tpu_custom_call.1} parent=0
    _
  %s11 = ssub.s32 1, %s9
  %s12 = scalar_select 0, %s11, %s9
  $region1: #{tpu_custom_call.1} parent=0
    #allocation3 [shape = 'u8[131072]{0}', space=vmem, size = 0x20000, scoped, tag = 'input window, operand 0']
    #allocation4 [shape = 's32[2]{0}', space=sflag, size = 0x8, scoped, tag = 'scoped memory for tpu_custom_call.1']
    #allocation5 [shape = 's32[2]{0}', space=sflag, size = 0x8, scoped, tag = 'scoped memory for tpu_custom_call.1']
    #allocation6 [shape = 'u8[65536]{0}', space=vmem, size = 0x10000, scoped, tag = 'input window, operand 1, single buffered']
    #allocation7 [shape = 's32[1]{0}', space=sflag, size = 0x4, scoped, tag = 'scoped memory for tpu_custom_call.1']
    #allocation8 [shape = 'u8[294912]{0}', space=vmem, size = 0x48000, scoped, tag = 'input window, operand 4, single buffered']
    #allocation9 [shape = 'u8[32768]{0}', space=vmem, size = 0x8000, scoped, tag = 'input window, operand 6, single buffered']
    #allocation10 [shape = 's32[1]{0}', space=sflag, size = 0x4, scoped, tag = 'scoped memory for tpu_custom_call.1']
    #allocation11 [shape = 'u8[131072]{0}', space=vmem, size = 0x20000, scoped, tag = 'output window, operand 0']
    %13 = vsyncpa [#allocation4], 0
    %s14 = scalar_lea.sflag [#allocation4], 1
    %15 = vsyncpa %s14, 0
    %16 = vsyncpa [#allocation7], 0
    %17 = vsyncpa [#allocation10], 0
    %18 = vsyncpa [#allocation5], 0
    %s19 = scalar_lea.sflag [#allocation5], 1
    %20 = vsyncpa %s19, 0
    loop: start=0, step=1, limit=4
    $region2: #{tpu_custom_call.1} parent=1 // loop_pre_header
      _
    $region3: #{tpu_custom_call.1} parent=1 // loop_header
      %s22 = sphi 0, %s26
      %p23 = scmp.ge.s32.totalorder %s22, 4
      %s32 = sphi 0, %s34
      %s35 = sphi 0, %s32
      %s36 = sphi 0, %s35
      %s52 = sphi 0, %s36
      %s56 = sphi 0, %s56
      %s58 = sphi 0, %s56
      %s59 = sphi 0, %s58
      %s73 = sphi 0, %s59
      %s77 = sphi 0, %s77
      %s79 = sphi 0, %s77
      %s80 = sphi 0, %s79
      %s94 = sphi 0, %s80
      %s98 = sphi 0, %s98
      %s100 = sphi 0, %s98
      %s101 = sphi 0, %s100
      %s115 = sphi 0, %s101
      %s119 = sphi 0, %s119
      %s121 = sphi 0, %s119
      %s122 = sphi 0, %s121
      %s136 = sphi 0, %s122
      %s140 = sphi 0, %s140
      %s142 = sphi 0, %s140
      %s143 = sphi 0, %s142
      %s157 = sphi 0, %s143
      %s161 = sphi 0, %s161
      %s163 = sphi 0, %s161
      %s164 = sphi 0, %s163
      %s178 = sphi 0, %s164
      %s182 = sphi 0, %s182
      %s184 = sphi 0, %s182
      %s185 = sphi 0, %s184
      %s199 = sphi 0, %s185
      %s205 = sphi 0, %s207
      %s208 = sphi 0, %s205
      %s209 = sphi 0, %s208
      %s225 = sphi 0, %s209
    $region4: #{tpu_custom_call.1} parent=1 // loop_header_branch
      %25 = sbr.rel (%p23) target = $region8
    $region5: #{tpu_custom_call.1} parent=1 // loop_body
      %s27 = ssub.s32 %s22, 1
      %s28 = ssub.s32 %s22, 2
      %s29 = sadd.s32 %s22, 1
      %s30 = ssub.s32 %s22, %s29
      %p31 = scmp.eq.s32.totalorder %s30, 0
      %s33 = sadd.s32 %s32, 1
      %s34 = scalar_select %p31, %s32, %s33
      %p37 = pneg %p31
      %p38 = scmp.eq.s32.totalorder %s22, 1
      %p39 = por %p37, %p38
      %p40 = scmp.ne.s32.totalorder %s32, %s35
      %p41 = scmp.eq.s32.totalorder %s22, 0
      %p42 = por %p40, %p41
      %p43 = scmp.ne.s32.totalorder %s32, %s35
      %p44 = scmp.eq.s32.totalorder %s27, 1
      %p45 = por %p43, %p44
      %p46 = scmp.ne.s32.totalorder %s35, %s36
      %p47 = scmp.eq.s32.totalorder %s27, 0
      %p48 = por %p46, %p47
      %p49 = scmp.ne.s32.totalorder %s35, %s36
      %p50 = scmp.eq.s32.totalorder %s28, 1
      %p51 = por %p49, %p50
      %p53 = scmp.ne.s32.totalorder %s36, %s52
      %p54 = scmp.eq.s32.totalorder %s28, 0
      %p55 = por %p53, %p54
      %s57 = sadd.s32 %s56, 1
      %p60 = scmp.eq.s32.totalorder %s22, 1
      %p61 = scmp.ne.s32.totalorder %s56, %s58
      %p62 = scmp.eq.s32.totalorder %s22, 0
      %p63 = por %p61, %p62
      %p64 = scmp.ne.s32.totalorder %s56, %s58
      %p65 = scmp.eq.s32.totalorder %s27, 1
      %p66 = por %p64, %p65
      %p67 = scmp.ne.s32.totalorder %s58, %s59
      %p68 = scmp.eq.s32.totalorder %s27, 0
      %p69 = por %p67, %p68
      %p70 = scmp.ne.s32.totalorder %s58, %s59
      %p71 = scmp.eq.s32.totalorder %s28, 1
      %p72 = por %p70, %p71
      %p74 = scmp.ne.s32.totalorder %s59, %s73
      %p75 = scmp.eq.s32.totalorder %s28, 0
      %p76 = por %p74, %p75
      %s78 = sadd.s32 %s77, 1
      %p81 = scmp.eq.s32.totalorder %s22, 1
      %p82 = scmp.ne.s32.totalorder %s77, %s79
      %p83 = scmp.eq.s32.totalorder %s22, 0
      %p84 = por %p82, %p83
      %p85 = scmp.ne.s32.totalorder %s77, %s79
      %p86 = scmp.eq.s32.totalorder %s27, 1
      %p87 = por %p85, %p86
      %p88 = scmp.ne.s32.totalorder %s79, %s80
      %p89 = scmp.eq.s32.totalorder %s27, 0
      %p90 = por %p88, %p89
      %p91 = scmp.ne.s32.totalorder %s79, %s80
      %p92 = scmp.eq.s32.totalorder %s28, 1
      %p93 = por %p91, %p92
      %p95 = scmp.ne.s32.totalorder %s80, %s94
      %p96 = scmp.eq.s32.totalorder %s28, 0
      %p97 = por %p95, %p96
      %s99 = sadd.s32 %s98, 1
      %p102 = scmp.eq.s32.totalorder %s22, 1
      %p103 = scmp.ne.s32.totalorder %s98, %s100
      %p104 = scmp.eq.s32.totalorder %s22, 0
      %p105 = por %p103, %p104
      %p106 = scmp.ne.s32.totalorder %s98, %s100
      %p107 = scmp.eq.s32.totalorder %s27, 1
      %p108 = por %p106, %p107
      %p109 = scmp.ne.s32.totalorder %s100, %s101
      %p110 = scmp.eq.s32.totalorder %s27, 0
      %p111 = por %p109, %p110
      %p112 = scmp.ne.s32.totalorder %s100, %s101
      %p113 = scmp.eq.s32.totalorder %s28, 1
      %p114 = por %p112, %p113
      %p116 = scmp.ne.s32.totalorder %s101, %s115
      %p117 = scmp.eq.s32.totalorder %s28, 0
      %p118 = por %p116, %p117
      %s120 = sadd.s32 %s119, 1
      %p123 = scmp.eq.s32.totalorder %s22, 1
      %p124 = scmp.ne.s32.totalorder %s119, %s121
      %p125 = scmp.eq.s32.totalorder %s22, 0
      %p126 = por %p124, %p125
      %p127 = scmp.ne.s32.totalorder %s119, %s121
      %p128 = scmp.eq.s32.totalorder %s27, 1
      %p129 = por %p127, %p128
      %p130 = scmp.ne.s32.totalorder %s121, %s122
      %p131 = scmp.eq.s32.totalorder %s27, 0
      %p132 = por %p130, %p131
      %p133 = scmp.ne.s32.totalorder %s121, %s122
      %p134 = scmp.eq.s32.totalorder %s28, 1
      %p135 = por %p133, %p134
      %p137 = scmp.ne.s32.totalorder %s122, %s136
      %p138 = scmp.eq.s32.totalorder %s28, 0
      %p139 = por %p137, %p138
      %s141 = sadd.s32 %s140, 1
      %p144 = scmp.eq.s32.totalorder %s22, 1
      %p145 = scmp.ne.s32.totalorder %s140, %s142
      %p146 = scmp.eq.s32.totalorder %s22, 0
      %p147 = por %p145, %p146
      %p148 = scmp.ne.s32.totalorder %s140, %s142
      %p149 = scmp.eq.s32.totalorder %s27, 1
      %p150 = por %p148, %p149
      %p151 = scmp.ne.s32.totalorder %s142, %s143
      %p152 = scmp.eq.s32.totalorder %s27, 0
      %p153 = por %p151, %p152
      %p154 = scmp.ne.s32.totalorder %s142, %s143
      %p155 = scmp.eq.s32.totalorder %s28, 1
      %p156 = por %p154, %p155
      %p158 = scmp.ne.s32.totalorder %s143, %s157
      %p159 = scmp.eq.s32.totalorder %s28, 0
      %p160 = por %p158, %p159
      %s162 = sadd.s32 %s161, 1
      %p165 = scmp.eq.s32.totalorder %s22, 1
      %p166 = scmp.ne.s32.totalorder %s161, %s163
      %p167 = scmp.eq.s32.totalorder %s22, 0
      %p168 = por %p166, %p167
      %p169 = scmp.ne.s32.totalorder %s161, %s163
      %p170 = scmp.eq.s32.totalorder %s27, 1
      %p171 = por %p169, %p170
      %p172 = scmp.ne.s32.totalorder %s163, %s164
      %p173 = scmp.eq.s32.totalorder %s27, 0
      %p174 = por %p172, %p173
      %p175 = scmp.ne.s32.totalorder %s163, %s164
      %p176 = scmp.eq.s32.totalorder %s28, 1
      %p177 = por %p175, %p176
      %p179 = scmp.ne.s32.totalorder %s164, %s178
      %p180 = scmp.eq.s32.totalorder %s28, 0
      %p181 = por %p179, %p180
      %s183 = sadd.s32 %s182, 1
      %p186 = scmp.eq.s32.totalorder %s22, 1
      %p187 = scmp.ne.s32.totalorder %s182, %s184
      %p188 = scmp.eq.s32.totalorder %s22, 0
      %p189 = por %p187, %p188
      %p190 = scmp.ne.s32.totalorder %s182, %s184
      %p191 = scmp.eq.s32.totalorder %s27, 1
      %p192 = por %p190, %p191
      %p193 = scmp.ne.s32.totalorder %s184, %s185
      %p194 = scmp.eq.s32.totalorder %s27, 0
      %p195 = por %p193, %p194
      %p196 = scmp.ne.s32.totalorder %s184, %s185
      %p197 = scmp.eq.s32.totalorder %s28, 1
      %p198 = por %p196, %p197
      %p200 = scmp.ne.s32.totalorder %s185, %s199
      %p201 = scmp.eq.s32.totalorder %s28, 0
      %p202 = por %p200, %p201
      %s203 = ssub.s32 %s22, %s29
      %p204 = scmp.eq.s32.totalorder %s203, 0
      %s206 = sadd.s32 %s205, 1
      %s207 = scalar_select %p204, %s205, %s206
      %p210 = pneg %p204
      %p211 = scmp.eq.s32.totalorder %s22, 1
      %p212 = por %p210, %p211
      %p213 = scmp.ne.s32.totalorder %s205, %s208
      %p214 = scmp.eq.s32.totalorder %s22, 0
      %p215 = por %p213, %p214
      %p216 = scmp.ne.s32.totalorder %s205, %s208
      %p217 = scmp.eq.s32.totalorder %s27, 1
      %p218 = por %p216, %p217
      %p219 = scmp.ne.s32.totalorder %s208, %s209
      %p220 = scmp.eq.s32.totalorder %s27, 0
      %p221 = por %p219, %p220
      %p222 = scmp.ne.s32.totalorder %s208, %s209
      %p223 = scmp.eq.s32.totalorder %s28, 1
      %p224 = por %p222, %p223
      %p226 = scmp.ne.s32.totalorder %s209, %s225
      %p227 = scmp.eq.s32.totalorder %s28, 0
      %p228 = por %p226, %p227
      %p229 = scmp.le.s32.totalorder 1, %s22
      %p230 = scmp.lt.s32.totalorder %s22, 3
      %p231 = pnand %p229, %p230
      %p232 = pneg %p231
      // Predicated region
      $region9: #{tpu_custom_call.1} parent=5 // pred_check
        _
      $region10: #{tpu_custom_call.1} parent=5 // pred_check_branch
        %234 = sbr.rel (%p231) target = $region12
      $region11: #{tpu_custom_call.1} parent=5 // pred_region
        %s235 = ssub.s32 %s22, 1
        // Predicated region
        $region13: #{tpu_custom_call.1} parent=11 // pred_check
          %p236 = pneg %p69
        $region14: #{tpu_custom_call.1} parent=11 // pred_check_branch
          %238 = sbr.rel (%p236) target = $region16
        $region15: #{tpu_custom_call.1} parent=11 // pred_region
          %s240 = ssub.s32 2048, 2048
          %241 = vsyncadd [#allocation7], %s240
          %s242 = sshll.u32 [#allocation6], 4
          %s243 = int_to_ptr.vmem [resolvable:$true] %s242
          %248 = dma.hbm_to_vmem [thread:$0]  %s1, 2048, %s243, [#allocation7], 128, 128, 8
        $region16: #{tpu_custom_call.1} parent=11 // pred_fallthru
          _
        // Predicated region
        $region17: #{tpu_custom_call.1} parent=11 // pred_check
          %p249 = pneg %p90
        $region18: #{tpu_custom_call.1} parent=11 // pred_check_branch
          %251 = sbr.rel (%p249) target = $region20
        $region19: #{tpu_custom_call.1} parent=11 // pred_region
          _
        $region20: #{tpu_custom_call.1} parent=11 // pred_fallthru
          _
        // Predicated region
        $region21: #{tpu_custom_call.1} parent=11 // pred_check
          %p252 = pneg %p111
        $region22: #{tpu_custom_call.1} parent=11 // pred_check_branch
          %254 = sbr.rel (%p252) target = $region24
        $region23: #{tpu_custom_call.1} parent=11 // pred_region
          _
        $region24: #{tpu_custom_call.1} parent=11 // pred_fallthru
          _
        // Predicated region
        $region25: #{tpu_custom_call.1} parent=11 // pred_check
          %p255 = pneg %p132
        $region26: #{tpu_custom_call.1} parent=11 // pred_check_branch
          %257 = sbr.rel (%p255) target = $region28
        $region27: #{tpu_custom_call.1} parent=11 // pred_region
          %s259 = ssub.s32 9216, 9216
          %260 = vsyncadd [#allocation7], %s259
          %s261 = sshll.u32 [#allocation8], 4
          %s262 = int_to_ptr.vmem [resolvable:$true] %s261
          %267 = dma.hbm_to_vmem [thread:$0]  %s4, 9216, %s262, [#allocation7], 192, 192, 12
        $region28: #{tpu_custom_call.1} parent=11 // pred_fallthru
          _
        // Predicated region
        $region29: #{tpu_custom_call.1} parent=11 // pred_check
          %p268 = pneg %p153
        $region30: #{tpu_custom_call.1} parent=11 // pred_check_branch
          %270 = sbr.rel (%p268) target = $region32
        $region31: #{tpu_custom_call.1} parent=11 // pred_region
          _
        $region32: #{tpu_custom_call.1} parent=11 // pred_fallthru
          _
        // Predicated region
        $region33: #{tpu_custom_call.1} parent=11 // pred_check
          %p271 = pneg %p174
        $region34: #{tpu_custom_call.1} parent=11 // pred_check_branch
          %273 = sbr.rel (%p271) target = $region36
        $region35: #{tpu_custom_call.1} parent=11 // pred_region
          %s275 = ssub.s32 1024, 1024
          %276 = vsyncadd [#allocation10], %s275
          %s277 = sshll.u32 [#allocation9], 4
          %s278 = int_to_ptr.vmem [resolvable:$true] %s277
          %283 = dma.hbm_to_vmem [thread:$0]  %s6, 1024, %s278, [#allocation10], 64, 64, 4
        $region36: #{tpu_custom_call.1} parent=11 // pred_fallthru
          _
        // Predicated region
        $region37: #{tpu_custom_call.1} parent=11 // pred_check
          %p284 = pneg %p195
        $region38: #{tpu_custom_call.1} parent=11 // pred_check_branch
          %286 = sbr.rel (%p284) target = $region40
        $region39: #{tpu_custom_call.1} parent=11 // pred_region
          _
        $region40: #{tpu_custom_call.1} parent=11 // pred_fallthru
          _
      $region12: #{tpu_custom_call.1} parent=5 // pred_fallthru
        _
      %p287 = scmp.lt.s32.totalorder %s22, 2
      // Predicated region
      $region41: #{tpu_custom_call.1} parent=5 // pred_check
        %p288 = pneg %p287
      $region42: #{tpu_custom_call.1} parent=5 // pred_check_branch
        %290 = sbr.rel (%p288) target = $region44
      $region43: #{tpu_custom_call.1} parent=5 // pred_region
        // Predicated region
        $region45: #{tpu_custom_call.1} parent=43 // pred_check
          %p291 = pneg %p42
        $region46: #{tpu_custom_call.1} parent=43 // pred_check_branch
          %293 = sbr.rel (%p291) target = $region48
        $region47: #{tpu_custom_call.1} parent=43 // pred_region
          %s294 = sand.u32 %s32, 1
          %s295 = scalar_lea.sflag [#allocation4], %s294
          %s296 = sand.u32 %s32, 1
          %s297 = smul.addr %s296, 128
          %s298 = scalar_lea.vmem [#allocation3], %s297
          %s300 = ssub.s32 2048, 2048
          %301 = vsyncadd %s295, %s300
          %s302 = smul.addr %s22, 32
          %s303 = smul.addr %s302, 64
          %s304 = scalar_lea.hbm %s0, %s303
          %s305 = sshll.u32 %s298, 4
          %s306 = int_to_ptr.vmem [resolvable:$true] %s305
          %311 = dma.hbm_to_vmem [thread:$0]  %s304, 2048, %s306, %s295, 64, 64, 4
        $region48: #{tpu_custom_call.1} parent=43 // pred_fallthru
          _
      $region44: #{tpu_custom_call.1} parent=5 // pred_fallthru
        _
      %p312 = scmp.le.s32.totalorder 1, %s22
      %p313 = scmp.lt.s32.totalorder %s22, 3
      %p314 = pnand %p312, %p313
      %p315 = pneg %p314
      // Predicated region
      $region49: #{tpu_custom_call.1} parent=5 // pred_check
        _
      $region50: #{tpu_custom_call.1} parent=5 // pred_check_branch
        %317 = sbr.rel (%p314) target = $region52
      $region51: #{tpu_custom_call.1} parent=5 // pred_region
        %s318 = ssub.s32 %s22, 1
        %s319 = sand.u32 %s35, 1
        %s320 = scalar_lea.sflag [#allocation4], %s319
        %s321 = sand.u32 %s35, 1
        %s322 = smul.addr %s321, 128
        %s323 = scalar_lea.vmem [#allocation3], %s322
        // Predicated region
        $region53: #{tpu_custom_call.1} parent=51 // pred_check
          %p324 = pneg %p48
        $region54: #{tpu_custom_call.1} parent=51 // pred_check_branch
          %326 = sbr.rel (%p324) target = $region56
        $region55: #{tpu_custom_call.1} parent=51 // pred_region
          %327 = dma.done %s320, 2048
        $region56: #{tpu_custom_call.1} parent=51 // pred_fallthru
          _
        // Predicated region
        $region57: #{tpu_custom_call.1} parent=51 // pred_check
          %p328 = pneg %p69
        $region58: #{tpu_custom_call.1} parent=51 // pred_check_branch
          %330 = sbr.rel (%p328) target = $region60
        $region59: #{tpu_custom_call.1} parent=51 // pred_region
          %331 = dma.done [#allocation7], 2048
        $region60: #{tpu_custom_call.1} parent=51 // pred_fallthru
          _
        // Predicated region
        $region61: #{tpu_custom_call.1} parent=51 // pred_check
          %p332 = pneg %p132
        $region62: #{tpu_custom_call.1} parent=51 // pred_check_branch
          %334 = sbr.rel (%p332) target = $region64
        $region63: #{tpu_custom_call.1} parent=51 // pred_region
          %335 = dma.done [#allocation7], 9216
        $region64: #{tpu_custom_call.1} parent=51 // pred_fallthru
          _
        // Predicated region
        $region65: #{tpu_custom_call.1} parent=51 // pred_check
          %p336 = pneg %p174
        $region66: #{tpu_custom_call.1} parent=51 // pred_check_branch
          %338 = sbr.rel (%p336) target = $region68
        $region67: #{tpu_custom_call.1} parent=51 // pred_region
          %339 = dma.done [#allocation10], 1024
        $region68: #{tpu_custom_call.1} parent=51 // pred_fallthru
          _
        %s340 = sand.u32 %s35, 1
        %s341 = scalar_lea.sflag [#allocation4], %s340
        %s342 = sand.u32 %s35, 1
        %s343 = smul.addr %s342, 128
        %s344 = scalar_lea.vmem [#allocation3], %s343
        %p345 = pneg %p48
        %p346 = pneg %p45
        %p347 = pneg %p69
        %p348 = pneg %p66
        %p349 = pneg %p90
        %p350 = pneg %p87
        %p351 = pneg %p111
        %p352 = pneg %p108
        %p353 = pneg %p132
        %p354 = pneg %p129
        %p355 = pneg %p153
        %p356 = pneg %p150
        %p357 = pneg %p174
        %p358 = pneg %p171
        %p359 = pneg %p195
        %p360 = pneg %p192
        %p361 = pneg %p221
        %p362 = pneg %p218
        %s363 = sand.u32 %s208, 1
        %s364 = scalar_lea.sflag [#allocation5], %s363
        %s365 = sand.u32 %s208, 1
        %s366 = smul.addr %s365, 128
        %s367 = scalar_lea.vmem [#allocation11], %s366
        %v369 = vld [vmem:[%s323] sm:$0xf]
        %v370 = vld [vmem:[%s323 + $0x4] sm:$0xf]
        %v371 = vld [vmem:[%s323 + $0x8] sm:$0xf]
        %v372 = vld [vmem:[%s323 + $0xc] sm:$0xf]
        %v373 = vld [vmem:[%s323 + $0x10] sm:$0xf]
        %v374 = vld [vmem:[%s323 + $0x14] sm:$0xf]
        %v375 = vld [vmem:[%s323 + $0x18] sm:$0xf]
        %v376 = vld [vmem:[%s323 + $0x1c] sm:$0xf]
        %v377 = vld [vmem:[%s323 + $0x20] sm:$0xf]
        %v378 = vld [vmem:[%s323 + $0x24] sm:$0xf]
        %v379 = vld [vmem:[%s323 + $0x28] sm:$0xf]
        %v380 = vld [vmem:[%s323 + $0x2c] sm:$0xf]
        %v381 = vld [vmem:[%s323 + $0x30] sm:$0xf]
        %v382 = vld [vmem:[%s323 + $0x34] sm:$0xf]
        %v383 = vld [vmem:[%s323 + $0x38] sm:$0xf]
        %v384 = vld [vmem:[%s323 + $0x3c] sm:$0xf]
        %v385 = vld [vmem:[%s323 + $0x40] sm:$0xf]
        %v386 = vld [vmem:[%s323 + $0x44] sm:$0xf]
        %v387 = vld [vmem:[%s323 + $0x48] sm:$0xf]
        %v388 = vld [vmem:[%s323 + $0x4c] sm:$0xf]
        %v389 = vld [vmem:[%s323 + $0x50] sm:$0xf]
        %v390 = vld [vmem:[%s323 + $0x54] sm:$0xf]
        %v391 = vld [vmem:[%s323 + $0x58] sm:$0xf]
        %v392 = vld [vmem:[%s323 + $0x5c] sm:$0xf]
        %v393 = vld [vmem:[%s323 + $0x60] sm:$0xf]
        %v394 = vld [vmem:[%s323 + $0x64] sm:$0xf]
        %v395 = vld [vmem:[%s323 + $0x68] sm:$0xf]
        %v396 = vld [vmem:[%s323 + $0x6c] sm:$0xf]
        %v397 = vld [vmem:[%s323 + $0x70] sm:$0xf]
        %v398 = vld [vmem:[%s323 + $0x74] sm:$0xf]
        %v399 = vld [vmem:[%s323 + $0x78] sm:$0xf]
        %v400 = vld [vmem:[%s323 + $0x7c] sm:$0xf]
        %v401 = vld [vmem:[#allocation6] sm:$0xff]
        %v402 = vld [vmem:[#allocation6 + $0x8] sm:$0xff]
        %v403 = vld [vmem:[#allocation6 + $0x10] sm:$0xff]
        %v404 = vld [vmem:[#allocation6 + $0x18] sm:$0xff]
        %v405 = vld [vmem:[#allocation6 + $0x20] sm:$0xff]
        %v406 = vld [vmem:[#allocation6 + $0x28] sm:$0xff]
        %v407 = vld [vmem:[#allocation6 + $0x30] sm:$0xff]
        %v408 = vld [vmem:[#allocation6 + $0x38] sm:$0xff]
        %v409 = vld [vmem:[#allocation6 + $0x40] sm:$0xff]
        %v410 = vld [vmem:[#allocation6 + $0x48] sm:$0xff]
        %v411 = vld [vmem:[#allocation6 + $0x50] sm:$0xff]
        %v412 = vld [vmem:[#allocation6 + $0x58] sm:$0xff]
        %v413 = vld [vmem:[#allocation6 + $0x60] sm:$0xff]
        %v414 = vld [vmem:[#allocation6 + $0x68] sm:$0xff]
        %v415 = vld [vmem:[#allocation6 + $0x70] sm:$0xff]
        %v416 = vld [vmem:[#allocation6 + $0x78] sm:$0xff]
        %v449 = vunpack.c.l.b16 %v369
        %v450 = vunpack.c.l.b16 %v370
        %v451 = vunpack.c.l.b16 %v371
        %v452 = vunpack.c.l.b16 %v372
        %v453 = vunpack.c.l.b16 %v373
        %v454 = vunpack.c.l.b16 %v374
        %v455 = vunpack.c.l.b16 %v375
        %v456 = vunpack.c.l.b16 %v376
        %v457 = vunpack.c.l.b16 %v377
        %v458 = vunpack.c.l.b16 %v378
        %v459 = vunpack.c.l.b16 %v379
        %v460 = vunpack.c.l.b16 %v380
        %v461 = vunpack.c.l.b16 %v381
        %v462 = vunpack.c.l.b16 %v382
        %v463 = vunpack.c.l.b16 %v383
        %v464 = vunpack.c.l.b16 %v384
        %v465 = vunpack.c.l.b16 %v385
        %v466 = vunpack.c.l.b16 %v386
        %v467 = vunpack.c.l.b16 %v387
        %v468 = vunpack.c.l.b16 %v388
        %v469 = vunpack.c.l.b16 %v389
        %v470 = vunpack.c.l.b16 %v390
        %v471 = vunpack.c.l.b16 %v391
        %v472 = vunpack.c.l.b16 %v392
        %v473 = vunpack.c.l.b16 %v393
        %v474 = vunpack.c.l.b16 %v394
        %v475 = vunpack.c.l.b16 %v395
        %v476 = vunpack.c.l.b16 %v396
        %v477 = vunpack.c.l.b16 %v397
        %v478 = vunpack.c.l.b16 %v398
        %v479 = vunpack.c.l.b16 %v399
        %v480 = vunpack.c.l.b16 %v400
        %v481 = vpack.c.b16 %v450, %v449
        %v482 = vpack.c.b16 %v452, %v451
        %v483 = vpack.c.b16 %v454, %v453
        %v484 = vpack.c.b16 %v456, %v455
        %v485 = vpack.c.b16 %v458, %v457
        %v486 = vpack.c.b16 %v460, %v459
        %v487 = vpack.c.b16 %v462, %v461
        %v488 = vpack.c.b16 %v464, %v463
        %v489 = vpack.c.b16 %v466, %v465
        %v490 = vpack.c.b16 %v468, %v467
        %v491 = vpack.c.b16 %v470, %v469
        %v492 = vpack.c.b16 %v472, %v471
        %v493 = vpack.c.b16 %v474, %v473
        %v494 = vpack.c.b16 %v476, %v475
        %v495 = vpack.c.b16 %v478, %v477
        %v496 = vpack.c.b16 %v480, %v479
        %v529 = vunpack.c.l.b16 %v401
        %v530 = vunpack.c.h.b16 %v401
        %v531 = vunpack.c.l.b16 %v402
        %v532 = vunpack.c.h.b16 %v402
        %v533 = vunpack.c.l.b16 %v403
        %v534 = vunpack.c.h.b16 %v403
        %v535 = vunpack.c.l.b16 %v404
        %v536 = vunpack.c.h.b16 %v404
        %v537 = vunpack.c.l.b16 %v405
        %v538 = vunpack.c.h.b16 %v405
        %v539 = vunpack.c.l.b16 %v406
        %v540 = vunpack.c.h.b16 %v406
        %v541 = vunpack.c.l.b16 %v407
        %v542 = vunpack.c.h.b16 %v407
        %v543 = vunpack.c.l.b16 %v408
        %v544 = vunpack.c.h.b16 %v408
        %v545 = vunpack.c.l.b16 %v409
        %v546 = vunpack.c.h.b16 %v409
        %v547 = vunpack.c.l.b16 %v410
        %v548 = vunpack.c.h.b16 %v410
        %v549 = vunpack.c.l.b16 %v411
        %v550 = vunpack.c.h.b16 %v411
        %v551 = vunpack.c.l.b16 %v412
        %v552 = vunpack.c.h.b16 %v412
        %v553 = vunpack.c.l.b16 %v413
        %v554 = vunpack.c.h.b16 %v413
        %v555 = vunpack.c.l.b16 %v414
        %v556 = vunpack.c.h.b16 %v414
        %v557 = vunpack.c.l.b16 %v415
        %v558 = vunpack.c.h.b16 %v415
        %v559 = vunpack.c.l.b16 %v416
        %v560 = vunpack.c.h.b16 %v416
        %v561 = vpack.c.b16 %v531, %v529
        %v562 = vpack.c.b16 %v532, %v530
        %v563 = vpack.c.b16 %v535, %v533
        %v564 = vpack.c.b16 %v536, %v534
        %v565 = vpack.c.b16 %v539, %v537
        %v566 = vpack.c.b16 %v540, %v538
        %v567 = vpack.c.b16 %v543, %v541
        %v568 = vpack.c.b16 %v544, %v542
        %v569 = vpack.c.b16 %v547, %v545
        %v570 = vpack.c.b16 %v548, %v546
        %v571 = vpack.c.b16 %v551, %v549
        %v572 = vpack.c.b16 %v552, %v550
        %v573 = vpack.c.b16 %v555, %v553
        %v574 = vpack.c.b16 %v556, %v554
        %v575 = vpack.c.b16 %v559, %v557
        %v576 = vpack.c.b16 %v560, %v558
        %593 = vmatprep.subr.bf16.mxu0 %v576
        %594 = vmatpush1.bf16.msra.mxu0 %v575
        %595 = vmatprep.subr.bf16.mxu0 %v574
        %596 = vmatpush1.bf16.msra.mxu0 %v573
        %597 = vmatprep.subr.bf16.mxu0 %v572
        %598 = vmatpush1.bf16.msra.mxu0 %v571
        %599 = vmatprep.subr.bf16.mxu0 %v570
        %600 = vmatpush1.bf16.msra.mxu0 %v569
        %601 = vmatprep.subr.bf16.mxu0 %v568
        %602 = vmatpush1.bf16.msra.mxu0 %v567
        %603 = vmatprep.subr.bf16.mxu0 %v566
        %604 = vmatpush1.bf16.msra.mxu0 %v565
        %605 = vmatprep.subr.bf16.mxu0 %v564
        %606 = vmatpush1.bf16.msra.mxu0 %v563
        %607 = vmatprep.subr.bf16.mxu0 %v562
        %608 = vmatpush1.bf16.msra.mxu0 %v561
        %609 = vmatprep.subr.bf16.mxu0 0
        %610 = vmatpush2.bf16.msra.mxu0 0
        %611 = vmatprep.subr.bf16.mxu0 0
        %612 = vmatpush2.bf16.msra.mxu0 0
        %613 = vmatprep.subr.bf16.mxu0 0
        %614 = vmatpush2.bf16.msra.mxu0 0
        %615 = vmatprep.subr.bf16.mxu0 0
        %616 = vmatpush2.bf16.msra.mxu0 0
        %617 = vmatprep.subr.bf16.mxu0 0
        %618 = vmatpush2.bf16.msra.mxu0 0
        %619 = vmatprep.subr.bf16.mxu0 0
        %620 = vmatpush2.bf16.msra.mxu0 0
        %621 = vmatprep.subr.bf16.mxu0 0
        %622 = vmatpush2.bf16.msra.mxu0 0
        %623 = vmatprep.subr.bf16.mxu0 0
        %624 = vmatpush2.bf16.msra.mxu0 0
        %625 = vmatprep.mubr.bf16.mxu0 0
        %626 = vmatmul.mubr.bf16.gmra.mxu0 %v481
        %v627 = vpop.f32.mrf.mxu0
        %v628 = vadd.f32 0.0, %v627
        %v629 = vpop.f32.mrf.mxu0
        %v630 = vadd.f32 0.0, %v629
        %v631 = vpop.f32.mrf.mxu0
        %v632 = vadd.f32 0.0, %v631
        %v633 = vpop.f32.mrf.mxu0
        %v634 = vadd.f32 0.0, %v633
        %635 = vmatprep.mubr.bf16.mxu0 0
        %636 = vmatmul.mubr.bf16.gmra.mxu0 %v482
        %v637 = vpop.f32.mrf.mxu0
        %v638 = vadd.f32 0.0, %v637
        %v639 = vpop.f32.mrf.mxu0
        %v640 = vadd.f32 0.0, %v639
        %v641 = vpop.f32.mrf.mxu0
        %v642 = vadd.f32 0.0, %v641
        %v643 = vpop.f32.mrf.mxu0
        %v644 = vadd.f32 0.0, %v643
        %645 = vmatprep.mubr.bf16.mxu0 0
        %646 = vmatmul.mubr.bf16.gmra.mxu0 %v483
        %v647 = vpop.f32.mrf.mxu0
        %v648 = vadd.f32 0.0, %v647
        %v649 = vpop.f32.mrf.mxu0
        %v650 = vadd.f32 0.0, %v649
        %v651 = vpop.f32.mrf.mxu0
        %v652 = vadd.f32 0.0, %v651
        %v653 = vpop.f32.mrf.mxu0
        %v654 = vadd.f32 0.0, %v653
        %655 = vmatprep.mubr.bf16.mxu0 0
        %656 = vmatmul.mubr.bf16.gmra.mxu0 %v484
        %v657 = vpop.f32.mrf.mxu0
        %v658 = vadd.f32 0.0, %v657
        %v659 = vpop.f32.mrf.mxu0
        %v660 = vadd.f32 0.0, %v659
        %v661 = vpop.f32.mrf.mxu0
        %v662 = vadd.f32 0.0, %v661
        %v663 = vpop.f32.mrf.mxu0
        %v664 = vadd.f32 0.0, %v663
        %665 = vmatprep.mubr.bf16.mxu0 0
        %666 = vmatmul.mubr.bf16.gmra.mxu0 %v485
        %v667 = vpop.f32.mrf.mxu0
        %v668 = vadd.f32 0.0, %v667
        %v669 = vpop.f32.mrf.mxu0
        %v670 = vadd.f32 0.0, %v669
        %v671 = vpop.f32.mrf.mxu0
        %v672 = vadd.f32 0.0, %v671
        %v673 = vpop.f32.mrf.mxu0
        %v674 = vadd.f32 0.0, %v673
        %675 = vmatprep.mubr.bf16.mxu0 0
        %676 = vmatmul.mubr.bf16.gmra.mxu0 %v486
        %v677 = vpop.f32.mrf.mxu0
        %v678 = vadd.f32 0.0, %v677
        %v679 = vpop.f32.mrf.mxu0
        %v680 = vadd.f32 0.0, %v679
        %v681 = vpop.f32.mrf.mxu0
        %v682 = vadd.f32 0.0, %v681
        %v683 = vpop.f32.mrf.mxu0
        %v684 = vadd.f32 0.0, %v683
        %685 = vmatprep.mubr.bf16.mxu0 0
        %686 = vmatmul.mubr.bf16.gmra.mxu0 %v487
        %v687 = vpop.f32.mrf.mxu0
        %v688 = vadd.f32 0.0, %v687
        %v689 = vpop.f32.mrf.mxu0
        %v690 = vadd.f32 0.0, %v689
        %v691 = vpop.f32.mrf.mxu0
        %v692 = vadd.f32 0.0, %v691
        %v693 = vpop.f32.mrf.mxu0
        %v694 = vadd.f32 0.0, %v693
        %695 = vmatprep.mubr.bf16.mxu0 0
        %696 = vmatmul.mubr.bf16.gmra.mxu0 %v488
        %v697 = vpop.f32.mrf.mxu0
        %v698 = vadd.f32 0.0, %v697
        %v699 = vpop.f32.mrf.mxu0
        %v700 = vadd.f32 0.0, %v699
        %v701 = vpop.f32.mrf.mxu0
        %v702 = vadd.f32 0.0, %v701
        %v703 = vpop.f32.mrf.mxu0
        %v704 = vadd.f32 0.0, %v703
        %705 = vmatprep.mubr.bf16.mxu0 0
        %706 = vmatmul.mubr.bf16.gmra.mxu0 %v489
        %v707 = vpop.f32.mrf.mxu0
        %v708 = vadd.f32 0.0, %v707
        %v709 = vpop.f32.mrf.mxu0
        %v710 = vadd.f32 0.0, %v709
        %v711 = vpop.f32.mrf.mxu0
        %v712 = vadd.f32 0.0, %v711
        %v713 = vpop.f32.mrf.mxu0
        %v714 = vadd.f32 0.0, %v713
        %715 = vmatprep.mubr.bf16.mxu0 0
        %716 = vmatmul.mubr.bf16.gmra.mxu0 %v490
        %v717 = vpop.f32.mrf.mxu0
        %v718 = vadd.f32 0.0, %v717
        %v719 = vpop.f32.mrf.mxu0
        %v720 = vadd.f32 0.0, %v719
        %v721 = vpop.f32.mrf.mxu0
        %v722 = vadd.f32 0.0, %v721
        %v723 = vpop.f32.mrf.mxu0
        %v724 = vadd.f32 0.0, %v723
        %725 = vmatprep.mubr.bf16.mxu0 0
        %726 = vmatmul.mubr.bf16.gmra.mxu0 %v491
        %v727 = vpop.f32.mrf.mxu0
        %v728 = vadd.f32 0.0, %v727
        %v729 = vpop.f32.mrf.mxu0
        %v730 = vadd.f32 0.0, %v729
        %v731 = vpop.f32.mrf.mxu0
        %v732 = vadd.f32 0.0, %v731
        %v733 = vpop.f32.mrf.mxu0
        %v734 = vadd.f32 0.0, %v733
        %735 = vmatprep.mubr.bf16.mxu0 0
        %736 = vmatmul.mubr.bf16.gmra.mxu0 %v492
        %v737 = vpop.f32.mrf.mxu0
        %v738 = vadd.f32 0.0, %v737
        %v739 = vpop.f32.mrf.mxu0
        %v740 = vadd.f32 0.0, %v739
        %v741 = vpop.f32.mrf.mxu0
        %v742 = vadd.f32 0.0, %v741
        %v743 = vpop.f32.mrf.mxu0
        %v744 = vadd.f32 0.0, %v743
        %745 = vmatprep.mubr.bf16.mxu0 0
        %746 = vmatmul.mubr.bf16.gmra.mxu0 %v493
        %v747 = vpop.f32.mrf.mxu0
        %v748 = vadd.f32 0.0, %v747
        %v749 = vpop.f32.mrf.mxu0
        %v750 = vadd.f32 0.0, %v749
        %v751 = vpop.f32.mrf.mxu0
        %v752 = vadd.f32 0.0, %v751
        %v753 = vpop.f32.mrf.mxu0
        %v754 = vadd.f32 0.0, %v753
        %755 = vmatprep.mubr.bf16.mxu0 0
        %756 = vmatmul.mubr.bf16.gmra.mxu0 %v494
        %v757 = vpop.f32.mrf.mxu0
        %v758 = vadd.f32 0.0, %v757
        %v759 = vpop.f32.mrf.mxu0
        %v760 = vadd.f32 0.0, %v759
        %v761 = vpop.f32.mrf.mxu0
        %v762 = vadd.f32 0.0, %v761
        %v763 = vpop.f32.mrf.mxu0
        %v764 = vadd.f32 0.0, %v763
        %765 = vmatprep.mubr.bf16.mxu0 0
        %766 = vmatmul.mubr.bf16.gmra.mxu0 %v495
        %v767 = vpop.f32.mrf.mxu0
        %v768 = vadd.f32 0.0, %v767
        %v769 = vpop.f32.mrf.mxu0
        %v770 = vadd.f32 0.0, %v769
        %v771 = vpop.f32.mrf.mxu0
        %v772 = vadd.f32 0.0, %v771
        %v773 = vpop.f32.mrf.mxu0
        %v774 = vadd.f32 0.0, %v773
        %775 = vmatprep.mubr.bf16.mxu0 0
        %776 = vmatmul.mubr.bf16.gmra.mxu0 %v496
        %v777 = vpop.f32.mrf.mxu0
        %v778 = vadd.f32 0.0, %v777
        %v779 = vpop.f32.mrf.mxu0
        %v780 = vadd.f32 0.0, %v779
        %v781 = vpop.f32.mrf.mxu0
        %v782 = vadd.f32 0.0, %v781
        %v783 = vpop.f32.mrf.mxu0
        %v784 = vadd.f32 0.0, %v783
        %785 = vdwg.mxu0
        %v786 = vld [vmem:[%s2] sm:$0x1]
        %v788 = vlaneseq
        %v789 = vshrl.u32 %v788, 7
        %v790 = vsub.s32 0, %v789
        %v791 = vrot.slane %v786, %v790
        %v793 = vadd.f32 %v628, %v791
        %v794 = vadd.f32 %v632, %v791
        %v795 = vadd.f32 %v638, %v791
        %v796 = vadd.f32 %v642, %v791
        %v797 = vadd.f32 %v648, %v791
        %v798 = vadd.f32 %v652, %v791
        %v799 = vadd.f32 %v658, %v791
        %v800 = vadd.f32 %v662, %v791
        %v801 = vadd.f32 %v668, %v791
        %v802 = vadd.f32 %v672, %v791
        %v803 = vadd.f32 %v678, %v791
        %v804 = vadd.f32 %v682, %v791
        %v805 = vadd.f32 %v688, %v791
        %v806 = vadd.f32 %v692, %v791
        %v807 = vadd.f32 %v698, %v791
        %v808 = vadd.f32 %v702, %v791
        %v809 = vadd.f32 %v708, %v791
        %v810 = vadd.f32 %v712, %v791
        %v811 = vadd.f32 %v718, %v791
        %v812 = vadd.f32 %v722, %v791
        %v813 = vadd.f32 %v728, %v791
        %v814 = vadd.f32 %v732, %v791
        %v815 = vadd.f32 %v738, %v791
        %v816 = vadd.f32 %v742, %v791
        %v817 = vadd.f32 %v748, %v791
        %v818 = vadd.f32 %v752, %v791
        %v819 = vadd.f32 %v758, %v791
        %v820 = vadd.f32 %v762, %v791
        %v821 = vadd.f32 %v768, %v791
        %v822 = vadd.f32 %v772, %v791
        %v823 = vadd.f32 %v778, %v791
        %v824 = vadd.f32 %v782, %v791
        %v825 = vmax.f32 %v793, 0.0
        %v826 = vmax.f32 %v794, 0.0
        %v827 = vmax.f32 %v795, 0.0
        %v828 = vmax.f32 %v796, 0.0
        %v829 = vmax.f32 %v797, 0.0
        %v830 = vmax.f32 %v798, 0.0
        %v831 = vmax.f32 %v799, 0.0
        %v832 = vmax.f32 %v800, 0.0
        %v833 = vmax.f32 %v801, 0.0
        %v834 = vmax.f32 %v802, 0.0
        %v835 = vmax.f32 %v803, 0.0
        %v836 = vmax.f32 %v804, 0.0
        %v837 = vmax.f32 %v805, 0.0
        %v838 = vmax.f32 %v806, 0.0
        %v839 = vmax.f32 %v807, 0.0
        %v840 = vmax.f32 %v808, 0.0
        %v841 = vmax.f32 %v809, 0.0
        %v842 = vmax.f32 %v810, 0.0
        %v843 = vmax.f32 %v811, 0.0
        %v844 = vmax.f32 %v812, 0.0
        %v845 = vmax.f32 %v813, 0.0
        %v846 = vmax.f32 %v814, 0.0
        %v847 = vmax.f32 %v815, 0.0
        %v848 = vmax.f32 %v816, 0.0
        %v849 = vmax.f32 %v817, 0.0
        %v850 = vmax.f32 %v818, 0.0
        %v851 = vmax.f32 %v819, 0.0
        %v852 = vmax.f32 %v820, 0.0
        %v853 = vmax.f32 %v821, 0.0
        %v854 = vmax.f32 %v822, 0.0
        %v855 = vmax.f32 %v823, 0.0
        %v856 = vmax.f32 %v824, 0.0
        %v857 = vld [vmem:[%s3] sm:$0x1]
        %v859 = vlaneseq
        %v860 = vshrl.u32 %v859, 7
        %v861 = vsub.s32 0, %v860
        %v862 = vrot.slane %v857, %v861
        %v864 = vadd.f32 %v630, %v862
        %v865 = vadd.f32 %v634, %v862
        %v866 = vadd.f32 %v640, %v862
        %v867 = vadd.f32 %v644, %v862
        %v868 = vadd.f32 %v650, %v862
        %v869 = vadd.f32 %v654, %v862
        %v870 = vadd.f32 %v660, %v862
        %v871 = vadd.f32 %v664, %v862
        %v872 = vadd.f32 %v670, %v862
        %v873 = vadd.f32 %v674, %v862
        %v874 = vadd.f32 %v680, %v862
        %v875 = vadd.f32 %v684, %v862
        %v876 = vadd.f32 %v690, %v862
        %v877 = vadd.f32 %v694, %v862
        %v878 = vadd.f32 %v700, %v862
        %v879 = vadd.f32 %v704, %v862
        %v880 = vadd.f32 %v710, %v862
        %v881 = vadd.f32 %v714, %v862
        %v882 = vadd.f32 %v720, %v862
        %v883 = vadd.f32 %v724, %v862
        %v884 = vadd.f32 %v730, %v862
        %v885 = vadd.f32 %v734, %v862
        %v886 = vadd.f32 %v740, %v862
        %v887 = vadd.f32 %v744, %v862
        %v888 = vadd.f32 %v750, %v862
        %v889 = vadd.f32 %v754, %v862
        %v890 = vadd.f32 %v760, %v862
        %v891 = vadd.f32 %v764, %v862
        %v892 = vadd.f32 %v770, %v862
        %v893 = vadd.f32 %v774, %v862
        %v894 = vadd.f32 %v780, %v862
        %v895 = vadd.f32 %v784, %v862
        %v896 = vmax.f32 %v864, 0.0
        %v897 = vmax.f32 %v865, 0.0
        %v898 = vmax.f32 %v866, 0.0
        %v899 = vmax.f32 %v867, 0.0
        %v900 = vmax.f32 %v868, 0.0
        %v901 = vmax.f32 %v869, 0.0
        %v902 = vmax.f32 %v870, 0.0
        %v903 = vmax.f32 %v871, 0.0
        %v904 = vmax.f32 %v872, 0.0
        %v905 = vmax.f32 %v873, 0.0
        %v906 = vmax.f32 %v874, 0.0
        %v907 = vmax.f32 %v875, 0.0
        %v908 = vmax.f32 %v876, 0.0
        %v909 = vmax.f32 %v877, 0.0
        %v910 = vmax.f32 %v878, 0.0
        %v911 = vmax.f32 %v879, 0.0
        %v912 = vmax.f32 %v880, 0.0
        %v913 = vmax.f32 %v881, 0.0
        %v914 = vmax.f32 %v882, 0.0
        %v915 = vmax.f32 %v883, 0.0
        %v916 = vmax.f32 %v884, 0.0
        %v917 = vmax.f32 %v885, 0.0
        %v918 = vmax.f32 %v886, 0.0
        %v919 = vmax.f32 %v887, 0.0
        %v920 = vmax.f32 %v888, 0.0
        %v921 = vmax.f32 %v889, 0.0
        %v922 = vmax.f32 %v890, 0.0
        %v923 = vmax.f32 %v891, 0.0
        %v924 = vmax.f32 %v892, 0.0
        %v925 = vmax.f32 %v893, 0.0
        %v926 = vmax.f32 %v894, 0.0
        %v927 = vmax.f32 %v895, 0.0
        %928 = vst [vmem:[#allocation2] sm:$0xf] 0
        %929 = vst [vmem:[#allocation2 + $0x4] sm:$0xf] 0
        %930 = vst [vmem:[#allocation2 + $0x8] sm:$0xf] 0
        %s931 = scalar_lea.vmem [#allocation2], 204
        %932 = vst [vmem:[%s931] sm:$0xf] 0
        %933 = vst [vmem:[%s931 + $0x4] sm:$0xf] 0
        %934 = vst [vmem:[%s931 + $0x8] sm:$0xf] 0
        %s935 = scalar_lea.vmem [#allocation2], 12
        %vm936 = vcmask 1040384
        %vm937 = vsmask.f32 256
        %vm938 = vmand %vm936, %vm937
        %v939 = vld [vmem:[%s935] sm:$0x1]
        %v940 = vsel %vm938, 0, %v939
        %941 = vst [vmem:[%s935] sm:$0x1] %v940
        %v942 = vld [vmem:[%s935 + $0xc] sm:$0x1]
        %v943 = vsel %vm938, 0, %v942
        %944 = vst [vmem:[%s935 + $0xc] sm:$0x1] %v943
        %v945 = vld [vmem:[%s935 + $0x18] sm:$0x1]
        %v946 = vsel %vm938, 0, %v945
        %947 = vst [vmem:[%s935 + $0x18] sm:$0x1] %v946
        %v948 = vld [vmem:[%s935 + $0x24] sm:$0x1]
        %v949 = vsel %vm938, 0, %v948
        %950 = vst [vmem:[%s935 + $0x24] sm:$0x1] %v949
        %v951 = vld [vmem:[%s935 + $0x30] sm:$0x1]
        %v952 = vsel %vm938, 0, %v951
        %953 = vst [vmem:[%s935 + $0x30] sm:$0x1] %v952
        %v954 = vld [vmem:[%s935 + $0x3c] sm:$0x1]
        %v955 = vsel %vm938, 0, %v954
        %956 = vst [vmem:[%s935 + $0x3c] sm:$0x1] %v955
        %v957 = vld [vmem:[%s935 + $0x48] sm:$0x1]
        %v958 = vsel %vm938, 0, %v957
        %959 = vst [vmem:[%s935 + $0x48] sm:$0x1] %v958
        %v960 = vld [vmem:[%s935 + $0x54] sm:$0x1]
        %v961 = vsel %vm938, 0, %v960
        %962 = vst [vmem:[%s935 + $0x54] sm:$0x1] %v961
        %v963 = vld [vmem:[%s935 + $0x60] sm:$0x1]
        %v964 = vsel %vm938, 0, %v963
        %965 = vst [vmem:[%s935 + $0x60] sm:$0x1] %v964
        %v966 = vld [vmem:[%s935 + $0x6c] sm:$0x1]
        %v967 = vsel %vm938, 0, %v966
        %968 = vst [vmem:[%s935 + $0x6c] sm:$0x1] %v967
        %v969 = vld [vmem:[%s935 + $0x78] sm:$0x1]
        %v970 = vsel %vm938, 0, %v969
        %971 = vst [vmem:[%s935 + $0x78] sm:$0x1] %v970
        %v972 = vld [vmem:[%s935 + $0x84] sm:$0x1]
        %v973 = vsel %vm938, 0, %v972
        %974 = vst [vmem:[%s935 + $0x84] sm:$0x1] %v973
        %v975 = vld [vmem:[%s935 + $0x90] sm:$0x1]
        %v976 = vsel %vm938, 0, %v975
        %977 = vst [vmem:[%s935 + $0x90] sm:$0x1] %v976
        %v978 = vld [vmem:[%s935 + $0x9c] sm:$0x1]
        %v979 = vsel %vm938, 0, %v978
        %980 = vst [vmem:[%s935 + $0x9c] sm:$0x1] %v979
        %v981 = vld [vmem:[%s935 + $0xa8] sm:$0x1]
        %v982 = vsel %vm938, 0, %v981
        %983 = vst [vmem:[%s935 + $0xa8] sm:$0x1] %v982
        %v984 = vld [vmem:[%s935 + $0xb4] sm:$0x1]
        %v985 = vsel %vm938, 0, %v984
        %986 = vst [vmem:[%s935 + $0xb4] sm:$0x1] %v985
        %vm987 = vcmask 1043456
        %vm988 = vsmask.f32 7938
        %vm989 = vmand %vm987, %vm988
        %v990 = vld [vmem:[%s935 + $0x8] sm:$0xf]
        %v991 = vsel %vm989, 0, %v990
        %992 = vst [vmem:[%s935 + $0x8] sm:$0xf] %v991
        %v993 = vld [vmem:[%s935 + $0x14] sm:$0xf]
        %v994 = vsel %vm989, 0, %v993
        %995 = vst [vmem:[%s935 + $0x14] sm:$0xf] %v994
        %v996 = vld [vmem:[%s935 + $0x20] sm:$0xf]
        %v997 = vsel %vm989, 0, %v996
        %998 = vst [vmem:[%s935 + $0x20] sm:$0xf] %v997
        %v999 = vld [vmem:[%s935 + $0x2c] sm:$0xf]
        %v1000 = vsel %vm989, 0, %v999
        %1001 = vst [vmem:[%s935 + $0x2c] sm:$0xf] %v1000
        %v1002 = vld [vmem:[%s935 + $0x38] sm:$0xf]
        %v1003 = vsel %vm989, 0, %v1002
        %1004 = vst [vmem:[%s935 + $0x38] sm:$0xf] %v1003
        %v1005 = vld [vmem:[%s935 + $0x44] sm:$0xf]
        %v1006 = vsel %vm989, 0, %v1005
        %1007 = vst [vmem:[%s935 + $0x44] sm:$0xf] %v1006
        %v1008 = vld [vmem:[%s935 + $0x50] sm:$0xf]
        %v1009 = vsel %vm989, 0, %v1008
        %1010 = vst [vmem:[%s935 + $0x50] sm:$0xf] %v1009
        %v1011 = vld [vmem:[%s935 + $0x5c] sm:$0xf]
        %v1012 = vsel %vm989, 0, %v1011
        %1013 = vst [vmem:[%s935 + $0x5c] sm:$0xf] %v1012
        %v1014 = vld [vmem:[%s935 + $0x68] sm:$0xf]
        %v1015 = vsel %vm989, 0, %v1014
        %1016 = vst [vmem:[%s935 + $0x68] sm:$0xf] %v1015
        %v1017 = vld [vmem:[%s935 + $0x74] sm:$0xf]
        %v1018 = vsel %vm989, 0, %v1017
        %1019 = vst [vmem:[%s935 + $0x74] sm:$0xf] %v1018
        %v1020 = vld [vmem:[%s935 + $0x80] sm:$0xf]
        %v1021 = vsel %vm989, 0, %v1020
        %1022 = vst [vmem:[%s935 + $0x80] sm:$0xf] %v1021
        %v1023 = vld [vmem:[%s935 + $0x8c] sm:$0xf]
        %v1024 = vsel %vm989, 0, %v1023
        %1025 = vst [vmem:[%s935 + $0x8c] sm:$0xf] %v1024
        %v1026 = vld [vmem:[%s935 + $0x98] sm:$0xf]
        %v1027 = vsel %vm989, 0, %v1026
        %1028 = vst [vmem:[%s935 + $0x98] sm:$0xf] %v1027
        %v1029 = vld [vmem:[%s935 + $0xa4] sm:$0xf]
        %v1030 = vsel %vm989, 0, %v1029
        %1031 = vst [vmem:[%s935 + $0xa4] sm:$0xf] %v1030
        %v1032 = vld [vmem:[%s935 + $0xb0] sm:$0xf]
        %v1033 = vsel %vm989, 0, %v1032
        %1034 = vst [vmem:[%s935 + $0xb0] sm:$0xf] %v1033
        %v1035 = vld [vmem:[%s935 + $0xbc] sm:$0xf]
        %v1036 = vsel %vm989, 0, %v1035
        %1037 = vst [vmem:[%s935 + $0xbc] sm:$0xf] %v1036
        %v1038 = vpack.c.bf16 %v826, %v825
        %v1039 = vpack.c.bf16 %v828, %v827
        %v1040 = vpack.c.bf16 %v830, %v829
        %v1041 = vpack.c.bf16 %v832, %v831
        %v1042 = vpack.c.bf16 %v834, %v833
        %v1043 = vpack.c.bf16 %v836, %v835
        %v1044 = vpack.c.bf16 %v838, %v837
        %v1045 = vpack.c.bf16 %v840, %v839
        %v1046 = vpack.c.bf16 %v842, %v841
        %v1047 = vpack.c.bf16 %v844, %v843
        %v1048 = vpack.c.bf16 %v846, %v845
        %v1049 = vpack.c.bf16 %v848, %v847
        %v1050 = vpack.c.bf16 %v850, %v849
        %v1051 = vpack.c.bf16 %v852, %v851
        %v1052 = vpack.c.bf16 %v854, %v853
        %v1053 = vpack.c.bf16 %v856, %v855
        %v1070 = vunpack.c.l.b16 %v1038
        %v1071 = vunpack.c.h.b16 %v1038
        %v1072 = vunpack.c.l.b16 %v1039
        %v1073 = vunpack.c.h.b16 %v1039
        %v1074 = vunpack.c.l.b16 %v1040
        %v1075 = vunpack.c.h.b16 %v1040
        %v1076 = vunpack.c.l.b16 %v1041
        %v1077 = vunpack.c.h.b16 %v1041
        %v1078 = vunpack.c.l.b16 %v1042
        %v1079 = vunpack.c.h.b16 %v1042
        %v1080 = vunpack.c.l.b16 %v1043
        %v1081 = vunpack.c.h.b16 %v1043
        %v1082 = vunpack.c.l.b16 %v1044
        %v1083 = vunpack.c.h.b16 %v1044
        %v1084 = vunpack.c.l.b16 %v1045
        %v1085 = vunpack.c.h.b16 %v1045
        %v1086 = vunpack.c.l.b16 %v1046
        %v1087 = vunpack.c.h.b16 %v1046
        %v1088 = vunpack.c.l.b16 %v1047
        %v1089 = vunpack.c.h.b16 %v1047
        %v1090 = vunpack.c.l.b16 %v1048
        %v1091 = vunpack.c.h.b16 %v1048
        %v1092 = vunpack.c.l.b16 %v1049
        %v1093 = vunpack.c.h.b16 %v1049
        %v1094 = vunpack.c.l.b16 %v1050
        %v1095 = vunpack.c.h.b16 %v1050
        %v1096 = vunpack.c.l.b16 %v1051
        %v1097 = vunpack.c.h.b16 %v1051
        %v1098 = vunpack.c.l.b16 %v1052
        %v1099 = vunpack.c.h.b16 %v1052
        %v1100 = vunpack.c.l.b16 %v1053
        %v1101 = vunpack.c.h.b16 %v1053
        %v1102 = vpack.c.b16 %v1070, %v1070
        %v1103 = vpack.c.b16 %v1071, %v1071
        %v1104 = vpack.c.b16 %v1072, %v1072
        %v1105 = vpack.c.b16 %v1073, %v1073
        %v1106 = vpack.c.b16 %v1074, %v1074
        %v1107 = vpack.c.b16 %v1075, %v1075
        %v1108 = vpack.c.b16 %v1076, %v1076
        %v1109 = vpack.c.b16 %v1077, %v1077
        %v1110 = vpack.c.b16 %v1078, %v1078
        %v1111 = vpack.c.b16 %v1079, %v1079
        %v1112 = vpack.c.b16 %v1080, %v1080
        %v1113 = vpack.c.b16 %v1081, %v1081
        %v1114 = vpack.c.b16 %v1082, %v1082
        %v1115 = vpack.c.b16 %v1083, %v1083
        %v1116 = vpack.c.b16 %v1084, %v1084
        %v1117 = vpack.c.b16 %v1085, %v1085
        %v1118 = vpack.c.b16 %v1086, %v1086
        %v1119 = vpack.c.b16 %v1087, %v1087
        %v1120 = vpack.c.b16 %v1088, %v1088
        %v1121 = vpack.c.b16 %v1089, %v1089
        %v1122 = vpack.c.b16 %v1090, %v1090
        %v1123 = vpack.c.b16 %v1091, %v1091
        %v1124 = vpack.c.b16 %v1092, %v1092
        %v1125 = vpack.c.b16 %v1093, %v1093
        %v1126 = vpack.c.b16 %v1094, %v1094
        %v1127 = vpack.c.b16 %v1095, %v1095
        %v1128 = vpack.c.b16 %v1096, %v1096
        %v1129 = vpack.c.b16 %v1097, %v1097
        %v1130 = vpack.c.b16 %v1098, %v1098
        %v1131 = vpack.c.b16 %v1099, %v1099
        %v1132 = vpack.c.b16 %v1100, %v1100
        %v1133 = vpack.c.b16 %v1101, %v1101
        %vm1134 = vsmask.f32 4368
        %vm1135 = vmor %vm937, %vm1134
        %v1137 = vshrl.u32 %v1102, 16
        %v1139 = vrot.slane %v1137, 7
        %v1140 = vshll.u32 %v1102, 16
        %v1142 = vor.u32 %v1139, %v1140
        %v1143 = vrot.slane %v1139, 4
        %v1145 = vshrl.u32 %v1103, 16
        %v1147 = vrot.slane %v1145, 7
        %v1148 = vshll.u32 %v1103, 16
        %v1150 = vor.u32 %v1147, %v1148
        %v1151 = vsel %vm1135, %v1143, %v1150
        %v1152 = vrot.slane %v1147, 4
        %v1154 = vshrl.u32 %v1104, 16
        %v1156 = vrot.slane %v1154, 7
        %v1157 = vshll.u32 %v1104, 16
        %v1159 = vor.u32 %v1156, %v1157
        %v1160 = vrot.slane %v1156, 4
        %v1162 = vshrl.u32 %v1105, 16
        %v1164 = vrot.slane %v1162, 7
        %v1165 = vshll.u32 %v1105, 16
        %v1167 = vor.u32 %v1164, %v1165
        %v1168 = vsel %vm1135, %v1160, %v1167
        %v1169 = vrot.slane %v1164, 4
        %v1171 = vshrl.u32 %v1106, 16
        %v1173 = vrot.slane %v1171, 7
        %v1174 = vshll.u32 %v1106, 16
        %v1176 = vor.u32 %v1173, %v1174
        %v1177 = vrot.slane %v1173, 4
        %v1179 = vshrl.u32 %v1107, 16
        %v1181 = vrot.slane %v1179, 7
        %v1182 = vshll.u32 %v1107, 16
        %v1184 = vor.u32 %v1181, %v1182
        %v1185 = vsel %vm1135, %v1177, %v1184
        %v1186 = vrot.slane %v1181, 4
        %v1188 = vshrl.u32 %v1108, 16
        %v1190 = vrot.slane %v1188, 7
        %v1191 = vshll.u32 %v1108, 16
        %v1193 = vor.u32 %v1190, %v1191
        %v1194 = vrot.slane %v1190, 4
        %v1196 = vshrl.u32 %v1109, 16
        %v1198 = vrot.slane %v1196, 7
        %v1199 = vshll.u32 %v1109, 16
        %v1201 = vor.u32 %v1198, %v1199
        %v1202 = vsel %vm1135, %v1194, %v1201
        %v1203 = vrot.slane %v1198, 4
        %v1205 = vshrl.u32 %v1110, 16
        %v1207 = vrot.slane %v1205, 7
        %v1208 = vshll.u32 %v1110, 16
        %v1210 = vor.u32 %v1207, %v1208
        %v1211 = vrot.slane %v1207, 4
        %v1213 = vshrl.u32 %v1111, 16
        %v1215 = vrot.slane %v1213, 7
        %v1216 = vshll.u32 %v1111, 16
        %v1218 = vor.u32 %v1215, %v1216
        %v1219 = vsel %vm1135, %v1211, %v1218
        %v1220 = vrot.slane %v1215, 4
        %v1222 = vshrl.u32 %v1112, 16
        %v1224 = vrot.slane %v1222, 7
        %v1225 = vshll.u32 %v1112, 16
        %v1227 = vor.u32 %v1224, %v1225
        %v1228 = vrot.slane %v1224, 4
        %v1230 = vshrl.u32 %v1113, 16
        %v1232 = vrot.slane %v1230, 7
        %v1233 = vshll.u32 %v1113, 16
        %v1235 = vor.u32 %v1232, %v1233
        %v1236 = vsel %vm1135, %v1228, %v1235
        %v1237 = vrot.slane %v1232, 4
        %v1239 = vshrl.u32 %v1114, 16
        %v1241 = vrot.slane %v1239, 7
        %v1242 = vshll.u32 %v1114, 16
        %v1244 = vor.u32 %v1241, %v1242
        %v1245 = vrot.slane %v1241, 4
        %v1247 = vshrl.u32 %v1115, 16
        %v1249 = vrot.slane %v1247, 7
        %v1250 = vshll.u32 %v1115, 16
        %v1252 = vor.u32 %v1249, %v1250
        %v1253 = vsel %vm1135, %v1245, %v1252
        %v1254 = vrot.slane %v1249, 4
        %v1256 = vshrl.u32 %v1116, 16
        %v1258 = vrot.slane %v1256, 7
        %v1259 = vshll.u32 %v1116, 16
        %v1261 = vor.u32 %v1258, %v1259
        %v1262 = vrot.slane %v1258, 4
        %v1264 = vshrl.u32 %v1117, 16
        %v1266 = vrot.slane %v1264, 7
        %v1267 = vshll.u32 %v1117, 16
        %v1269 = vor.u32 %v1266, %v1267
        %v1270 = vsel %vm1135, %v1262, %v1269
        %v1271 = vrot.slane %v1266, 4
        %v1273 = vshrl.u32 %v1118, 16
        %v1275 = vrot.slane %v1273, 7
        %v1276 = vshll.u32 %v1118, 16
        %v1278 = vor.u32 %v1275, %v1276
        %v1279 = vrot.slane %v1275, 4
        %v1281 = vshrl.u32 %v1119, 16
        %v1283 = vrot.slane %v1281, 7
        %v1284 = vshll.u32 %v1119, 16
        %v1286 = vor.u32 %v1283, %v1284
        %v1287 = vsel %vm1135, %v1279, %v1286
        %v1288 = vrot.slane %v1283, 4
        %v1290 = vshrl.u32 %v1120, 16
        %v1292 = vrot.slane %v1290, 7
        %v1293 = vshll.u32 %v1120, 16
        %v1295 = vor.u32 %v1292, %v1293
        %v1296 = vrot.slane %v1292, 4
        %v1298 = vshrl.u32 %v1121, 16
        %v1300 = vrot.slane %v1298, 7
        %v1301 = vshll.u32 %v1121, 16
        %v1303 = vor.u32 %v1300, %v1301
        %v1304 = vsel %vm1135, %v1296, %v1303
        %v1305 = vrot.slane %v1300, 4
        %v1307 = vshrl.u32 %v1122, 16
        %v1309 = vrot.slane %v1307, 7
        %v1310 = vshll.u32 %v1122, 16
        %v1312 = vor.u32 %v1309, %v1310
        %v1313 = vrot.slane %v1309, 4
        %v1315 = vshrl.u32 %v1123, 16
        %v1317 = vrot.slane %v1315, 7
        %v1318 = vshll.u32 %v1123, 16
        %v1320 = vor.u32 %v1317, %v1318
        %v1321 = vsel %vm1135, %v1313, %v1320
        %v1322 = vrot.slane %v1317, 4
        %v1324 = vshrl.u32 %v1124, 16
        %v1326 = vrot.slane %v1324, 7
        %v1327 = vshll.u32 %v1124, 16
        %v1329 = vor.u32 %v1326, %v1327
        %v1330 = vrot.slane %v1326, 4
        %v1332 = vshrl.u32 %v1125, 16
        %v1334 = vrot.slane %v1332, 7
        %v1335 = vshll.u32 %v1125, 16
        %v1337 = vor.u32 %v1334, %v1335
        %v1338 = vsel %vm1135, %v1330, %v1337
        %v1339 = vrot.slane %v1334, 4
        %v1341 = vshrl.u32 %v1126, 16
        %v1343 = vrot.slane %v1341, 7
        %v1344 = vshll.u32 %v1126, 16
        %v1346 = vor.u32 %v1343, %v1344
        %v1347 = vrot.slane %v1343, 4
        %v1349 = vshrl.u32 %v1127, 16
        %v1351 = vrot.slane %v1349, 7
        %v1352 = vshll.u32 %v1127, 16
        %v1354 = vor.u32 %v1351, %v1352
        %v1355 = vsel %vm1135, %v1347, %v1354
        %v1356 = vrot.slane %v1351, 4
        %v1358 = vshrl.u32 %v1128, 16
        %v1360 = vrot.slane %v1358, 7
        %v1361 = vshll.u32 %v1128, 16
        %v1363 = vor.u32 %v1360, %v1361
        %v1364 = vrot.slane %v1360, 4
        %v1366 = vshrl.u32 %v1129, 16
        %v1368 = vrot.slane %v1366, 7
        %v1369 = vshll.u32 %v1129, 16
        %v1371 = vor.u32 %v1368, %v1369
        %v1372 = vsel %vm1135, %v1364, %v1371
        %v1373 = vrot.slane %v1368, 4
        %v1375 = vshrl.u32 %v1130, 16
        %v1377 = vrot.slane %v1375, 7
        %v1378 = vshll.u32 %v1130, 16
        %v1380 = vor.u32 %v1377, %v1378
        %v1381 = vrot.slane %v1377, 4
        %v1383 = vshrl.u32 %v1131, 16
        %v1385 = vrot.slane %v1383, 7
        %v1386 = vshll.u32 %v1131, 16
        %v1388 = vor.u32 %v1385, %v1386
        %v1389 = vsel %vm1135, %v1381, %v1388
        %v1390 = vrot.slane %v1385, 4
        %v1392 = vshrl.u32 %v1132, 16
        %v1394 = vrot.slane %v1392, 7
        %v1395 = vshll.u32 %v1132, 16
        %v1397 = vor.u32 %v1394, %v1395
        %v1398 = vrot.slane %v1394, 4
        %v1400 = vshrl.u32 %v1133, 16
        %v1402 = vrot.slane %v1400, 7
        %v1403 = vshll.u32 %v1133, 16
        %v1405 = vor.u32 %v1402, %v1403
        %v1406 = vsel %vm1135, %v1398, %v1405
        %v1407 = vrot.slane %v1402, 4
        %v1456 = vld [vmem:[%s935] sm:$0xf]
        %v1457 = vsel %vm989, %v1142, %v1456
        %1458 = vst [vmem:[%s935] sm:$0xf] %v1457
        %1459 = vst [vmem:[%s935 + $0x4] sm:$0xf] %v1151
        %v1460 = vld [vmem:[%s935 + $0x8] sm:$0x1]
        %v1461 = vsel %vm938, %v1152, %v1460
        %1462 = vst [vmem:[%s935 + $0x8] sm:$0x1] %v1461
        %v1463 = vld [vmem:[%s935 + $0xc] sm:$0xf]
        %v1464 = vsel %vm989, %v1159, %v1463
        %1465 = vst [vmem:[%s935 + $0xc] sm:$0xf] %v1464
        %1466 = vst [vmem:[%s935 + $0x10] sm:$0xf] %v1168
        %v1467 = vld [vmem:[%s935 + $0x14] sm:$0x1]
        %v1468 = vsel %vm938, %v1169, %v1467
        %1469 = vst [vmem:[%s935 + $0x14] sm:$0x1] %v1468
        %v1470 = vld [vmem:[%s935 + $0x18] sm:$0xf]
        %v1471 = vsel %vm989, %v1176, %v1470
        %1472 = vst [vmem:[%s935 + $0x18] sm:$0xf] %v1471
        %1473 = vst [vmem:[%s935 + $0x1c] sm:$0xf] %v1185
        %v1474 = vld [vmem:[%s935 + $0x20] sm:$0x1]
        %v1475 = vsel %vm938, %v1186, %v1474
        %1476 = vst [vmem:[%s935 + $0x20] sm:$0x1] %v1475
        %v1477 = vld [vmem:[%s935 + $0x24] sm:$0xf]
        %v1478 = vsel %vm989, %v1193, %v1477
        %1479 = vst [vmem:[%s935 + $0x24] sm:$0xf] %v1478
        %1480 = vst [vmem:[%s935 + $0x28] sm:$0xf] %v1202
        %v1481 = vld [vmem:[%s935 + $0x2c] sm:$0x1]
        %v1482 = vsel %vm938, %v1203, %v1481
        %1483 = vst [vmem:[%s935 + $0x2c] sm:$0x1] %v1482
        %v1484 = vld [vmem:[%s935 + $0x30] sm:$0xf]
        %v1485 = vsel %vm989, %v1210, %v1484
        %1486 = vst [vmem:[%s935 + $0x30] sm:$0xf] %v1485
        %1487 = vst [vmem:[%s935 + $0x34] sm:$0xf] %v1219
        %v1488 = vld [vmem:[%s935 + $0x38] sm:$0x1]
        %v1489 = vsel %vm938, %v1220, %v1488
        %1490 = vst [vmem:[%s935 + $0x38] sm:$0x1] %v1489
        %v1491 = vld [vmem:[%s935 + $0x3c] sm:$0xf]
        %v1492 = vsel %vm989, %v1227, %v1491
        %1493 = vst [vmem:[%s935 + $0x3c] sm:$0xf] %v1492
        %1494 = vst [vmem:[%s935 + $0x40] sm:$0xf] %v1236
        %v1495 = vld [vmem:[%s935 + $0x44] sm:$0x1]
        %v1496 = vsel %vm938, %v1237, %v1495
        %1497 = vst [vmem:[%s935 + $0x44] sm:$0x1] %v1496
        %v1498 = vld [vmem:[%s935 + $0x48] sm:$0xf]
        %v1499 = vsel %vm989, %v1244, %v1498
        %1500 = vst [vmem:[%s935 + $0x48] sm:$0xf] %v1499
        %1501 = vst [vmem:[%s935 + $0x4c] sm:$0xf] %v1253
        %v1502 = vld [vmem:[%s935 + $0x50] sm:$0x1]
        %v1503 = vsel %vm938, %v1254, %v1502
        %1504 = vst [vmem:[%s935 + $0x50] sm:$0x1] %v1503
        %v1505 = vld [vmem:[%s935 + $0x54] sm:$0xf]
        %v1506 = vsel %vm989, %v1261, %v1505
        %1507 = vst [vmem:[%s935 + $0x54] sm:$0xf] %v1506
        %1508 = vst [vmem:[%s935 + $0x58] sm:$0xf] %v1270
        %v1509 = vld [vmem:[%s935 + $0x5c] sm:$0x1]
        %v1510 = vsel %vm938, %v1271, %v1509
        %1511 = vst [vmem:[%s935 + $0x5c] sm:$0x1] %v1510
        %v1512 = vld [vmem:[%s935 + $0x60] sm:$0xf]
        %v1513 = vsel %vm989, %v1278, %v1512
        %1514 = vst [vmem:[%s935 + $0x60] sm:$0xf] %v1513
        %1515 = vst [vmem:[%s935 + $0x64] sm:$0xf] %v1287
        %v1516 = vld [vmem:[%s935 + $0x68] sm:$0x1]
        %v1517 = vsel %vm938, %v1288, %v1516
        %1518 = vst [vmem:[%s935 + $0x68] sm:$0x1] %v1517
        %v1519 = vld [vmem:[%s935 + $0x6c] sm:$0xf]
        %v1520 = vsel %vm989, %v1295, %v1519
        %1521 = vst [vmem:[%s935 + $0x6c] sm:$0xf] %v1520
        %1522 = vst [vmem:[%s935 + $0x70] sm:$0xf] %v1304
        %v1523 = vld [vmem:[%s935 + $0x74] sm:$0x1]
        %v1524 = vsel %vm938, %v1305, %v1523
        %1525 = vst [vmem:[%s935 + $0x74] sm:$0x1] %v1524
        %v1526 = vld [vmem:[%s935 + $0x78] sm:$0xf]
        %v1527 = vsel %vm989, %v1312, %v1526
        %1528 = vst [vmem:[%s935 + $0x78] sm:$0xf] %v1527
        %1529 = vst [vmem:[%s935 + $0x7c] sm:$0xf] %v1321
        %v1530 = vld [vmem:[%s935 + $0x80] sm:$0x1]
        %v1531 = vsel %vm938, %v1322, %v1530
        %1532 = vst [vmem:[%s935 + $0x80] sm:$0x1] %v1531
        %v1533 = vld [vmem:[%s935 + $0x84] sm:$0xf]
        %v1534 = vsel %vm989, %v1329, %v1533
        %1535 = vst [vmem:[%s935 + $0x84] sm:$0xf] %v1534
        %1536 = vst [vmem:[%s935 + $0x88] sm:$0xf] %v1338
        %v1537 = vld [vmem:[%s935 + $0x8c] sm:$0x1]
        %v1538 = vsel %vm938, %v1339, %v1537
        %1539 = vst [vmem:[%s935 + $0x8c] sm:$0x1] %v1538
        %v1540 = vld [vmem:[%s935 + $0x90] sm:$0xf]
        %v1541 = vsel %vm989, %v1346, %v1540
        %1542 = vst [vmem:[%s935 + $0x90] sm:$0xf] %v1541
        %1543 = vst [vmem:[%s935 + $0x94] sm:$0xf] %v1355
        %v1544 = vld [vmem:[%s935 + $0x98] sm:$0x1]
        %v1545 = vsel %vm938, %v1356, %v1544
        %1546 = vst [vmem:[%s935 + $0x98] sm:$0x1] %v1545
        %v1547 = vld [vmem:[%s935 + $0x9c] sm:$0xf]
        %v1548 = vsel %vm989, %v1363, %v1547
        %1549 = vst [vmem:[%s935 + $0x9c] sm:$0xf] %v1548
        %1550 = vst [vmem:[%s935 + $0xa0] sm:$0xf] %v1372
        %v1551 = vld [vmem:[%s935 + $0xa4] sm:$0x1]
        %v1552 = vsel %vm938, %v1373, %v1551
        %1553 = vst [vmem:[%s935 + $0xa4] sm:$0x1] %v1552
        %v1554 = vld [vmem:[%s935 + $0xa8] sm:$0xf]
        %v1555 = vsel %vm989, %v1380, %v1554
        %1556 = vst [vmem:[%s935 + $0xa8] sm:$0xf] %v1555
        %1557 = vst [vmem:[%s935 + $0xac] sm:$0xf] %v1389
        %v1558 = vld [vmem:[%s935 + $0xb0] sm:$0x1]
        %v1559 = vsel %vm938, %v1390, %v1558
        %1560 = vst [vmem:[%s935 + $0xb0] sm:$0x1] %v1559
        %v1561 = vld [vmem:[%s935 + $0xb4] sm:$0xf]
        %v1562 = vsel %vm989, %v1397, %v1561
        %1563 = vst [vmem:[%s935 + $0xb4] sm:$0xf] %v1562
        %1564 = vst [vmem:[%s935 + $0xb8] sm:$0xf] %v1406
        %v1565 = vld [vmem:[%s935 + $0xbc] sm:$0x1]
        %v1566 = vsel %vm938, %v1407, %v1565
        %1567 = vst [vmem:[%s935 + $0xbc] sm:$0x1] %v1566
        %v1568 = vld [vmem:[#allocation2] sm:$0xf]
        %v1569 = vld [vmem:[#allocation2 + $0x4] sm:$0xf]
        %v1570 = vld [vmem:[#allocation2 + $0x8] sm:$0xf]
        %v1571 = vld [vmem:[#allocation2 + $0xc] sm:$0xf]
        %v1572 = vld [vmem:[#allocation2 + $0x10] sm:$0xf]
        %v1573 = vld [vmem:[#allocation2 + $0x14] sm:$0xf]
        %v1574 = vld [vmem:[#allocation2 + $0x18] sm:$0xf]
        %v1575 = vld [vmem:[#allocation2 + $0x1c] sm:$0xf]
        %v1576 = vld [vmem:[#allocation2 + $0x20] sm:$0xf]
        %v1577 = vld [vmem:[#allocation2 + $0x24] sm:$0xf]
        %v1578 = vld [vmem:[#allocation2 + $0x28] sm:$0xf]
        %v1579 = vld [vmem:[#allocation2 + $0x2c] sm:$0xf]
        %v1580 = vld [vmem:[#allocation2 + $0x30] sm:$0xf]
        %v1581 = vld [vmem:[#allocation2 + $0x34] sm:$0xf]
        %v1582 = vld [vmem:[#allocation2 + $0x38] sm:$0xf]
        %v1583 = vld [vmem:[#allocation2 + $0x3c] sm:$0xf]
        %v1584 = vld [vmem:[#allocation2 + $0x40] sm:$0xf]
        %v1585 = vld [vmem:[#allocation2 + $0x44] sm:$0xf]
        %v1586 = vld [vmem:[#allocation2 + $0x48] sm:$0xf]
        %v1587 = vld [vmem:[#allocation2 + $0x4c] sm:$0xf]
        %v1588 = vld [vmem:[#allocation2 + $0x50] sm:$0xf]
        %v1589 = vld [vmem:[#allocation2 + $0x54] sm:$0xf]
        %v1590 = vld [vmem:[#allocation2 + $0x58] sm:$0xf]
        %v1591 = vld [vmem:[#allocation2 + $0x5c] sm:$0xf]
        %v1592 = vld [vmem:[#allocation2 + $0x60] sm:$0xf]
        %v1593 = vld [vmem:[#allocation2 + $0x64] sm:$0xf]
        %v1594 = vld [vmem:[#allocation2 + $0x68] sm:$0xf]
        %v1595 = vld [vmem:[#allocation2 + $0x6c] sm:$0xf]
        %v1596 = vld [vmem:[#allocation2 + $0x70] sm:$0xf]
        %v1597 = vld [vmem:[#allocation2 + $0x74] sm:$0xf]
        %v1598 = vld [vmem:[#allocation2 + $0x78] sm:$0xf]
        %v1599 = vld [vmem:[#allocation2 + $0x7c] sm:$0xf]
        %v1600 = vld [vmem:[#allocation2 + $0x80] sm:$0xf]
        %v1601 = vld [vmem:[#allocation2 + $0x84] sm:$0xf]
        %v1602 = vld [vmem:[#allocation2 + $0x88] sm:$0xf]
        %v1603 = vld [vmem:[#allocation2 + $0x8c] sm:$0xf]
        %v1604 = vld [vmem:[#allocation2 + $0x90] sm:$0xf]
        %v1605 = vld [vmem:[#allocation2 + $0x94] sm:$0xf]
        %v1606 = vld [vmem:[#allocation2 + $0x98] sm:$0xf]
        %v1607 = vld [vmem:[#allocation2 + $0x9c] sm:$0xf]
        %v1608 = vld [vmem:[#allocation2 + $0xa0] sm:$0xf]
        %v1609 = vld [vmem:[#allocation2 + $0xa4] sm:$0xf]
        %v1610 = vld [vmem:[#allocation2 + $0xa8] sm:$0xf]
        %v1611 = vld [vmem:[#allocation2 + $0xac] sm:$0xf]
        %v1612 = vld [vmem:[#allocation2 + $0xb0] sm:$0xf]
        %v1613 = vld [vmem:[#allocation2 + $0xb4] sm:$0xf]
        %v1614 = vld [vmem:[#allocation2 + $0xb8] sm:$0xf]
        %v1615 = vld [vmem:[#allocation2 + $0xbc] sm:$0xf]
        %v1616 = vld [vmem:[#allocation8] sm:$0xff]
        %v1617 = vld [vmem:[#allocation8 + $0x8] sm:$0xf]
        %v1618 = vld [vmem:[#allocation8 + $0xc] sm:$0xff]
        %v1619 = vld [vmem:[#allocation8 + $0x14] sm:$0xf]
        %v1620 = vld [vmem:[#allocation8 + $0x18] sm:$0xff]
        %v1621 = vld [vmem:[#allocation8 + $0x20] sm:$0xf]
        %v1622 = vld [vmem:[#allocation8 + $0x24] sm:$0xff]
        %v1623 = vld [vmem:[#allocation8 + $0x2c] sm:$0xf]
        %v1624 = vld [vmem:[#allocation8 + $0x30] sm:$0xff]
        %v1625 = vld [vmem:[#allocation8 + $0x38] sm:$0xf]
        %v1626 = vld [vmem:[#allocation8 + $0x3c] sm:$0xff]
        %v1627 = vld [vmem:[#allocation8 + $0x44] sm:$0xf]
        %v1628 = vld [vmem:[#allocation8 + $0x48] sm:$0xff]
        %v1629 = vld [vmem:[#allocation8 + $0x50] sm:$0xf]
        %v1630 = vld [vmem:[#allocation8 + $0x54] sm:$0xff]
        %v1631 = vld [vmem:[#allocation8 + $0x5c] sm:$0xf]
        %v1632 = vld [vmem:[#allocation8 + $0x60] sm:$0xff]
        %v1633 = vld [vmem:[#allocation8 + $0x68] sm:$0xf]
        %v1634 = vld [vmem:[#allocation8 + $0x6c] sm:$0xff]
        %v1635 = vld [vmem:[#allocation8 + $0x74] sm:$0xf]
        %v1636 = vld [vmem:[#allocation8 + $0x78] sm:$0xff]
        %v1637 = vld [vmem:[#allocation8 + $0x80] sm:$0xf]
        %v1638 = vld [vmem:[#allocation8 + $0x84] sm:$0xff]
        %v1639 = vld [vmem:[#allocation8 + $0x8c] sm:$0xf]
        %v1640 = vld [vmem:[#allocation8 + $0x90] sm:$0xff]
        %v1641 = vld [vmem:[#allocation8 + $0x98] sm:$0xf]
        %v1642 = vld [vmem:[#allocation8 + $0x9c] sm:$0xff]
        %v1643 = vld [vmem:[#allocation8 + $0xa4] sm:$0xf]
        %v1644 = vld [vmem:[#allocation8 + $0xa8] sm:$0xff]
        %v1645 = vld [vmem:[#allocation8 + $0xb0] sm:$0xf]
        %v1646 = vld [vmem:[#allocation8 + $0xb4] sm:$0xff]
        %v1647 = vld [vmem:[#allocation8 + $0xbc] sm:$0xf]
        %v1696 = vunpack.c.l.b16 %v1568
        %v1697 = vunpack.c.l.b16 %v1569
        %v1698 = vunpack.c.l.b16 %v1570
        %v1699 = vunpack.c.l.b16 %v1571
        %v1700 = vunpack.c.l.b16 %v1572
        %v1701 = vunpack.c.l.b16 %v1573
        %v1702 = vunpack.c.l.b16 %v1574
        %v1703 = vunpack.c.l.b16 %v1575
        %v1704 = vunpack.c.l.b16 %v1576
        %v1705 = vunpack.c.l.b16 %v1577
        %v1706 = vunpack.c.l.b16 %v1578
        %v1707 = vunpack.c.l.b16 %v1579
        %v1708 = vunpack.c.l.b16 %v1580
        %v1709 = vunpack.c.l.b16 %v1581
        %v1710 = vunpack.c.l.b16 %v1582
        %v1711 = vunpack.c.l.b16 %v1583
        %v1712 = vunpack.c.l.b16 %v1584
        %v1713 = vunpack.c.l.b16 %v1585
        %v1714 = vunpack.c.l.b16 %v1586
        %v1715 = vunpack.c.l.b16 %v1587
        %v1716 = vunpack.c.l.b16 %v1588
        %v1717 = vunpack.c.l.b16 %v1589
        %v1718 = vunpack.c.l.b16 %v1590
        %v1719 = vunpack.c.l.b16 %v1591
        %v1720 = vunpack.c.l.b16 %v1592
        %v1721 = vunpack.c.l.b16 %v1593
        %v1722 = vunpack.c.l.b16 %v1594
        %v1723 = vunpack.c.l.b16 %v1595
        %v1724 = vunpack.c.l.b16 %v1596
        %v1725 = vunpack.c.l.b16 %v1597
        %v1726 = vunpack.c.l.b16 %v1598
        %v1727 = vunpack.c.l.b16 %v1599
        %v1728 = vunpack.c.l.b16 %v1600
        %v1729 = vunpack.c.l.b16 %v1601
        %v1730 = vunpack.c.l.b16 %v1602
        %v1731 = vunpack.c.l.b16 %v1603
        %v1732 = vunpack.c.l.b16 %v1604
        %v1733 = vunpack.c.l.b16 %v1605
        %v1734 = vunpack.c.l.b16 %v1606
        %v1735 = vunpack.c.l.b16 %v1607
        %v1736 = vunpack.c.l.b16 %v1608
        %v1737 = vunpack.c.l.b16 %v1609
        %v1738 = vunpack.c.l.b16 %v1610
        %v1739 = vunpack.c.l.b16 %v1611
        %v1740 = vunpack.c.l.b16 %v1612
        %v1741 = vunpack.c.l.b16 %v1613
        %v1742 = vunpack.c.l.b16 %v1614
        %v1743 = vunpack.c.l.b16 %v1615
        %v1744 = vpack.c.b16 %v1697, %v1696
        %v1745 = vpack.c.b16 %v1699, %v1698
        %v1746 = vpack.c.b16 %v1701, %v1700
        %v1747 = vpack.c.b16 %v1703, %v1702
        %v1748 = vpack.c.b16 %v1705, %v1704
        %v1749 = vpack.c.b16 %v1707, %v1706
        %v1750 = vpack.c.b16 %v1709, %v1708
        %v1751 = vpack.c.b16 %v1711, %v1710
        %v1752 = vpack.c.b16 %v1713, %v1712
        %v1753 = vpack.c.b16 %v1715, %v1714
        %v1754 = vpack.c.b16 %v1717, %v1716
        %v1755 = vpack.c.b16 %v1719, %v1718
        %v1756 = vpack.c.b16 %v1721, %v1720
        %v1757 = vpack.c.b16 %v1723, %v1722
        %v1758 = vpack.c.b16 %v1725, %v1724
        %v1759 = vpack.c.b16 %v1727, %v1726
        %v1760 = vpack.c.b16 %v1729, %v1728
        %v1761 = vpack.c.b16 %v1731, %v1730
        %v1762 = vpack.c.b16 %v1733, %v1732
        %v1763 = vpack.c.b16 %v1735, %v1734
        %v1764 = vpack.c.b16 %v1737, %v1736
        %v1765 = vpack.c.b16 %v1739, %v1738
        %v1766 = vpack.c.b16 %v1741, %v1740
        %v1767 = vpack.c.b16 %v1743, %v1742
        %v1824 = vunpack.c.l.b16 %v1616
        %v1825 = vunpack.c.h.b16 %v1616
        %v1826 = vunpack.c.l.b16 %v1617
        %v1827 = vunpack.c.l.b16 %v1618
        %v1828 = vunpack.c.h.b16 %v1618
        %v1829 = vunpack.c.l.b16 %v1619
        %v1830 = vunpack.c.l.b16 %v1620
        %v1831 = vunpack.c.h.b16 %v1620
        %v1832 = vunpack.c.l.b16 %v1621
        %v1833 = vunpack.c.l.b16 %v1622
        %v1834 = vunpack.c.h.b16 %v1622
        %v1835 = vunpack.c.l.b16 %v1623
        %v1836 = vunpack.c.l.b16 %v1624
        %v1837 = vunpack.c.h.b16 %v1624
        %v1838 = vunpack.c.l.b16 %v1625
        %v1839 = vunpack.c.l.b16 %v1626
        %v1840 = vunpack.c.h.b16 %v1626
        %v1841 = vunpack.c.l.b16 %v1627
        %v1842 = vunpack.c.l.b16 %v1628
        %v1843 = vunpack.c.h.b16 %v1628
        %v1844 = vunpack.c.l.b16 %v1629
        %v1845 = vunpack.c.l.b16 %v1630
        %v1846 = vunpack.c.h.b16 %v1630
        %v1847 = vunpack.c.l.b16 %v1631
        %v1848 = vunpack.c.l.b16 %v1632
        %v1849 = vunpack.c.h.b16 %v1632
        %v1850 = vunpack.c.l.b16 %v1633
        %v1851 = vunpack.c.l.b16 %v1634
        %v1852 = vunpack.c.h.b16 %v1634
        %v1853 = vunpack.c.l.b16 %v1635
        %v1854 = vunpack.c.l.b16 %v1636
        %v1855 = vunpack.c.h.b16 %v1636
        %v1856 = vunpack.c.l.b16 %v1637
        %v1857 = vunpack.c.l.b16 %v1638
        %v1858 = vunpack.c.h.b16 %v1638
        %v1859 = vunpack.c.l.b16 %v1639
        %v1860 = vunpack.c.l.b16 %v1640
        %v1861 = vunpack.c.h.b16 %v1640
        %v1862 = vunpack.c.l.b16 %v1641
        %v1863 = vunpack.c.l.b16 %v1642
        %v1864 = vunpack.c.h.b16 %v1642
        %v1865 = vunpack.c.l.b16 %v1643
        %v1866 = vunpack.c.l.b16 %v1644
        %v1867 = vunpack.c.h.b16 %v1644
        %v1868 = vunpack.c.l.b16 %v1645
        %v1869 = vunpack.c.l.b16 %v1646
        %v1870 = vunpack.c.h.b16 %v1646
        %v1871 = vunpack.c.l.b16 %v1647
        %v1872 = vpack.c.b16 %v1827, %v1824
        %v1873 = vpack.c.b16 %v1828, %v1825
        %v1874 = vpack.c.b16 %v1829, %v1826
        %v1875 = vpack.c.b16 %v1833, %v1830
        %v1876 = vpack.c.b16 %v1834, %v1831
        %v1877 = vpack.c.b16 %v1835, %v1832
        %v1878 = vpack.c.b16 %v1839, %v1836
        %v1879 = vpack.c.b16 %v1840, %v1837
        %v1880 = vpack.c.b16 %v1841, %v1838
        %v1881 = vpack.c.b16 %v1845, %v1842
        %v1882 = vpack.c.b16 %v1846, %v1843
        %v1883 = vpack.c.b16 %v1847, %v1844
        %v1884 = vpack.c.b16 %v1851, %v1848
        %v1885 = vpack.c.b16 %v1852, %v1849
        %v1886 = vpack.c.b16 %v1853, %v1850
        %v1887 = vpack.c.b16 %v1857, %v1854
        %v1888 = vpack.c.b16 %v1858, %v1855
        %v1889 = vpack.c.b16 %v1859, %v1856
        %v1890 = vpack.c.b16 %v1863, %v1860
        %v1891 = vpack.c.b16 %v1864, %v1861
        %v1892 = vpack.c.b16 %v1865, %v1862
        %v1893 = vpack.c.b16 %v1869, %v1866
        %v1894 = vpack.c.b16 %v1870, %v1867
        %v1895 = vpack.c.b16 %v1871, %v1868
        %1920 = vmatprep.subr.bf16.mxu0 %v1894
        %1921 = vmatpush1.bf16.msra.mxu0 %v1893
        %1922 = vmatprep.subr.bf16.mxu0 %v1891
        %1923 = vmatpush1.bf16.msra.mxu0 %v1890
        %1924 = vmatprep.subr.bf16.mxu0 %v1888
        %1925 = vmatpush1.bf16.msra.mxu0 %v1887
        %1926 = vmatprep.subr.bf16.mxu0 %v1885
        %1927 = vmatpush1.bf16.msra.mxu0 %v1884
        %1928 = vmatprep.subr.bf16.mxu0 %v1882
        %1929 = vmatpush1.bf16.msra.mxu0 %v1881
        %1930 = vmatprep.subr.bf16.mxu0 %v1879
        %1931 = vmatpush1.bf16.msra.mxu0 %v1878
        %1932 = vmatprep.subr.bf16.mxu0 %v1876
        %1933 = vmatpush1.bf16.msra.mxu0 %v1875
        %1934 = vmatprep.subr.bf16.mxu0 %v1873
        %1935 = vmatpush1.bf16.msra.mxu0 %v1872
        %1936 = vmatprep.subr.bf16.mxu0 0
        %1937 = vmatpush2.bf16.msra.mxu0 0
        %1938 = vmatprep.subr.bf16.mxu0 0
        %1939 = vmatpush2.bf16.msra.mxu0 0
        %1940 = vmatprep.subr.bf16.mxu0 0
        %1941 = vmatpush2.bf16.msra.mxu0 0
        %1942 = vmatprep.subr.bf16.mxu0 0
        %1943 = vmatpush2.bf16.msra.mxu0 0
        %1944 = vmatprep.subr.bf16.mxu0 0
        %1945 = vmatpush2.bf16.msra.mxu0 0
        %1946 = vmatprep.subr.bf16.mxu0 0
        %1947 = vmatpush2.bf16.msra.mxu0 0
        %1948 = vmatprep.subr.bf16.mxu0 0
        %1949 = vmatpush2.bf16.msra.mxu0 0
        %1950 = vmatprep.subr.bf16.mxu0 0
        %1951 = vmatpush2.bf16.msra.mxu0 0
        %1952 = vmatprep.mubr.bf16.mxu0 0
        %1953 = vmatmul.mubr.bf16.gmra.mxu0 %v1744
        %v1954 = vpop.f32.mrf.mxu0
        %v1955 = vadd.f32 0.0, %v1954
        %v1956 = vpop.f32.mrf.mxu0
        %v1957 = vadd.f32 0.0, %v1956
        %v1958 = vpop.f32.mrf.mxu0
        %v1959 = vadd.f32 0.0, %v1958
        %v1960 = vpop.f32.mrf.mxu0
        %v1961 = vadd.f32 0.0, %v1960
        %1962 = vmatprep.mubr.bf16.mxu0 0
        %1963 = vmatmul.mubr.bf16.gmra.mxu0 %v1745
        %v1964 = vpop.f32.mrf.mxu0
        %v1965 = vpop.f32.mrf.mxu0
        %v1966 = vadd.f32 0.0, %v1965
        %v1967 = vpop.f32.mrf.mxu0
        %v1968 = vadd.f32 0.0, %v1967
        %v1969 = vpop.f32.mrf.mxu0
        %v1970 = vadd.f32 0.0, %v1969
        %1971 = vmatprep.mubr.bf16.mxu0 0
        %1972 = vmatmul.mubr.bf16.gmra.mxu0 %v1746
        %v1973 = vpop.f32.mrf.mxu0
        %v1974 = vadd.f32 0.0, %v1973
        %v1975 = vpop.f32.mrf.mxu0
        %v1976 = vadd.f32 0.0, %v1975
        %v1977 = vpop.f32.mrf.mxu0
        %v1978 = vpop.f32.mrf.mxu0
        %v1979 = vadd.f32 0.0, %v1978
        %1980 = vmatprep.mubr.bf16.mxu0 0
        %1981 = vmatmul.mubr.bf16.gmra.mxu0 %v1747
        %v1982 = vpop.f32.mrf.mxu0
        %v1983 = vadd.f32 0.0, %v1982
        %v1984 = vpop.f32.mrf.mxu0
        %v1985 = vadd.f32 0.0, %v1984
        %v1986 = vpop.f32.mrf.mxu0
        %v1987 = vadd.f32 0.0, %v1986
        %v1988 = vpop.f32.mrf.mxu0
        %v1989 = vadd.f32 0.0, %v1988
        %1990 = vmatprep.mubr.bf16.mxu0 0
        %1991 = vmatmul.mubr.bf16.gmra.mxu0 %v1748
        %v1992 = vpop.f32.mrf.mxu0
        %v1993 = vpop.f32.mrf.mxu0
        %v1994 = vadd.f32 0.0, %v1993
        %v1995 = vpop.f32.mrf.mxu0
        %v1996 = vadd.f32 0.0, %v1995
        %v1997 = vpop.f32.mrf.mxu0
        %v1998 = vadd.f32 0.0, %v1997
        %1999 = vmatprep.mubr.bf16.mxu0 0
        %2000 = vmatmul.mubr.bf16.gmra.mxu0 %v1749
        %v2001 = vpop.f32.mrf.mxu0
        %v2002 = vadd.f32 0.0, %v2001
        %v2003 = vpop.f32.mrf.mxu0
        %v2004 = vadd.f32 0.0, %v2003
        %v2005 = vpop.f32.mrf.mxu0
        %v2006 = vpop.f32.mrf.mxu0
        %v2007 = vadd.f32 0.0, %v2006
        %2008 = vmatprep.mubr.bf16.mxu0 0
        %2009 = vmatmul.mubr.bf16.gmra.mxu0 %v1750
        %v2010 = vpop.f32.mrf.mxu0
        %v2011 = vadd.f32 0.0, %v2010
        %v2012 = vpop.f32.mrf.mxu0
        %v2013 = vadd.f32 0.0, %v2012
        %v2014 = vpop.f32.mrf.mxu0
        %v2015 = vadd.f32 0.0, %v2014
        %v2016 = vpop.f32.mrf.mxu0
        %v2017 = vadd.f32 0.0, %v2016
        %2018 = vmatprep.mubr.bf16.mxu0 0
        %2019 = vmatmul.mubr.bf16.gmra.mxu0 %v1751
        %v2020 = vpop.f32.mrf.mxu0
        %v2021 = vpop.f32.mrf.mxu0
        %v2022 = vadd.f32 0.0, %v2021
        %v2023 = vpop.f32.mrf.mxu0
        %v2024 = vadd.f32 0.0, %v2023
        %v2025 = vpop.f32.mrf.mxu0
        %v2026 = vadd.f32 0.0, %v2025
        %2027 = vmatprep.mubr.bf16.mxu0 0
        %2028 = vmatmul.mubr.bf16.gmra.mxu0 %v1752
        %v2029 = vpop.f32.mrf.mxu0
        %v2030 = vadd.f32 0.0, %v2029
        %v2031 = vpop.f32.mrf.mxu0
        %v2032 = vadd.f32 0.0, %v2031
        %v2033 = vpop.f32.mrf.mxu0
        %v2034 = vpop.f32.mrf.mxu0
        %v2035 = vadd.f32 0.0, %v2034
        %2036 = vmatprep.mubr.bf16.mxu0 0
        %2037 = vmatmul.mubr.bf16.gmra.mxu0 %v1753
        %v2038 = vpop.f32.mrf.mxu0
        %v2039 = vadd.f32 0.0, %v2038
        %v2040 = vpop.f32.mrf.mxu0
        %v2041 = vadd.f32 0.0, %v2040
        %v2042 = vpop.f32.mrf.mxu0
        %v2043 = vadd.f32 0.0, %v2042
        %v2044 = vpop.f32.mrf.mxu0
        %v2045 = vadd.f32 0.0, %v2044
        %2046 = vmatprep.mubr.bf16.mxu0 0
        %2047 = vmatmul.mubr.bf16.gmra.mxu0 %v1754
        %v2048 = vpop.f32.mrf.mxu0
        %v2049 = vpop.f32.mrf.mxu0
        %v2050 = vadd.f32 0.0, %v2049
        %v2051 = vpop.f32.mrf.mxu0
        %v2052 = vadd.f32 0.0, %v2051
        %v2053 = vpop.f32.mrf.mxu0
        %v2054 = vadd.f32 0.0, %v2053
        %2055 = vmatprep.mubr.bf16.mxu0 0
        %2056 = vmatmul.mubr.bf16.gmra.mxu0 %v1755
        %v2057 = vpop.f32.mrf.mxu0
        %v2058 = vadd.f32 0.0, %v2057
        %v2059 = vpop.f32.mrf.mxu0
        %v2060 = vadd.f32 0.0, %v2059
        %v2061 = vpop.f32.mrf.mxu0
        %v2062 = vpop.f32.mrf.mxu0
        %v2063 = vadd.f32 0.0, %v2062
        %2064 = vmatprep.mubr.bf16.mxu0 0
        %2065 = vmatmul.mubr.bf16.gmra.mxu0 %v1756
        %v2066 = vpop.f32.mrf.mxu0
        %v2067 = vadd.f32 0.0, %v2066
        %v2068 = vpop.f32.mrf.mxu0
        %v2069 = vadd.f32 0.0, %v2068
        %v2070 = vpop.f32.mrf.mxu0
        %v2071 = vadd.f32 0.0, %v2070
        %v2072 = vpop.f32.mrf.mxu0
        %v2073 = vadd.f32 0.0, %v2072
        %2074 = vmatprep.mubr.bf16.mxu0 0
        %2075 = vmatmul.mubr.bf16.gmra.mxu0 %v1757
        %v2076 = vpop.f32.mrf.mxu0
        %v2077 = vpop.f32.mrf.mxu0
        %v2078 = vadd.f32 0.0, %v2077
        %v2079 = vpop.f32.mrf.mxu0
        %v2080 = vadd.f32 0.0, %v2079
        %v2081 = vpop.f32.mrf.mxu0
        %v2082 = vadd.f32 0.0, %v2081
        %2083 = vmatprep.mubr.bf16.mxu0 0
        %2084 = vmatmul.mubr.bf16.gmra.mxu0 %v1758
        %v2085 = vpop.f32.mrf.mxu0
        %v2086 = vadd.f32 0.0, %v2085
        %v2087 = vpop.f32.mrf.mxu0
        %v2088 = vadd.f32 0.0, %v2087
        %v2089 = vpop.f32.mrf.mxu0
        %v2090 = vpop.f32.mrf.mxu0
        %v2091 = vadd.f32 0.0, %v2090
        %2092 = vmatprep.mubr.bf16.mxu0 0
        %2093 = vmatmul.mubr.bf16.gmra.mxu0 %v1759
        %v2094 = vpop.f32.mrf.mxu0
        %v2095 = vadd.f32 0.0, %v2094
        %v2096 = vpop.f32.mrf.mxu0
        %v2097 = vadd.f32 0.0, %v2096
        %v2098 = vpop.f32.mrf.mxu0
        %v2099 = vadd.f32 0.0, %v2098
        %v2100 = vpop.f32.mrf.mxu0
        %v2101 = vadd.f32 0.0, %v2100
        %2102 = vmatprep.mubr.bf16.mxu0 0
        %2103 = vmatmul.mubr.bf16.gmra.mxu0 %v1760
        %v2104 = vpop.f32.mrf.mxu0
        %v2105 = vpop.f32.mrf.mxu0
        %v2106 = vadd.f32 0.0, %v2105
        %v2107 = vpop.f32.mrf.mxu0
        %v2108 = vadd.f32 0.0, %v2107
        %v2109 = vpop.f32.mrf.mxu0
        %v2110 = vadd.f32 0.0, %v2109
        %2111 = vmatprep.mubr.bf16.mxu0 0
        %2112 = vmatmul.mubr.bf16.gmra.mxu0 %v1761
        %v2113 = vpop.f32.mrf.mxu0
        %v2114 = vadd.f32 0.0, %v2113
        %v2115 = vpop.f32.mrf.mxu0
        %v2116 = vadd.f32 0.0, %v2115
        %v2117 = vpop.f32.mrf.mxu0
        %v2118 = vpop.f32.mrf.mxu0
        %v2119 = vadd.f32 0.0, %v2118
        %2120 = vmatprep.mubr.bf16.mxu0 0
        %2121 = vmatmul.mubr.bf16.gmra.mxu0 %v1762
        %v2122 = vpop.f32.mrf.mxu0
        %v2123 = vadd.f32 0.0, %v2122
        %v2124 = vpop.f32.mrf.mxu0
        %v2125 = vadd.f32 0.0, %v2124
        %v2126 = vpop.f32.mrf.mxu0
        %v2127 = vadd.f32 0.0, %v2126
        %v2128 = vpop.f32.mrf.mxu0
        %v2129 = vadd.f32 0.0, %v2128
        %2130 = vmatprep.mubr.bf16.mxu0 0
        %2131 = vmatmul.mubr.bf16.gmra.mxu0 %v1763
        %v2132 = vpop.f32.mrf.mxu0
        %v2133 = vpop.f32.mrf.mxu0
        %v2134 = vadd.f32 0.0, %v2133
        %v2135 = vpop.f32.mrf.mxu0
        %v2136 = vadd.f32 0.0, %v2135
        %v2137 = vpop.f32.mrf.mxu0
        %v2138 = vadd.f32 0.0, %v2137
        %2139 = vmatprep.mubr.bf16.mxu0 0
        %2140 = vmatmul.mubr.bf16.gmra.mxu0 %v1764
        %v2141 = vpop.f32.mrf.mxu0
        %v2142 = vadd.f32 0.0, %v2141
        %v2143 = vpop.f32.mrf.mxu0
        %v2144 = vadd.f32 0.0, %v2143
        %v2145 = vpop.f32.mrf.mxu0
        %v2146 = vpop.f32.mrf.mxu0
        %v2147 = vadd.f32 0.0, %v2146
        %2148 = vmatprep.mubr.bf16.mxu0 0
        %2149 = vmatmul.mubr.bf16.gmra.mxu0 %v1765
        %v2150 = vpop.f32.mrf.mxu0
        %v2151 = vadd.f32 0.0, %v2150
        %v2152 = vpop.f32.mrf.mxu0
        %v2153 = vadd.f32 0.0, %v2152
        %v2154 = vpop.f32.mrf.mxu0
        %v2155 = vadd.f32 0.0, %v2154
        %v2156 = vpop.f32.mrf.mxu0
        %v2157 = vadd.f32 0.0, %v2156
        %2158 = vmatprep.mubr.bf16.mxu0 0
        %2159 = vmatmul.mubr.bf16.gmra.mxu0 %v1766
        %v2160 = vpop.f32.mrf.mxu0
        %v2161 = vpop.f32.mrf.mxu0
        %v2162 = vadd.f32 0.0, %v2161
        %v2163 = vpop.f32.mrf.mxu0
        %v2164 = vadd.f32 0.0, %v2163
        %v2165 = vpop.f32.mrf.mxu0
        %v2166 = vadd.f32 0.0, %v2165
        %2167 = vmatprep.mubr.bf16.mxu0 0
        %2168 = vmatmul.mubr.bf16.gmra.mxu0 %v1767
        %v2169 = vpop.f32.mrf.mxu0
        %v2170 = vadd.f32 0.0, %v2169
        %v2171 = vpop.f32.mrf.mxu0
        %v2172 = vadd.f32 0.0, %v2171
        %v2173 = vpop.f32.mrf.mxu0
        %v2174 = vpop.f32.mrf.mxu0
        %v2175 = vadd.f32 0.0, %v2174
        %2176 = vdwg.mxu0
        %2177 = vmatprep.subr.bf16.mxu0 0
        %2178 = vmatpush1.bf16.msra.mxu0 %v1895
        %2179 = vmatprep.subr.bf16.mxu0 0
        %2180 = vmatpush1.bf16.msra.mxu0 %v1892
        %2181 = vmatprep.subr.bf16.mxu0 0
        %2182 = vmatpush1.bf16.msra.mxu0 %v1889
        %2183 = vmatprep.subr.bf16.mxu0 0
        %2184 = vmatpush1.bf16.msra.mxu0 %v1886
        %2185 = vmatprep.subr.bf16.mxu0 0
        %2186 = vmatpush1.bf16.msra.mxu0 %v1883
        %2187 = vmatprep.subr.bf16.mxu0 0
        %2188 = vmatpush1.bf16.msra.mxu0 %v1880
        %2189 = vmatprep.subr.bf16.mxu0 0
        %2190 = vmatpush1.bf16.msra.mxu0 %v1877
        %2191 = vmatprep.subr.bf16.mxu0 0
        %2192 = vmatpush1.bf16.msra.mxu0 %v1874
        %2193 = vmatprep.subr.bf16.mxu0 0
        %2194 = vmatpush2.bf16.msra.mxu0 0
        %2195 = vmatprep.subr.bf16.mxu0 0
        %2196 = vmatpush2.bf16.msra.mxu0 0
        %2197 = vmatprep.subr.bf16.mxu0 0
        %2198 = vmatpush2.bf16.msra.mxu0 0
        %2199 = vmatprep.subr.bf16.mxu0 0
        %2200 = vmatpush2.bf16.msra.mxu0 0
        %2201 = vmatprep.subr.bf16.mxu0 0
        %2202 = vmatpush2.bf16.msra.mxu0 0
        %2203 = vmatprep.subr.bf16.mxu0 0
        %2204 = vmatpush2.bf16.msra.mxu0 0
        %2205 = vmatprep.subr.bf16.mxu0 0
        %2206 = vmatpush2.bf16.msra.mxu0 0
        %2207 = vmatprep.subr.bf16.mxu0 0
        %2208 = vmatpush2.bf16.msra.mxu0 0
        %2209 = vmatprep.mubr.bf16.mxu0 0
        %2210 = vmatmul.mubr.bf16.gmra.mxu0 %v1744
        %v2211 = vpop.f32.mrf.mxu0
        %v2212 = vadd.f32 0.0, %v2211
        %v2213 = vpop.f32.mrf.mxu0
        %v2214 = vpop.f32.mrf.mxu0
        %v2215 = vadd.f32 0.0, %v2214
        %v2216 = vpop.f32.mrf.mxu0
        %2217 = vmatprep.mubr.bf16.mxu0 0
        %2218 = vmatmul.mubr.bf16.gmra.mxu0 %v1745
        %v2219 = vpop.f32.mrf.mxu0
        %v2220 = vadd.f32 0.0, %v2219
        %v2221 = vpop.f32.mrf.mxu0
        %v2222 = vpop.f32.mrf.mxu0
        %v2223 = vadd.f32 0.0, %v2222
        %v2224 = vpop.f32.mrf.mxu0
        %2225 = vmatprep.mubr.bf16.mxu0 0
        %2226 = vmatmul.mubr.bf16.gmra.mxu0 %v1746
        %v2227 = vpop.f32.mrf.mxu0
        %v2228 = vadd.f32 0.0, %v2227
        %v2229 = vpop.f32.mrf.mxu0
        %v2230 = vpop.f32.mrf.mxu0
        %v2231 = vadd.f32 0.0, %v2230
        %v2232 = vpop.f32.mrf.mxu0
        %2233 = vmatprep.mubr.bf16.mxu0 0
        %2234 = vmatmul.mubr.bf16.gmra.mxu0 %v1747
        %v2235 = vpop.f32.mrf.mxu0
        %v2236 = vadd.f32 0.0, %v2235
        %v2237 = vpop.f32.mrf.mxu0
        %v2238 = vpop.f32.mrf.mxu0
        %v2239 = vadd.f32 0.0, %v2238
        %v2240 = vpop.f32.mrf.mxu0
        %2241 = vmatprep.mubr.bf16.mxu0 0
        %2242 = vmatmul.mubr.bf16.gmra.mxu0 %v1748
        %v2243 = vpop.f32.mrf.mxu0
        %v2244 = vadd.f32 0.0, %v2243
        %v2245 = vpop.f32.mrf.mxu0
        %v2246 = vpop.f32.mrf.mxu0
        %v2247 = vadd.f32 0.0, %v2246
        %v2248 = vpop.f32.mrf.mxu0
        %2249 = vmatprep.mubr.bf16.mxu0 0
        %2250 = vmatmul.mubr.bf16.gmra.mxu0 %v1749
        %v2251 = vpop.f32.mrf.mxu0
        %v2252 = vadd.f32 0.0, %v2251
        %v2253 = vpop.f32.mrf.mxu0
        %v2254 = vpop.f32.mrf.mxu0
        %v2255 = vadd.f32 0.0, %v2254
        %v2256 = vpop.f32.mrf.mxu0
        %2257 = vmatprep.mubr.bf16.mxu0 0
        %2258 = vmatmul.mubr.bf16.gmra.mxu0 %v1750
        %v2259 = vpop.f32.mrf.mxu0
        %v2260 = vadd.f32 0.0, %v2259
        %v2261 = vpop.f32.mrf.mxu0
        %v2262 = vpop.f32.mrf.mxu0
        %v2263 = vadd.f32 0.0, %v2262
        %v2264 = vpop.f32.mrf.mxu0
        %2265 = vmatprep.mubr.bf16.mxu0 0
        %2266 = vmatmul.mubr.bf16.gmra.mxu0 %v1751
        %v2267 = vpop.f32.mrf.mxu0
        %v2268 = vadd.f32 0.0, %v2267
        %v2269 = vpop.f32.mrf.mxu0
        %v2270 = vpop.f32.mrf.mxu0
        %v2271 = vadd.f32 0.0, %v2270
        %v2272 = vpop.f32.mrf.mxu0
        %2273 = vmatprep.mubr.bf16.mxu0 0
        %2274 = vmatmul.mubr.bf16.gmra.mxu0 %v1752
        %v2275 = vpop.f32.mrf.mxu0
        %v2276 = vadd.f32 0.0, %v2275
        %v2277 = vpop.f32.mrf.mxu0
        %v2278 = vpop.f32.mrf.mxu0
        %v2279 = vadd.f32 0.0, %v2278
        %v2280 = vpop.f32.mrf.mxu0
        %2281 = vmatprep.mubr.bf16.mxu0 0
        %2282 = vmatmul.mubr.bf16.gmra.mxu0 %v1753
        %v2283 = vpop.f32.mrf.mxu0
        %v2284 = vadd.f32 0.0, %v2283
        %v2285 = vpop.f32.mrf.mxu0
        %v2286 = vpop.f32.mrf.mxu0
        %v2287 = vadd.f32 0.0, %v2286
        %v2288 = vpop.f32.mrf.mxu0
        %2289 = vmatprep.mubr.bf16.mxu0 0
        %2290 = vmatmul.mubr.bf16.gmra.mxu0 %v1754
        %v2291 = vpop.f32.mrf.mxu0
        %v2292 = vadd.f32 0.0, %v2291
        %v2293 = vpop.f32.mrf.mxu0
        %v2294 = vpop.f32.mrf.mxu0
        %v2295 = vadd.f32 0.0, %v2294
        %v2296 = vpop.f32.mrf.mxu0
        %2297 = vmatprep.mubr.bf16.mxu0 0
        %2298 = vmatmul.mubr.bf16.gmra.mxu0 %v1755
        %v2299 = vpop.f32.mrf.mxu0
        %v2300 = vadd.f32 0.0, %v2299
        %v2301 = vpop.f32.mrf.mxu0
        %v2302 = vpop.f32.mrf.mxu0
        %v2303 = vadd.f32 0.0, %v2302
        %v2304 = vpop.f32.mrf.mxu0
        %2305 = vmatprep.mubr.bf16.mxu0 0
        %2306 = vmatmul.mubr.bf16.gmra.mxu0 %v1756
        %v2307 = vpop.f32.mrf.mxu0
        %v2308 = vadd.f32 0.0, %v2307
        %v2309 = vpop.f32.mrf.mxu0
        %v2310 = vpop.f32.mrf.mxu0
        %v2311 = vadd.f32 0.0, %v2310
        %v2312 = vpop.f32.mrf.mxu0
        %2313 = vmatprep.mubr.bf16.mxu0 0
        %2314 = vmatmul.mubr.bf16.gmra.mxu0 %v1757
        %v2315 = vpop.f32.mrf.mxu0
        %v2316 = vadd.f32 0.0, %v2315
        %v2317 = vpop.f32.mrf.mxu0
        %v2318 = vpop.f32.mrf.mxu0
        %v2319 = vadd.f32 0.0, %v2318
        %v2320 = vpop.f32.mrf.mxu0
        %2321 = vmatprep.mubr.bf16.mxu0 0
        %2322 = vmatmul.mubr.bf16.gmra.mxu0 %v1758
        %v2323 = vpop.f32.mrf.mxu0
        %v2324 = vadd.f32 0.0, %v2323
        %v2325 = vpop.f32.mrf.mxu0
        %v2326 = vpop.f32.mrf.mxu0
        %v2327 = vadd.f32 0.0, %v2326
        %v2328 = vpop.f32.mrf.mxu0
        %2329 = vmatprep.mubr.bf16.mxu0 0
        %2330 = vmatmul.mubr.bf16.gmra.mxu0 %v1759
        %v2331 = vpop.f32.mrf.mxu0
        %v2332 = vadd.f32 0.0, %v2331
        %v2333 = vpop.f32.mrf.mxu0
        %v2334 = vpop.f32.mrf.mxu0
        %v2335 = vadd.f32 0.0, %v2334
        %v2336 = vpop.f32.mrf.mxu0
        %2337 = vmatprep.mubr.bf16.mxu0 0
        %2338 = vmatmul.mubr.bf16.gmra.mxu0 %v1760
        %v2339 = vpop.f32.mrf.mxu0
        %v2340 = vadd.f32 0.0, %v2339
        %v2341 = vpop.f32.mrf.mxu0
        %v2342 = vpop.f32.mrf.mxu0
        %v2343 = vadd.f32 0.0, %v2342
        %v2344 = vpop.f32.mrf.mxu0
        %2345 = vmatprep.mubr.bf16.mxu0 0
        %2346 = vmatmul.mubr.bf16.gmra.mxu0 %v1761
        %v2347 = vpop.f32.mrf.mxu0
        %v2348 = vadd.f32 0.0, %v2347
        %v2349 = vpop.f32.mrf.mxu0
        %v2350 = vpop.f32.mrf.mxu0
        %v2351 = vadd.f32 0.0, %v2350
        %v2352 = vpop.f32.mrf.mxu0
        %2353 = vmatprep.mubr.bf16.mxu0 0
        %2354 = vmatmul.mubr.bf16.gmra.mxu0 %v1762
        %v2355 = vpop.f32.mrf.mxu0
        %v2356 = vadd.f32 0.0, %v2355
        %v2357 = vpop.f32.mrf.mxu0
        %v2358 = vpop.f32.mrf.mxu0
        %v2359 = vadd.f32 0.0, %v2358
        %v2360 = vpop.f32.mrf.mxu0
        %2361 = vmatprep.mubr.bf16.mxu0 0
        %2362 = vmatmul.mubr.bf16.gmra.mxu0 %v1763
        %v2363 = vpop.f32.mrf.mxu0
        %v2364 = vadd.f32 0.0, %v2363
        %v2365 = vpop.f32.mrf.mxu0
        %v2366 = vpop.f32.mrf.mxu0
        %v2367 = vadd.f32 0.0, %v2366
        %v2368 = vpop.f32.mrf.mxu0
        %2369 = vmatprep.mubr.bf16.mxu0 0
        %2370 = vmatmul.mubr.bf16.gmra.mxu0 %v1764
        %v2371 = vpop.f32.mrf.mxu0
        %v2372 = vadd.f32 0.0, %v2371
        %v2373 = vpop.f32.mrf.mxu0
        %v2374 = vpop.f32.mrf.mxu0
        %v2375 = vadd.f32 0.0, %v2374
        %v2376 = vpop.f32.mrf.mxu0
        %2377 = vmatprep.mubr.bf16.mxu0 0
        %2378 = vmatmul.mubr.bf16.gmra.mxu0 %v1765
        %v2379 = vpop.f32.mrf.mxu0
        %v2380 = vadd.f32 0.0, %v2379
        %v2381 = vpop.f32.mrf.mxu0
        %v2382 = vpop.f32.mrf.mxu0
        %v2383 = vadd.f32 0.0, %v2382
        %v2384 = vpop.f32.mrf.mxu0
        %2385 = vmatprep.mubr.bf16.mxu0 0
        %2386 = vmatmul.mubr.bf16.gmra.mxu0 %v1766
        %v2387 = vpop.f32.mrf.mxu0
        %v2388 = vadd.f32 0.0, %v2387
        %v2389 = vpop.f32.mrf.mxu0
        %v2390 = vpop.f32.mrf.mxu0
        %v2391 = vadd.f32 0.0, %v2390
        %v2392 = vpop.f32.mrf.mxu0
        %2393 = vmatprep.mubr.bf16.mxu0 0
        %2394 = vmatmul.mubr.bf16.gmra.mxu0 %v1767
        %v2395 = vpop.f32.mrf.mxu0
        %v2396 = vadd.f32 0.0, %v2395
        %v2397 = vpop.f32.mrf.mxu0
        %v2398 = vpop.f32.mrf.mxu0
        %v2399 = vadd.f32 0.0, %v2398
        %v2400 = vpop.f32.mrf.mxu0
        %2401 = vdwg.mxu0
        %vm2450 = vcmask 1046528
        %v2451 = vrot.slane %v1957, 1
        %v2452 = vrot.slane %v1961, 1
        %v2453 = vsel %vm2450, %v2451, %v2452
        %v2454 = vrot.slane %v1966, 1
        %v2455 = vsel %vm2450, %v2452, %v2454
        %v2456 = vrot.slane %v1970, 1
        %v2457 = vrot.slane %v1976, 1
        %v2458 = vsel %vm2450, %v2456, %v2457
        %v2459 = vrot.slane %v1979, 1
        %v2460 = vsel %vm2450, %v2457, %v2459
        %v2461 = vrot.slane %v1985, 1
        %v2462 = vrot.slane %v1989, 1
        %v2463 = vsel %vm2450, %v2461, %v2462
        %v2464 = vrot.slane %v1994, 1
        %v2465 = vsel %vm2450, %v2462, %v2464
        %v2466 = vrot.slane %v1998, 1
        %v2467 = vrot.slane %v2004, 1
        %v2468 = vsel %vm2450, %v2466, %v2467
        %v2469 = vrot.slane %v2007, 1
        %v2470 = vsel %vm2450, %v2467, %v2469
        %v2471 = vrot.slane %v2013, 1
        %v2472 = vrot.slane %v2017, 1
        %v2473 = vsel %vm2450, %v2471, %v2472
        %v2474 = vrot.slane %v2022, 1
        %v2475 = vsel %vm2450, %v2472, %v2474
        %v2476 = vrot.slane %v2026, 1
        %v2477 = vrot.slane %v2032, 1
        %v2478 = vsel %vm2450, %v2476, %v2477
        %v2479 = vrot.slane %v2035, 1
        %v2480 = vsel %vm2450, %v2477, %v2479
        %v2481 = vrot.slane %v2041, 1
        %v2482 = vrot.slane %v2045, 1
        %v2483 = vsel %vm2450, %v2481, %v2482
        %v2484 = vrot.slane %v2050, 1
        %v2485 = vsel %vm2450, %v2482, %v2484
        %v2486 = vrot.slane %v2054, 1
        %v2487 = vrot.slane %v2060, 1
        %v2488 = vsel %vm2450, %v2486, %v2487
        %v2489 = vrot.slane %v2063, 1
        %v2490 = vsel %vm2450, %v2487, %v2489
        %v2491 = vrot.slane %v2069, 1
        %v2492 = vrot.slane %v2073, 1
        %v2493 = vsel %vm2450, %v2491, %v2492
        %v2494 = vrot.slane %v2078, 1
        %v2495 = vsel %vm2450, %v2492, %v2494
        %v2496 = vrot.slane %v2082, 1
        %v2497 = vrot.slane %v2088, 1
        %v2498 = vsel %vm2450, %v2496, %v2497
        %v2499 = vrot.slane %v2091, 1
        %v2500 = vsel %vm2450, %v2497, %v2499
        %v2501 = vrot.slane %v2097, 1
        %v2502 = vrot.slane %v2101, 1
        %v2503 = vsel %vm2450, %v2501, %v2502
        %v2504 = vrot.slane %v2106, 1
        %v2505 = vsel %vm2450, %v2502, %v2504
        %v2506 = vrot.slane %v2110, 1
        %v2507 = vrot.slane %v2116, 1
        %v2508 = vsel %vm2450, %v2506, %v2507
        %v2509 = vrot.slane %v2119, 1
        %v2510 = vsel %vm2450, %v2507, %v2509
        %v2511 = vrot.slane %v2125, 1
        %v2512 = vrot.slane %v2129, 1
        %v2513 = vsel %vm2450, %v2511, %v2512
        %v2514 = vrot.slane %v2134, 1
        %v2515 = vsel %vm2450, %v2512, %v2514
        %v2516 = vrot.slane %v2138, 1
        %v2517 = vrot.slane %v2144, 1
        %v2518 = vsel %vm2450, %v2516, %v2517
        %v2519 = vrot.slane %v2147, 1
        %v2520 = vsel %vm2450, %v2517, %v2519
        %v2521 = vrot.slane %v2153, 1
        %v2522 = vrot.slane %v2157, 1
        %v2523 = vsel %vm2450, %v2521, %v2522
        %v2524 = vrot.slane %v2162, 1
        %v2525 = vsel %vm2450, %v2522, %v2524
        %v2526 = vrot.slane %v2166, 1
        %v2527 = vrot.slane %v2172, 1
        %v2528 = vsel %vm2450, %v2526, %v2527
        %v2529 = vrot.slane %v2175, 1
        %v2530 = vsel %vm2450, %v2527, %v2529
        %v2563 = vadd.f32 %v1955, %v2453
        %v2564 = vadd.f32 %v1959, %v2455
        %v2565 = vadd.f32 %v1968, %v2458
        %v2566 = vadd.f32 %v1974, %v2460
        %v2567 = vadd.f32 %v1983, %v2463
        %v2568 = vadd.f32 %v1987, %v2465
        %v2569 = vadd.f32 %v1996, %v2468
        %v2570 = vadd.f32 %v2002, %v2470
        %v2571 = vadd.f32 %v2011, %v2473
        %v2572 = vadd.f32 %v2015, %v2475
        %v2573 = vadd.f32 %v2024, %v2478
        %v2574 = vadd.f32 %v2030, %v2480
        %v2575 = vadd.f32 %v2039, %v2483
        %v2576 = vadd.f32 %v2043, %v2485
        %v2577 = vadd.f32 %v2052, %v2488
        %v2578 = vadd.f32 %v2058, %v2490
        %v2579 = vadd.f32 %v2067, %v2493
        %v2580 = vadd.f32 %v2071, %v2495
        %v2581 = vadd.f32 %v2080, %v2498
        %v2582 = vadd.f32 %v2086, %v2500
        %v2583 = vadd.f32 %v2095, %v2503
        %v2584 = vadd.f32 %v2099, %v2505
        %v2585 = vadd.f32 %v2108, %v2508
        %v2586 = vadd.f32 %v2114, %v2510
        %v2587 = vadd.f32 %v2123, %v2513
        %v2588 = vadd.f32 %v2127, %v2515
        %v2589 = vadd.f32 %v2136, %v2518
        %v2590 = vadd.f32 %v2142, %v2520
        %v2591 = vadd.f32 %v2151, %v2523
        %v2592 = vadd.f32 %v2155, %v2525
        %v2593 = vadd.f32 %v2164, %v2528
        %v2594 = vadd.f32 %v2170, %v2530
        %vm2643 = vcmask 1045504
        %v2644 = vrot.slane %v2212, 2
        %v2645 = vrot.slane %v2215, 2
        %v2646 = vsel %vm2643, %v2644, %v2645
        %v2647 = vrot.slane %v2220, 2
        %v2648 = vsel %vm2643, %v2645, %v2647
        %v2649 = vrot.slane %v2223, 2
        %v2650 = vrot.slane %v2228, 2
        %v2651 = vsel %vm2643, %v2649, %v2650
        %v2652 = vrot.slane %v2231, 2
        %v2653 = vsel %vm2643, %v2650, %v2652
        %v2654 = vrot.slane %v2236, 2
        %v2655 = vrot.slane %v2239, 2
        %v2656 = vsel %vm2643, %v2654, %v2655
        %v2657 = vrot.slane %v2244, 2
        %v2658 = vsel %vm2643, %v2655, %v2657
        %v2659 = vrot.slane %v2247, 2
        %v2660 = vrot.slane %v2252, 2
        %v2661 = vsel %vm2643, %v2659, %v2660
        %v2662 = vrot.slane %v2255, 2
        %v2663 = vsel %vm2643, %v2660, %v2662
        %v2664 = vrot.slane %v2260, 2
        %v2665 = vrot.slane %v2263, 2
        %v2666 = vsel %vm2643, %v2664, %v2665
        %v2667 = vrot.slane %v2268, 2
        %v2668 = vsel %vm2643, %v2665, %v2667
        %v2669 = vrot.slane %v2271, 2
        %v2670 = vrot.slane %v2276, 2
        %v2671 = vsel %vm2643, %v2669, %v2670
        %v2672 = vrot.slane %v2279, 2
        %v2673 = vsel %vm2643, %v2670, %v2672
        %v2674 = vrot.slane %v2284, 2
        %v2675 = vrot.slane %v2287, 2
        %v2676 = vsel %vm2643, %v2674, %v2675
        %v2677 = vrot.slane %v2292, 2
        %v2678 = vsel %vm2643, %v2675, %v2677
        %v2679 = vrot.slane %v2295, 2
        %v2680 = vrot.slane %v2300, 2
        %v2681 = vsel %vm2643, %v2679, %v2680
        %v2682 = vrot.slane %v2303, 2
        %v2683 = vsel %vm2643, %v2680, %v2682
        %v2684 = vrot.slane %v2308, 2
        %v2685 = vrot.slane %v2311, 2
        %v2686 = vsel %vm2643, %v2684, %v2685
        %v2687 = vrot.slane %v2316, 2
        %v2688 = vsel %vm2643, %v2685, %v2687
        %v2689 = vrot.slane %v2319, 2
        %v2690 = vrot.slane %v2324, 2
        %v2691 = vsel %vm2643, %v2689, %v2690
        %v2692 = vrot.slane %v2327, 2
        %v2693 = vsel %vm2643, %v2690, %v2692
        %v2694 = vrot.slane %v2332, 2
        %v2695 = vrot.slane %v2335, 2
        %v2696 = vsel %vm2643, %v2694, %v2695
        %v2697 = vrot.slane %v2340, 2
        %v2698 = vsel %vm2643, %v2695, %v2697
        %v2699 = vrot.slane %v2343, 2
        %v2700 = vrot.slane %v2348, 2
        %v2701 = vsel %vm2643, %v2699, %v2700
        %v2702 = vrot.slane %v2351, 2
        %v2703 = vsel %vm2643, %v2700, %v2702
        %v2704 = vrot.slane %v2356, 2
        %v2705 = vrot.slane %v2359, 2
        %v2706 = vsel %vm2643, %v2704, %v2705
        %v2707 = vrot.slane %v2364, 2
        %v2708 = vsel %vm2643, %v2705, %v2707
        %v2709 = vrot.slane %v2367, 2
        %v2710 = vrot.slane %v2372, 2
        %v2711 = vsel %vm2643, %v2709, %v2710
        %v2712 = vrot.slane %v2375, 2
        %v2713 = vsel %vm2643, %v2710, %v2712
        %v2714 = vrot.slane %v2380, 2
        %v2715 = vrot.slane %v2383, 2
        %v2716 = vsel %vm2643, %v2714, %v2715
        %v2717 = vrot.slane %v2388, 2
        %v2718 = vsel %vm2643, %v2715, %v2717
        %v2719 = vrot.slane %v2391, 2
        %v2720 = vrot.slane %v2396, 2
        %v2721 = vsel %vm2643, %v2719, %v2720
        %v2722 = vrot.slane %v2399, 2
        %v2723 = vsel %vm2643, %v2720, %v2722
        %v2756 = vadd.f32 %v2563, %v2646
        %v2757 = vadd.f32 %v2564, %v2648
        %v2758 = vadd.f32 %v2565, %v2651
        %v2759 = vadd.f32 %v2566, %v2653
        %v2760 = vadd.f32 %v2567, %v2656
        %v2761 = vadd.f32 %v2568, %v2658
        %v2762 = vadd.f32 %v2569, %v2661
        %v2763 = vadd.f32 %v2570, %v2663
        %v2764 = vadd.f32 %v2571, %v2666
        %v2765 = vadd.f32 %v2572, %v2668
        %v2766 = vadd.f32 %v2573, %v2671
        %v2767 = vadd.f32 %v2574, %v2673
        %v2768 = vadd.f32 %v2575, %v2676
        %v2769 = vadd.f32 %v2576, %v2678
        %v2770 = vadd.f32 %v2577, %v2681
        %v2771 = vadd.f32 %v2578, %v2683
        %v2772 = vadd.f32 %v2579, %v2686
        %v2773 = vadd.f32 %v2580, %v2688
        %v2774 = vadd.f32 %v2581, %v2691
        %v2775 = vadd.f32 %v2582, %v2693
        %v2776 = vadd.f32 %v2583, %v2696
        %v2777 = vadd.f32 %v2584, %v2698
        %v2778 = vadd.f32 %v2585, %v2701
        %v2779 = vadd.f32 %v2586, %v2703
        %v2780 = vadd.f32 %v2587, %v2706
        %v2781 = vadd.f32 %v2588, %v2708
        %v2782 = vadd.f32 %v2589, %v2711
        %v2783 = vadd.f32 %v2590, %v2713
        %v2784 = vadd.f32 %v2591, %v2716
        %v2785 = vadd.f32 %v2592, %v2718
        %v2786 = vadd.f32 %v2593, %v2721
        %v2787 = vadd.f32 %v2594, %v2723
        %v2788 = vld [vmem:[%s935] sm:$0xf]
        %v2789 = vld [vmem:[%s935 + $0x4] sm:$0xf]
        %v2790 = vld [vmem:[%s935 + $0x8] sm:$0xf]
        %v2791 = vld [vmem:[%s935 + $0xc] sm:$0xf]
        %v2792 = vld [vmem:[%s935 + $0x10] sm:$0xf]
        %v2793 = vld [vmem:[%s935 + $0x14] sm:$0xf]
        %v2794 = vld [vmem:[%s935 + $0x18] sm:$0xf]
        %v2795 = vld [vmem:[%s935 + $0x1c] sm:$0xf]
        %v2796 = vld [vmem:[%s935 + $0x20] sm:$0xf]
        %v2797 = vld [vmem:[%s935 + $0x24] sm:$0xf]
        %v2798 = vld [vmem:[%s935 + $0x28] sm:$0xf]
        %v2799 = vld [vmem:[%s935 + $0x2c] sm:$0xf]
        %v2800 = vld [vmem:[%s935 + $0x30] sm:$0xf]
        %v2801 = vld [vmem:[%s935 + $0x34] sm:$0xf]
        %v2802 = vld [vmem:[%s935 + $0x38] sm:$0xf]
        %v2803 = vld [vmem:[%s935 + $0x3c] sm:$0xf]
        %v2804 = vld [vmem:[%s935 + $0x40] sm:$0xf]
        %v2805 = vld [vmem:[%s935 + $0x44] sm:$0xf]
        %v2806 = vld [vmem:[%s935 + $0x48] sm:$0xf]
        %v2807 = vld [vmem:[%s935 + $0x4c] sm:$0xf]
        %v2808 = vld [vmem:[%s935 + $0x50] sm:$0xf]
        %v2809 = vld [vmem:[%s935 + $0x54] sm:$0xf]
        %v2810 = vld [vmem:[%s935 + $0x58] sm:$0xf]
        %v2811 = vld [vmem:[%s935 + $0x5c] sm:$0xf]
        %v2812 = vld [vmem:[%s935 + $0x60] sm:$0xf]
        %v2813 = vld [vmem:[%s935 + $0x64] sm:$0xf]
        %v2814 = vld [vmem:[%s935 + $0x68] sm:$0xf]
        %v2815 = vld [vmem:[%s935 + $0x6c] sm:$0xf]
        %v2816 = vld [vmem:[%s935 + $0x70] sm:$0xf]
        %v2817 = vld [vmem:[%s935 + $0x74] sm:$0xf]
        %v2818 = vld [vmem:[%s935 + $0x78] sm:$0xf]
        %v2819 = vld [vmem:[%s935 + $0x7c] sm:$0xf]
        %v2820 = vld [vmem:[%s935 + $0x80] sm:$0xf]
        %v2821 = vld [vmem:[%s935 + $0x84] sm:$0xf]
        %v2822 = vld [vmem:[%s935 + $0x88] sm:$0xf]
        %v2823 = vld [vmem:[%s935 + $0x8c] sm:$0xf]
        %v2824 = vld [vmem:[%s935 + $0x90] sm:$0xf]
        %v2825 = vld [vmem:[%s935 + $0x94] sm:$0xf]
        %v2826 = vld [vmem:[%s935 + $0x98] sm:$0xf]
        %v2827 = vld [vmem:[%s935 + $0x9c] sm:$0xf]
        %v2828 = vld [vmem:[%s935 + $0xa0] sm:$0xf]
        %v2829 = vld [vmem:[%s935 + $0xa4] sm:$0xf]
        %v2830 = vld [vmem:[%s935 + $0xa8] sm:$0xf]
        %v2831 = vld [vmem:[%s935 + $0xac] sm:$0xf]
        %v2832 = vld [vmem:[%s935 + $0xb0] sm:$0xf]
        %v2833 = vld [vmem:[%s935 + $0xb4] sm:$0xf]
        %v2834 = vld [vmem:[%s935 + $0xb8] sm:$0xf]
        %v2835 = vld [vmem:[%s935 + $0xbc] sm:$0xf]
        %s2836 = scalar_lea.vmem [#allocation8], 192
        %v2837 = vld [vmem:[%s2836] sm:$0xff]
        %v2838 = vld [vmem:[%s2836 + $0x8] sm:$0xf]
        %v2839 = vld [vmem:[%s2836 + $0xc] sm:$0xff]
        %v2840 = vld [vmem:[%s2836 + $0x14] sm:$0xf]
        %v2841 = vld [vmem:[%s2836 + $0x18] sm:$0xff]
        %v2842 = vld [vmem:[%s2836 + $0x20] sm:$0xf]
        %v2843 = vld [vmem:[%s2836 + $0x24] sm:$0xff]
        %v2844 = vld [vmem:[%s2836 + $0x2c] sm:$0xf]
        %v2845 = vld [vmem:[%s2836 + $0x30] sm:$0xff]
        %v2846 = vld [vmem:[%s2836 + $0x38] sm:$0xf]
        %v2847 = vld [vmem:[%s2836 + $0x3c] sm:$0xff]
        %v2848 = vld [vmem:[%s2836 + $0x44] sm:$0xf]
        %v2849 = vld [vmem:[%s2836 + $0x48] sm:$0xff]
        %v2850 = vld [vmem:[%s2836 + $0x50] sm:$0xf]
        %v2851 = vld [vmem:[%s2836 + $0x54] sm:$0xff]
        %v2852 = vld [vmem:[%s2836 + $0x5c] sm:$0xf]
        %v2853 = vld [vmem:[%s2836 + $0x60] sm:$0xff]
        %v2854 = vld [vmem:[%s2836 + $0x68] sm:$0xf]
        %v2855 = vld [vmem:[%s2836 + $0x6c] sm:$0xff]
        %v2856 = vld [vmem:[%s2836 + $0x74] sm:$0xf]
        %v2857 = vld [vmem:[%s2836 + $0x78] sm:$0xff]
        %v2858 = vld [vmem:[%s2836 + $0x80] sm:$0xf]
        %v2859 = vld [vmem:[%s2836 + $0x84] sm:$0xff]
        %v2860 = vld [vmem:[%s2836 + $0x8c] sm:$0xf]
        %v2861 = vld [vmem:[%s2836 + $0x90] sm:$0xff]
        %v2862 = vld [vmem:[%s2836 + $0x98] sm:$0xf]
        %v2863 = vld [vmem:[%s2836 + $0x9c] sm:$0xff]
        %v2864 = vld [vmem:[%s2836 + $0xa4] sm:$0xf]
        %v2865 = vld [vmem:[%s2836 + $0xa8] sm:$0xff]
        %v2866 = vld [vmem:[%s2836 + $0xb0] sm:$0xf]
        %v2867 = vld [vmem:[%s2836 + $0xb4] sm:$0xff]
        %v2868 = vld [vmem:[%s2836 + $0xbc] sm:$0xf]
        %v2917 = vunpack.c.l.b16 %v2788
        %v2918 = vunpack.c.l.b16 %v2789
        %v2919 = vunpack.c.l.b16 %v2790
        %v2920 = vunpack.c.l.b16 %v2791
        %v2921 = vunpack.c.l.b16 %v2792
        %v2922 = vunpack.c.l.b16 %v2793
        %v2923 = vunpack.c.l.b16 %v2794
        %v2924 = vunpack.c.l.b16 %v2795
        %v2925 = vunpack.c.l.b16 %v2796
        %v2926 = vunpack.c.l.b16 %v2797
        %v2927 = vunpack.c.l.b16 %v2798
        %v2928 = vunpack.c.l.b16 %v2799
        %v2929 = vunpack.c.l.b16 %v2800
        %v2930 = vunpack.c.l.b16 %v2801
        %v2931 = vunpack.c.l.b16 %v2802
        %v2932 = vunpack.c.l.b16 %v2803
        %v2933 = vunpack.c.l.b16 %v2804
        %v2934 = vunpack.c.l.b16 %v2805
        %v2935 = vunpack.c.l.b16 %v2806
        %v2936 = vunpack.c.l.b16 %v2807
        %v2937 = vunpack.c.l.b16 %v2808
        %v2938 = vunpack.c.l.b16 %v2809
        %v2939 = vunpack.c.l.b16 %v2810
        %v2940 = vunpack.c.l.b16 %v2811
        %v2941 = vunpack.c.l.b16 %v2812
        %v2942 = vunpack.c.l.b16 %v2813
        %v2943 = vunpack.c.l.b16 %v2814
        %v2944 = vunpack.c.l.b16 %v2815
        %v2945 = vunpack.c.l.b16 %v2816
        %v2946 = vunpack.c.l.b16 %v2817
        %v2947 = vunpack.c.l.b16 %v2818
        %v2948 = vunpack.c.l.b16 %v2819
        %v2949 = vunpack.c.l.b16 %v2820
        %v2950 = vunpack.c.l.b16 %v2821
        %v2951 = vunpack.c.l.b16 %v2822
        %v2952 = vunpack.c.l.b16 %v2823
        %v2953 = vunpack.c.l.b16 %v2824
        %v2954 = vunpack.c.l.b16 %v2825
        %v2955 = vunpack.c.l.b16 %v2826
        %v2956 = vunpack.c.l.b16 %v2827
        %v2957 = vunpack.c.l.b16 %v2828
        %v2958 = vunpack.c.l.b16 %v2829
        %v2959 = vunpack.c.l.b16 %v2830
        %v2960 = vunpack.c.l.b16 %v2831
        %v2961 = vunpack.c.l.b16 %v2832
        %v2962 = vunpack.c.l.b16 %v2833
        %v2963 = vunpack.c.l.b16 %v2834
        %v2964 = vunpack.c.l.b16 %v2835
        %v2965 = vpack.c.b16 %v2918, %v2917
        %v2966 = vpack.c.b16 %v2920, %v2919
        %v2967 = vpack.c.b16 %v2922, %v2921
        %v2968 = vpack.c.b16 %v2924, %v2923
        %v2969 = vpack.c.b16 %v2926, %v2925
        %v2970 = vpack.c.b16 %v2928, %v2927
        %v2971 = vpack.c.b16 %v2930, %v2929
        %v2972 = vpack.c.b16 %v2932, %v2931
        %v2973 = vpack.c.b16 %v2934, %v2933
        %v2974 = vpack.c.b16 %v2936, %v2935
        %v2975 = vpack.c.b16 %v2938, %v2937
        %v2976 = vpack.c.b16 %v2940, %v2939
        %v2977 = vpack.c.b16 %v2942, %v2941
        %v2978 = vpack.c.b16 %v2944, %v2943
        %v2979 = vpack.c.b16 %v2946, %v2945
        %v2980 = vpack.c.b16 %v2948, %v2947
        %v2981 = vpack.c.b16 %v2950, %v2949
        %v2982 = vpack.c.b16 %v2952, %v2951
        %v2983 = vpack.c.b16 %v2954, %v2953
        %v2984 = vpack.c.b16 %v2956, %v2955
        %v2985 = vpack.c.b16 %v2958, %v2957
        %v2986 = vpack.c.b16 %v2960, %v2959
        %v2987 = vpack.c.b16 %v2962, %v2961
        %v2988 = vpack.c.b16 %v2964, %v2963
        %v3045 = vunpack.c.l.b16 %v2837
        %v3046 = vunpack.c.h.b16 %v2837
        %v3047 = vunpack.c.l.b16 %v2838
        %v3048 = vunpack.c.l.b16 %v2839
        %v3049 = vunpack.c.h.b16 %v2839
        %v3050 = vunpack.c.l.b16 %v2840
        %v3051 = vunpack.c.l.b16 %v2841
        %v3052 = vunpack.c.h.b16 %v2841
        %v3053 = vunpack.c.l.b16 %v2842
        %v3054 = vunpack.c.l.b16 %v2843
        %v3055 = vunpack.c.h.b16 %v2843
        %v3056 = vunpack.c.l.b16 %v2844
        %v3057 = vunpack.c.l.b16 %v2845
        %v3058 = vunpack.c.h.b16 %v2845
        %v3059 = vunpack.c.l.b16 %v2846
        %v3060 = vunpack.c.l.b16 %v2847
        %v3061 = vunpack.c.h.b16 %v2847
        %v3062 = vunpack.c.l.b16 %v2848
        %v3063 = vunpack.c.l.b16 %v2849
        %v3064 = vunpack.c.h.b16 %v2849
        %v3065 = vunpack.c.l.b16 %v2850
        %v3066 = vunpack.c.l.b16 %v2851
        %v3067 = vunpack.c.h.b16 %v2851
        %v3068 = vunpack.c.l.b16 %v2852
        %v3069 = vunpack.c.l.b16 %v2853
        %v3070 = vunpack.c.h.b16 %v2853
        %v3071 = vunpack.c.l.b16 %v2854
        %v3072 = vunpack.c.l.b16 %v2855
        %v3073 = vunpack.c.h.b16 %v2855
        %v3074 = vunpack.c.l.b16 %v2856
        %v3075 = vunpack.c.l.b16 %v2857
        %v3076 = vunpack.c.h.b16 %v2857
        %v3077 = vunpack.c.l.b16 %v2858
        %v3078 = vunpack.c.l.b16 %v2859
        %v3079 = vunpack.c.h.b16 %v2859
        %v3080 = vunpack.c.l.b16 %v2860
        %v3081 = vunpack.c.l.b16 %v2861
        %v3082 = vunpack.c.h.b16 %v2861
        %v3083 = vunpack.c.l.b16 %v2862
        %v3084 = vunpack.c.l.b16 %v2863
        %v3085 = vunpack.c.h.b16 %v2863
        %v3086 = vunpack.c.l.b16 %v2864
        %v3087 = vunpack.c.l.b16 %v2865
        %v3088 = vunpack.c.h.b16 %v2865
        %v3089 = vunpack.c.l.b16 %v2866
        %v3090 = vunpack.c.l.b16 %v2867
        %v3091 = vunpack.c.h.b16 %v2867
        %v3092 = vunpack.c.l.b16 %v2868
        %v3093 = vpack.c.b16 %v3048, %v3045
        %v3094 = vpack.c.b16 %v3049, %v3046
        %v3095 = vpack.c.b16 %v3050, %v3047
        %v3096 = vpack.c.b16 %v3054, %v3051
        %v3097 = vpack.c.b16 %v3055, %v3052
        %v3098 = vpack.c.b16 %v3056, %v3053
        %v3099 = vpack.c.b16 %v3060, %v3057
        %v3100 = vpack.c.b16 %v3061, %v3058
        %v3101 = vpack.c.b16 %v3062, %v3059
        %v3102 = vpack.c.b16 %v3066, %v3063
        %v3103 = vpack.c.b16 %v3067, %v3064
        %v3104 = vpack.c.b16 %v3068, %v3065
        %v3105 = vpack.c.b16 %v3072, %v3069
        %v3106 = vpack.c.b16 %v3073, %v3070
        %v3107 = vpack.c.b16 %v3074, %v3071
        %v3108 = vpack.c.b16 %v3078, %v3075
        %v3109 = vpack.c.b16 %v3079, %v3076
        %v3110 = vpack.c.b16 %v3080, %v3077
        %v3111 = vpack.c.b16 %v3084, %v3081
        %v3112 = vpack.c.b16 %v3085, %v3082
        %v3113 = vpack.c.b16 %v3086, %v3083
        %v3114 = vpack.c.b16 %v3090, %v3087
        %v3115 = vpack.c.b16 %v3091, %v3088
        %v3116 = vpack.c.b16 %v3092, %v3089
        %3141 = vmatprep.subr.bf16.mxu0 %v3115
        %3142 = vmatpush1.bf16.msra.mxu0 %v3114
        %3143 = vmatprep.subr.bf16.mxu0 %v3112
        %3144 = vmatpush1.bf16.msra.mxu0 %v3111
        %3145 = vmatprep.subr.bf16.mxu0 %v3109
        %3146 = vmatpush1.bf16.msra.mxu0 %v3108
        %3147 = vmatprep.subr.bf16.mxu0 %v3106
        %3148 = vmatpush1.bf16.msra.mxu0 %v3105
        %3149 = vmatprep.subr.bf16.mxu0 %v3103
        %3150 = vmatpush1.bf16.msra.mxu0 %v3102
        %3151 = vmatprep.subr.bf16.mxu0 %v3100
        %3152 = vmatpush1.bf16.msra.mxu0 %v3099
        %3153 = vmatprep.subr.bf16.mxu0 %v3097
        %3154 = vmatpush1.bf16.msra.mxu0 %v3096
        %3155 = vmatprep.subr.bf16.mxu0 %v3094
        %3156 = vmatpush1.bf16.msra.mxu0 %v3093
        %3157 = vmatprep.subr.bf16.mxu0 0
        %3158 = vmatpush2.bf16.msra.mxu0 0
        %3159 = vmatprep.subr.bf16.mxu0 0
        %3160 = vmatpush2.bf16.msra.mxu0 0
        %3161 = vmatprep.subr.bf16.mxu0 0
        %3162 = vmatpush2.bf16.msra.mxu0 0
        %3163 = vmatprep.subr.bf16.mxu0 0
        %3164 = vmatpush2.bf16.msra.mxu0 0
        %3165 = vmatprep.subr.bf16.mxu0 0
        %3166 = vmatpush2.bf16.msra.mxu0 0
        %3167 = vmatprep.subr.bf16.mxu0 0
        %3168 = vmatpush2.bf16.msra.mxu0 0
        %3169 = vmatprep.subr.bf16.mxu0 0
        %3170 = vmatpush2.bf16.msra.mxu0 0
        %3171 = vmatprep.subr.bf16.mxu0 0
        %3172 = vmatpush2.bf16.msra.mxu0 0
        %3173 = vmatprep.mubr.bf16.mxu0 0
        %3174 = vmatmul.mubr.bf16.gmra.mxu0 %v2965
        %v3175 = vpop.f32.mrf.mxu0
        %v3176 = vadd.f32 0.0, %v3175
        %v3177 = vpop.f32.mrf.mxu0
        %v3178 = vadd.f32 0.0, %v3177
        %v3179 = vpop.f32.mrf.mxu0
        %v3180 = vadd.f32 0.0, %v3179
        %v3181 = vpop.f32.mrf.mxu0
        %v3182 = vadd.f32 0.0, %v3181
        %3183 = vmatprep.mubr.bf16.mxu0 0
        %3184 = vmatmul.mubr.bf16.gmra.mxu0 %v2966
        %v3185 = vpop.f32.mrf.mxu0
        %v3186 = vpop.f32.mrf.mxu0
        %v3187 = vadd.f32 0.0, %v3186
        %v3188 = vpop.f32.mrf.mxu0
        %v3189 = vadd.f32 0.0, %v3188
        %v3190 = vpop.f32.mrf.mxu0
        %v3191 = vadd.f32 0.0, %v3190
        %3192 = vmatprep.mubr.bf16.mxu0 0
        %3193 = vmatmul.mubr.bf16.gmra.mxu0 %v2967
        %v3194 = vpop.f32.mrf.mxu0
        %v3195 = vadd.f32 0.0, %v3194
        %v3196 = vpop.f32.mrf.mxu0
        %v3197 = vadd.f32 0.0, %v3196
        %v3198 = vpop.f32.mrf.mxu0
        %v3199 = vpop.f32.mrf.mxu0
        %v3200 = vadd.f32 0.0, %v3199
        %3201 = vmatprep.mubr.bf16.mxu0 0
        %3202 = vmatmul.mubr.bf16.gmra.mxu0 %v2968
        %v3203 = vpop.f32.mrf.mxu0
        %v3204 = vadd.f32 0.0, %v3203
        %v3205 = vpop.f32.mrf.mxu0
        %v3206 = vadd.f32 0.0, %v3205
        %v3207 = vpop.f32.mrf.mxu0
        %v3208 = vadd.f32 0.0, %v3207
        %v3209 = vpop.f32.mrf.mxu0
        %v3210 = vadd.f32 0.0, %v3209
        %3211 = vmatprep.mubr.bf16.mxu0 0
        %3212 = vmatmul.mubr.bf16.gmra.mxu0 %v2969
        %v3213 = vpop.f32.mrf.mxu0
        %v3214 = vpop.f32.mrf.mxu0
        %v3215 = vadd.f32 0.0, %v3214
        %v3216 = vpop.f32.mrf.mxu0
        %v3217 = vadd.f32 0.0, %v3216
        %v3218 = vpop.f32.mrf.mxu0
        %v3219 = vadd.f32 0.0, %v3218
        %3220 = vmatprep.mubr.bf16.mxu0 0
        %3221 = vmatmul.mubr.bf16.gmra.mxu0 %v2970
        %v3222 = vpop.f32.mrf.mxu0
        %v3223 = vadd.f32 0.0, %v3222
        %v3224 = vpop.f32.mrf.mxu0
        %v3225 = vadd.f32 0.0, %v3224
        %v3226 = vpop.f32.mrf.mxu0
        %v3227 = vpop.f32.mrf.mxu0
        %v3228 = vadd.f32 0.0, %v3227
        %3229 = vmatprep.mubr.bf16.mxu0 0
        %3230 = vmatmul.mubr.bf16.gmra.mxu0 %v2971
        %v3231 = vpop.f32.mrf.mxu0
        %v3232 = vadd.f32 0.0, %v3231
        %v3233 = vpop.f32.mrf.mxu0
        %v3234 = vadd.f32 0.0, %v3233
        %v3235 = vpop.f32.mrf.mxu0
        %v3236 = vadd.f32 0.0, %v3235
        %v3237 = vpop.f32.mrf.mxu0
        %v3238 = vadd.f32 0.0, %v3237
        %3239 = vmatprep.mubr.bf16.mxu0 0
        %3240 = vmatmul.mubr.bf16.gmra.mxu0 %v2972
        %v3241 = vpop.f32.mrf.mxu0
        %v3242 = vpop.f32.mrf.mxu0
        %v3243 = vadd.f32 0.0, %v3242
        %v3244 = vpop.f32.mrf.mxu0
        %v3245 = vadd.f32 0.0, %v3244
        %v3246 = vpop.f32.mrf.mxu0
        %v3247 = vadd.f32 0.0, %v3246
        %3248 = vmatprep.mubr.bf16.mxu0 0
        %3249 = vmatmul.mubr.bf16.gmra.mxu0 %v2973
        %v3250 = vpop.f32.mrf.mxu0
        %v3251 = vadd.f32 0.0, %v3250
        %v3252 = vpop.f32.mrf.mxu0
        %v3253 = vadd.f32 0.0, %v3252
        %v3254 = vpop.f32.mrf.mxu0
        %v3255 = vpop.f32.mrf.mxu0
        %v3256 = vadd.f32 0.0, %v3255
        %3257 = vmatprep.mubr.bf16.mxu0 0
        %3258 = vmatmul.mubr.bf16.gmra.mxu0 %v2974
        %v3259 = vpop.f32.mrf.mxu0
        %v3260 = vadd.f32 0.0, %v3259
        %v3261 = vpop.f32.mrf.mxu0
        %v3262 = vadd.f32 0.0, %v3261
        %v3263 = vpop.f32.mrf.mxu0
        %v3264 = vadd.f32 0.0, %v3263
        %v3265 = vpop.f32.mrf.mxu0
        %v3266 = vadd.f32 0.0, %v3265
        %3267 = vmatprep.mubr.bf16.mxu0 0
        %3268 = vmatmul.mubr.bf16.gmra.mxu0 %v2975
        %v3269 = vpop.f32.mrf.mxu0
        %v3270 = vpop.f32.mrf.mxu0
        %v3271 = vadd.f32 0.0, %v3270
        %v3272 = vpop.f32.mrf.mxu0
        %v3273 = vadd.f32 0.0, %v3272
        %v3274 = vpop.f32.mrf.mxu0
        %v3275 = vadd.f32 0.0, %v3274
        %3276 = vmatprep.mubr.bf16.mxu0 0
        %3277 = vmatmul.mubr.bf16.gmra.mxu0 %v2976
        %v3278 = vpop.f32.mrf.mxu0
        %v3279 = vadd.f32 0.0, %v3278
        %v3280 = vpop.f32.mrf.mxu0
        %v3281 = vadd.f32 0.0, %v3280
        %v3282 = vpop.f32.mrf.mxu0
        %v3283 = vpop.f32.mrf.mxu0
        %v3284 = vadd.f32 0.0, %v3283
        %3285 = vmatprep.mubr.bf16.mxu0 0
        %3286 = vmatmul.mubr.bf16.gmra.mxu0 %v2977
        %v3287 = vpop.f32.mrf.mxu0
        %v3288 = vadd.f32 0.0, %v3287
        %v3289 = vpop.f32.mrf.mxu0
        %v3290 = vadd.f32 0.0, %v3289
        %v3291 = vpop.f32.mrf.mxu0
        %v3292 = vadd.f32 0.0, %v3291
        %v3293 = vpop.f32.mrf.mxu0
        %v3294 = vadd.f32 0.0, %v3293
        %3295 = vmatprep.mubr.bf16.mxu0 0
        %3296 = vmatmul.mubr.bf16.gmra.mxu0 %v2978
        %v3297 = vpop.f32.mrf.mxu0
        %v3298 = vpop.f32.mrf.mxu0
        %v3299 = vadd.f32 0.0, %v3298
        %v3300 = vpop.f32.mrf.mxu0
        %v3301 = vadd.f32 0.0, %v3300
        %v3302 = vpop.f32.mrf.mxu0
        %v3303 = vadd.f32 0.0, %v3302
        %3304 = vmatprep.mubr.bf16.mxu0 0
        %3305 = vmatmul.mubr.bf16.gmra.mxu0 %v2979
        %v3306 = vpop.f32.mrf.mxu0
        %v3307 = vadd.f32 0.0, %v3306
        %v3308 = vpop.f32.mrf.mxu0
        %v3309 = vadd.f32 0.0, %v3308
        %v3310 = vpop.f32.mrf.mxu0
        %v3311 = vpop.f32.mrf.mxu0
        %v3312 = vadd.f32 0.0, %v3311
        %3313 = vmatprep.mubr.bf16.mxu0 0
        %3314 = vmatmul.mubr.bf16.gmra.mxu0 %v2980
        %v3315 = vpop.f32.mrf.mxu0
        %v3316 = vadd.f32 0.0, %v3315
        %v3317 = vpop.f32.mrf.mxu0
        %v3318 = vadd.f32 0.0, %v3317
        %v3319 = vpop.f32.mrf.mxu0
        %v3320 = vadd.f32 0.0, %v3319
        %v3321 = vpop.f32.mrf.mxu0
        %v3322 = vadd.f32 0.0, %v3321
        %3323 = vmatprep.mubr.bf16.mxu0 0
        %3324 = vmatmul.mubr.bf16.gmra.mxu0 %v2981
        %v3325 = vpop.f32.mrf.mxu0
        %v3326 = vpop.f32.mrf.mxu0
        %v3327 = vadd.f32 0.0, %v3326
        %v3328 = vpop.f32.mrf.mxu0
        %v3329 = vadd.f32 0.0, %v3328
        %v3330 = vpop.f32.mrf.mxu0
        %v3331 = vadd.f32 0.0, %v3330
        %3332 = vmatprep.mubr.bf16.mxu0 0
        %3333 = vmatmul.mubr.bf16.gmra.mxu0 %v2982
        %v3334 = vpop.f32.mrf.mxu0
        %v3335 = vadd.f32 0.0, %v3334
        %v3336 = vpop.f32.mrf.mxu0
        %v3337 = vadd.f32 0.0, %v3336
        %v3338 = vpop.f32.mrf.mxu0
        %v3339 = vpop.f32.mrf.mxu0
        %v3340 = vadd.f32 0.0, %v3339
        %3341 = vmatprep.mubr.bf16.mxu0 0
        %3342 = vmatmul.mubr.bf16.gmra.mxu0 %v2983
        %v3343 = vpop.f32.mrf.mxu0
        %v3344 = vadd.f32 0.0, %v3343
        %v3345 = vpop.f32.mrf.mxu0
        %v3346 = vadd.f32 0.0, %v3345
        %v3347 = vpop.f32.mrf.mxu0
        %v3348 = vadd.f32 0.0, %v3347
        %v3349 = vpop.f32.mrf.mxu0
        %v3350 = vadd.f32 0.0, %v3349
        %3351 = vmatprep.mubr.bf16.mxu0 0
        %3352 = vmatmul.mubr.bf16.gmra.mxu0 %v2984
        %v3353 = vpop.f32.mrf.mxu0
        %v3354 = vpop.f32.mrf.mxu0
        %v3355 = vadd.f32 0.0, %v3354
        %v3356 = vpop.f32.mrf.mxu0
        %v3357 = vadd.f32 0.0, %v3356
        %v3358 = vpop.f32.mrf.mxu0
        %v3359 = vadd.f32 0.0, %v3358
        %3360 = vmatprep.mubr.bf16.mxu0 0
        %3361 = vmatmul.mubr.bf16.gmra.mxu0 %v2985
        %v3362 = vpop.f32.mrf.mxu0
        %v3363 = vadd.f32 0.0, %v3362
        %v3364 = vpop.f32.mrf.mxu0
        %v3365 = vadd.f32 0.0, %v3364
        %v3366 = vpop.f32.mrf.mxu0
        %v3367 = vpop.f32.mrf.mxu0
        %v3368 = vadd.f32 0.0, %v3367
        %3369 = vmatprep.mubr.bf16.mxu0 0
        %3370 = vmatmul.mubr.bf16.gmra.mxu0 %v2986
        %v3371 = vpop.f32.mrf.mxu0
        %v3372 = vadd.f32 0.0, %v3371
        %v3373 = vpop.f32.mrf.mxu0
        %v3374 = vadd.f32 0.0, %v3373
        %v3375 = vpop.f32.mrf.mxu0
        %v3376 = vadd.f32 0.0, %v3375
        %v3377 = vpop.f32.mrf.mxu0
        %v3378 = vadd.f32 0.0, %v3377
        %3379 = vmatprep.mubr.bf16.mxu0 0
        %3380 = vmatmul.mubr.bf16.gmra.mxu0 %v2987
        %v3381 = vpop.f32.mrf.mxu0
        %v3382 = vpop.f32.mrf.mxu0
        %v3383 = vadd.f32 0.0, %v3382
        %v3384 = vpop.f32.mrf.mxu0
        %v3385 = vadd.f32 0.0, %v3384
        %v3386 = vpop.f32.mrf.mxu0
        %v3387 = vadd.f32 0.0, %v3386
        %3388 = vmatprep.mubr.bf16.mxu0 0
        %3389 = vmatmul.mubr.bf16.gmra.mxu0 %v2988
        %v3390 = vpop.f32.mrf.mxu0
        %v3391 = vadd.f32 0.0, %v3390
        %v3392 = vpop.f32.mrf.mxu0
        %v3393 = vadd.f32 0.0, %v3392
        %v3394 = vpop.f32.mrf.mxu0
        %v3395 = vpop.f32.mrf.mxu0
        %v3396 = vadd.f32 0.0, %v3395
        %3397 = vdwg.mxu0
        %3398 = vmatprep.subr.bf16.mxu0 0
        %3399 = vmatpush1.bf16.msra.mxu0 %v3116
        %3400 = vmatprep.subr.bf16.mxu0 0
        %3401 = vmatpush1.bf16.msra.mxu0 %v3113
        %3402 = vmatprep.subr.bf16.mxu0 0
        %3403 = vmatpush1.bf16.msra.mxu0 %v3110
        %3404 = vmatprep.subr.bf16.mxu0 0
        %3405 = vmatpush1.bf16.msra.mxu0 %v3107
        %3406 = vmatprep.subr.bf16.mxu0 0
        %3407 = vmatpush1.bf16.msra.mxu0 %v3104
        %3408 = vmatprep.subr.bf16.mxu0 0
        %3409 = vmatpush1.bf16.msra.mxu0 %v3101
        %3410 = vmatprep.subr.bf16.mxu0 0
        %3411 = vmatpush1.bf16.msra.mxu0 %v3098
        %3412 = vmatprep.subr.bf16.mxu0 0
        %3413 = vmatpush1.bf16.msra.mxu0 %v3095
        %3414 = vmatprep.subr.bf16.mxu0 0
        %3415 = vmatpush2.bf16.msra.mxu0 0
        %3416 = vmatprep.subr.bf16.mxu0 0
        %3417 = vmatpush2.bf16.msra.mxu0 0
        %3418 = vmatprep.subr.bf16.mxu0 0
        %3419 = vmatpush2.bf16.msra.mxu0 0
        %3420 = vmatprep.subr.bf16.mxu0 0
        %3421 = vmatpush2.bf16.msra.mxu0 0
        %3422 = vmatprep.subr.bf16.mxu0 0
        %3423 = vmatpush2.bf16.msra.mxu0 0
        %3424 = vmatprep.subr.bf16.mxu0 0
        %3425 = vmatpush2.bf16.msra.mxu0 0
        %3426 = vmatprep.subr.bf16.mxu0 0
        %3427 = vmatpush2.bf16.msra.mxu0 0
        %3428 = vmatprep.subr.bf16.mxu0 0
        %3429 = vmatpush2.bf16.msra.mxu0 0
        %3430 = vmatprep.mubr.bf16.mxu0 0
        %3431 = vmatmul.mubr.bf16.gmra.mxu0 %v2965
        %v3432 = vpop.f32.mrf.mxu0
        %v3433 = vadd.f32 0.0, %v3432
        %v3434 = vpop.f32.mrf.mxu0
        %v3435 = vpop.f32.mrf.mxu0
        %v3436 = vadd.f32 0.0, %v3435
        %v3437 = vpop.f32.mrf.mxu0
        %3438 = vmatprep.mubr.bf16.mxu0 0
        %3439 = vmatmul.mubr.bf16.gmra.mxu0 %v2966
        %v3440 = vpop.f32.mrf.mxu0
        %v3441 = vadd.f32 0.0, %v3440
        %v3442 = vpop.f32.mrf.mxu0
        %v3443 = vpop.f32.mrf.mxu0
        %v3444 = vadd.f32 0.0, %v3443
        %v3445 = vpop.f32.mrf.mxu0
        %3446 = vmatprep.mubr.bf16.mxu0 0
        %3447 = vmatmul.mubr.bf16.gmra.mxu0 %v2967
        %v3448 = vpop.f32.mrf.mxu0
        %v3449 = vadd.f32 0.0, %v3448
        %v3450 = vpop.f32.mrf.mxu0
        %v3451 = vpop.f32.mrf.mxu0
        %v3452 = vadd.f32 0.0, %v3451
        %v3453 = vpop.f32.mrf.mxu0
        %3454 = vmatprep.mubr.bf16.mxu0 0
        %3455 = vmatmul.mubr.bf16.gmra.mxu0 %v2968
        %v3456 = vpop.f32.mrf.mxu0
        %v3457 = vadd.f32 0.0, %v3456
        %v3458 = vpop.f32.mrf.mxu0
        %v3459 = vpop.f32.mrf.mxu0
        %v3460 = vadd.f32 0.0, %v3459
        %v3461 = vpop.f32.mrf.mxu0
        %3462 = vmatprep.mubr.bf16.mxu0 0
        %3463 = vmatmul.mubr.bf16.gmra.mxu0 %v2969
        %v3464 = vpop.f32.mrf.mxu0
        %v3465 = vadd.f32 0.0, %v3464
        %v3466 = vpop.f32.mrf.mxu0
        %v3467 = vpop.f32.mrf.mxu0
        %v3468 = vadd.f32 0.0, %v3467
        %v3469 = vpop.f32.mrf.mxu0
        %3470 = vmatprep.mubr.bf16.mxu0 0
        %3471 = vmatmul.mubr.bf16.gmra.mxu0 %v2970
        %v3472 = vpop.f32.mrf.mxu0
        %v3473 = vadd.f32 0.0, %v3472
        %v3474 = vpop.f32.mrf.mxu0
        %v3475 = vpop.f32.mrf.mxu0
        %v3476 = vadd.f32 0.0, %v3475
        %v3477 = vpop.f32.mrf.mxu0
        %3478 = vmatprep.mubr.bf16.mxu0 0
        %3479 = vmatmul.mubr.bf16.gmra.mxu0 %v2971
        %v3480 = vpop.f32.mrf.mxu0
        %v3481 = vadd.f32 0.0, %v3480
        %v3482 = vpop.f32.mrf.mxu0
        %v3483 = vpop.f32.mrf.mxu0
        %v3484 = vadd.f32 0.0, %v3483
        %v3485 = vpop.f32.mrf.mxu0
        %3486 = vmatprep.mubr.bf16.mxu0 0
        %3487 = vmatmul.mubr.bf16.gmra.mxu0 %v2972
        %v3488 = vpop.f32.mrf.mxu0
        %v3489 = vadd.f32 0.0, %v3488
        %v3490 = vpop.f32.mrf.mxu0
        %v3491 = vpop.f32.mrf.mxu0
        %v3492 = vadd.f32 0.0, %v3491
        %v3493 = vpop.f32.mrf.mxu0
        %3494 = vmatprep.mubr.bf16.mxu0 0
        %3495 = vmatmul.mubr.bf16.gmra.mxu0 %v2973
        %v3496 = vpop.f32.mrf.mxu0
        %v3497 = vadd.f32 0.0, %v3496
        %v3498 = vpop.f32.mrf.mxu0
        %v3499 = vpop.f32.mrf.mxu0
        %v3500 = vadd.f32 0.0, %v3499
        %v3501 = vpop.f32.mrf.mxu0
        %3502 = vmatprep.mubr.bf16.mxu0 0
        %3503 = vmatmul.mubr.bf16.gmra.mxu0 %v2974
        %v3504 = vpop.f32.mrf.mxu0
        %v3505 = vadd.f32 0.0, %v3504
        %v3506 = vpop.f32.mrf.mxu0
        %v3507 = vpop.f32.mrf.mxu0
        %v3508 = vadd.f32 0.0, %v3507
        %v3509 = vpop.f32.mrf.mxu0
        %3510 = vmatprep.mubr.bf16.mxu0 0
        %3511 = vmatmul.mubr.bf16.gmra.mxu0 %v2975
        %v3512 = vpop.f32.mrf.mxu0
        %v3513 = vadd.f32 0.0, %v3512
        %v3514 = vpop.f32.mrf.mxu0
        %v3515 = vpop.f32.mrf.mxu0
        %v3516 = vadd.f32 0.0, %v3515
        %v3517 = vpop.f32.mrf.mxu0
        %3518 = vmatprep.mubr.bf16.mxu0 0
        %3519 = vmatmul.mubr.bf16.gmra.mxu0 %v2976
        %v3520 = vpop.f32.mrf.mxu0
        %v3521 = vadd.f32 0.0, %v3520
        %v3522 = vpop.f32.mrf.mxu0
        %v3523 = vpop.f32.mrf.mxu0
        %v3524 = vadd.f32 0.0, %v3523
        %v3525 = vpop.f32.mrf.mxu0
        %3526 = vmatprep.mubr.bf16.mxu0 0
        %3527 = vmatmul.mubr.bf16.gmra.mxu0 %v2977
        %v3528 = vpop.f32.mrf.mxu0
        %v3529 = vadd.f32 0.0, %v3528
        %v3530 = vpop.f32.mrf.mxu0
        %v3531 = vpop.f32.mrf.mxu0
        %v3532 = vadd.f32 0.0, %v3531
        %v3533 = vpop.f32.mrf.mxu0
        %3534 = vmatprep.mubr.bf16.mxu0 0
        %3535 = vmatmul.mubr.bf16.gmra.mxu0 %v2978
        %v3536 = vpop.f32.mrf.mxu0
        %v3537 = vadd.f32 0.0, %v3536
        %v3538 = vpop.f32.mrf.mxu0
        %v3539 = vpop.f32.mrf.mxu0
        %v3540 = vadd.f32 0.0, %v3539
        %v3541 = vpop.f32.mrf.mxu0
        %3542 = vmatprep.mubr.bf16.mxu0 0
        %3543 = vmatmul.mubr.bf16.gmra.mxu0 %v2979
        %v3544 = vpop.f32.mrf.mxu0
        %v3545 = vadd.f32 0.0, %v3544
        %v3546 = vpop.f32.mrf.mxu0
        %v3547 = vpop.f32.mrf.mxu0
        %v3548 = vadd.f32 0.0, %v3547
        %v3549 = vpop.f32.mrf.mxu0
        %3550 = vmatprep.mubr.bf16.mxu0 0
        %3551 = vmatmul.mubr.bf16.gmra.mxu0 %v2980
        %v3552 = vpop.f32.mrf.mxu0
        %v3553 = vadd.f32 0.0, %v3552
        %v3554 = vpop.f32.mrf.mxu0
        %v3555 = vpop.f32.mrf.mxu0
        %v3556 = vadd.f32 0.0, %v3555
        %v3557 = vpop.f32.mrf.mxu0
        %3558 = vmatprep.mubr.bf16.mxu0 0
        %3559 = vmatmul.mubr.bf16.gmra.mxu0 %v2981
        %v3560 = vpop.f32.mrf.mxu0
        %v3561 = vadd.f32 0.0, %v3560
        %v3562 = vpop.f32.mrf.mxu0
        %v3563 = vpop.f32.mrf.mxu0
        %v3564 = vadd.f32 0.0, %v3563
        %v3565 = vpop.f32.mrf.mxu0
        %3566 = vmatprep.mubr.bf16.mxu0 0
        %3567 = vmatmul.mubr.bf16.gmra.mxu0 %v2982
        %v3568 = vpop.f32.mrf.mxu0
        %v3569 = vadd.f32 0.0, %v3568
        %v3570 = vpop.f32.mrf.mxu0
        %v3571 = vpop.f32.mrf.mxu0
        %v3572 = vadd.f32 0.0, %v3571
        %v3573 = vpop.f32.mrf.mxu0
        %3574 = vmatprep.mubr.bf16.mxu0 0
        %3575 = vmatmul.mubr.bf16.gmra.mxu0 %v2983
        %v3576 = vpop.f32.mrf.mxu0
        %v3577 = vadd.f32 0.0, %v3576
        %v3578 = vpop.f32.mrf.mxu0
        %v3579 = vpop.f32.mrf.mxu0
        %v3580 = vadd.f32 0.0, %v3579
        %v3581 = vpop.f32.mrf.mxu0
        %3582 = vmatprep.mubr.bf16.mxu0 0
        %3583 = vmatmul.mubr.bf16.gmra.mxu0 %v2984
        %v3584 = vpop.f32.mrf.mxu0
        %v3585 = vadd.f32 0.0, %v3584
        %v3586 = vpop.f32.mrf.mxu0
        %v3587 = vpop.f32.mrf.mxu0
        %v3588 = vadd.f32 0.0, %v3587
        %v3589 = vpop.f32.mrf.mxu0
        %3590 = vmatprep.mubr.bf16.mxu0 0
        %3591 = vmatmul.mubr.bf16.gmra.mxu0 %v2985
        %v3592 = vpop.f32.mrf.mxu0
        %v3593 = vadd.f32 0.0, %v3592
        %v3594 = vpop.f32.mrf.mxu0
        %v3595 = vpop.f32.mrf.mxu0
        %v3596 = vadd.f32 0.0, %v3595
        %v3597 = vpop.f32.mrf.mxu0
        %3598 = vmatprep.mubr.bf16.mxu0 0
        %3599 = vmatmul.mubr.bf16.gmra.mxu0 %v2986
        %v3600 = vpop.f32.mrf.mxu0
        %v3601 = vadd.f32 0.0, %v3600
        %v3602 = vpop.f32.mrf.mxu0
        %v3603 = vpop.f32.mrf.mxu0
        %v3604 = vadd.f32 0.0, %v3603
        %v3605 = vpop.f32.mrf.mxu0
        %3606 = vmatprep.mubr.bf16.mxu0 0
        %3607 = vmatmul.mubr.bf16.gmra.mxu0 %v2987
        %v3608 = vpop.f32.mrf.mxu0
        %v3609 = vadd.f32 0.0, %v3608
        %v3610 = vpop.f32.mrf.mxu0
        %v3611 = vpop.f32.mrf.mxu0
        %v3612 = vadd.f32 0.0, %v3611
        %v3613 = vpop.f32.mrf.mxu0
        %3614 = vmatprep.mubr.bf16.mxu0 0
        %3615 = vmatmul.mubr.bf16.gmra.mxu0 %v2988
        %v3616 = vpop.f32.mrf.mxu0
        %v3617 = vadd.f32 0.0, %v3616
        %v3618 = vpop.f32.mrf.mxu0
        %v3619 = vpop.f32.mrf.mxu0
        %v3620 = vadd.f32 0.0, %v3619
        %v3621 = vpop.f32.mrf.mxu0
        %3622 = vdwg.mxu0
        %v3623 = vadd.f32 %v2756, %v3176
        %v3624 = vadd.f32 %v2757, %v3180
        %v3625 = vadd.f32 %v2758, %v3189
        %v3626 = vadd.f32 %v2759, %v3195
        %v3627 = vadd.f32 %v2760, %v3204
        %v3628 = vadd.f32 %v2761, %v3208
        %v3629 = vadd.f32 %v2762, %v3217
        %v3630 = vadd.f32 %v2763, %v3223
        %v3631 = vadd.f32 %v2764, %v3232
        %v3632 = vadd.f32 %v2765, %v3236
        %v3633 = vadd.f32 %v2766, %v3245
        %v3634 = vadd.f32 %v2767, %v3251
        %v3635 = vadd.f32 %v2768, %v3260
        %v3636 = vadd.f32 %v2769, %v3264
        %v3637 = vadd.f32 %v2770, %v3273
        %v3638 = vadd.f32 %v2771, %v3279
        %v3639 = vadd.f32 %v2772, %v3288
        %v3640 = vadd.f32 %v2773, %v3292
        %v3641 = vadd.f32 %v2774, %v3301
        %v3642 = vadd.f32 %v2775, %v3307
        %v3643 = vadd.f32 %v2776, %v3316
        %v3644 = vadd.f32 %v2777, %v3320
        %v3645 = vadd.f32 %v2778, %v3329
        %v3646 = vadd.f32 %v2779, %v3335
        %v3647 = vadd.f32 %v2780, %v3344
        %v3648 = vadd.f32 %v2781, %v3348
        %v3649 = vadd.f32 %v2782, %v3357
        %v3650 = vadd.f32 %v2783, %v3363
        %v3651 = vadd.f32 %v2784, %v3372
        %v3652 = vadd.f32 %v2785, %v3376
        %v3653 = vadd.f32 %v2786, %v3385
        %v3654 = vadd.f32 %v2787, %v3391
        %v3703 = vrot.slane %v3178, 1
        %v3704 = vrot.slane %v3182, 1
        %v3705 = vsel %vm2450, %v3703, %v3704
        %v3706 = vrot.slane %v3187, 1
        %v3707 = vsel %vm2450, %v3704, %v3706
        %v3708 = vrot.slane %v3191, 1
        %v3709 = vrot.slane %v3197, 1
        %v3710 = vsel %vm2450, %v3708, %v3709
        %v3711 = vrot.slane %v3200, 1
        %v3712 = vsel %vm2450, %v3709, %v3711
        %v3713 = vrot.slane %v3206, 1
        %v3714 = vrot.slane %v3210, 1
        %v3715 = vsel %vm2450, %v3713, %v3714
        %v3716 = vrot.slane %v3215, 1
        %v3717 = vsel %vm2450, %v3714, %v3716
        %v3718 = vrot.slane %v3219, 1
        %v3719 = vrot.slane %v3225, 1
        %v3720 = vsel %vm2450, %v3718, %v3719
        %v3721 = vrot.slane %v3228, 1
        %v3722 = vsel %vm2450, %v3719, %v3721
        %v3723 = vrot.slane %v3234, 1
        %v3724 = vrot.slane %v3238, 1
        %v3725 = vsel %vm2450, %v3723, %v3724
        %v3726 = vrot.slane %v3243, 1
        %v3727 = vsel %vm2450, %v3724, %v3726
        %v3728 = vrot.slane %v3247, 1
        %v3729 = vrot.slane %v3253, 1
        %v3730 = vsel %vm2450, %v3728, %v3729
        %v3731 = vrot.slane %v3256, 1
        %v3732 = vsel %vm2450, %v3729, %v3731
        %v3733 = vrot.slane %v3262, 1
        %v3734 = vrot.slane %v3266, 1
        %v3735 = vsel %vm2450, %v3733, %v3734
        %v3736 = vrot.slane %v3271, 1
        %v3737 = vsel %vm2450, %v3734, %v3736
        %v3738 = vrot.slane %v3275, 1
        %v3739 = vrot.slane %v3281, 1
        %v3740 = vsel %vm2450, %v3738, %v3739
        %v3741 = vrot.slane %v3284, 1
        %v3742 = vsel %vm2450, %v3739, %v3741
        %v3743 = vrot.slane %v3290, 1
        %v3744 = vrot.slane %v3294, 1
        %v3745 = vsel %vm2450, %v3743, %v3744
        %v3746 = vrot.slane %v3299, 1
        %v3747 = vsel %vm2450, %v3744, %v3746
        %v3748 = vrot.slane %v3303, 1
        %v3749 = vrot.slane %v3309, 1
        %v3750 = vsel %vm2450, %v3748, %v3749
        %v3751 = vrot.slane %v3312, 1
        %v3752 = vsel %vm2450, %v3749, %v3751
        %v3753 = vrot.slane %v3318, 1
        %v3754 = vrot.slane %v3322, 1
        %v3755 = vsel %vm2450, %v3753, %v3754
        %v3756 = vrot.slane %v3327, 1
        %v3757 = vsel %vm2450, %v3754, %v3756
        %v3758 = vrot.slane %v3331, 1
        %v3759 = vrot.slane %v3337, 1
        %v3760 = vsel %vm2450, %v3758, %v3759
        %v3761 = vrot.slane %v3340, 1
        %v3762 = vsel %vm2450, %v3759, %v3761
        %v3763 = vrot.slane %v3346, 1
        %v3764 = vrot.slane %v3350, 1
        %v3765 = vsel %vm2450, %v3763, %v3764
        %v3766 = vrot.slane %v3355, 1
        %v3767 = vsel %vm2450, %v3764, %v3766
        %v3768 = vrot.slane %v3359, 1
        %v3769 = vrot.slane %v3365, 1
        %v3770 = vsel %vm2450, %v3768, %v3769
        %v3771 = vrot.slane %v3368, 1
        %v3772 = vsel %vm2450, %v3769, %v3771
        %v3773 = vrot.slane %v3374, 1
        %v3774 = vrot.slane %v3378, 1
        %v3775 = vsel %vm2450, %v3773, %v3774
        %v3776 = vrot.slane %v3383, 1
        %v3777 = vsel %vm2450, %v3774, %v3776
        %v3778 = vrot.slane %v3387, 1
        %v3779 = vrot.slane %v3393, 1
        %v3780 = vsel %vm2450, %v3778, %v3779
        %v3781 = vrot.slane %v3396, 1
        %v3782 = vsel %vm2450, %v3779, %v3781
        %v3815 = vadd.f32 %v3623, %v3705
        %v3816 = vadd.f32 %v3624, %v3707
        %v3817 = vadd.f32 %v3625, %v3710
        %v3818 = vadd.f32 %v3626, %v3712
        %v3819 = vadd.f32 %v3627, %v3715
        %v3820 = vadd.f32 %v3628, %v3717
        %v3821 = vadd.f32 %v3629, %v3720
        %v3822 = vadd.f32 %v3630, %v3722
        %v3823 = vadd.f32 %v3631, %v3725
        %v3824 = vadd.f32 %v3632, %v3727
        %v3825 = vadd.f32 %v3633, %v3730
        %v3826 = vadd.f32 %v3634, %v3732
        %v3827 = vadd.f32 %v3635, %v3735
        %v3828 = vadd.f32 %v3636, %v3737
        %v3829 = vadd.f32 %v3637, %v3740
        %v3830 = vadd.f32 %v3638, %v3742
        %v3831 = vadd.f32 %v3639, %v3745
        %v3832 = vadd.f32 %v3640, %v3747
        %v3833 = vadd.f32 %v3641, %v3750
        %v3834 = vadd.f32 %v3642, %v3752
        %v3835 = vadd.f32 %v3643, %v3755
        %v3836 = vadd.f32 %v3644, %v3757
        %v3837 = vadd.f32 %v3645, %v3760
        %v3838 = vadd.f32 %v3646, %v3762
        %v3839 = vadd.f32 %v3647, %v3765
        %v3840 = vadd.f32 %v3648, %v3767
        %v3841 = vadd.f32 %v3649, %v3770
        %v3842 = vadd.f32 %v3650, %v3772
        %v3843 = vadd.f32 %v3651, %v3775
        %v3844 = vadd.f32 %v3652, %v3777
        %v3845 = vadd.f32 %v3653, %v3780
        %v3846 = vadd.f32 %v3654, %v3782
        %v3895 = vrot.slane %v3433, 2
        %v3896 = vrot.slane %v3436, 2
        %v3897 = vsel %vm2643, %v3895, %v3896
        %v3898 = vrot.slane %v3441, 2
        %v3899 = vsel %vm2643, %v3896, %v3898
        %v3900 = vrot.slane %v3444, 2
        %v3901 = vrot.slane %v3449, 2
        %v3902 = vsel %vm2643, %v3900, %v3901
        %v3903 = vrot.slane %v3452, 2
        %v3904 = vsel %vm2643, %v3901, %v3903
        %v3905 = vrot.slane %v3457, 2
        %v3906 = vrot.slane %v3460, 2
        %v3907 = vsel %vm2643, %v3905, %v3906
        %v3908 = vrot.slane %v3465, 2
        %v3909 = vsel %vm2643, %v3906, %v3908
        %v3910 = vrot.slane %v3468, 2
        %v3911 = vrot.slane %v3473, 2
        %v3912 = vsel %vm2643, %v3910, %v3911
        %v3913 = vrot.slane %v3476, 2
        %v3914 = vsel %vm2643, %v3911, %v3913
        %v3915 = vrot.slane %v3481, 2
        %v3916 = vrot.slane %v3484, 2
        %v3917 = vsel %vm2643, %v3915, %v3916
        %v3918 = vrot.slane %v3489, 2
        %v3919 = vsel %vm2643, %v3916, %v3918
        %v3920 = vrot.slane %v3492, 2
        %v3921 = vrot.slane %v3497, 2
        %v3922 = vsel %vm2643, %v3920, %v3921
        %v3923 = vrot.slane %v3500, 2
        %v3924 = vsel %vm2643, %v3921, %v3923
        %v3925 = vrot.slane %v3505, 2
        %v3926 = vrot.slane %v3508, 2
        %v3927 = vsel %vm2643, %v3925, %v3926
        %v3928 = vrot.slane %v3513, 2
        %v3929 = vsel %vm2643, %v3926, %v3928
        %v3930 = vrot.slane %v3516, 2
        %v3931 = vrot.slane %v3521, 2
        %v3932 = vsel %vm2643, %v3930, %v3931
        %v3933 = vrot.slane %v3524, 2
        %v3934 = vsel %vm2643, %v3931, %v3933
        %v3935 = vrot.slane %v3529, 2
        %v3936 = vrot.slane %v3532, 2
        %v3937 = vsel %vm2643, %v3935, %v3936
        %v3938 = vrot.slane %v3537, 2
        %v3939 = vsel %vm2643, %v3936, %v3938
        %v3940 = vrot.slane %v3540, 2
        %v3941 = vrot.slane %v3545, 2
        %v3942 = vsel %vm2643, %v3940, %v3941
        %v3943 = vrot.slane %v3548, 2
        %v3944 = vsel %vm2643, %v3941, %v3943
        %v3945 = vrot.slane %v3553, 2
        %v3946 = vrot.slane %v3556, 2
        %v3947 = vsel %vm2643, %v3945, %v3946
        %v3948 = vrot.slane %v3561, 2
        %v3949 = vsel %vm2643, %v3946, %v3948
        %v3950 = vrot.slane %v3564, 2
        %v3951 = vrot.slane %v3569, 2
        %v3952 = vsel %vm2643, %v3950, %v3951
        %v3953 = vrot.slane %v3572, 2
        %v3954 = vsel %vm2643, %v3951, %v3953
        %v3955 = vrot.slane %v3577, 2
        %v3956 = vrot.slane %v3580, 2
        %v3957 = vsel %vm2643, %v3955, %v3956
        %v3958 = vrot.slane %v3585, 2
        %v3959 = vsel %vm2643, %v3956, %v3958
        %v3960 = vrot.slane %v3588, 2
        %v3961 = vrot.slane %v3593, 2
        %v3962 = vsel %vm2643, %v3960, %v3961
        %v3963 = vrot.slane %v3596, 2
        %v3964 = vsel %vm2643, %v3961, %v3963
        %v3965 = vrot.slane %v3601, 2
        %v3966 = vrot.slane %v3604, 2
        %v3967 = vsel %vm2643, %v3965, %v3966
        %v3968 = vrot.slane %v3609, 2
        %v3969 = vsel %vm2643, %v3966, %v3968
        %v3970 = vrot.slane %v3612, 2
        %v3971 = vrot.slane %v3617, 2
        %v3972 = vsel %vm2643, %v3970, %v3971
        %v3973 = vrot.slane %v3620, 2
        %v3974 = vsel %vm2643, %v3971, %v3973
        %v4007 = vadd.f32 %v3815, %v3897
        %v4008 = vadd.f32 %v3816, %v3899
        %v4009 = vadd.f32 %v3817, %v3902
        %v4010 = vadd.f32 %v3818, %v3904
        %v4011 = vadd.f32 %v3819, %v3907
        %v4012 = vadd.f32 %v3820, %v3909
        %v4013 = vadd.f32 %v3821, %v3912
        %v4014 = vadd.f32 %v3822, %v3914
        %v4015 = vadd.f32 %v3823, %v3917
        %v4016 = vadd.f32 %v3824, %v3919
        %v4017 = vadd.f32 %v3825, %v3922
        %v4018 = vadd.f32 %v3826, %v3924
        %v4019 = vadd.f32 %v3827, %v3927
        %v4020 = vadd.f32 %v3828, %v3929
        %v4021 = vadd.f32 %v3829, %v3932
        %v4022 = vadd.f32 %v3830, %v3934
        %v4023 = vadd.f32 %v3831, %v3937
        %v4024 = vadd.f32 %v3832, %v3939
        %v4025 = vadd.f32 %v3833, %v3942
        %v4026 = vadd.f32 %v3834, %v3944
        %v4027 = vadd.f32 %v3835, %v3947
        %v4028 = vadd.f32 %v3836, %v3949
        %v4029 = vadd.f32 %v3837, %v3952
        %v4030 = vadd.f32 %v3838, %v3954
        %v4031 = vadd.f32 %v3839, %v3957
        %v4032 = vadd.f32 %v3840, %v3959
        %v4033 = vadd.f32 %v3841, %v3962
        %v4034 = vadd.f32 %v3842, %v3964
        %v4035 = vadd.f32 %v3843, %v3967
        %v4036 = vadd.f32 %v3844, %v3969
        %v4037 = vadd.f32 %v3845, %v3972
        %v4038 = vadd.f32 %v3846, %v3974
        %s4039 = scalar_lea.vmem [#allocation2], 24
        %v4040 = vld [vmem:[%s4039] sm:$0xf]
        %v4041 = vld [vmem:[%s4039 + $0x4] sm:$0xf]
        %v4042 = vld [vmem:[%s4039 + $0x8] sm:$0xf]
        %v4043 = vld [vmem:[%s4039 + $0xc] sm:$0xf]
        %v4044 = vld [vmem:[%s4039 + $0x10] sm:$0xf]
        %v4045 = vld [vmem:[%s4039 + $0x14] sm:$0xf]
        %v4046 = vld [vmem:[%s4039 + $0x18] sm:$0xf]
        %v4047 = vld [vmem:[%s4039 + $0x1c] sm:$0xf]
        %v4048 = vld [vmem:[%s4039 + $0x20] sm:$0xf]
        %v4049 = vld [vmem:[%s4039 + $0x24] sm:$0xf]
        %v4050 = vld [vmem:[%s4039 + $0x28] sm:$0xf]
        %v4051 = vld [vmem:[%s4039 + $0x2c] sm:$0xf]
        %v4052 = vld [vmem:[%s4039 + $0x30] sm:$0xf]
        %v4053 = vld [vmem:[%s4039 + $0x34] sm:$0xf]
        %v4054 = vld [vmem:[%s4039 + $0x38] sm:$0xf]
        %v4055 = vld [vmem:[%s4039 + $0x3c] sm:$0xf]
        %v4056 = vld [vmem:[%s4039 + $0x40] sm:$0xf]
        %v4057 = vld [vmem:[%s4039 + $0x44] sm:$0xf]
        %v4058 = vld [vmem:[%s4039 + $0x48] sm:$0xf]
        %v4059 = vld [vmem:[%s4039 + $0x4c] sm:$0xf]
        %v4060 = vld [vmem:[%s4039 + $0x50] sm:$0xf]
        %v4061 = vld [vmem:[%s4039 + $0x54] sm:$0xf]
        %v4062 = vld [vmem:[%s4039 + $0x58] sm:$0xf]
        %v4063 = vld [vmem:[%s4039 + $0x5c] sm:$0xf]
        %v4064 = vld [vmem:[%s4039 + $0x60] sm:$0xf]
        %v4065 = vld [vmem:[%s4039 + $0x64] sm:$0xf]
        %v4066 = vld [vmem:[%s4039 + $0x68] sm:$0xf]
        %v4067 = vld [vmem:[%s4039 + $0x6c] sm:$0xf]
        %v4068 = vld [vmem:[%s4039 + $0x70] sm:$0xf]
        %v4069 = vld [vmem:[%s4039 + $0x74] sm:$0xf]
        %v4070 = vld [vmem:[%s4039 + $0x78] sm:$0xf]
        %v4071 = vld [vmem:[%s4039 + $0x7c] sm:$0xf]
        %v4072 = vld [vmem:[%s4039 + $0x80] sm:$0xf]
        %v4073 = vld [vmem:[%s4039 + $0x84] sm:$0xf]
        %v4074 = vld [vmem:[%s4039 + $0x88] sm:$0xf]
        %v4075 = vld [vmem:[%s4039 + $0x8c] sm:$0xf]
        %v4076 = vld [vmem:[%s4039 + $0x90] sm:$0xf]
        %v4077 = vld [vmem:[%s4039 + $0x94] sm:$0xf]
        %v4078 = vld [vmem:[%s4039 + $0x98] sm:$0xf]
        %v4079 = vld [vmem:[%s4039 + $0x9c] sm:$0xf]
        %v4080 = vld [vmem:[%s4039 + $0xa0] sm:$0xf]
        %v4081 = vld [vmem:[%s4039 + $0xa4] sm:$0xf]
        %v4082 = vld [vmem:[%s4039 + $0xa8] sm:$0xf]
        %v4083 = vld [vmem:[%s4039 + $0xac] sm:$0xf]
        %v4084 = vld [vmem:[%s4039 + $0xb0] sm:$0xf]
        %v4085 = vld [vmem:[%s4039 + $0xb4] sm:$0xf]
        %v4086 = vld [vmem:[%s4039 + $0xb8] sm:$0xf]
        %v4087 = vld [vmem:[%s4039 + $0xbc] sm:$0xf]
        %s4088 = scalar_lea.vmem [#allocation8], 384
        %v4089 = vld [vmem:[%s4088] sm:$0xff]
        %v4090 = vld [vmem:[%s4088 + $0x8] sm:$0xf]
        %v4091 = vld [vmem:[%s4088 + $0xc] sm:$0xff]
        %v4092 = vld [vmem:[%s4088 + $0x14] sm:$0xf]
        %v4093 = vld [vmem:[%s4088 + $0x18] sm:$0xff]
        %v4094 = vld [vmem:[%s4088 + $0x20] sm:$0xf]
        %v4095 = vld [vmem:[%s4088 + $0x24] sm:$0xff]
        %v4096 = vld [vmem:[%s4088 + $0x2c] sm:$0xf]
        %v4097 = vld [vmem:[%s4088 + $0x30] sm:$0xff]
        %v4098 = vld [vmem:[%s4088 + $0x38] sm:$0xf]
        %v4099 = vld [vmem:[%s4088 + $0x3c] sm:$0xff]
        %v4100 = vld [vmem:[%s4088 + $0x44] sm:$0xf]
        %v4101 = vld [vmem:[%s4088 + $0x48] sm:$0xff]
        %v4102 = vld [vmem:[%s4088 + $0x50] sm:$0xf]
        %v4103 = vld [vmem:[%s4088 + $0x54] sm:$0xff]
        %v4104 = vld [vmem:[%s4088 + $0x5c] sm:$0xf]
        %v4105 = vld [vmem:[%s4088 + $0x60] sm:$0xff]
        %v4106 = vld [vmem:[%s4088 + $0x68] sm:$0xf]
        %v4107 = vld [vmem:[%s4088 + $0x6c] sm:$0xff]
        %v4108 = vld [vmem:[%s4088 + $0x74] sm:$0xf]
        %v4109 = vld [vmem:[%s4088 + $0x78] sm:$0xff]
        %v4110 = vld [vmem:[%s4088 + $0x80] sm:$0xf]
        %v4111 = vld [vmem:[%s4088 + $0x84] sm:$0xff]
        %v4112 = vld [vmem:[%s4088 + $0x8c] sm:$0xf]
        %v4113 = vld [vmem:[%s4088 + $0x90] sm:$0xff]
        %v4114 = vld [vmem:[%s4088 + $0x98] sm:$0xf]
        %v4115 = vld [vmem:[%s4088 + $0x9c] sm:$0xff]
        %v4116 = vld [vmem:[%s4088 + $0xa4] sm:$0xf]
        %v4117 = vld [vmem:[%s4088 + $0xa8] sm:$0xff]
        %v4118 = vld [vmem:[%s4088 + $0xb0] sm:$0xf]
        %v4119 = vld [vmem:[%s4088 + $0xb4] sm:$0xff]
        %v4120 = vld [vmem:[%s4088 + $0xbc] sm:$0xf]
        %v4169 = vunpack.c.l.b16 %v4040
        %v4170 = vunpack.c.l.b16 %v4041
        %v4171 = vunpack.c.l.b16 %v4042
        %v4172 = vunpack.c.l.b16 %v4043
        %v4173 = vunpack.c.l.b16 %v4044
        %v4174 = vunpack.c.l.b16 %v4045
        %v4175 = vunpack.c.l.b16 %v4046
        %v4176 = vunpack.c.l.b16 %v4047
        %v4177 = vunpack.c.l.b16 %v4048
        %v4178 = vunpack.c.l.b16 %v4049
        %v4179 = vunpack.c.l.b16 %v4050
        %v4180 = vunpack.c.l.b16 %v4051
        %v4181 = vunpack.c.l.b16 %v4052
        %v4182 = vunpack.c.l.b16 %v4053
        %v4183 = vunpack.c.l.b16 %v4054
        %v4184 = vunpack.c.l.b16 %v4055
        %v4185 = vunpack.c.l.b16 %v4056
        %v4186 = vunpack.c.l.b16 %v4057
        %v4187 = vunpack.c.l.b16 %v4058
        %v4188 = vunpack.c.l.b16 %v4059
        %v4189 = vunpack.c.l.b16 %v4060
        %v4190 = vunpack.c.l.b16 %v4061
        %v4191 = vunpack.c.l.b16 %v4062
        %v4192 = vunpack.c.l.b16 %v4063
        %v4193 = vunpack.c.l.b16 %v4064
        %v4194 = vunpack.c.l.b16 %v4065
        %v4195 = vunpack.c.l.b16 %v4066
        %v4196 = vunpack.c.l.b16 %v4067
        %v4197 = vunpack.c.l.b16 %v4068
        %v4198 = vunpack.c.l.b16 %v4069
        %v4199 = vunpack.c.l.b16 %v4070
        %v4200 = vunpack.c.l.b16 %v4071
        %v4201 = vunpack.c.l.b16 %v4072
        %v4202 = vunpack.c.l.b16 %v4073
        %v4203 = vunpack.c.l.b16 %v4074
        %v4204 = vunpack.c.l.b16 %v4075
        %v4205 = vunpack.c.l.b16 %v4076
        %v4206 = vunpack.c.l.b16 %v4077
        %v4207 = vunpack.c.l.b16 %v4078
        %v4208 = vunpack.c.l.b16 %v4079
        %v4209 = vunpack.c.l.b16 %v4080
        %v4210 = vunpack.c.l.b16 %v4081
        %v4211 = vunpack.c.l.b16 %v4082
        %v4212 = vunpack.c.l.b16 %v4083
        %v4213 = vunpack.c.l.b16 %v4084
        %v4214 = vunpack.c.l.b16 %v4085
        %v4215 = vunpack.c.l.b16 %v4086
        %v4216 = vunpack.c.l.b16 %v4087
        %v4217 = vpack.c.b16 %v4170, %v4169
        %v4218 = vpack.c.b16 %v4172, %v4171
        %v4219 = vpack.c.b16 %v4174, %v4173
        %v4220 = vpack.c.b16 %v4176, %v4175
        %v4221 = vpack.c.b16 %v4178, %v4177
        %v4222 = vpack.c.b16 %v4180, %v4179
        %v4223 = vpack.c.b16 %v4182, %v4181
        %v4224 = vpack.c.b16 %v4184, %v4183
        %v4225 = vpack.c.b16 %v4186, %v4185
        %v4226 = vpack.c.b16 %v4188, %v4187
        %v4227 = vpack.c.b16 %v4190, %v4189
        %v4228 = vpack.c.b16 %v4192, %v4191
        %v4229 = vpack.c.b16 %v4194, %v4193
        %v4230 = vpack.c.b16 %v4196, %v4195
        %v4231 = vpack.c.b16 %v4198, %v4197
        %v4232 = vpack.c.b16 %v4200, %v4199
        %v4233 = vpack.c.b16 %v4202, %v4201
        %v4234 = vpack.c.b16 %v4204, %v4203
        %v4235 = vpack.c.b16 %v4206, %v4205
        %v4236 = vpack.c.b16 %v4208, %v4207
        %v4237 = vpack.c.b16 %v4210, %v4209
        %v4238 = vpack.c.b16 %v4212, %v4211
        %v4239 = vpack.c.b16 %v4214, %v4213
        %v4240 = vpack.c.b16 %v4216, %v4215
        %v4297 = vunpack.c.l.b16 %v4089
        %v4298 = vunpack.c.h.b16 %v4089
        %v4299 = vunpack.c.l.b16 %v4090
        %v4300 = vunpack.c.l.b16 %v4091
        %v4301 = vunpack.c.h.b16 %v4091
        %v4302 = vunpack.c.l.b16 %v4092
        %v4303 = vunpack.c.l.b16 %v4093
        %v4304 = vunpack.c.h.b16 %v4093
        %v4305 = vunpack.c.l.b16 %v4094
        %v4306 = vunpack.c.l.b16 %v4095
        %v4307 = vunpack.c.h.b16 %v4095
        %v4308 = vunpack.c.l.b16 %v4096
        %v4309 = vunpack.c.l.b16 %v4097
        %v4310 = vunpack.c.h.b16 %v4097
        %v4311 = vunpack.c.l.b16 %v4098
        %v4312 = vunpack.c.l.b16 %v4099
        %v4313 = vunpack.c.h.b16 %v4099
        %v4314 = vunpack.c.l.b16 %v4100
        %v4315 = vunpack.c.l.b16 %v4101
        %v4316 = vunpack.c.h.b16 %v4101
        %v4317 = vunpack.c.l.b16 %v4102
        %v4318 = vunpack.c.l.b16 %v4103
        %v4319 = vunpack.c.h.b16 %v4103
        %v4320 = vunpack.c.l.b16 %v4104
        %v4321 = vunpack.c.l.b16 %v4105
        %v4322 = vunpack.c.h.b16 %v4105
        %v4323 = vunpack.c.l.b16 %v4106
        %v4324 = vunpack.c.l.b16 %v4107
        %v4325 = vunpack.c.h.b16 %v4107
        %v4326 = vunpack.c.l.b16 %v4108
        %v4327 = vunpack.c.l.b16 %v4109
        %v4328 = vunpack.c.h.b16 %v4109
        %v4329 = vunpack.c.l.b16 %v4110
        %v4330 = vunpack.c.l.b16 %v4111
        %v4331 = vunpack.c.h.b16 %v4111
        %v4332 = vunpack.c.l.b16 %v4112
        %v4333 = vunpack.c.l.b16 %v4113
        %v4334 = vunpack.c.h.b16 %v4113
        %v4335 = vunpack.c.l.b16 %v4114
        %v4336 = vunpack.c.l.b16 %v4115
        %v4337 = vunpack.c.h.b16 %v4115
        %v4338 = vunpack.c.l.b16 %v4116
        %v4339 = vunpack.c.l.b16 %v4117
        %v4340 = vunpack.c.h.b16 %v4117
        %v4341 = vunpack.c.l.b16 %v4118
        %v4342 = vunpack.c.l.b16 %v4119
        %v4343 = vunpack.c.h.b16 %v4119
        %v4344 = vunpack.c.l.b16 %v4120
        %v4345 = vpack.c.b16 %v4300, %v4297
        %v4346 = vpack.c.b16 %v4301, %v4298
        %v4347 = vpack.c.b16 %v4302, %v4299
        %v4348 = vpack.c.b16 %v4306, %v4303
        %v4349 = vpack.c.b16 %v4307, %v4304
        %v4350 = vpack.c.b16 %v4308, %v4305
        %v4351 = vpack.c.b16 %v4312, %v4309
        %v4352 = vpack.c.b16 %v4313, %v4310
        %v4353 = vpack.c.b16 %v4314, %v4311
        %v4354 = vpack.c.b16 %v4318, %v4315
        %v4355 = vpack.c.b16 %v4319, %v4316
        %v4356 = vpack.c.b16 %v4320, %v4317
        %v4357 = vpack.c.b16 %v4324, %v4321
        %v4358 = vpack.c.b16 %v4325, %v4322
        %v4359 = vpack.c.b16 %v4326, %v4323
        %v4360 = vpack.c.b16 %v4330, %v4327
        %v4361 = vpack.c.b16 %v4331, %v4328
        %v4362 = vpack.c.b16 %v4332, %v4329
        %v4363 = vpack.c.b16 %v4336, %v4333
        %v4364 = vpack.c.b16 %v4337, %v4334
        %v4365 = vpack.c.b16 %v4338, %v4335
        %v4366 = vpack.c.b16 %v4342, %v4339
        %v4367 = vpack.c.b16 %v4343, %v4340
        %v4368 = vpack.c.b16 %v4344, %v4341
        %4393 = vmatprep.subr.bf16.mxu0 %v4367
        %4394 = vmatpush1.bf16.msra.mxu0 %v4366
        %4395 = vmatprep.subr.bf16.mxu0 %v4364
        %4396 = vmatpush1.bf16.msra.mxu0 %v4363
        %4397 = vmatprep.subr.bf16.mxu0 %v4361
        %4398 = vmatpush1.bf16.msra.mxu0 %v4360
        %4399 = vmatprep.subr.bf16.mxu0 %v4358
        %4400 = vmatpush1.bf16.msra.mxu0 %v4357
        %4401 = vmatprep.subr.bf16.mxu0 %v4355
        %4402 = vmatpush1.bf16.msra.mxu0 %v4354
        %4403 = vmatprep.subr.bf16.mxu0 %v4352
        %4404 = vmatpush1.bf16.msra.mxu0 %v4351
        %4405 = vmatprep.subr.bf16.mxu0 %v4349
        %4406 = vmatpush1.bf16.msra.mxu0 %v4348
        %4407 = vmatprep.subr.bf16.mxu0 %v4346
        %4408 = vmatpush1.bf16.msra.mxu0 %v4345
        %4409 = vmatprep.subr.bf16.mxu0 0
        %4410 = vmatpush2.bf16.msra.mxu0 0
        %4411 = vmatprep.subr.bf16.mxu0 0
        %4412 = vmatpush2.bf16.msra.mxu0 0
        %4413 = vmatprep.subr.bf16.mxu0 0
        %4414 = vmatpush2.bf16.msra.mxu0 0
        %4415 = vmatprep.subr.bf16.mxu0 0
        %4416 = vmatpush2.bf16.msra.mxu0 0
        %4417 = vmatprep.subr.bf16.mxu0 0
        %4418 = vmatpush2.bf16.msra.mxu0 0
        %4419 = vmatprep.subr.bf16.mxu0 0
        %4420 = vmatpush2.bf16.msra.mxu0 0
        %4421 = vmatprep.subr.bf16.mxu0 0
        %4422 = vmatpush2.bf16.msra.mxu0 0
        %4423 = vmatprep.subr.bf16.mxu0 0
        %4424 = vmatpush2.bf16.msra.mxu0 0
        %4425 = vmatprep.mubr.bf16.mxu0 0
        %4426 = vmatmul.mubr.bf16.gmra.mxu0 %v4217
        %v4427 = vpop.f32.mrf.mxu0
        %v4428 = vadd.f32 0.0, %v4427
        %v4429 = vpop.f32.mrf.mxu0
        %v4430 = vadd.f32 0.0, %v4429
        %v4431 = vpop.f32.mrf.mxu0
        %v4432 = vadd.f32 0.0, %v4431
        %v4433 = vpop.f32.mrf.mxu0
        %v4434 = vadd.f32 0.0, %v4433
        %4435 = vmatprep.mubr.bf16.mxu0 0
        %4436 = vmatmul.mubr.bf16.gmra.mxu0 %v4218
        %v4437 = vpop.f32.mrf.mxu0
        %v4438 = vpop.f32.mrf.mxu0
        %v4439 = vadd.f32 0.0, %v4438
        %v4440 = vpop.f32.mrf.mxu0
        %v4441 = vadd.f32 0.0, %v4440
        %v4442 = vpop.f32.mrf.mxu0
        %v4443 = vadd.f32 0.0, %v4442
        %4444 = vmatprep.mubr.bf16.mxu0 0
        %4445 = vmatmul.mubr.bf16.gmra.mxu0 %v4219
        %v4446 = vpop.f32.mrf.mxu0
        %v4447 = vadd.f32 0.0, %v4446
        %v4448 = vpop.f32.mrf.mxu0
        %v4449 = vadd.f32 0.0, %v4448
        %v4450 = vpop.f32.mrf.mxu0
        %v4451 = vpop.f32.mrf.mxu0
        %v4452 = vadd.f32 0.0, %v4451
        %4453 = vmatprep.mubr.bf16.mxu0 0
        %4454 = vmatmul.mubr.bf16.gmra.mxu0 %v4220
        %v4455 = vpop.f32.mrf.mxu0
        %v4456 = vadd.f32 0.0, %v4455
        %v4457 = vpop.f32.mrf.mxu0
        %v4458 = vadd.f32 0.0, %v4457
        %v4459 = vpop.f32.mrf.mxu0
        %v4460 = vadd.f32 0.0, %v4459
        %v4461 = vpop.f32.mrf.mxu0
        %v4462 = vadd.f32 0.0, %v4461
        %4463 = vmatprep.mubr.bf16.mxu0 0
        %4464 = vmatmul.mubr.bf16.gmra.mxu0 %v4221
        %v4465 = vpop.f32.mrf.mxu0
        %v4466 = vpop.f32.mrf.mxu0
        %v4467 = vadd.f32 0.0, %v4466
        %v4468 = vpop.f32.mrf.mxu0
        %v4469 = vadd.f32 0.0, %v4468
        %v4470 = vpop.f32.mrf.mxu0
        %v4471 = vadd.f32 0.0, %v4470
        %4472 = vmatprep.mubr.bf16.mxu0 0
        %4473 = vmatmul.mubr.bf16.gmra.mxu0 %v4222
        %v4474 = vpop.f32.mrf.mxu0
        %v4475 = vadd.f32 0.0, %v4474
        %v4476 = vpop.f32.mrf.mxu0
        %v4477 = vadd.f32 0.0, %v4476
        %v4478 = vpop.f32.mrf.mxu0
        %v4479 = vpop.f32.mrf.mxu0
        %v4480 = vadd.f32 0.0, %v4479
        %4481 = vmatprep.mubr.bf16.mxu0 0
        %4482 = vmatmul.mubr.bf16.gmra.mxu0 %v4223
        %v4483 = vpop.f32.mrf.mxu0
        %v4484 = vadd.f32 0.0, %v4483
        %v4485 = vpop.f32.mrf.mxu0
        %v4486 = vadd.f32 0.0, %v4485
        %v4487 = vpop.f32.mrf.mxu0
        %v4488 = vadd.f32 0.0, %v4487
        %v4489 = vpop.f32.mrf.mxu0
        %v4490 = vadd.f32 0.0, %v4489
        %4491 = vmatprep.mubr.bf16.mxu0 0
        %4492 = vmatmul.mubr.bf16.gmra.mxu0 %v4224
        %v4493 = vpop.f32.mrf.mxu0
        %v4494 = vpop.f32.mrf.mxu0
        %v4495 = vadd.f32 0.0, %v4494
        %v4496 = vpop.f32.mrf.mxu0
        %v4497 = vadd.f32 0.0, %v4496
        %v4498 = vpop.f32.mrf.mxu0
        %v4499 = vadd.f32 0.0, %v4498
        %4500 = vmatprep.mubr.bf16.mxu0 0
        %4501 = vmatmul.mubr.bf16.gmra.mxu0 %v4225
        %v4502 = vpop.f32.mrf.mxu0
        %v4503 = vadd.f32 0.0, %v4502
        %v4504 = vpop.f32.mrf.mxu0
        %v4505 = vadd.f32 0.0, %v4504
        %v4506 = vpop.f32.mrf.mxu0
        %v4507 = vpop.f32.mrf.mxu0
        %v4508 = vadd.f32 0.0, %v4507
        %4509 = vmatprep.mubr.bf16.mxu0 0
        %4510 = vmatmul.mubr.bf16.gmra.mxu0 %v4226
        %v4511 = vpop.f32.mrf.mxu0
        %v4512 = vadd.f32 0.0, %v4511
        %v4513 = vpop.f32.mrf.mxu0
        %v4514 = vadd.f32 0.0, %v4513
        %v4515 = vpop.f32.mrf.mxu0
        %v4516 = vadd.f32 0.0, %v4515
        %v4517 = vpop.f32.mrf.mxu0
        %v4518 = vadd.f32 0.0, %v4517
        %4519 = vmatprep.mubr.bf16.mxu0 0
        %4520 = vmatmul.mubr.bf16.gmra.mxu0 %v4227
        %v4521 = vpop.f32.mrf.mxu0
        %v4522 = vpop.f32.mrf.mxu0
        %v4523 = vadd.f32 0.0, %v4522
        %v4524 = vpop.f32.mrf.mxu0
        %v4525 = vadd.f32 0.0, %v4524
        %v4526 = vpop.f32.mrf.mxu0
        %v4527 = vadd.f32 0.0, %v4526
        %4528 = vmatprep.mubr.bf16.mxu0 0
        %4529 = vmatmul.mubr.bf16.gmra.mxu0 %v4228
        %v4530 = vpop.f32.mrf.mxu0
        %v4531 = vadd.f32 0.0, %v4530
        %v4532 = vpop.f32.mrf.mxu0
        %v4533 = vadd.f32 0.0, %v4532
        %v4534 = vpop.f32.mrf.mxu0
        %v4535 = vpop.f32.mrf.mxu0
        %v4536 = vadd.f32 0.0, %v4535
        %4537 = vmatprep.mubr.bf16.mxu0 0
        %4538 = vmatmul.mubr.bf16.gmra.mxu0 %v4229
        %v4539 = vpop.f32.mrf.mxu0
        %v4540 = vadd.f32 0.0, %v4539
        %v4541 = vpop.f32.mrf.mxu0
        %v4542 = vadd.f32 0.0, %v4541
        %v4543 = vpop.f32.mrf.mxu0
        %v4544 = vadd.f32 0.0, %v4543
        %v4545 = vpop.f32.mrf.mxu0
        %v4546 = vadd.f32 0.0, %v4545
        %4547 = vmatprep.mubr.bf16.mxu0 0
        %4548 = vmatmul.mubr.bf16.gmra.mxu0 %v4230
        %v4549 = vpop.f32.mrf.mxu0
        %v4550 = vpop.f32.mrf.mxu0
        %v4551 = vadd.f32 0.0, %v4550
        %v4552 = vpop.f32.mrf.mxu0
        %v4553 = vadd.f32 0.0, %v4552
        %v4554 = vpop.f32.mrf.mxu0
        %v4555 = vadd.f32 0.0, %v4554
        %4556 = vmatprep.mubr.bf16.mxu0 0
        %4557 = vmatmul.mubr.bf16.gmra.mxu0 %v4231
        %v4558 = vpop.f32.mrf.mxu0
        %v4559 = vadd.f32 0.0, %v4558
        %v4560 = vpop.f32.mrf.mxu0
        %v4561 = vadd.f32 0.0, %v4560
        %v4562 = vpop.f32.mrf.mxu0
        %v4563 = vpop.f32.mrf.mxu0
        %v4564 = vadd.f32 0.0, %v4563
        %4565 = vmatprep.mubr.bf16.mxu0 0
        %4566 = vmatmul.mubr.bf16.gmra.mxu0 %v4232
        %v4567 = vpop.f32.mrf.mxu0
        %v4568 = vadd.f32 0.0, %v4567
        %v4569 = vpop.f32.mrf.mxu0
        %v4570 = vadd.f32 0.0, %v4569
        %v4571 = vpop.f32.mrf.mxu0
        %v4572 = vadd.f32 0.0, %v4571
        %v4573 = vpop.f32.mrf.mxu0
        %v4574 = vadd.f32 0.0, %v4573
        %4575 = vmatprep.mubr.bf16.mxu0 0
        %4576 = vmatmul.mubr.bf16.gmra.mxu0 %v4233
        %v4577 = vpop.f32.mrf.mxu0
        %v4578 = vpop.f32.mrf.mxu0
        %v4579 = vadd.f32 0.0, %v4578
        %v4580 = vpop.f32.mrf.mxu0
        %v4581 = vadd.f32 0.0, %v4580
        %v4582 = vpop.f32.mrf.mxu0
        %v4583 = vadd.f32 0.0, %v4582
        %4584 = vmatprep.mubr.bf16.mxu0 0
        %4585 = vmatmul.mubr.bf16.gmra.mxu0 %v4234
        %v4586 = vpop.f32.mrf.mxu0
        %v4587 = vadd.f32 0.0, %v4586
        %v4588 = vpop.f32.mrf.mxu0
        %v4589 = vadd.f32 0.0, %v4588
        %v4590 = vpop.f32.mrf.mxu0
        %v4591 = vpop.f32.mrf.mxu0
        %v4592 = vadd.f32 0.0, %v4591
        %4593 = vmatprep.mubr.bf16.mxu0 0
        %4594 = vmatmul.mubr.bf16.gmra.mxu0 %v4235
        %v4595 = vpop.f32.mrf.mxu0
        %v4596 = vadd.f32 0.0, %v4595
        %v4597 = vpop.f32.mrf.mxu0
        %v4598 = vadd.f32 0.0, %v4597
        %v4599 = vpop.f32.mrf.mxu0
        %v4600 = vadd.f32 0.0, %v4599
        %v4601 = vpop.f32.mrf.mxu0
        %v4602 = vadd.f32 0.0, %v4601
        %4603 = vmatprep.mubr.bf16.mxu0 0
        %4604 = vmatmul.mubr.bf16.gmra.mxu0 %v4236
        %v4605 = vpop.f32.mrf.mxu0
        %v4606 = vpop.f32.mrf.mxu0
        %v4607 = vadd.f32 0.0, %v4606
        %v4608 = vpop.f32.mrf.mxu0
        %v4609 = vadd.f32 0.0, %v4608
        %v4610 = vpop.f32.mrf.mxu0
        %v4611 = vadd.f32 0.0, %v4610
        %4612 = vmatprep.mubr.bf16.mxu0 0
        %4613 = vmatmul.mubr.bf16.gmra.mxu0 %v4237
        %v4614 = vpop.f32.mrf.mxu0
        %v4615 = vadd.f32 0.0, %v4614
        %v4616 = vpop.f32.mrf.mxu0
        %v4617 = vadd.f32 0.0, %v4616
        %v4618 = vpop.f32.mrf.mxu0
        %v4619 = vpop.f32.mrf.mxu0
        %v4620 = vadd.f32 0.0, %v4619
        %4621 = vmatprep.mubr.bf16.mxu0 0
        %4622 = vmatmul.mubr.bf16.gmra.mxu0 %v4238
        %v4623 = vpop.f32.mrf.mxu0
        %v4624 = vadd.f32 0.0, %v4623
        %v4625 = vpop.f32.mrf.mxu0
        %v4626 = vadd.f32 0.0, %v4625
        %v4627 = vpop.f32.mrf.mxu0
        %v4628 = vadd.f32 0.0, %v4627
        %v4629 = vpop.f32.mrf.mxu0
        %v4630 = vadd.f32 0.0, %v4629
        %4631 = vmatprep.mubr.bf16.mxu0 0
        %4632 = vmatmul.mubr.bf16.gmra.mxu0 %v4239
        %v4633 = vpop.f32.mrf.mxu0
        %v4634 = vpop.f32.mrf.mxu0
        %v4635 = vadd.f32 0.0, %v4634
        %v4636 = vpop.f32.mrf.mxu0
        %v4637 = vadd.f32 0.0, %v4636
        %v4638 = vpop.f32.mrf.mxu0
        %v4639 = vadd.f32 0.0, %v4638
        %4640 = vmatprep.mubr.bf16.mxu0 0
        %4641 = vmatmul.mubr.bf16.gmra.mxu0 %v4240
        %v4642 = vpop.f32.mrf.mxu0
        %v4643 = vadd.f32 0.0, %v4642
        %v4644 = vpop.f32.mrf.mxu0
        %v4645 = vadd.f32 0.0, %v4644
        %v4646 = vpop.f32.mrf.mxu0
        %v4647 = vpop.f32.mrf.mxu0
        %v4648 = vadd.f32 0.0, %v4647
        %4649 = vdwg.mxu0
        %4650 = vmatprep.subr.bf16.mxu0 0
        %4651 = vmatpush1.bf16.msra.mxu0 %v4368
        %4652 = vmatprep.subr.bf16.mxu0 0
        %4653 = vmatpush1.bf16.msra.mxu0 %v4365
        %4654 = vmatprep.subr.bf16.mxu0 0
        %4655 = vmatpush1.bf16.msra.mxu0 %v4362
        %4656 = vmatprep.subr.bf16.mxu0 0
        %4657 = vmatpush1.bf16.msra.mxu0 %v4359
        %4658 = vmatprep.subr.bf16.mxu0 0
        %4659 = vmatpush1.bf16.msra.mxu0 %v4356
        %4660 = vmatprep.subr.bf16.mxu0 0
        %4661 = vmatpush1.bf16.msra.mxu0 %v4353
        %4662 = vmatprep.subr.bf16.mxu0 0
        %4663 = vmatpush1.bf16.msra.mxu0 %v4350
        %4664 = vmatprep.subr.bf16.mxu0 0
        %4665 = vmatpush1.bf16.msra.mxu0 %v4347
        %4666 = vmatprep.subr.bf16.mxu0 0
        %4667 = vmatpush2.bf16.msra.mxu0 0
        %4668 = vmatprep.subr.bf16.mxu0 0
        %4669 = vmatpush2.bf16.msra.mxu0 0
        %4670 = vmatprep.subr.bf16.mxu0 0
        %4671 = vmatpush2.bf16.msra.mxu0 0
        %4672 = vmatprep.subr.bf16.mxu0 0
        %4673 = vmatpush2.bf16.msra.mxu0 0
        %4674 = vmatprep.subr.bf16.mxu0 0
        %4675 = vmatpush2.bf16.msra.mxu0 0
        %4676 = vmatprep.subr.bf16.mxu0 0
        %4677 = vmatpush2.bf16.msra.mxu0 0
        %4678 = vmatprep.subr.bf16.mxu0 0
        %4679 = vmatpush2.bf16.msra.mxu0 0
        %4680 = vmatprep.subr.bf16.mxu0 0
        %4681 = vmatpush2.bf16.msra.mxu0 0
        %4682 = vmatprep.mubr.bf16.mxu0 0
        %4683 = vmatmul.mubr.bf16.gmra.mxu0 %v4217
        %v4684 = vpop.f32.mrf.mxu0
        %v4685 = vadd.f32 0.0, %v4684
        %v4686 = vpop.f32.mrf.mxu0
        %v4687 = vpop.f32.mrf.mxu0
        %v4688 = vadd.f32 0.0, %v4687
        %v4689 = vpop.f32.mrf.mxu0
        %4690 = vmatprep.mubr.bf16.mxu0 0
        %4691 = vmatmul.mubr.bf16.gmra.mxu0 %v4218
        %v4692 = vpop.f32.mrf.mxu0
        %v4693 = vadd.f32 0.0, %v4692
        %v4694 = vpop.f32.mrf.mxu0
        %v4695 = vpop.f32.mrf.mxu0
        %v4696 = vadd.f32 0.0, %v4695
        %v4697 = vpop.f32.mrf.mxu0
        %4698 = vmatprep.mubr.bf16.mxu0 0
        %4699 = vmatmul.mubr.bf16.gmra.mxu0 %v4219
        %v4700 = vpop.f32.mrf.mxu0
        %v4701 = vadd.f32 0.0, %v4700
        %v4702 = vpop.f32.mrf.mxu0
        %v4703 = vpop.f32.mrf.mxu0
        %v4704 = vadd.f32 0.0, %v4703
        %v4705 = vpop.f32.mrf.mxu0
        %4706 = vmatprep.mubr.bf16.mxu0 0
        %4707 = vmatmul.mubr.bf16.gmra.mxu0 %v4220
        %v4708 = vpop.f32.mrf.mxu0
        %v4709 = vadd.f32 0.0, %v4708
        %v4710 = vpop.f32.mrf.mxu0
        %v4711 = vpop.f32.mrf.mxu0
        %v4712 = vadd.f32 0.0, %v4711
        %v4713 = vpop.f32.mrf.mxu0
        %4714 = vmatprep.mubr.bf16.mxu0 0
        %4715 = vmatmul.mubr.bf16.gmra.mxu0 %v4221
        %v4716 = vpop.f32.mrf.mxu0
        %v4717 = vadd.f32 0.0, %v4716
        %v4718 = vpop.f32.mrf.mxu0
        %v4719 = vpop.f32.mrf.mxu0
        %v4720 = vadd.f32 0.0, %v4719
        %v4721 = vpop.f32.mrf.mxu0
        %4722 = vmatprep.mubr.bf16.mxu0 0
        %4723 = vmatmul.mubr.bf16.gmra.mxu0 %v4222
        %v4724 = vpop.f32.mrf.mxu0
        %v4725 = vadd.f32 0.0, %v4724
        %v4726 = vpop.f32.mrf.mxu0
        %v4727 = vpop.f32.mrf.mxu0
        %v4728 = vadd.f32 0.0, %v4727
        %v4729 = vpop.f32.mrf.mxu0
        %4730 = vmatprep.mubr.bf16.mxu0 0
        %4731 = vmatmul.mubr.bf16.gmra.mxu0 %v4223
        %v4732 = vpop.f32.mrf.mxu0
        %v4733 = vadd.f32 0.0, %v4732
        %v4734 = vpop.f32.mrf.mxu0
        %v4735 = vpop.f32.mrf.mxu0
        %v4736 = vadd.f32 0.0, %v4735
        %v4737 = vpop.f32.mrf.mxu0
        %4738 = vmatprep.mubr.bf16.mxu0 0
        %4739 = vmatmul.mubr.bf16.gmra.mxu0 %v4224
        %v4740 = vpop.f32.mrf.mxu0
        %v4741 = vadd.f32 0.0, %v4740
        %v4742 = vpop.f32.mrf.mxu0
        %v4743 = vpop.f32.mrf.mxu0
        %v4744 = vadd.f32 0.0, %v4743
        %v4745 = vpop.f32.mrf.mxu0
        %4746 = vmatprep.mubr.bf16.mxu0 0
        %4747 = vmatmul.mubr.bf16.gmra.mxu0 %v4225
        %v4748 = vpop.f32.mrf.mxu0
        %v4749 = vadd.f32 0.0, %v4748
        %v4750 = vpop.f32.mrf.mxu0
        %v4751 = vpop.f32.mrf.mxu0
        %v4752 = vadd.f32 0.0, %v4751
        %v4753 = vpop.f32.mrf.mxu0
        %4754 = vmatprep.mubr.bf16.mxu0 0
        %4755 = vmatmul.mubr.bf16.gmra.mxu0 %v4226
        %v4756 = vpop.f32.mrf.mxu0
        %v4757 = vadd.f32 0.0, %v4756
        %v4758 = vpop.f32.mrf.mxu0
        %v4759 = vpop.f32.mrf.mxu0
        %v4760 = vadd.f32 0.0, %v4759
        %v4761 = vpop.f32.mrf.mxu0
        %4762 = vmatprep.mubr.bf16.mxu0 0
        %4763 = vmatmul.mubr.bf16.gmra.mxu0 %v4227
        %v4764 = vpop.f32.mrf.mxu0
        %v4765 = vadd.f32 0.0, %v4764
        %v4766 = vpop.f32.mrf.mxu0
        %v4767 = vpop.f32.mrf.mxu0
        %v4768 = vadd.f32 0.0, %v4767
        %v4769 = vpop.f32.mrf.mxu0
        %4770 = vmatprep.mubr.bf16.mxu0 0
        %4771 = vmatmul.mubr.bf16.gmra.mxu0 %v4228
        %v4772 = vpop.f32.mrf.mxu0
        %v4773 = vadd.f32 0.0, %v4772
        %v4774 = vpop.f32.mrf.mxu0
        %v4775 = vpop.f32.mrf.mxu0
        %v4776 = vadd.f32 0.0, %v4775
        %v4777 = vpop.f32.mrf.mxu0
        %4778 = vmatprep.mubr.bf16.mxu0 0
        %4779 = vmatmul.mubr.bf16.gmra.mxu0 %v4229
        %v4780 = vpop.f32.mrf.mxu0
        %v4781 = vadd.f32 0.0, %v4780
        %v4782 = vpop.f32.mrf.mxu0
        %v4783 = vpop.f32.mrf.mxu0
        %v4784 = vadd.f32 0.0, %v4783
        %v4785 = vpop.f32.mrf.mxu0
        %4786 = vmatprep.mubr.bf16.mxu0 0
        %4787 = vmatmul.mubr.bf16.gmra.mxu0 %v4230
        %v4788 = vpop.f32.mrf.mxu0
        %v4789 = vadd.f32 0.0, %v4788
        %v4790 = vpop.f32.mrf.mxu0
        %v4791 = vpop.f32.mrf.mxu0
        %v4792 = vadd.f32 0.0, %v4791
        %v4793 = vpop.f32.mrf.mxu0
        %4794 = vmatprep.mubr.bf16.mxu0 0
        %4795 = vmatmul.mubr.bf16.gmra.mxu0 %v4231
        %v4796 = vpop.f32.mrf.mxu0
        %v4797 = vadd.f32 0.0, %v4796
        %v4798 = vpop.f32.mrf.mxu0
        %v4799 = vpop.f32.mrf.mxu0
        %v4800 = vadd.f32 0.0, %v4799
        %v4801 = vpop.f32.mrf.mxu0
        %4802 = vmatprep.mubr.bf16.mxu0 0
        %4803 = vmatmul.mubr.bf16.gmra.mxu0 %v4232
        %v4804 = vpop.f32.mrf.mxu0
        %v4805 = vadd.f32 0.0, %v4804
        %v4806 = vpop.f32.mrf.mxu0
        %v4807 = vpop.f32.mrf.mxu0
        %v4808 = vadd.f32 0.0, %v4807
        %v4809 = vpop.f32.mrf.mxu0
        %4810 = vmatprep.mubr.bf16.mxu0 0
        %4811 = vmatmul.mubr.bf16.gmra.mxu0 %v4233
        %v4812 = vpop.f32.mrf.mxu0
        %v4813 = vadd.f32 0.0, %v4812
        %v4814 = vpop.f32.mrf.mxu0
        %v4815 = vpop.f32.mrf.mxu0
        %v4816 = vadd.f32 0.0, %v4815
        %v4817 = vpop.f32.mrf.mxu0
        %4818 = vmatprep.mubr.bf16.mxu0 0
        %4819 = vmatmul.mubr.bf16.gmra.mxu0 %v4234
        %v4820 = vpop.f32.mrf.mxu0
        %v4821 = vadd.f32 0.0, %v4820
        %v4822 = vpop.f32.mrf.mxu0
        %v4823 = vpop.f32.mrf.mxu0
        %v4824 = vadd.f32 0.0, %v4823
        %v4825 = vpop.f32.mrf.mxu0
        %4826 = vmatprep.mubr.bf16.mxu0 0
        %4827 = vmatmul.mubr.bf16.gmra.mxu0 %v4235
        %v4828 = vpop.f32.mrf.mxu0
        %v4829 = vadd.f32 0.0, %v4828
        %v4830 = vpop.f32.mrf.mxu0
        %v4831 = vpop.f32.mrf.mxu0
        %v4832 = vadd.f32 0.0, %v4831
        %v4833 = vpop.f32.mrf.mxu0
        %4834 = vmatprep.mubr.bf16.mxu0 0
        %4835 = vmatmul.mubr.bf16.gmra.mxu0 %v4236
        %v4836 = vpop.f32.mrf.mxu0
        %v4837 = vadd.f32 0.0, %v4836
        %v4838 = vpop.f32.mrf.mxu0
        %v4839 = vpop.f32.mrf.mxu0
        %v4840 = vadd.f32 0.0, %v4839
        %v4841 = vpop.f32.mrf.mxu0
        %4842 = vmatprep.mubr.bf16.mxu0 0
        %4843 = vmatmul.mubr.bf16.gmra.mxu0 %v4237
        %v4844 = vpop.f32.mrf.mxu0
        %v4845 = vadd.f32 0.0, %v4844
        %v4846 = vpop.f32.mrf.mxu0
        %v4847 = vpop.f32.mrf.mxu0
        %v4848 = vadd.f32 0.0, %v4847
        %v4849 = vpop.f32.mrf.mxu0
        %4850 = vmatprep.mubr.bf16.mxu0 0
        %4851 = vmatmul.mubr.bf16.gmra.mxu0 %v4238
        %v4852 = vpop.f32.mrf.mxu0
        %v4853 = vadd.f32 0.0, %v4852
        %v4854 = vpop.f32.mrf.mxu0
        %v4855 = vpop.f32.mrf.mxu0
        %v4856 = vadd.f32 0.0, %v4855
        %v4857 = vpop.f32.mrf.mxu0
        %4858 = vmatprep.mubr.bf16.mxu0 0
        %4859 = vmatmul.mubr.bf16.gmra.mxu0 %v4239
        %v4860 = vpop.f32.mrf.mxu0
        %v4861 = vadd.f32 0.0, %v4860
        %v4862 = vpop.f32.mrf.mxu0
        %v4863 = vpop.f32.mrf.mxu0
        %v4864 = vadd.f32 0.0, %v4863
        %v4865 = vpop.f32.mrf.mxu0
        %4866 = vmatprep.mubr.bf16.mxu0 0
        %4867 = vmatmul.mubr.bf16.gmra.mxu0 %v4240
        %v4868 = vpop.f32.mrf.mxu0
        %v4869 = vadd.f32 0.0, %v4868
        %v4870 = vpop.f32.mrf.mxu0
        %v4871 = vpop.f32.mrf.mxu0
        %v4872 = vadd.f32 0.0, %v4871
        %v4873 = vpop.f32.mrf.mxu0
        %4874 = vdwg.mxu0
        %v4875 = vadd.f32 %v4007, %v4428
        %v4876 = vadd.f32 %v4008, %v4432
        %v4877 = vadd.f32 %v4009, %v4441
        %v4878 = vadd.f32 %v4010, %v4447
        %v4879 = vadd.f32 %v4011, %v4456
        %v4880 = vadd.f32 %v4012, %v4460
        %v4881 = vadd.f32 %v4013, %v4469
        %v4882 = vadd.f32 %v4014, %v4475
        %v4883 = vadd.f32 %v4015, %v4484
        %v4884 = vadd.f32 %v4016, %v4488
        %v4885 = vadd.f32 %v4017, %v4497
        %v4886 = vadd.f32 %v4018, %v4503
        %v4887 = vadd.f32 %v4019, %v4512
        %v4888 = vadd.f32 %v4020, %v4516
        %v4889 = vadd.f32 %v4021, %v4525
        %v4890 = vadd.f32 %v4022, %v4531
        %v4891 = vadd.f32 %v4023, %v4540
        %v4892 = vadd.f32 %v4024, %v4544
        %v4893 = vadd.f32 %v4025, %v4553
        %v4894 = vadd.f32 %v4026, %v4559
        %v4895 = vadd.f32 %v4027, %v4568
        %v4896 = vadd.f32 %v4028, %v4572
        %v4897 = vadd.f32 %v4029, %v4581
        %v4898 = vadd.f32 %v4030, %v4587
        %v4899 = vadd.f32 %v4031, %v4596
        %v4900 = vadd.f32 %v4032, %v4600
        %v4901 = vadd.f32 %v4033, %v4609
        %v4902 = vadd.f32 %v4034, %v4615
        %v4903 = vadd.f32 %v4035, %v4624
        %v4904 = vadd.f32 %v4036, %v4628
        %v4905 = vadd.f32 %v4037, %v4637
        %v4906 = vadd.f32 %v4038, %v4643
        %v4955 = vrot.slane %v4430, 1
        %v4956 = vrot.slane %v4434, 1
        %v4957 = vsel %vm2450, %v4955, %v4956
        %v4958 = vrot.slane %v4439, 1
        %v4959 = vsel %vm2450, %v4956, %v4958
        %v4960 = vrot.slane %v4443, 1
        %v4961 = vrot.slane %v4449, 1
        %v4962 = vsel %vm2450, %v4960, %v4961
        %v4963 = vrot.slane %v4452, 1
        %v4964 = vsel %vm2450, %v4961, %v4963
        %v4965 = vrot.slane %v4458, 1
        %v4966 = vrot.slane %v4462, 1
        %v4967 = vsel %vm2450, %v4965, %v4966
        %v4968 = vrot.slane %v4467, 1
        %v4969 = vsel %vm2450, %v4966, %v4968
        %v4970 = vrot.slane %v4471, 1
        %v4971 = vrot.slane %v4477, 1
        %v4972 = vsel %vm2450, %v4970, %v4971
        %v4973 = vrot.slane %v4480, 1
        %v4974 = vsel %vm2450, %v4971, %v4973
        %v4975 = vrot.slane %v4486, 1
        %v4976 = vrot.slane %v4490, 1
        %v4977 = vsel %vm2450, %v4975, %v4976
        %v4978 = vrot.slane %v4495, 1
        %v4979 = vsel %vm2450, %v4976, %v4978
        %v4980 = vrot.slane %v4499, 1
        %v4981 = vrot.slane %v4505, 1
        %v4982 = vsel %vm2450, %v4980, %v4981
        %v4983 = vrot.slane %v4508, 1
        %v4984 = vsel %vm2450, %v4981, %v4983
        %v4985 = vrot.slane %v4514, 1
        %v4986 = vrot.slane %v4518, 1
        %v4987 = vsel %vm2450, %v4985, %v4986
        %v4988 = vrot.slane %v4523, 1
        %v4989 = vsel %vm2450, %v4986, %v4988
        %v4990 = vrot.slane %v4527, 1
        %v4991 = vrot.slane %v4533, 1
        %v4992 = vsel %vm2450, %v4990, %v4991
        %v4993 = vrot.slane %v4536, 1
        %v4994 = vsel %vm2450, %v4991, %v4993
        %v4995 = vrot.slane %v4542, 1
        %v4996 = vrot.slane %v4546, 1
        %v4997 = vsel %vm2450, %v4995, %v4996
        %v4998 = vrot.slane %v4551, 1
        %v4999 = vsel %vm2450, %v4996, %v4998
        %v5000 = vrot.slane %v4555, 1
        %v5001 = vrot.slane %v4561, 1
        %v5002 = vsel %vm2450, %v5000, %v5001
        %v5003 = vrot.slane %v4564, 1
        %v5004 = vsel %vm2450, %v5001, %v5003
        %v5005 = vrot.slane %v4570, 1
        %v5006 = vrot.slane %v4574, 1
        %v5007 = vsel %vm2450, %v5005, %v5006
        %v5008 = vrot.slane %v4579, 1
        %v5009 = vsel %vm2450, %v5006, %v5008
        %v5010 = vrot.slane %v4583, 1
        %v5011 = vrot.slane %v4589, 1
        %v5012 = vsel %vm2450, %v5010, %v5011
        %v5013 = vrot.slane %v4592, 1
        %v5014 = vsel %vm2450, %v5011, %v5013
        %v5015 = vrot.slane %v4598, 1
        %v5016 = vrot.slane %v4602, 1
        %v5017 = vsel %vm2450, %v5015, %v5016
        %v5018 = vrot.slane %v4607, 1
        %v5019 = vsel %vm2450, %v5016, %v5018
        %v5020 = vrot.slane %v4611, 1
        %v5021 = vrot.slane %v4617, 1
        %v5022 = vsel %vm2450, %v5020, %v5021
        %v5023 = vrot.slane %v4620, 1
        %v5024 = vsel %vm2450, %v5021, %v5023
        %v5025 = vrot.slane %v4626, 1
        %v5026 = vrot.slane %v4630, 1
        %v5027 = vsel %vm2450, %v5025, %v5026
        %v5028 = vrot.slane %v4635, 1
        %v5029 = vsel %vm2450, %v5026, %v5028
        %v5030 = vrot.slane %v4639, 1
        %v5031 = vrot.slane %v4645, 1
        %v5032 = vsel %vm2450, %v5030, %v5031
        %v5033 = vrot.slane %v4648, 1
        %v5034 = vsel %vm2450, %v5031, %v5033
        %v5067 = vadd.f32 %v4875, %v4957
        %v5068 = vadd.f32 %v4876, %v4959
        %v5069 = vadd.f32 %v4877, %v4962
        %v5070 = vadd.f32 %v4878, %v4964
        %v5071 = vadd.f32 %v4879, %v4967
        %v5072 = vadd.f32 %v4880, %v4969
        %v5073 = vadd.f32 %v4881, %v4972
        %v5074 = vadd.f32 %v4882, %v4974
        %v5075 = vadd.f32 %v4883, %v4977
        %v5076 = vadd.f32 %v4884, %v4979
        %v5077 = vadd.f32 %v4885, %v4982
        %v5078 = vadd.f32 %v4886, %v4984
        %v5079 = vadd.f32 %v4887, %v4987
        %v5080 = vadd.f32 %v4888, %v4989
        %v5081 = vadd.f32 %v4889, %v4992
        %v5082 = vadd.f32 %v4890, %v4994
        %v5083 = vadd.f32 %v4891, %v4997
        %v5084 = vadd.f32 %v4892, %v4999
        %v5085 = vadd.f32 %v4893, %v5002
        %v5086 = vadd.f32 %v4894, %v5004
        %v5087 = vadd.f32 %v4895, %v5007
        %v5088 = vadd.f32 %v4896, %v5009
        %v5089 = vadd.f32 %v4897, %v5012
        %v5090 = vadd.f32 %v4898, %v5014
        %v5091 = vadd.f32 %v4899, %v5017
        %v5092 = vadd.f32 %v4900, %v5019
        %v5093 = vadd.f32 %v4901, %v5022
        %v5094 = vadd.f32 %v4902, %v5024
        %v5095 = vadd.f32 %v4903, %v5027
        %v5096 = vadd.f32 %v4904, %v5029
        %v5097 = vadd.f32 %v4905, %v5032
        %v5098 = vadd.f32 %v4906, %v5034
        %v5147 = vrot.slane %v4685, 2
        %v5148 = vrot.slane %v4688, 2
        %v5149 = vsel %vm2643, %v5147, %v5148
        %v5150 = vrot.slane %v4693, 2
        %v5151 = vsel %vm2643, %v5148, %v5150
        %v5152 = vrot.slane %v4696, 2
        %v5153 = vrot.slane %v4701, 2
        %v5154 = vsel %vm2643, %v5152, %v5153
        %v5155 = vrot.slane %v4704, 2
        %v5156 = vsel %vm2643, %v5153, %v5155
        %v5157 = vrot.slane %v4709, 2
        %v5158 = vrot.slane %v4712, 2
        %v5159 = vsel %vm2643, %v5157, %v5158
        %v5160 = vrot.slane %v4717, 2
        %v5161 = vsel %vm2643, %v5158, %v5160
        %v5162 = vrot.slane %v4720, 2
        %v5163 = vrot.slane %v4725, 2
        %v5164 = vsel %vm2643, %v5162, %v5163
        %v5165 = vrot.slane %v4728, 2
        %v5166 = vsel %vm2643, %v5163, %v5165
        %v5167 = vrot.slane %v4733, 2
        %v5168 = vrot.slane %v4736, 2
        %v5169 = vsel %vm2643, %v5167, %v5168
        %v5170 = vrot.slane %v4741, 2
        %v5171 = vsel %vm2643, %v5168, %v5170
        %v5172 = vrot.slane %v4744, 2
        %v5173 = vrot.slane %v4749, 2
        %v5174 = vsel %vm2643, %v5172, %v5173
        %v5175 = vrot.slane %v4752, 2
        %v5176 = vsel %vm2643, %v5173, %v5175
        %v5177 = vrot.slane %v4757, 2
        %v5178 = vrot.slane %v4760, 2
        %v5179 = vsel %vm2643, %v5177, %v5178
        %v5180 = vrot.slane %v4765, 2
        %v5181 = vsel %vm2643, %v5178, %v5180
        %v5182 = vrot.slane %v4768, 2
        %v5183 = vrot.slane %v4773, 2
        %v5184 = vsel %vm2643, %v5182, %v5183
        %v5185 = vrot.slane %v4776, 2
        %v5186 = vsel %vm2643, %v5183, %v5185
        %v5187 = vrot.slane %v4781, 2
        %v5188 = vrot.slane %v4784, 2
        %v5189 = vsel %vm2643, %v5187, %v5188
        %v5190 = vrot.slane %v4789, 2
        %v5191 = vsel %vm2643, %v5188, %v5190
        %v5192 = vrot.slane %v4792, 2
        %v5193 = vrot.slane %v4797, 2
        %v5194 = vsel %vm2643, %v5192, %v5193
        %v5195 = vrot.slane %v4800, 2
        %v5196 = vsel %vm2643, %v5193, %v5195
        %v5197 = vrot.slane %v4805, 2
        %v5198 = vrot.slane %v4808, 2
        %v5199 = vsel %vm2643, %v5197, %v5198
        %v5200 = vrot.slane %v4813, 2
        %v5201 = vsel %vm2643, %v5198, %v5200
        %v5202 = vrot.slane %v4816, 2
        %v5203 = vrot.slane %v4821, 2
        %v5204 = vsel %vm2643, %v5202, %v5203
        %v5205 = vrot.slane %v4824, 2
        %v5206 = vsel %vm2643, %v5203, %v5205
        %v5207 = vrot.slane %v4829, 2
        %v5208 = vrot.slane %v4832, 2
        %v5209 = vsel %vm2643, %v5207, %v5208
        %v5210 = vrot.slane %v4837, 2
        %v5211 = vsel %vm2643, %v5208, %v5210
        %v5212 = vrot.slane %v4840, 2
        %v5213 = vrot.slane %v4845, 2
        %v5214 = vsel %vm2643, %v5212, %v5213
        %v5215 = vrot.slane %v4848, 2
        %v5216 = vsel %vm2643, %v5213, %v5215
        %v5217 = vrot.slane %v4853, 2
        %v5218 = vrot.slane %v4856, 2
        %v5219 = vsel %vm2643, %v5217, %v5218
        %v5220 = vrot.slane %v4861, 2
        %v5221 = vsel %vm2643, %v5218, %v5220
        %v5222 = vrot.slane %v4864, 2
        %v5223 = vrot.slane %v4869, 2
        %v5224 = vsel %vm2643, %v5222, %v5223
        %v5225 = vrot.slane %v4872, 2
        %v5226 = vsel %vm2643, %v5223, %v5225
        %v5259 = vadd.f32 %v5067, %v5149
        %v5260 = vadd.f32 %v5068, %v5151
        %v5261 = vadd.f32 %v5069, %v5154
        %v5262 = vadd.f32 %v5070, %v5156
        %v5263 = vadd.f32 %v5071, %v5159
        %v5264 = vadd.f32 %v5072, %v5161
        %v5265 = vadd.f32 %v5073, %v5164
        %v5266 = vadd.f32 %v5074, %v5166
        %v5267 = vadd.f32 %v5075, %v5169
        %v5268 = vadd.f32 %v5076, %v5171
        %v5269 = vadd.f32 %v5077, %v5174
        %v5270 = vadd.f32 %v5078, %v5176
        %v5271 = vadd.f32 %v5079, %v5179
        %v5272 = vadd.f32 %v5080, %v5181
        %v5273 = vadd.f32 %v5081, %v5184
        %v5274 = vadd.f32 %v5082, %v5186
        %v5275 = vadd.f32 %v5083, %v5189
        %v5276 = vadd.f32 %v5084, %v5191
        %v5277 = vadd.f32 %v5085, %v5194
        %v5278 = vadd.f32 %v5086, %v5196
        %v5279 = vadd.f32 %v5087, %v5199
        %v5280 = vadd.f32 %v5088, %v5201
        %v5281 = vadd.f32 %v5089, %v5204
        %v5282 = vadd.f32 %v5090, %v5206
        %v5283 = vadd.f32 %v5091, %v5209
        %v5284 = vadd.f32 %v5092, %v5211
        %v5285 = vadd.f32 %v5093, %v5214
        %v5286 = vadd.f32 %v5094, %v5216
        %v5287 = vadd.f32 %v5095, %v5219
        %v5288 = vadd.f32 %v5096, %v5221
        %v5289 = vadd.f32 %v5097, %v5224
        %v5290 = vadd.f32 %v5098, %v5226
        %v5291 = vld [vmem:[%s5] sm:$0x1]
        %v5293 = vlaneseq
        %v5294 = vshrl.u32 %v5293, 7
        %v5295 = vsub.s32 0, %v5294
        %v5296 = vrot.slane %v5291, %v5295
        %v5298 = vadd.f32 %v5259, %v5296
        %v5299 = vadd.f32 %v5260, %v5296
        %v5300 = vadd.f32 %v5261, %v5296
        %v5301 = vadd.f32 %v5262, %v5296
        %v5302 = vadd.f32 %v5263, %v5296
        %v5303 = vadd.f32 %v5264, %v5296
        %v5304 = vadd.f32 %v5265, %v5296
        %v5305 = vadd.f32 %v5266, %v5296
        %v5306 = vadd.f32 %v5267, %v5296
        %v5307 = vadd.f32 %v5268, %v5296
        %v5308 = vadd.f32 %v5269, %v5296
        %v5309 = vadd.f32 %v5270, %v5296
        %v5310 = vadd.f32 %v5271, %v5296
        %v5311 = vadd.f32 %v5272, %v5296
        %v5312 = vadd.f32 %v5273, %v5296
        %v5313 = vadd.f32 %v5274, %v5296
        %v5314 = vadd.f32 %v5275, %v5296
        %v5315 = vadd.f32 %v5276, %v5296
        %v5316 = vadd.f32 %v5277, %v5296
        %v5317 = vadd.f32 %v5278, %v5296
        %v5318 = vadd.f32 %v5279, %v5296
        %v5319 = vadd.f32 %v5280, %v5296
        %v5320 = vadd.f32 %v5281, %v5296
        %v5321 = vadd.f32 %v5282, %v5296
        %v5322 = vadd.f32 %v5283, %v5296
        %v5323 = vadd.f32 %v5284, %v5296
        %v5324 = vadd.f32 %v5285, %v5296
        %v5325 = vadd.f32 %v5286, %v5296
        %v5326 = vadd.f32 %v5287, %v5296
        %v5327 = vadd.f32 %v5288, %v5296
        %v5328 = vadd.f32 %v5289, %v5296
        %v5329 = vadd.f32 %v5290, %v5296
        %v5330 = vmax.f32 %v5298, 0.0
        %v5331 = vmax.f32 %v5299, 0.0
        %v5332 = vmax.f32 %v5300, 0.0
        %v5333 = vmax.f32 %v5301, 0.0
        %v5334 = vmax.f32 %v5302, 0.0
        %v5335 = vmax.f32 %v5303, 0.0
        %v5336 = vmax.f32 %v5304, 0.0
        %v5337 = vmax.f32 %v5305, 0.0
        %v5338 = vmax.f32 %v5306, 0.0
        %v5339 = vmax.f32 %v5307, 0.0
        %v5340 = vmax.f32 %v5308, 0.0
        %v5341 = vmax.f32 %v5309, 0.0
        %v5342 = vmax.f32 %v5310, 0.0
        %v5343 = vmax.f32 %v5311, 0.0
        %v5344 = vmax.f32 %v5312, 0.0
        %v5345 = vmax.f32 %v5313, 0.0
        %v5346 = vmax.f32 %v5314, 0.0
        %v5347 = vmax.f32 %v5315, 0.0
        %v5348 = vmax.f32 %v5316, 0.0
        %v5349 = vmax.f32 %v5317, 0.0
        %v5350 = vmax.f32 %v5318, 0.0
        %v5351 = vmax.f32 %v5319, 0.0
        %v5352 = vmax.f32 %v5320, 0.0
        %v5353 = vmax.f32 %v5321, 0.0
        %v5354 = vmax.f32 %v5322, 0.0
        %v5355 = vmax.f32 %v5323, 0.0
        %v5356 = vmax.f32 %v5324, 0.0
        %v5357 = vmax.f32 %v5325, 0.0
        %v5358 = vmax.f32 %v5326, 0.0
        %v5359 = vmax.f32 %v5327, 0.0
        %v5360 = vmax.f32 %v5328, 0.0
        %v5361 = vmax.f32 %v5329, 0.0
        %v5362 = vpack.c.bf16 %v5331, %v5330
        %v5363 = vpack.c.bf16 %v5333, %v5332
        %v5364 = vpack.c.bf16 %v5335, %v5334
        %v5365 = vpack.c.bf16 %v5337, %v5336
        %v5366 = vpack.c.bf16 %v5339, %v5338
        %v5367 = vpack.c.bf16 %v5341, %v5340
        %v5368 = vpack.c.bf16 %v5343, %v5342
        %v5369 = vpack.c.bf16 %v5345, %v5344
        %v5370 = vpack.c.bf16 %v5347, %v5346
        %v5371 = vpack.c.bf16 %v5349, %v5348
        %v5372 = vpack.c.bf16 %v5351, %v5350
        %v5373 = vpack.c.bf16 %v5353, %v5352
        %v5374 = vpack.c.bf16 %v5355, %v5354
        %v5375 = vpack.c.bf16 %v5357, %v5356
        %v5376 = vpack.c.bf16 %v5359, %v5358
        %v5377 = vpack.c.bf16 %v5361, %v5360
        %v5378 = vld [vmem:[#allocation9] sm:$0xf]
        %v5379 = vld [vmem:[#allocation9 + $0x4] sm:$0xf]
        %v5380 = vld [vmem:[#allocation9 + $0x8] sm:$0xf]
        %v5381 = vld [vmem:[#allocation9 + $0xc] sm:$0xf]
        %v5382 = vld [vmem:[#allocation9 + $0x10] sm:$0xf]
        %v5383 = vld [vmem:[#allocation9 + $0x14] sm:$0xf]
        %v5384 = vld [vmem:[#allocation9 + $0x18] sm:$0xf]
        %v5385 = vld [vmem:[#allocation9 + $0x1c] sm:$0xf]
        %v5386 = vld [vmem:[#allocation9 + $0x20] sm:$0xf]
        %v5387 = vld [vmem:[#allocation9 + $0x24] sm:$0xf]
        %v5388 = vld [vmem:[#allocation9 + $0x28] sm:$0xf]
        %v5389 = vld [vmem:[#allocation9 + $0x2c] sm:$0xf]
        %v5390 = vld [vmem:[#allocation9 + $0x30] sm:$0xf]
        %v5391 = vld [vmem:[#allocation9 + $0x34] sm:$0xf]
        %v5392 = vld [vmem:[#allocation9 + $0x38] sm:$0xf]
        %v5393 = vld [vmem:[#allocation9 + $0x3c] sm:$0xf]
        %v5394 = vld [vmem:[%s7] sm:$0x1]
        %v5396 = vlaneseq
        %v5397 = vshrl.u32 %v5396, 7
        %v5398 = vsub.s32 0, %v5397
        %v5399 = vrot.slane %v5394, %v5398
        %v5417 = vunpack.c.l.b16 %v5378
        %v5418 = vunpack.c.l.b16 %v5379
        %v5419 = vunpack.c.l.b16 %v5380
        %v5420 = vunpack.c.l.b16 %v5381
        %v5421 = vunpack.c.l.b16 %v5382
        %v5422 = vunpack.c.l.b16 %v5383
        %v5423 = vunpack.c.l.b16 %v5384
        %v5424 = vunpack.c.l.b16 %v5385
        %v5425 = vunpack.c.l.b16 %v5386
        %v5426 = vunpack.c.l.b16 %v5387
        %v5427 = vunpack.c.l.b16 %v5388
        %v5428 = vunpack.c.l.b16 %v5389
        %v5429 = vunpack.c.l.b16 %v5390
        %v5430 = vunpack.c.l.b16 %v5391
        %v5431 = vunpack.c.l.b16 %v5392
        %v5432 = vunpack.c.l.b16 %v5393
        %v5433 = vpack.c.b16 %v5418, %v5417
        %v5434 = vpack.c.b16 %v5420, %v5419
        %v5435 = vpack.c.b16 %v5422, %v5421
        %v5436 = vpack.c.b16 %v5424, %v5423
        %v5437 = vpack.c.b16 %v5426, %v5425
        %v5438 = vpack.c.b16 %v5428, %v5427
        %v5439 = vpack.c.b16 %v5430, %v5429
        %v5440 = vpack.c.b16 %v5432, %v5431
        %5449 = vmatprep.subr.bf16.mxu0 0
        %5450 = vmatpush1.bf16.msra.mxu0 %v5440
        %5451 = vmatprep.subr.bf16.mxu0 0
        %5452 = vmatpush1.bf16.msra.mxu0 %v5439
        %5453 = vmatprep.subr.bf16.mxu0 0
        %5454 = vmatpush1.bf16.msra.mxu0 %v5438
        %5455 = vmatprep.subr.bf16.mxu0 0
        %5456 = vmatpush1.bf16.msra.mxu0 %v5437
        %5457 = vmatprep.subr.bf16.mxu0 0
        %5458 = vmatpush1.bf16.msra.mxu0 %v5436
        %5459 = vmatprep.subr.bf16.mxu0 0
        %5460 = vmatpush1.bf16.msra.mxu0 %v5435
        %5461 = vmatprep.subr.bf16.mxu0 0
        %5462 = vmatpush1.bf16.msra.mxu0 %v5434
        %5463 = vmatprep.subr.bf16.mxu0 0
        %5464 = vmatpush1.bf16.msra.mxu0 %v5433
        %5465 = vmatprep.subr.bf16.mxu0 0
        %5466 = vmatpush2.bf16.msra.mxu0 0
        %5467 = vmatprep.subr.bf16.mxu0 0
        %5468 = vmatpush2.bf16.msra.mxu0 0
        %5469 = vmatprep.subr.bf16.mxu0 0
        %5470 = vmatpush2.bf16.msra.mxu0 0
        %5471 = vmatprep.subr.bf16.mxu0 0
        %5472 = vmatpush2.bf16.msra.mxu0 0
        %5473 = vmatprep.subr.bf16.mxu0 0
        %5474 = vmatpush2.bf16.msra.mxu0 0
        %5475 = vmatprep.subr.bf16.mxu0 0
        %5476 = vmatpush2.bf16.msra.mxu0 0
        %5477 = vmatprep.subr.bf16.mxu0 0
        %5478 = vmatpush2.bf16.msra.mxu0 0
        %5479 = vmatprep.subr.bf16.mxu0 0
        %5480 = vmatpush2.bf16.msra.mxu0 0
        %5481 = vmatprep.mubr.bf16.mxu0 0
        %5482 = vmatmul.mubr.bf16.gmra.mxu0 %v5362
        %v5483 = vpop.f32.mrf.mxu0
        %v5484 = vadd.f32 %v5399, %v5483
        %v5485 = vpop.f32.mrf.mxu0
        %v5486 = vpop.f32.mrf.mxu0
        %v5487 = vadd.f32 %v5399, %v5486
        %v5488 = vpop.f32.mrf.mxu0
        %5489 = vmatprep.mubr.bf16.mxu0 0
        %5490 = vmatmul.mubr.bf16.gmra.mxu0 %v5363
        %v5491 = vpop.f32.mrf.mxu0
        %v5492 = vadd.f32 %v5399, %v5491
        %v5493 = vpop.f32.mrf.mxu0
        %v5494 = vpop.f32.mrf.mxu0
        %v5495 = vadd.f32 %v5399, %v5494
        %v5496 = vpop.f32.mrf.mxu0
        %5497 = vmatprep.mubr.bf16.mxu0 0
        %5498 = vmatmul.mubr.bf16.gmra.mxu0 %v5364
        %v5499 = vpop.f32.mrf.mxu0
        %v5500 = vadd.f32 %v5399, %v5499
        %v5501 = vpop.f32.mrf.mxu0
        %v5502 = vpop.f32.mrf.mxu0
        %v5503 = vadd.f32 %v5399, %v5502
        %v5504 = vpop.f32.mrf.mxu0
        %5505 = vmatprep.mubr.bf16.mxu0 0
        %5506 = vmatmul.mubr.bf16.gmra.mxu0 %v5365
        %v5507 = vpop.f32.mrf.mxu0
        %v5508 = vadd.f32 %v5399, %v5507
        %v5509 = vpop.f32.mrf.mxu0
        %v5510 = vpop.f32.mrf.mxu0
        %v5511 = vadd.f32 %v5399, %v5510
        %v5512 = vpop.f32.mrf.mxu0
        %5513 = vmatprep.mubr.bf16.mxu0 0
        %5514 = vmatmul.mubr.bf16.gmra.mxu0 %v5366
        %v5515 = vpop.f32.mrf.mxu0
        %v5516 = vadd.f32 %v5399, %v5515
        %v5517 = vpop.f32.mrf.mxu0
        %v5518 = vpop.f32.mrf.mxu0
        %v5519 = vadd.f32 %v5399, %v5518
        %v5520 = vpop.f32.mrf.mxu0
        %5521 = vmatprep.mubr.bf16.mxu0 0
        %5522 = vmatmul.mubr.bf16.gmra.mxu0 %v5367
        %v5523 = vpop.f32.mrf.mxu0
        %v5524 = vadd.f32 %v5399, %v5523
        %v5525 = vpop.f32.mrf.mxu0
        %v5526 = vpop.f32.mrf.mxu0
        %v5527 = vadd.f32 %v5399, %v5526
        %v5528 = vpop.f32.mrf.mxu0
        %5529 = vmatprep.mubr.bf16.mxu0 0
        %5530 = vmatmul.mubr.bf16.gmra.mxu0 %v5368
        %v5531 = vpop.f32.mrf.mxu0
        %v5532 = vadd.f32 %v5399, %v5531
        %v5533 = vpop.f32.mrf.mxu0
        %v5534 = vpop.f32.mrf.mxu0
        %v5535 = vadd.f32 %v5399, %v5534
        %v5536 = vpop.f32.mrf.mxu0
        %5537 = vmatprep.mubr.bf16.mxu0 0
        %5538 = vmatmul.mubr.bf16.gmra.mxu0 %v5369
        %v5539 = vpop.f32.mrf.mxu0
        %v5540 = vadd.f32 %v5399, %v5539
        %v5541 = vpop.f32.mrf.mxu0
        %v5542 = vpop.f32.mrf.mxu0
        %v5543 = vadd.f32 %v5399, %v5542
        %v5544 = vpop.f32.mrf.mxu0
        %5545 = vmatprep.mubr.bf16.mxu0 0
        %5546 = vmatmul.mubr.bf16.gmra.mxu0 %v5370
        %v5547 = vpop.f32.mrf.mxu0
        %v5548 = vadd.f32 %v5399, %v5547
        %v5549 = vpop.f32.mrf.mxu0
        %v5550 = vpop.f32.mrf.mxu0
        %v5551 = vadd.f32 %v5399, %v5550
        %v5552 = vpop.f32.mrf.mxu0
        %5553 = vmatprep.mubr.bf16.mxu0 0
        %5554 = vmatmul.mubr.bf16.gmra.mxu0 %v5371
        %v5555 = vpop.f32.mrf.mxu0
        %v5556 = vadd.f32 %v5399, %v5555
        %v5557 = vpop.f32.mrf.mxu0
        %v5558 = vpop.f32.mrf.mxu0
        %v5559 = vadd.f32 %v5399, %v5558
        %v5560 = vpop.f32.mrf.mxu0
        %5561 = vmatprep.mubr.bf16.mxu0 0
        %5562 = vmatmul.mubr.bf16.gmra.mxu0 %v5372
        %v5563 = vpop.f32.mrf.mxu0
        %v5564 = vadd.f32 %v5399, %v5563
        %v5565 = vpop.f32.mrf.mxu0
        %v5566 = vpop.f32.mrf.mxu0
        %v5567 = vadd.f32 %v5399, %v5566
        %v5568 = vpop.f32.mrf.mxu0
        %5569 = vmatprep.mubr.bf16.mxu0 0
        %5570 = vmatmul.mubr.bf16.gmra.mxu0 %v5373
        %v5571 = vpop.f32.mrf.mxu0
        %v5572 = vadd.f32 %v5399, %v5571
        %v5573 = vpop.f32.mrf.mxu0
        %v5574 = vpop.f32.mrf.mxu0
        %v5575 = vadd.f32 %v5399, %v5574
        %v5576 = vpop.f32.mrf.mxu0
        %5577 = vmatprep.mubr.bf16.mxu0 0
        %5578 = vmatmul.mubr.bf16.gmra.mxu0 %v5374
        %v5579 = vpop.f32.mrf.mxu0
        %v5580 = vadd.f32 %v5399, %v5579
        %v5581 = vpop.f32.mrf.mxu0
        %v5582 = vpop.f32.mrf.mxu0
        %v5583 = vadd.f32 %v5399, %v5582
        %v5584 = vpop.f32.mrf.mxu0
        %5585 = vmatprep.mubr.bf16.mxu0 0
        %5586 = vmatmul.mubr.bf16.gmra.mxu0 %v5375
        %v5587 = vpop.f32.mrf.mxu0
        %v5588 = vadd.f32 %v5399, %v5587
        %v5589 = vpop.f32.mrf.mxu0
        %v5590 = vpop.f32.mrf.mxu0
        %v5591 = vadd.f32 %v5399, %v5590
        %v5592 = vpop.f32.mrf.mxu0
        %5593 = vmatprep.mubr.bf16.mxu0 0
        %5594 = vmatmul.mubr.bf16.gmra.mxu0 %v5376
        %v5595 = vpop.f32.mrf.mxu0
        %v5596 = vadd.f32 %v5399, %v5595
        %v5597 = vpop.f32.mrf.mxu0
        %v5598 = vpop.f32.mrf.mxu0
        %v5599 = vadd.f32 %v5399, %v5598
        %v5600 = vpop.f32.mrf.mxu0
        %5601 = vmatprep.mubr.bf16.mxu0 0
        %5602 = vmatmul.mubr.bf16.gmra.mxu0 %v5377
        %v5603 = vpop.f32.mrf.mxu0
        %v5604 = vadd.f32 %v5399, %v5603
        %v5605 = vpop.f32.mrf.mxu0
        %v5606 = vpop.f32.mrf.mxu0
        %v5607 = vadd.f32 %v5399, %v5606
        %v5608 = vpop.f32.mrf.mxu0
        %5609 = vdwg.mxu0
        %v5610 = vadd.f32 %v5484, %v896
        %v5611 = vadd.f32 %v5487, %v897
        %v5612 = vadd.f32 %v5492, %v898
        %v5613 = vadd.f32 %v5495, %v899
        %v5614 = vadd.f32 %v5500, %v900
        %v5615 = vadd.f32 %v5503, %v901
        %v5616 = vadd.f32 %v5508, %v902
        %v5617 = vadd.f32 %v5511, %v903
        %v5618 = vadd.f32 %v5516, %v904
        %v5619 = vadd.f32 %v5519, %v905
        %v5620 = vadd.f32 %v5524, %v906
        %v5621 = vadd.f32 %v5527, %v907
        %v5622 = vadd.f32 %v5532, %v908
        %v5623 = vadd.f32 %v5535, %v909
        %v5624 = vadd.f32 %v5540, %v910
        %v5625 = vadd.f32 %v5543, %v911
        %v5626 = vadd.f32 %v5548, %v912
        %v5627 = vadd.f32 %v5551, %v913
        %v5628 = vadd.f32 %v5556, %v914
        %v5629 = vadd.f32 %v5559, %v915
        %v5630 = vadd.f32 %v5564, %v916
        %v5631 = vadd.f32 %v5567, %v917
        %v5632 = vadd.f32 %v5572, %v918
        %v5633 = vadd.f32 %v5575, %v919
        %v5634 = vadd.f32 %v5580, %v920
        %v5635 = vadd.f32 %v5583, %v921
        %v5636 = vadd.f32 %v5588, %v922
        %v5637 = vadd.f32 %v5591, %v923
        %v5638 = vadd.f32 %v5596, %v924
        %v5639 = vadd.f32 %v5599, %v925
        %v5640 = vadd.f32 %v5604, %v926
        %v5641 = vadd.f32 %v5607, %v927
        %v5642 = vmax.f32 %v5610, 0.0
        %v5643 = vmax.f32 %v5611, 0.0
        %v5644 = vmax.f32 %v5612, 0.0
        %v5645 = vmax.f32 %v5613, 0.0
        %v5646 = vmax.f32 %v5614, 0.0
        %v5647 = vmax.f32 %v5615, 0.0
        %v5648 = vmax.f32 %v5616, 0.0
        %v5649 = vmax.f32 %v5617, 0.0
        %v5650 = vmax.f32 %v5618, 0.0
        %v5651 = vmax.f32 %v5619, 0.0
        %v5652 = vmax.f32 %v5620, 0.0
        %v5653 = vmax.f32 %v5621, 0.0
        %v5654 = vmax.f32 %v5622, 0.0
        %v5655 = vmax.f32 %v5623, 0.0
        %v5656 = vmax.f32 %v5624, 0.0
        %v5657 = vmax.f32 %v5625, 0.0
        %v5658 = vmax.f32 %v5626, 0.0
        %v5659 = vmax.f32 %v5627, 0.0
        %v5660 = vmax.f32 %v5628, 0.0
        %v5661 = vmax.f32 %v5629, 0.0
        %v5662 = vmax.f32 %v5630, 0.0
        %v5663 = vmax.f32 %v5631, 0.0
        %v5664 = vmax.f32 %v5632, 0.0
        %v5665 = vmax.f32 %v5633, 0.0
        %v5666 = vmax.f32 %v5634, 0.0
        %v5667 = vmax.f32 %v5635, 0.0
        %v5668 = vmax.f32 %v5636, 0.0
        %v5669 = vmax.f32 %v5637, 0.0
        %v5670 = vmax.f32 %v5638, 0.0
        %v5671 = vmax.f32 %v5639, 0.0
        %v5672 = vmax.f32 %v5640, 0.0
        %v5673 = vmax.f32 %v5641, 0.0
        %v5674 = vpack.c.bf16 %v5643, %v5642
        %v5675 = vpack.c.bf16 %v5645, %v5644
        %v5676 = vpack.c.bf16 %v5647, %v5646
        %v5677 = vpack.c.bf16 %v5649, %v5648
        %v5678 = vpack.c.bf16 %v5651, %v5650
        %v5679 = vpack.c.bf16 %v5653, %v5652
        %v5680 = vpack.c.bf16 %v5655, %v5654
        %v5681 = vpack.c.bf16 %v5657, %v5656
        %v5682 = vpack.c.bf16 %v5659, %v5658
        %v5683 = vpack.c.bf16 %v5661, %v5660
        %v5684 = vpack.c.bf16 %v5663, %v5662
        %v5685 = vpack.c.bf16 %v5665, %v5664
        %v5686 = vpack.c.bf16 %v5667, %v5666
        %v5687 = vpack.c.bf16 %v5669, %v5668
        %v5688 = vpack.c.bf16 %v5671, %v5670
        %v5689 = vpack.c.bf16 %v5673, %v5672
        %v5706 = vunpack.c.l.b16 %v5674
        %v5707 = vunpack.c.h.b16 %v5674
        %v5708 = vunpack.c.l.b16 %v5675
        %v5709 = vunpack.c.h.b16 %v5675
        %v5710 = vunpack.c.l.b16 %v5676
        %v5711 = vunpack.c.h.b16 %v5676
        %v5712 = vunpack.c.l.b16 %v5677
        %v5713 = vunpack.c.h.b16 %v5677
        %v5714 = vunpack.c.l.b16 %v5678
        %v5715 = vunpack.c.h.b16 %v5678
        %v5716 = vunpack.c.l.b16 %v5679
        %v5717 = vunpack.c.h.b16 %v5679
        %v5718 = vunpack.c.l.b16 %v5680
        %v5719 = vunpack.c.h.b16 %v5680
        %v5720 = vunpack.c.l.b16 %v5681
        %v5721 = vunpack.c.h.b16 %v5681
        %v5722 = vunpack.c.l.b16 %v5682
        %v5723 = vunpack.c.h.b16 %v5682
        %v5724 = vunpack.c.l.b16 %v5683
        %v5725 = vunpack.c.h.b16 %v5683
        %v5726 = vunpack.c.l.b16 %v5684
        %v5727 = vunpack.c.h.b16 %v5684
        %v5728 = vunpack.c.l.b16 %v5685
        %v5729 = vunpack.c.h.b16 %v5685
        %v5730 = vunpack.c.l.b16 %v5686
        %v5731 = vunpack.c.h.b16 %v5686
        %v5732 = vunpack.c.l.b16 %v5687
        %v5733 = vunpack.c.h.b16 %v5687
        %v5734 = vunpack.c.l.b16 %v5688
        %v5735 = vunpack.c.h.b16 %v5688
        %v5736 = vunpack.c.l.b16 %v5689
        %v5737 = vunpack.c.h.b16 %v5689
        %v5738 = vpack.c.b16 %v5706, %v5706
        %v5739 = vpack.c.b16 %v5707, %v5707
        %v5740 = vpack.c.b16 %v5708, %v5708
        %v5741 = vpack.c.b16 %v5709, %v5709
        %v5742 = vpack.c.b16 %v5710, %v5710
        %v5743 = vpack.c.b16 %v5711, %v5711
        %v5744 = vpack.c.b16 %v5712, %v5712
        %v5745 = vpack.c.b16 %v5713, %v5713
        %v5746 = vpack.c.b16 %v5714, %v5714
        %v5747 = vpack.c.b16 %v5715, %v5715
        %v5748 = vpack.c.b16 %v5716, %v5716
        %v5749 = vpack.c.b16 %v5717, %v5717
        %v5750 = vpack.c.b16 %v5718, %v5718
        %v5751 = vpack.c.b16 %v5719, %v5719
        %v5752 = vpack.c.b16 %v5720, %v5720
        %v5753 = vpack.c.b16 %v5721, %v5721
        %v5754 = vpack.c.b16 %v5722, %v5722
        %v5755 = vpack.c.b16 %v5723, %v5723
        %v5756 = vpack.c.b16 %v5724, %v5724
        %v5757 = vpack.c.b16 %v5725, %v5725
        %v5758 = vpack.c.b16 %v5726, %v5726
        %v5759 = vpack.c.b16 %v5727, %v5727
        %v5760 = vpack.c.b16 %v5728, %v5728
        %v5761 = vpack.c.b16 %v5729, %v5729
        %v5762 = vpack.c.b16 %v5730, %v5730
        %v5763 = vpack.c.b16 %v5731, %v5731
        %v5764 = vpack.c.b16 %v5732, %v5732
        %v5765 = vpack.c.b16 %v5733, %v5733
        %v5766 = vpack.c.b16 %v5734, %v5734
        %v5767 = vpack.c.b16 %v5735, %v5735
        %v5768 = vpack.c.b16 %v5736, %v5736
        %v5769 = vpack.c.b16 %v5737, %v5737
        %5802 = vst [vmem:[%s367] sm:$0xf] %v5738
        %5803 = vst [vmem:[%s367 + $0x4] sm:$0xf] %v5739
        %5804 = vst [vmem:[%s367 + $0x8] sm:$0xf] %v5740
        %5805 = vst [vmem:[%s367 + $0xc] sm:$0xf] %v5741
        %5806 = vst [vmem:[%s367 + $0x10] sm:$0xf] %v5742
        %5807 = vst [vmem:[%s367 + $0x14] sm:$0xf] %v5743
        %5808 = vst [vmem:[%s367 + $0x18] sm:$0xf] %v5744
        %5809 = vst [vmem:[%s367 + $0x1c] sm:$0xf] %v5745
        %5810 = vst [vmem:[%s367 + $0x20] sm:$0xf] %v5746
        %5811 = vst [vmem:[%s367 + $0x24] sm:$0xf] %v5747
        %5812 = vst [vmem:[%s367 + $0x28] sm:$0xf] %v5748
        %5813 = vst [vmem:[%s367 + $0x2c] sm:$0xf] %v5749
        %5814 = vst [vmem:[%s367 + $0x30] sm:$0xf] %v5750
        %5815 = vst [vmem:[%s367 + $0x34] sm:$0xf] %v5751
        %5816 = vst [vmem:[%s367 + $0x38] sm:$0xf] %v5752
        %5817 = vst [vmem:[%s367 + $0x3c] sm:$0xf] %v5753
        %5818 = vst [vmem:[%s367 + $0x40] sm:$0xf] %v5754
        %5819 = vst [vmem:[%s367 + $0x44] sm:$0xf] %v5755
        %5820 = vst [vmem:[%s367 + $0x48] sm:$0xf] %v5756
        %5821 = vst [vmem:[%s367 + $0x4c] sm:$0xf] %v5757
        %5822 = vst [vmem:[%s367 + $0x50] sm:$0xf] %v5758
        %5823 = vst [vmem:[%s367 + $0x54] sm:$0xf] %v5759
        %5824 = vst [vmem:[%s367 + $0x58] sm:$0xf] %v5760
        %5825 = vst [vmem:[%s367 + $0x5c] sm:$0xf] %v5761
        %5826 = vst [vmem:[%s367 + $0x60] sm:$0xf] %v5762
        %5827 = vst [vmem:[%s367 + $0x64] sm:$0xf] %v5763
        %5828 = vst [vmem:[%s367 + $0x68] sm:$0xf] %v5764
        %5829 = vst [vmem:[%s367 + $0x6c] sm:$0xf] %v5765
        %5830 = vst [vmem:[%s367 + $0x70] sm:$0xf] %v5766
        %5831 = vst [vmem:[%s367 + $0x74] sm:$0xf] %v5767
        %5832 = vst [vmem:[%s367 + $0x78] sm:$0xf] %v5768
        %5833 = vst [vmem:[%s367 + $0x7c] sm:$0xf] %v5769
        %s5834 = sand.u32 %s208, 1
        %s5835 = scalar_lea.sflag [#allocation5], %s5834
        %s5836 = sand.u32 %s208, 1
        %s5837 = smul.addr %s5836, 128
        %s5838 = scalar_lea.vmem [#allocation11], %s5837
        // Predicated region
        $region69: #{tpu_custom_call.1} parent=51 // pred_check
          %p5839 = pneg %p218
        $region70: #{tpu_custom_call.1} parent=51 // pred_check_branch
          %5841 = sbr.rel (%p5839) target = $region72
        $region71: #{tpu_custom_call.1} parent=51 // pred_region
          %s5843 = ssub.s32 2048, 2048
          %5844 = vsyncadd %s5835, %s5843
          %s5845 = smul.addr %s27, 32
          %s5846 = smul.addr %s5845, 64
          %s5847 = scalar_lea.hbm %s8, %s5846
          %s5848 = sshll.u32 %s5838, 4
          %s5849 = int_to_ptr.vmem [resolvable:$true] %s5848
          %5854 = dma.vmem_to_hbm [thread:$0]  %s5849, 2048, %s5847, %s5835, 64, 64, 4
        $region72: #{tpu_custom_call.1} parent=51 // pred_fallthru
          _
      $region52: #{tpu_custom_call.1} parent=5 // pred_fallthru
        _
      %p5855 = scmp.le.s32.totalorder 2, %s22
      // Predicated region
      $region73: #{tpu_custom_call.1} parent=5 // pred_check
        %p5856 = pneg %p5855
      $region74: #{tpu_custom_call.1} parent=5 // pred_check_branch
        %5858 = sbr.rel (%p5856) target = $region76
      $region75: #{tpu_custom_call.1} parent=5 // pred_region
        %s5859 = ssub.s32 %s22, 2
        // Predicated region
        $region77: #{tpu_custom_call.1} parent=75 // pred_check
          %p5860 = pneg %p224
        $region78: #{tpu_custom_call.1} parent=75 // pred_check_branch
          %5862 = sbr.rel (%p5860) target = $region80
        $region79: #{tpu_custom_call.1} parent=75 // pred_region
          %s5863 = sand.u32 %s209, 1
          %s5864 = scalar_lea.sflag [#allocation5], %s5863
          %s5865 = sand.u32 %s209, 1
          %s5866 = smul.addr %s5865, 128
          %s5867 = scalar_lea.vmem [#allocation11], %s5866
          %5868 = dma.done %s5864, 2048
        $region80: #{tpu_custom_call.1} parent=75 // pred_fallthru
          _
      $region76: #{tpu_custom_call.1} parent=5 // pred_fallthru
        _
    $region6: #{tpu_custom_call.1} parent=1 // loop_footer
      %s26 = sadd.s32 1, %s22
    $region7: #{tpu_custom_call.1} parent=1 // loop_footer_branch
      %21 = sbr.rel target = $region3
    $region8: #{tpu_custom_call.1} parent=1 // loop_exit
      _
    %5869 = vsyncpa [#allocation4], 1
    %s5870 = scalar_lea.sflag [#allocation4], 1
    %5871 = vsyncpa %s5870, 1
    %5872 = vsyncpa [#allocation7], 1
    %5873 = vsyncpa [#allocation10], 1
    %5874 = vsyncpa [#allocation5], 1
    %s5875 = scalar_lea.sflag [#allocation5], 1
    %5876 = vsyncpa %s5875, 1

</llo_original>
